<compile_context>
chip_gen: v7x
topology: tpu7x:2x2x1
jax: 0.10.0
libtpu: 0.0.40
codegen_flags: <defaults>
</compile_context>

<pallas_src>
from functools import partial

import jax
import jax.numpy as jnp
from jax.experimental import pallas as pl
from jax.experimental.pallas import tpu as pltpu


# ----------------------------------------------------------------------------
# helpers
# ----------------------------------------------------------------------------
def _round_up(x, m):
    return (x + m - 1) // m * m


def _pick_tile(padded, candidates=(512, 256, 128)):
    """Largest candidate tile that divides the (already aligned) padded dim."""
    for c in candidates:
        if c <= padded and padded % c == 0:
            return c
    return padded


_VMEM_LIMIT_CACHE = None


def _vmem_limit_bytes():
    """Generation-aware VMEM budget: ~3/4 of physical (96 MiB on v5e/v6e, 48 MiB on v7x)."""
    global _VMEM_LIMIT_CACHE
    if _VMEM_LIMIT_CACHE is None:
        try:
            cap = int(pltpu.get_tpu_info().vmem_capacity_bytes)
        except Exception:
            cap = 64 * 1024 * 1024          # conservative (v7x-sized) fallback
        _VMEM_LIMIT_CACHE = min(cap * 3 // 4, 100 * 1024 * 1024)
    return _VMEM_LIMIT_CACHE


# ----------------------------------------------------------------------------
# Pallas kernels
# ----------------------------------------------------------------------------
def gemm_bias_kernel(a_ref, b_ref, bias_ref, o_ref, acc_ref, *, relu):
    """M/N/K-tiled GEMM, f32 VMEM accumulator, fused bias(+ReLU), bf16 output.

    CORRECTNESS NOTE: the K axis must stay the LAST (innermost) grid axis, marked
    "arbitrary", and the output/accumulator block index must not depend on k.
    """
    k = pl.program_id(2)

    @pl.when(k == 0)
    def _():
        acc_ref[...] = jnp.zeros_like(acc_ref)

    acc_ref[...] += jnp.dot(a_ref[...], b_ref[...], preferred_element_type=jnp.float32)

    @pl.when(k == pl.num_programs(2) - 1)
    def _():
        out = acc_ref[...] + bias_ref[...]
        if relu:
            out = jnp.maximum(out, 0.0)
        o_ref[...] = out.astype(o_ref.dtype)


def conv3x3_kernel(*refs, TH, W, n_in, relu):
    """Direct 3x3 conv (padding=1 via the caller's 1-pixel spatial pre-pad).

    refs = (x_0..x_{n_in-1}, w_0..w_{n_in-1}, bias, out, acc_scratch).
    n_in=2 fuses the decoder's channel concat (up, skip) into the first conv.

    Per input branch:
      * the 3 horizontal (dx) taps are interleaved along the channel axis ONCE
        (one concat instead of nine per-tap sublane-shift relayout copies),
        raising the matmul contraction to K = 3*Cin,
      * the 3 vertical (dy) taps are free major-dim slices feeding 3 MXU GEMMs,
      * everything accumulates into a f32 VMEM scratch (bounded vreg pressure),
      * bias + ReLU epilogue, bf16 store with a lane-dense (128-multiple) Cout.
    """
    x_refs = refs[:n_in]
    w_refs = refs[n_in:2 * n_in]
    bias_ref = refs[2 * n_in]
    o_ref = refs[2 * n_in + 1]
    acc_ref = refs[2 * n_in + 2]

    acc_ref[...] = jnp.zeros_like(acc_ref)
    for x_ref, w_ref in zip(x_refs, w_refs):
        x = x_ref[0]                                          # (TH+2, W+2, Cin) bf16
        cin = x.shape[-1]
        # dx-interleave once: K = 3*Cin  (no per-tap W-shift relayouts feeding the MXU).
        x3 = jnp.concatenate(
            [x[:, 0:W, :], x[:, 1:W + 1, :], x[:, 2:W + 2, :]], axis=-1)
        for dy in range(3):                                   # dy slices are free (major dim)
            a = x3[dy:dy + TH].reshape(TH * W, 3 * cin)
            acc_ref[...] += jnp.dot(a, w_ref[dy], preferred_element_type=jnp.float32)

    out = acc_ref[...] + bias_ref[...]
    if relu:
        out = jnp.maximum(out, 0.0)
    o_ref[0] = out.astype(o_ref.dtype)


# ----------------------------------------------------------------------------
# Pallas wrappers
# ----------------------------------------------------------------------------
def matmul_bias_act(A, Bp, bias_p, relu=False):
    """A:(M,K) activations @ Bp:(Kp,Np) packed bf16 weights + bias -> (M, Np) bf16."""
    M, K = A.shape
    Kp, Np = Bp.shape
    assert Kp >= K and Kp % 128 == 0 and Np % 128 == 0

    Mp = _round_up(M, 8)
    TM = _pick_tile(Mp, (512, 256, 128))      # prefer 256-multiples (v6e/v7x MXU is 2x256x256)
    TN = _pick_tile(Np, (512, 256, 128))
    TK = _pick_tile(Kp, (512, 256, 128))

    # Ensure >=2 parallel output blocks so a second TensorCore (v7x) is never idle.
    while (Mp // TM) * (Np // TN) < 2 and TM >= 16 and (TM // 2) % 8 == 0:
        TM //= 2

    if Mp != M or Kp != K:
        A = jnp.pad(A, ((0, Mp - M), (0, Kp - K)))
    A = A.astype(jnp.bfloat16)

    k_tiles = Kp // TK
    if k_tiles > 2:
        # Deeper buffering on the streamed K operand to hide DMA latency.
        b_spec = pl.BlockSpec((TK, TN), lambda i, j, k: (k, j), pipeline_mode=pl.Buffered(3))
    else:
        b_spec = pl.BlockSpec((TK, TN), lambda i, j, k: (k, j))

    out = pl.pallas_call(
        partial(gemm_bias_kernel, relu=relu),
        out_shape=jax.ShapeDtypeStruct((Mp, Np), jnp.bfloat16),
        grid=(Mp // TM, Np // TN, k_tiles),
        in_specs=[
            pl.BlockSpec((TM, TK), lambda i, j, k: (i, k)),
            b_spec,
            pl.BlockSpec((1, TN), lambda i, j, k: (0, j)),
        ],
        out_specs=pl.BlockSpec((TM, TN), lambda i, j, k: (i, j)),
        scratch_shapes=[pltpu.VMEM((TM, TN), jnp.float32)],
        compiler_params=pltpu.CompilerParams(
            dimension_semantics=("parallel", "parallel", "arbitrary"),
            vmem_limit_bytes=_vmem_limit_bytes(),
        ),
    )(A, Bp, bias_p)
    return out[:M]


def _pick_th(N, H, W, cins, tcn, budget_bytes):
    """Largest row-block TH (divisor of H) whose per-block VMEM footprint fits, then split
    further if needed so the grid has >=2 parallel blocks (v7x second TensorCore)."""
    def est(th):
        b = th * W * tcn * 4 + 2 * th * W * tcn * 2          # f32 acc + 2x bf16 output block
        for cin in cins:
            b += 2 * (th + 2) * (W + 2) * cin * 2            # 2x bf16 input block
            b += (th + 2) * W * 3 * cin * 2                  # in-kernel dx-interleaved temp
            b += 2 * 9 * cin * tcn * 2                       # 2x packed weights
        return b

    cands = [c for c in (H, 512, 256, 128, 64, 32, 16, 8) if c <= H and H % c == 0]
    th = cands[-1]
    for c in cands:
        if est(c) <= budget_bytes:
            th = c
            break
    while N * (H // th) < 2 and th >= 16 and th % 2 == 0 and H % (th // 2) == 0:
        th //= 2
    return th


def conv3x3(xs, wps, bias_p, relu):
    """Fused (multi-input) 3x3 conv, padding=1.

    xs:  list of NHWC bf16 feature maps (semantically channel-concatenated, in order).
    wps: matching list of packed (3, 3*Cin_i, Cout_p) bf16 weights (dx-interleaved).
    Returns (N, H, W, Cout_p) bf16; padded output channels are exact zeros.
    """
    N, H, W, _ = xs[0].shape
    for x in xs:
        assert x.shape[:3] == (N, H, W)
    Cout_p = bias_p.shape[1]
    assert Cout_p % 128 == 0
    TCN = 256 if Cout_p % 256 == 0 else 128

    vmem_limit = _vmem_limit_bytes()
    cins = [int(x.shape[-1]) for x in xs]
    TH = _pick_th(N, H, W, cins, TCN, int(vmem_limit * 0.6))
    n_blk = H // TH
    NB = N * n_blk

    def blockify(x):
        # TODO(synk): handle the 1-pixel halo fully in-kernel (masked edge taps / halo DMA)
        # to remove this wrapper-side pad and the row-block duplication when n_blk > 1.
        xp = jnp.pad(x, ((0, 0), (1, 1), (1, 1), (0, 0)))     # bf16 spatial pad
        if n_blk == 1:
            return xp
        blocks = [xp[:, b * TH: b * TH + TH + 2] for b in range(n_blk)]
        return jnp.stack(blocks, axis=1).reshape(NB, TH + 2, W + 2, x.shape[-1])

    xbs = [blockify(x) for x in xs]

    in_specs = []
    for cin in cins:
        in_specs.append(pl.BlockSpec((1, TH + 2, W + 2, cin), lambda n, j: (n, 0, 0, 0)))
    for cin in cins:
        in_specs.append(pl.BlockSpec((3, 3 * cin, TCN), lambda n, j: (0, 0, j)))
    in_specs.append(pl.BlockSpec((1, TCN), lambda n, j: (0, j)))

    out = pl.pallas_call(
        partial(conv3x3_kernel, TH=TH, W=W, n_in=len(xs), relu=relu),
        out_shape=jax.ShapeDtypeStruct((NB, TH * W, Cout_p), jnp.bfloat16),
        grid=(NB, Cout_p // TCN),
        in_specs=in_specs,
        out_specs=pl.BlockSpec((1, TH * W, TCN), lambda n, j: (n, 0, j)),
        scratch_shapes=[pltpu.VMEM((TH * W, TCN), jnp.float32)],
        compiler_params=pltpu.CompilerParams(
            dimension_semantics=("parallel", "parallel"),
            vmem_limit_bytes=vmem_limit,
        ),
    )(*xbs, *wps, bias_p)
    return out.reshape(N, H, W, Cout_p)


def conv_transpose2x2(x, wp, bias_p, cout):
    """ConvTranspose2d(k=2, s=2) as one GEMM + bf16 pixel shuffle.  x: (N,H,W,Cin) bf16."""
    N, H, W, Cin = x.shape
    A = x.reshape(N * H * W, Cin)
    out = matmul_bias_act(A, wp, bias_p, relu=False)                  # (N*H*W, Np) bf16
    out = out[:, : 4 * cout].reshape(N, H, W, 2, 2, cout)
    # Packed columns are (ky, kx, o)-ordered so the inner (kx, o) dims stay contiguous here.
    out = jnp.transpose(out, (0, 1, 3, 2, 4, 5)).reshape(N, 2 * H, 2 * W, cout)
    return out


# ----------------------------------------------------------------------------
# Parameter packing (hoisted out of the forward path) + forward
# ----------------------------------------------------------------------------
def pack_decoder_params(raw, in_c, features):
    """Repack torch-layout weights into padded, bf16 GEMM/conv layouts -- done once."""
    packed = {}
    cout_t = in_c // 2

    # ConvTranspose2d weight (Cin, Cout, 2, 2) -> (Kp, Np) bf16, columns ordered (ky, kx, o).
    wt = jnp.transpose(raw["tw"], (0, 2, 3, 1)).reshape(in_c, 4 * cout_t)
    Kp = _round_up(in_c, 128)
    Np = _round_up(4 * cout_t, 128)
    packed["tw"] = jnp.pad(wt, ((0, Kp - in_c), (0, Np - 4 * cout_t))).astype(jnp.bfloat16)
    tb = jnp.tile(raw["tb"], 4)
    packed["tb"] = jnp.pad(tb, (0, Np - 4 * cout_t)).reshape(1, Np).astype(jnp.float32)

    def pack_conv(w, b, cin_lo, cin_hi, cin_pad):
        """Torch (Cout, Cin, 3, 3) -> dx-interleaved (3_dy, 3_dx*cin_pad, Cout_p) bf16.

        Takes input-channel slab [cin_lo, cin_hi), zero-pads it to cin_pad channels, and
        pads Cout to a lane-dense multiple of 128 (padded columns stay exactly zero)."""
        cout = w.shape[0]
        cout_p = _round_up(cout, 128)
        ws = jnp.transpose(w[:, cin_lo:cin_hi], (2, 3, 1, 0))          # (dy, dx, cin, cout)
        ws = jnp.pad(ws, ((0, 0), (0, 0),
                          (0, cin_pad - (cin_hi - cin_lo)), (0, cout_p - cout)))
        ws = ws.reshape(3, 3 * cin_pad, cout_p).astype(jnp.bfloat16)
        bp = jnp.pad(b, (0, cout_p - cout)).reshape(1, cout_p).astype(jnp.float32)
        return ws, bp

    # conv1: the channel concat is fused in-kernel -> split weights into `up` / `skip` slabs
    # (torch.cat([out, skip], dim=1) puts the transposed-conv output first).
    packed["w1_up"], packed["b1"] = pack_conv(raw["w1"], raw["b1"], 0, features, features)
    packed["w1_skip"], _ = pack_conv(raw["w1"], raw["b1"], features, 2 * features, features)
    # conv2 consumes conv1's lane-padded output directly (no channel slice in between):
    # pad its input channels to conv1's padded Cout; those padded lanes are exact zeros.
    feat_p = _round_up(features, 128)
    packed["w2"], packed["b2"] = pack_conv(raw["w2"], raw["b2"], 0, features, feat_p)
    return packed


def decoder_forward(packed, x_nchw, skip_nchw, *, in_c, features):
    x = jnp.transpose(x_nchw, (0, 2, 3, 1)).astype(jnp.bfloat16)       # NCHW -> NHWC, bf16
    skip = jnp.transpose(skip_nchw, (0, 2, 3, 1)).astype(jnp.bfloat16)

    up = conv_transpose2x2(x, packed["tw"], packed["tb"], in_c // 2)   # (N,2H,2W,in_c//2) bf16

    # First 3x3 conv with the channel concat fused in-kernel (no cat tensor HBM round trip).
    h = conv3x3([up, skip], [packed["w1_up"], packed["w1_skip"]], packed["b1"], relu=True)
    # Second 3x3 conv consumes the lane-padded (128-multiple) output directly.
    h = conv3x3([h], [packed["w2"]], packed["b2"], relu=True)

    h = h[..., :features]                                              # drop zero padding lanes
    return jnp.transpose(h, (0, 3, 1, 2)).astype(jnp.float32)          # NHWC -> NCHW


# ----------------------------------------------------------------------------
# Deterministic init (torch shapes) + pure-JAX f32 reference for a sanity check
# ----------------------------------------------------------------------------
def init_raw_params(key, in_c, features):
    ks = jax.random.split(key, 6)
    cout_t = in_c // 2
    raw = {}
    raw["tw"] = jax.random.normal(ks[0], (in_c, cout_t, 2, 2), jnp.float32) * jnp.sqrt(2.0 / (in_c * 4))
    raw["tb"] = jax.random.normal(ks[1], (cout_t,), jnp.float32) * 0.01
    raw["w1"] = jax.random.normal(ks[2], (features, 2 * features, 3, 3), jnp.float32) * jnp.sqrt(2.0 / (2 * features * 9))
    raw["b1"] = jax.random.normal(ks[3], (features,), jnp.float32) * 0.01
    raw["w2"] = jax.random.normal(ks[4], (features, features, 3, 3), jnp.float32) * jnp.sqrt(2.0 / (features * 9))
    raw["b2"] = jax.random.normal(ks[5], (features,), jnp.float32) * 0.01
    return raw


def decoder_reference(raw, x_nchw, skip_nchw):
    x = jnp.transpose(x_nchw, (0, 2, 3, 1)).astype(jnp.float32)
    skip = jnp.transpose(skip_nchw, (0, 2, 3, 1)).astype(jnp.float32)
    N, H, W, _ = x.shape
    cout_t = raw["tw"].shape[1]

    up = jnp.einsum("nhwi,iokl->nhkwlo", x, raw["tw"]).reshape(N, 2 * H, 2 * W, cout_t)
    up = up + raw["tb"]
    h = jnp.concatenate([up, skip], axis=-1)

    def conv3x3_ref(t, w, b):
        n_, hh, ww, _ = t.shape
        tp = jnp.pad(t, ((0, 0), (1, 1), (1, 1), (0, 0)))
        acc = jnp.zeros((n_, hh, ww, w.shape[0]), jnp.float32)
        for dy in range(3):
            for dx in range(3):
                acc = acc + jnp.einsum("nhwi,oi->nhwo",
                                       tp[:, dy:dy + hh, dx:dx + ww, :], w[:, :, dy, dx])
        return jnp.maximum(acc + b, 0.0)

    h = conv3x3_ref(h, raw["w1"], raw["b1"])
    h = conv3x3_ref(h, raw["w2"], raw["b2"])
    return jnp.transpose(h, (0, 3, 1, 2))


# ----------------------------------------------------------------------------
if __name__ == "__main__":
    key = jax.random.PRNGKey(0)
    pkey, xkey, skey = jax.random.split(key, 3)

    batch, in_c, features, spatial = 2, 64, 32, 8   # skip / output spatial = 16

    raw = init_raw_params(pkey, in_c, features)
    packed = pack_decoder_params(raw, in_c, features)   # packing hoisted out of forward

    x = jax.random.normal(xkey, (batch, in_c, spatial, spatial), jnp.float32)
    skip = jax.random.normal(skey, (batch, features, 2 * spatial, 2 * spatial), jnp.float32)

    fwd = jax.jit(partial(decoder_forward, in_c=in_c, features=features))
    y = fwd(packed, x, skip)
    jax.block_until_ready(y)

    assert y.shape == (batch, features, 2 * spatial, 2 * spatial), y.shape
    assert bool(jnp.isfinite(y).all())

    # bf16-MXU / bf16-intermediate kernels vs. pure-f32 XLA reference (loose tolerance).
    y_ref = decoder_reference(raw, x, skip)
    assert jnp.allclose(y, y_ref, rtol=0.1, atol=0.1), float(jnp.max(jnp.abs(y - y_ref)))

    print("KERNEL_OK")
</pallas_src>

<mosaic_0001>
module attributes {stable_mosaic.version = 11 : i64} {
  func.func @gemm_bias_kernel(%arg0: i32, %arg1: i32, %arg2: i32, %arg3: memref<64x128xbf16, #tpu.memory_space<vmem>>, %arg4: memref<128x128xbf16, #tpu.memory_space<vmem>>, %arg5: memref<1x128xf32, #tpu.memory_space<vmem>>, %arg6: memref<64x128xbf16, #tpu.memory_space<vmem>>, %arg7: memref<64x128xf32, #tpu.memory_space<vmem>>) attributes {dimension_semantics = [#tpu.dimension_semantics<parallel>, #tpu.dimension_semantics<parallel>, #tpu.dimension_semantics<arbitrary>], iteration_bounds = array<i64: 2, 1, 1>, scalar_prefetch = 0 : i64, scratch_operands = 1 : i64, tpu.core_type = #tpu.core_type<tc>, window_params = [{transform_indices = @transform_0, window_bounds = array<i64: 64, 128>}, {transform_indices = @transform_1, window_bounds = array<i64: 128, 128>}, {transform_indices = @transform_2, window_bounds = array<i64: 1, 128>}, {transform_indices = @transform_3, window_bounds = array<i64: 64, 128>}]} {
    %c0_i32 = arith.constant 0 : i32
    %0 = arith.cmpi eq, %arg2, %c0_i32 : i32
    %1 = arith.extui %0 : i1 to i32
    %c0_i32_0 = arith.constant 0 : i32
    %2 = arith.cmpi ne, %1, %c0_i32_0 : i32
    scf.if %2 {
      %cst_10 = arith.constant 0.000000e+00 : f32
      %12 = vector.broadcast %cst_10 : f32 to vector<64x128xf32>
      %c0_11 = arith.constant 0 : index
      %c0_12 = arith.constant 0 : index
      %13 = vector.load %arg7[%c0_11, %c0_12] : memref<64x128xf32, #tpu.memory_space<vmem>>, vector<64x128xf32>
      tpu.vector_store %arg7[%c0_11, %c0_12], %12 {strides = array<i32>} : memref<64x128xf32, #tpu.memory_space<vmem>>, vector<64x128xf32>,
    } else {
    }
    %c0 = arith.constant 0 : index
    %c0_1 = arith.constant 0 : index
    %3 = vector.load %arg7[%c0, %c0_1] : memref<64x128xf32, #tpu.memory_space<vmem>>, vector<64x128xf32>
    %c0_2 = arith.constant 0 : index
    %c0_3 = arith.constant 0 : index
    %4 = vector.load %arg3[%c0_2, %c0_3] : memref<64x128xbf16, #tpu.memory_space<vmem>>, vector<64x128xbf16>
    %c0_4 = arith.constant 0 : index
    %c0_5 = arith.constant 0 : index
    %5 = vector.load %arg4[%c0_4, %c0_5] : memref<128x128xbf16, #tpu.memory_space<vmem>>, vector<128x128xbf16>
    %cst = arith.constant dense<0.000000e+00> : vector<64x128xf32>
    %6 = tpu.matmul %4, %5, %cst {dimension_numbers = #tpu.dot_dimension_numbers<[1], [0], [0], [1], [0, 0, 1, 1], [], []>} : vector<64x128xbf16>, vector<128x128xbf16>, vector<64x128xf32> -> vector<64x128xf32>
    %7 = arith.addf %3, %6 : vector<64x128xf32>
    %c0_6 = arith.constant 0 : index
    %c0_7 = arith.constant 0 : index
    %8 = vector.load %arg7[%c0_6, %c0_7] : memref<64x128xf32, #tpu.memory_space<vmem>>, vector<64x128xf32>
    tpu.vector_store %arg7[%c0_6, %c0_7], %7 {strides = array<i32>} : memref<64x128xf32, #tpu.memory_space<vmem>>, vector<64x128xf32>,
    %c0_i32_8 = arith.constant 0 : i32
    %9 = arith.cmpi eq, %arg2, %c0_i32_8 : i32
    %10 = arith.extui %9 : i1 to i32
    %c0_i32_9 = arith.constant 0 : i32
    %11 = arith.cmpi ne, %10, %c0_i32_9 : i32
    scf.if %11 {
      %c0_10 = arith.constant 0 : index
      %c0_11 = arith.constant 0 : index
      %12 = vector.load %arg7[%c0_10, %c0_11] : memref<64x128xf32, #tpu.memory_space<vmem>>, vector<64x128xf32>
      %c0_12 = arith.constant 0 : index
      %c0_13 = arith.constant 0 : index
      %13 = vector.load %arg5[%c0_12, %c0_13] : memref<1x128xf32, #tpu.memory_space<vmem>>, vector<1x128xf32>
      %14 = vector.broadcast %13 : vector<1x128xf32> to vector<64x128xf32>
      %15 = arith.addf %12, %14 : vector<64x128xf32>
      %16 = arith.truncf %15 : vector<64x128xf32> to vector<64x128xbf16>
      %c0_14 = arith.constant 0 : index
      %c0_15 = arith.constant 0 : index
      %17 = vector.load %arg6[%c0_14, %c0_15] : memref<64x128xbf16, #tpu.memory_space<vmem>>, vector<64x128xbf16>
      tpu.vector_store %arg6[%c0_14, %c0_15], %16 {strides = array<i32>} : memref<64x128xbf16, #tpu.memory_space<vmem>>, vector<64x128xbf16>,
    } else {
    }
    return
  }
  func.func @transform_0(%arg0: i32, %arg1: i32, %arg2: i32) -> (i32, i32) {
    %c0_i32 = arith.constant 0 : i32
    return %arg0, %arg2 : i32, i32
  }
  func.func @transform_1(%arg0: i32, %arg1: i32, %arg2: i32) -> (i32, i32) {
    %c0_i32 = arith.constant 0 : i32
    return %arg2, %arg1 : i32, i32
  }
  func.func @transform_2(%arg0: i32, %arg1: i32, %arg2: i32) -> (i32, i32) {
    %c0_i32 = arith.constant 0 : i32
    %c0_i32_0 = arith.constant 0 : i32
    return %c0_i32, %arg1 : i32, i32
  }
  func.func @transform_3(%arg0: i32, %arg1: i32, %arg2: i32) -> (i32, i32) {
    %c0_i32 = arith.constant 0 : i32
    return %arg0, %arg1 : i32, i32
  }
}

module attributes {stable_mosaic.version = 11 : i64} {
  func.func @conv3x3_kernel(%arg0: i32, %arg1: i32, %arg2: memref<1x18x18x32xbf16, #tpu.memory_space<vmem>>, %arg3: memref<1x18x18x32xbf16, #tpu.memory_space<vmem>>, %arg4: memref<3x96x128xbf16, #tpu.memory_space<vmem>>, %arg5: memref<3x96x128xbf16, #tpu.memory_space<vmem>>, %arg6: memref<1x128xf32, #tpu.memory_space<vmem>>, %arg7: memref<1x256x128xbf16, #tpu.memory_space<vmem>>, %arg8: memref<256x128xf32, #tpu.memory_space<vmem>>) attributes {dimension_semantics = [#tpu.dimension_semantics<parallel>, #tpu.dimension_semantics<parallel>], iteration_bounds = array<i64: 2, 1>, scalar_prefetch = 0 : i64, scratch_operands = 1 : i64, tpu.core_type = #tpu.core_type<tc>, window_params = [{transform_indices = @transform_0, window_bounds = array<i64: 1, 18, 18, 32>}, {transform_indices = @transform_1, window_bounds = array<i64: 1, 18, 18, 32>}, {transform_indices = @transform_2, window_bounds = array<i64: 3, 96, 128>}, {transform_indices = @transform_3, window_bounds = array<i64: 3, 96, 128>}, {transform_indices = @transform_4, window_bounds = array<i64: 1, 128>}, {transform_indices = @transform_5, window_bounds = array<i64: 1, 256, 128>}]} {
    %cst = arith.constant 0.000000e+00 : f32
    %0 = vector.broadcast %cst : f32 to vector<256x128xf32>
    %c0 = arith.constant 0 : index
    %c0_0 = arith.constant 0 : index
    %1 = vector.load %arg8[%c0, %c0_0] : memref<256x128xf32, #tpu.memory_space<vmem>>, vector<256x128xf32>
    tpu.vector_store %arg8[%c0, %c0_0], %0 {strides = array<i32>} : memref<256x128xf32, #tpu.memory_space<vmem>>, vector<256x128xf32>,
    %c0_1 = arith.constant 0 : index
    %c0_2 = arith.constant 0 : index
    %c0_3 = arith.constant 0 : index
    %c0_4 = arith.constant 0 : index
    %2 = vector.load %arg2[%c0_1, %c0_2, %c0_3, %c0_4] : memref<1x18x18x32xbf16, #tpu.memory_space<vmem>>, vector<1x18x18x32xbf16>
    %3 = vector.shape_cast %2 : vector<1x18x18x32xbf16> to vector<18x18x32xbf16>
    %4 = vector.extract_strided_slice %3 {offsets = [0, 0, 0], sizes = [18, 16, 32], strides = [1, 1, 1]} : vector<18x18x32xbf16> to vector<18x16x32xbf16>
    %5 = vector.extract_strided_slice %3 {offsets = [0, 1, 0], sizes = [18, 16, 32], strides = [1, 1, 1]} : vector<18x18x32xbf16> to vector<18x16x32xbf16>
    %6 = vector.extract_strided_slice %3 {offsets = [0, 2, 0], sizes = [18, 16, 32], strides = [1, 1, 1]} : vector<18x18x32xbf16> to vector<18x16x32xbf16>
    %7 = tpu.concatenate %4, %5, %6 in 2 : vector<18x16x32xbf16>, vector<18x16x32xbf16>, vector<18x16x32xbf16> -> vector<18x16x96xbf16>
    %8 = vector.extract_strided_slice %7 {offsets = [0, 0, 0], sizes = [16, 16, 96], strides = [1, 1, 1]} : vector<18x16x96xbf16> to vector<16x16x96xbf16>
    %9 = vector.shape_cast %8 : vector<16x16x96xbf16> to vector<256x96xbf16>
    %c0_5 = arith.constant 0 : index
    %c0_6 = arith.constant 0 : index
    %10 = vector.load %arg8[%c0_5, %c0_6] : memref<256x128xf32, #tpu.memory_space<vmem>>, vector<256x128xf32>
    %c0_7 = arith.constant 0 : index
    %c0_8 = arith.constant 0 : index
    %c0_9 = arith.constant 0 : index
    %11 = vector.load %arg4[%c0_7, %c0_8, %c0_9] : memref<3x96x128xbf16, #tpu.memory_space<vmem>>, vector<1x96x128xbf16>
    %12 = vector.shape_cast %11 : vector<1x96x128xbf16> to vector<96x128xbf16>
    %cst_10 = arith.constant dense<0.000000e+00> : vector<256x128xf32>
    %13 = tpu.matmul %9, %12, %cst_10 {dimension_numbers = #tpu.dot_dimension_numbers<[1], [0], [0], [1], [0, 0, 1, 1], [], []>} : vector<256x96xbf16>, vector<96x128xbf16>, vector<256x128xf32> -> vector<256x128xf32>
    %14 = arith.addf %10, %13 : vector<256x128xf32>
    %c0_11 = arith.constant 0 : index
    %c0_12 = arith.constant 0 : index
    %15 = vector.load %arg8[%c0_11, %c0_12] : memref<256x128xf32, #tpu.memory_space<vmem>>, vector<256x128xf32>
    tpu.vector_store %arg8[%c0_11, %c0_12], %14 {strides = array<i32>} : memref<256x128xf32, #tpu.memory_space<vmem>>, vector<256x128xf32>,
    %16 = vector.extract_strided_slice %7 {offsets = [1, 0, 0], sizes = [16, 16, 96], strides = [1, 1, 1]} : vector<18x16x96xbf16> to vector<16x16x96xbf16>
    %17 = vector.shape_cast %16 : vector<16x16x96xbf16> to vector<256x96xbf16>
    %c0_13 = arith.constant 0 : index
    %c0_14 = arith.constant 0 : index
    %18 = vector.load %arg8[%c0_13, %c0_14] : memref<256x128xf32, #tpu.memory_space<vmem>>, vector<256x128xf32>
    %c1 = arith.constant 1 : index
    %c0_15 = arith.constant 0 : index
    %c0_16 = arith.constant 0 : index
    %19 = vector.load %arg4[%c1, %c0_15, %c0_16] : memref<3x96x128xbf16, #tpu.memory_space<vmem>>, vector<1x96x128xbf16>
    %20 = vector.shape_cast %19 : vector<1x96x128xbf16> to vector<96x128xbf16>
    %cst_17 = arith.constant dense<0.000000e+00> : vector<256x128xf32>
    %21 = tpu.matmul %17, %20, %cst_17 {dimension_numbers = #tpu.dot_dimension_numbers<[1], [0], [0], [1], [0, 0, 1, 1], [], []>} : vector<256x96xbf16>, vector<96x128xbf16>, vector<256x128xf32> -> vector<256x128xf32>
    %22 = arith.addf %18, %21 : vector<256x128xf32>
    %c0_18 = arith.constant 0 : index
    %c0_19 = arith.constant 0 : index
    %23 = vector.load %arg8[%c0_18, %c0_19] : memref<256x128xf32, #tpu.memory_space<vmem>>, vector<256x128xf32>
    tpu.vector_store %arg8[%c0_18, %c0_19], %22 {strides = array<i32>} : memref<256x128xf32, #tpu.memory_space<vmem>>, vector<256x128xf32>,
    %24 = vector.extract_strided_slice %7 {offsets = [2, 0, 0], sizes = [16, 16, 96], strides = [1, 1, 1]} : vector<18x16x96xbf16> to vector<16x16x96xbf16>
    %25 = vector.shape_cast %24 : vector<16x16x96xbf16> to vector<256x96xbf16>
    %c0_20 = arith.constant 0 : index
    %c0_21 = arith.constant 0 : index
    %26 = vector.load %arg8[%c0_20, %c0_21] : memref<256x128xf32, #tpu.memory_space<vmem>>, vector<256x128xf32>
    %c2 = arith.constant 2 : index
    %c0_22 = arith.constant 0 : index
    %c0_23 = arith.constant 0 : index
    %27 = vector.load %arg4[%c2, %c0_22, %c0_23] : memref<3x96x128xbf16, #tpu.memory_space<vmem>>, vector<1x96x128xbf16>
    %28 = vector.shape_cast %27 : vector<1x96x128xbf16> to vector<96x128xbf16>
    %cst_24 = arith.constant dense<0.000000e+00> : vector<256x128xf32>
    %29 = tpu.matmul %25, %28, %cst_24 {dimension_numbers = #tpu.dot_dimension_numbers<[1], [0], [0], [1], [0, 0, 1, 1], [], []>} : vector<256x96xbf16>, vector<96x128xbf16>, vector<256x128xf32> -> vector<256x128xf32>
    %30 = arith.addf %26, %29 : vector<256x128xf32>
    %c0_25 = arith.constant 0 : index
    %c0_26 = arith.constant 0 : index
    %31 = vector.load %arg8[%c0_25, %c0_26] : memref<256x128xf32, #tpu.memory_space<vmem>>, vector<256x128xf32>
    tpu.vector_store %arg8[%c0_25, %c0_26], %30 {strides = array<i32>} : memref<256x128xf32, #tpu.memory_space<vmem>>, vector<256x128xf32>,
    %c0_27 = arith.constant 0 : index
    %c0_28 = arith.constant 0 : index
    %c0_29 = arith.constant 0 : index
    %c0_30 = arith.constant 0 : index
    %32 = vector.load %arg3[%c0_27, %c0_28, %c0_29, %c0_30] : memref<1x18x18x32xbf16, #tpu.memory_space<vmem>>, vector<1x18x18x32xbf16>
    %33 = vector.shape_cast %32 : vector<1x18x18x32xbf16> to vector<18x18x32xbf16>
    %34 = vector.extract_strided_slice %33 {offsets = [0, 0, 0], sizes = [18, 16, 32], strides = [1, 1, 1]} : vector<18x18x32xbf16> to vector<18x16x32xbf16>
    %35 = vector.extract_strided_slice %33 {offsets = [0, 1, 0], sizes = [18, 16, 32], strides = [1, 1, 1]} : vector<18x18x32xbf16> to vector<18x16x32xbf16>
    %36 = vector.extract_strided_slice %33 {offsets = [0, 2, 0], sizes = [18, 16, 32], strides = [1, 1, 1]} : vector<18x18x32xbf16> to vector<18x16x32xbf16>
    %37 = tpu.concatenate %34, %35, %36 in 2 : vector<18x16x32xbf16>, vector<18x16x32xbf16>, vector<18x16x32xbf16> -> vector<18x16x96xbf16>
    %38 = vector.extract_strided_slice %37 {offsets = [0, 0, 0], sizes = [16, 16, 96], strides = [1, 1, 1]} : vector<18x16x96xbf16> to vector<16x16x96xbf16>
    %39 = vector.shape_cast %38 : vector<16x16x96xbf16> to vector<256x96xbf16>
    %c0_31 = arith.constant 0 : index
    %c0_32 = arith.constant 0 : index
    %40 = vector.load %arg8[%c0_31, %c0_32] : memref<256x128xf32, #tpu.memory_space<vmem>>, vector<256x128xf32>
    %c0_33 = arith.constant 0 : index
    %c0_34 = arith.constant 0 : index
    %c0_35 = arith.constant 0 : index
    %41 = vector.load %arg5[%c0_33, %c0_34, %c0_35] : memref<3x96x128xbf16, #tpu.memory_space<vmem>>, vector<1x96x128xbf16>
    %42 = vector.shape_cast %41 : vector<1x96x128xbf16> to vector<96x128xbf16>
    %cst_36 = arith.constant dense<0.000000e+00> : vector<256x128xf32>
    %43 = tpu.matmul %39, %42, %cst_36 {dimension_numbers = #tpu.dot_dimension_numbers<[1], [0], [0], [1], [0, 0, 1, 1], [], []>} : vector<256x96xbf16>, vector<96x128xbf16>, vector<256x128xf32> -> vector<256x128xf32>
    %44 = arith.addf %40, %43 : vector<256x128xf32>
    %c0_37 = arith.constant 0 : index
    %c0_38 = arith.constant 0 : index
    %45 = vector.load %arg8[%c0_37, %c0_38] : memref<256x128xf32, #tpu.memory_space<vmem>>, vector<256x128xf32>
    tpu.vector_store %arg8[%c0_37, %c0_38], %44 {strides = array<i32>} : memref<256x128xf32, #tpu.memory_space<vmem>>, vector<256x128xf32>,
    %46 = vector.extract_strided_slice %37 {offsets = [1, 0, 0], sizes = [16, 16, 96], strides = [1, 1, 1]} : vector<18x16x96xbf16> to vector<16x16x96xbf16>
    %47 = vector.shape_cast %46 : vector<16x16x96xbf16> to vector<256x96xbf16>
    %c0_39 = arith.constant 0 : index
    %c0_40 = arith.constant 0 : index
    %48 = vector.load %arg8[%c0_39, %c0_40] : memref<256x128xf32, #tpu.memory_space<vmem>>, vector<256x128xf32>
    %c1_41 = arith.constant 1 : index
    %c0_42 = arith.constant 0 : index
    %c0_43 = arith.constant 0 : index
    %49 = vector.load %arg5[%c1_41, %c0_42, %c0_43] : memref<3x96x128xbf16, #tpu.memory_space<vmem>>, vector<1x96x128xbf16>
    %50 = vector.shape_cast %49 : vector<1x96x128xbf16> to vector<96x128xbf16>
    %cst_44 = arith.constant dense<0.000000e+00> : vector<256x128xf32>
    %51 = tpu.matmul %47, %50, %cst_44 {dimension_numbers = #tpu.dot_dimension_numbers<[1], [0], [0], [1], [0, 0, 1, 1], [], []>} : vector<256x96xbf16>, vector<96x128xbf16>, vector<256x128xf32> -> vector<256x128xf32>
    %52 = arith.addf %48, %51 : vector<256x128xf32>
    %c0_45 = arith.constant 0 : index
    %c0_46 = arith.constant 0 : index
    %53 = vector.load %arg8[%c0_45, %c0_46] : memref<256x128xf32, #tpu.memory_space<vmem>>, vector<256x128xf32>
    tpu.vector_store %arg8[%c0_45, %c0_46], %52 {strides = array<i32>} : memref<256x128xf32, #tpu.memory_space<vmem>>, vector<256x128xf32>,
    %54 = vector.extract_strided_slice %37 {offsets = [2, 0, 0], sizes = [16, 16, 96], strides = [1, 1, 1]} : vector<18x16x96xbf16> to vector<16x16x96xbf16>
    %55 = vector.shape_cast %54 : vector<16x16x96xbf16> to vector<256x96xbf16>
    %c0_47 = arith.constant 0 : index
    %c0_48 = arith.constant 0 : index
    %56 = vector.load %arg8[%c0_47, %c0_48] : memref<256x128xf32, #tpu.memory_space<vmem>>, vector<256x128xf32>
    %c2_49 = arith.constant 2 : index
    %c0_50 = arith.constant 0 : index
    %c0_51 = arith.constant 0 : index
    %57 = vector.load %arg5[%c2_49, %c0_50, %c0_51] : memref<3x96x128xbf16, #tpu.memory_space<vmem>>, vector<1x96x128xbf16>
    %58 = vector.shape_cast %57 : vector<1x96x128xbf16> to vector<96x128xbf16>
    %cst_52 = arith.constant dense<0.000000e+00> : vector<256x128xf32>
    %59 = tpu.matmul %55, %58, %cst_52 {dimension_numbers = #tpu.dot_dimension_numbers<[1], [0], [0], [1], [0, 0, 1, 1], [], []>} : vector<256x96xbf16>, vector<96x128xbf16>, vector<256x128xf32> -> vector<256x128xf32>
    %60 = arith.addf %56, %59 : vector<256x128xf32>
    %c0_53 = arith.constant 0 : index
    %c0_54 = arith.constant 0 : index
    %61 = vector.load %arg8[%c0_53, %c0_54] : memref<256x128xf32, #tpu.memory_space<vmem>>, vector<256x128xf32>
    tpu.vector_store %arg8[%c0_53, %c0_54], %60 {strides = array<i32>} : memref<256x128xf32, #tpu.memory_space<vmem>>, vector<256x128xf32>,
    %c0_55 = arith.constant 0 : index
    %c0_56 = arith.constant 0 : index
    %62 = vector.load %arg8[%c0_55, %c0_56] : memref<256x128xf32, #tpu.memory_space<vmem>>, vector<256x128xf32>
    %c0_57 = arith.constant 0 : index
    %c0_58 = arith.constant 0 : index
    %63 = vector.load %arg6[%c0_57, %c0_58] : memref<1x128xf32, #tpu.memory_space<vmem>>, vector<1x128xf32>
    %64 = vector.broadcast %63 : vector<1x128xf32> to vector<256x128xf32>
    %65 = arith.addf %62, %64 : vector<256x128xf32>
    %cst_59 = arith.constant 0.000000e+00 : f32
    %66 = vector.broadcast %cst_59 : f32 to vector<256x128xf32>
    %67 = arith.maximumf %65, %66 : vector<256x128xf32>
    %68 = arith.truncf %67 : vector<256x128xf32> to vector<256x128xbf16>
    %c0_60 = arith.constant 0 : index
    %c0_61 = arith.constant 0 : index
    %c0_62 = arith.constant 0 : index
    %69 = vector.load %arg7[%c0_60, %c0_61, %c0_62] : memref<1x256x128xbf16, #tpu.memory_space<vmem>>, vector<1x256x128xbf16>
    %70 = vector.shape_cast %69 : vector<1x256x128xbf16> to vector<256x128xbf16>
    %71 = vector.shape_cast %68 : vector<256x128xbf16> to vector<1x256x128xbf16>
    tpu.vector_store %arg7[%c0_60, %c0_61, %c0_62], %71 {strides = array<i32>} : memref<1x256x128xbf16, #tpu.memory_space<vmem>>, vector<1x256x128xbf16>,
    return
  }
  func.func @transform_0(%arg0: i32, %arg1: i32) -> (i32, i32, i32, i32) {
    %c0_i32 = arith.constant 0 : i32
    %c0_i32_0 = arith.constant 0 : i32
    %c0_i32_1 = arith.constant 0 : i32
    %c0_i32_2 = arith.constant 0 : i32
    return %arg0, %c0_i32, %c0_i32_0, %c0_i32_1 : i32, i32, i32, i32
  }
  func.func @transform_1(%arg0: i32, %arg1: i32) -> (i32, i32, i32, i32) {
    %c0_i32 = arith.constant 0 : i32
    %c0_i32_0 = arith.constant 0 : i32
    %c0_i32_1 = arith.constant 0 : i32
    %c0_i32_2 = arith.constant 0 : i32
    return %arg0, %c0_i32, %c0_i32_0, %c0_i32_1 : i32, i32, i32, i32
  }
  func.func @transform_2(%arg0: i32, %arg1: i32) -> (i32, i32, i32) {
    %c0_i32 = arith.constant 0 : i32
    %c0_i32_0 = arith.constant 0 : i32
    %c0_i32_1 = arith.constant 0 : i32
    return %c0_i32, %c0_i32_0, %arg1 : i32, i32, i32
  }
  func.func @transform_3(%arg0: i32, %arg1: i32) -> (i32, i32, i32) {
    %c0_i32 = arith.constant 0 : i32
    %c0_i32_0 = arith.constant 0 : i32
    %c0_i32_1 = arith.constant 0 : i32
    return %c0_i32, %c0_i32_0, %arg1 : i32, i32, i32
  }
  func.func @transform_4(%arg0: i32, %arg1: i32) -> (i32, i32) {
    %c0_i32 = arith.constant 0 : i32
    %c0_i32_0 = arith.constant 0 : i32
    return %c0_i32, %arg1 : i32, i32
  }
  func.func @transform_5(%arg0: i32, %arg1: i32) -> (i32, i32, i32) {
    %c0_i32 = arith.constant 0 : i32
    %c0_i32_0 = arith.constant 0 : i32
    return %arg0, %c0_i32, %arg1 : i32, i32, i32
  }
}

module attributes {stable_mosaic.version = 11 : i64} {
  func.func @conv3x3_kernel(%arg0: i32, %arg1: i32, %arg2: memref<1x18x18x128xbf16, #tpu.memory_space<vmem>>, %arg3: memref<3x384x128xbf16, #tpu.memory_space<vmem>>, %arg4: memref<1x128xf32, #tpu.memory_space<vmem>>, %arg5: memref<1x256x128xbf16, #tpu.memory_space<vmem>>, %arg6: memref<256x128xf32, #tpu.memory_space<vmem>>) attributes {dimension_semantics = [#tpu.dimension_semantics<parallel>, #tpu.dimension_semantics<parallel>], iteration_bounds = array<i64: 2, 1>, scalar_prefetch = 0 : i64, scratch_operands = 1 : i64, tpu.core_type = #tpu.core_type<tc>, window_params = [{transform_indices = @transform_0, window_bounds = array<i64: 1, 18, 18, 128>}, {transform_indices = @transform_1, window_bounds = array<i64: 3, 384, 128>}, {transform_indices = @transform_2, window_bounds = array<i64: 1, 128>}, {transform_indices = @transform_3, window_bounds = array<i64: 1, 256, 128>}]} {
    %cst = arith.constant 0.000000e+00 : f32
    %0 = vector.broadcast %cst : f32 to vector<256x128xf32>
    %c0 = arith.constant 0 : index
    %c0_0 = arith.constant 0 : index
    %1 = vector.load %arg6[%c0, %c0_0] : memref<256x128xf32, #tpu.memory_space<vmem>>, vector<256x128xf32>
    tpu.vector_store %arg6[%c0, %c0_0], %0 {strides = array<i32>} : memref<256x128xf32, #tpu.memory_space<vmem>>, vector<256x128xf32>,
    %c0_1 = arith.constant 0 : index
    %c0_2 = arith.constant 0 : index
    %c0_3 = arith.constant 0 : index
    %c0_4 = arith.constant 0 : index
    %2 = vector.load %arg2[%c0_1, %c0_2, %c0_3, %c0_4] : memref<1x18x18x128xbf16, #tpu.memory_space<vmem>>, vector<1x18x18x128xbf16>
    %3 = vector.shape_cast %2 : vector<1x18x18x128xbf16> to vector<18x18x128xbf16>
    %4 = vector.extract_strided_slice %3 {offsets = [0, 0, 0], sizes = [18, 16, 128], strides = [1, 1, 1]} : vector<18x18x128xbf16> to vector<18x16x128xbf16>
    %5 = vector.extract_strided_slice %3 {offsets = [0, 1, 0], sizes = [18, 16, 128], strides = [1, 1, 1]} : vector<18x18x128xbf16> to vector<18x16x128xbf16>
    %6 = vector.extract_strided_slice %3 {offsets = [0, 2, 0], sizes = [18, 16, 128], strides = [1, 1, 1]} : vector<18x18x128xbf16> to vector<18x16x128xbf16>
    %7 = tpu.concatenate %4, %5, %6 in 2 : vector<18x16x128xbf16>, vector<18x16x128xbf16>, vector<18x16x128xbf16> -> vector<18x16x384xbf16>
    %8 = vector.extract_strided_slice %7 {offsets = [0, 0, 0], sizes = [16, 16, 384], strides = [1, 1, 1]} : vector<18x16x384xbf16> to vector<16x16x384xbf16>
    %9 = vector.shape_cast %8 : vector<16x16x384xbf16> to vector<256x384xbf16>
    %c0_5 = arith.constant 0 : index
    %c0_6 = arith.constant 0 : index
    %10 = vector.load %arg6[%c0_5, %c0_6] : memref<256x128xf32, #tpu.memory_space<vmem>>, vector<256x128xf32>
    %c0_7 = arith.constant 0 : index
    %c0_8 = arith.constant 0 : index
    %c0_9 = arith.constant 0 : index
    %11 = vector.load %arg3[%c0_7, %c0_8, %c0_9] : memref<3x384x128xbf16, #tpu.memory_space<vmem>>, vector<1x384x128xbf16>
    %12 = vector.shape_cast %11 : vector<1x384x128xbf16> to vector<384x128xbf16>
    %cst_10 = arith.constant dense<0.000000e+00> : vector<256x128xf32>
    %13 = tpu.matmul %9, %12, %cst_10 {dimension_numbers = #tpu.dot_dimension_numbers<[1], [0], [0], [1], [0, 0, 1, 1], [], []>} : vector<256x384xbf16>, vector<384x128xbf16>, vector<256x128xf32> -> vector<256x128xf32>
    %14 = arith.addf %10, %13 : vector<256x128xf32>
    %c0_11 = arith.constant 0 : index
    %c0_12 = arith.constant 0 : index
    %15 = vector.load %arg6[%c0_11, %c0_12] : memref<256x128xf32, #tpu.memory_space<vmem>>, vector<256x128xf32>
    tpu.vector_store %arg6[%c0_11, %c0_12], %14 {strides = array<i32>} : memref<256x128xf32, #tpu.memory_space<vmem>>, vector<256x128xf32>,
    %16 = vector.extract_strided_slice %7 {offsets = [1, 0, 0], sizes = [16, 16, 384], strides = [1, 1, 1]} : vector<18x16x384xbf16> to vector<16x16x384xbf16>
    %17 = vector.shape_cast %16 : vector<16x16x384xbf16> to vector<256x384xbf16>
    %c0_13 = arith.constant 0 : index
    %c0_14 = arith.constant 0 : index
    %18 = vector.load %arg6[%c0_13, %c0_14] : memref<256x128xf32, #tpu.memory_space<vmem>>, vector<256x128xf32>
    %c1 = arith.constant 1 : index
    %c0_15 = arith.constant 0 : index
    %c0_16 = arith.constant 0 : index
    %19 = vector.load %arg3[%c1, %c0_15, %c0_16] : memref<3x384x128xbf16, #tpu.memory_space<vmem>>, vector<1x384x128xbf16>
    %20 = vector.shape_cast %19 : vector<1x384x128xbf16> to vector<384x128xbf16>
    %cst_17 = arith.constant dense<0.000000e+00> : vector<256x128xf32>
    %21 = tpu.matmul %17, %20, %cst_17 {dimension_numbers = #tpu.dot_dimension_numbers<[1], [0], [0], [1], [0, 0, 1, 1], [], []>} : vector<256x384xbf16>, vector<384x128xbf16>, vector<256x128xf32> -> vector<256x128xf32>
    %22 = arith.addf %18, %21 : vector<256x128xf32>
    %c0_18 = arith.constant 0 : index
    %c0_19 = arith.constant 0 : index
    %23 = vector.load %arg6[%c0_18, %c0_19] : memref<256x128xf32, #tpu.memory_space<vmem>>, vector<256x128xf32>
    tpu.vector_store %arg6[%c0_18, %c0_19], %22 {strides = array<i32>} : memref<256x128xf32, #tpu.memory_space<vmem>>, vector<256x128xf32>,
    %24 = vector.extract_strided_slice %7 {offsets = [2, 0, 0], sizes = [16, 16, 384], strides = [1, 1, 1]} : vector<18x16x384xbf16> to vector<16x16x384xbf16>
    %25 = vector.shape_cast %24 : vector<16x16x384xbf16> to vector<256x384xbf16>
    %c0_20 = arith.constant 0 : index
    %c0_21 = arith.constant 0 : index
    %26 = vector.load %arg6[%c0_20, %c0_21] : memref<256x128xf32, #tpu.memory_space<vmem>>, vector<256x128xf32>
    %c2 = arith.constant 2 : index
    %c0_22 = arith.constant 0 : index
    %c0_23 = arith.constant 0 : index
    %27 = vector.load %arg3[%c2, %c0_22, %c0_23] : memref<3x384x128xbf16, #tpu.memory_space<vmem>>, vector<1x384x128xbf16>
    %28 = vector.shape_cast %27 : vector<1x384x128xbf16> to vector<384x128xbf16>
    %cst_24 = arith.constant dense<0.000000e+00> : vector<256x128xf32>
    %29 = tpu.matmul %25, %28, %cst_24 {dimension_numbers = #tpu.dot_dimension_numbers<[1], [0], [0], [1], [0, 0, 1, 1], [], []>} : vector<256x384xbf16>, vector<384x128xbf16>, vector<256x128xf32> -> vector<256x128xf32>
    %30 = arith.addf %26, %29 : vector<256x128xf32>
    %c0_25 = arith.constant 0 : index
    %c0_26 = arith.constant 0 : index
    %31 = vector.load %arg6[%c0_25, %c0_26] : memref<256x128xf32, #tpu.memory_space<vmem>>, vector<256x128xf32>
    tpu.vector_store %arg6[%c0_25, %c0_26], %30 {strides = array<i32>} : memref<256x128xf32, #tpu.memory_space<vmem>>, vector<256x128xf32>,
    %c0_27 = arith.constant 0 : index
    %c0_28 = arith.constant 0 : index
    %32 = vector.load %arg6[%c0_27, %c0_28] : memref<256x128xf32, #tpu.memory_space<vmem>>, vector<256x128xf32>
    %c0_29 = arith.constant 0 : index
    %c0_30 = arith.constant 0 : index
    %33 = vector.load %arg4[%c0_29, %c0_30] : memref<1x128xf32, #tpu.memory_space<vmem>>, vector<1x128xf32>
    %34 = vector.broadcast %33 : vector<1x128xf32> to vector<256x128xf32>
    %35 = arith.addf %32, %34 : vector<256x128xf32>
    %cst_31 = arith.constant 0.000000e+00 : f32
    %36 = vector.broadcast %cst_31 : f32 to vector<256x128xf32>
    %37 = arith.maximumf %35, %36 : vector<256x128xf32>
    %38 = arith.truncf %37 : vector<256x128xf32> to vector<256x128xbf16>
    %c0_32 = arith.constant 0 : index
    %c0_33 = arith.constant 0 : index
    %c0_34 = arith.constant 0 : index
    %39 = vector.load %arg5[%c0_32, %c0_33, %c0_34] : memref<1x256x128xbf16, #tpu.memory_space<vmem>>, vector<1x256x128xbf16>
    %40 = vector.shape_cast %39 : vector<1x256x128xbf16> to vector<256x128xbf16>
    %41 = vector.shape_cast %38 : vector<256x128xbf16> to vector<1x256x128xbf16>
    tpu.vector_store %arg5[%c0_32, %c0_33, %c0_34], %41 {strides = array<i32>} : memref<1x256x128xbf16, #tpu.memory_space<vmem>>, vector<1x256x128xbf16>,
    return
  }
  func.func @transform_0(%arg0: i32, %arg1: i32) -> (i32, i32, i32, i32) {
    %c0_i32 = arith.constant 0 : i32
    %c0_i32_0 = arith.constant 0 : i32
    %c0_i32_1 = arith.constant 0 : i32
    %c0_i32_2 = arith.constant 0 : i32
    return %arg0, %c0_i32, %c0_i32_0, %c0_i32_1 : i32, i32, i32, i32
  }
  func.func @transform_1(%arg0: i32, %arg1: i32) -> (i32, i32, i32) {
    %c0_i32 = arith.constant 0 : i32
    %c0_i32_0 = arith.constant 0 : i32
    %c0_i32_1 = arith.constant 0 : i32
    return %c0_i32, %c0_i32_0, %arg1 : i32, i32, i32
  }
  func.func @transform_2(%arg0: i32, %arg1: i32) -> (i32, i32) {
    %c0_i32 = arith.constant 0 : i32
    %c0_i32_0 = arith.constant 0 : i32
    return %c0_i32, %arg1 : i32, i32
  }
  func.func @transform_3(%arg0: i32, %arg1: i32) -> (i32, i32, i32) {
    %c0_i32 = arith.constant 0 : i32
    %c0_i32_0 = arith.constant 0 : i32
    return %arg0, %c0_i32, %arg1 : i32, i32, i32
  }
}

</mosaic_0001>

<llo_original>
// kernel: decoder_forward.3
$region0: #{decoder_forward.3}
  #allocation0 [shape = 'u32[]', space=smem, size = 0x4, offset = 0x4, fixed_abs, tag = 'smem constant byte address 0x4 - core index']
  #allocation1 [shape = 'u32[144,128]{1,0:T(1,128)}', space=vmem, size = 0x12000, scoped, tag = 'internal scratch']
  #allocation2 [shape = 'f32[64,128]{1,0:T(8,128)}', space=vmem, size = 0x8000, scoped, tag = 'scratch operand']
  %s0 = inlined_call_operand.vmem [shape: bf16[128,128], index: 0, kind: input, shape index: {}]
  %s1 = inlined_call_operand.vmem [shape: bf16[128,128], index: 1, kind: input, shape index: {}]
  %s2 = inlined_call_operand.vmem [shape: f32[1,128], index: 2, kind: input, shape index: {}]
  %s3 = inlined_call_operand.vmem [shape: bf16[128,128], index: 3, kind: output, shape index: {}]
  %s4 = sld [smem:[#allocation0]]
  $region53: #{decoder_forward.3} parent=0
    _
  %s6 = ssub.s32 1, %s4
  %s7 = scalar_select 0, %s6, %s4
  loop: start=0, step=1, limit=4
  $region2: #{decoder_forward.3} parent=0 // loop_pre_header
    _
  $region3: #{decoder_forward.3} parent=0 // loop_header
    %s9 = sphi 0, %s13
    %p10 = scmp.ge.s32.totalorder %s9, 4
    %s16 = sphi 0, %s35
    %s17 = sphi 0, %s31
    %s18 = sphi 0, %s27
    %s19 = sphi 0, %s16
    %s20 = sphi 0, %s17
    %s21 = sphi 0, %s18
    %s22 = sphi 0, %s19
    %s23 = sphi 0, %s20
    %s24 = sphi 0, %s21
    %s40 = sphi 0, %s42
    %s43 = sphi 0, %s40
    %s44 = sphi 0, %s43
    %s60 = sphi 0, %s44
    %s68 = sphi 0, %s70
    %s71 = sphi 0, %s68
    %s72 = sphi 0, %s71
    %s88 = sphi 0, %s72
    %s94 = sphi 0, %s96
    %s97 = sphi 0, %s94
    %s98 = sphi 0, %s97
    %s114 = sphi 0, %s98
    %s122 = sphi 0, %s124
    %s125 = sphi 0, %s122
    %s126 = sphi 0, %s125
    %s142 = sphi 0, %s126
  $region4: #{decoder_forward.3} parent=0 // loop_header_branch
    %12 = sbr.rel (%p10) target = $region8
  $region5: #{decoder_forward.3} parent=0 // loop_body
    %s14 = ssub.s32 %s9, 1
    %s15 = ssub.s32 %s9, 2
    %s25 = sadd.s32 1, %s18
    %p26 = scmp.ge.s32.totalorder %s25, 1
    %s27 = scalar_select %p26, 0, %s25
    %s28 = sadd.s32 1, %s17
    %s29 = scalar_select %p26, %s28, %s17
    %p30 = scmp.ge.s32.totalorder %s29, 1
    %s31 = scalar_select %p30, 0, %s29
    %s32 = sadd.s32 1, %s16
    %s33 = scalar_select %p30, %s32, %s16
    %p34 = scmp.ge.s32.totalorder %s33, 2
    %s35 = scalar_select %p34, 0, %s33
    %s36 = ssub.s32 %s16, %s35
    %s37 = ssub.s32 %s18, %s27
    %s38 = sor.u32 %s36, %s37
    %p39 = scmp.eq.s32.totalorder %s38, 0
    %s41 = sadd.s32 %s40, 1
    %s42 = scalar_select %p39, %s40, %s41
    %p45 = pneg %p39
    %p46 = scmp.eq.s32.totalorder %s9, 1
    %p47 = por %p45, %p46
    %p48 = scmp.ne.s32.totalorder %s40, %s43
    %p49 = scmp.eq.s32.totalorder %s9, 0
    %p50 = por %p48, %p49
    %p51 = scmp.ne.s32.totalorder %s40, %s43
    %p52 = scmp.eq.s32.totalorder %s14, 1
    %p53 = por %p51, %p52
    %p54 = scmp.ne.s32.totalorder %s43, %s44
    %p55 = scmp.eq.s32.totalorder %s14, 0
    %p56 = por %p54, %p55
    %p57 = scmp.ne.s32.totalorder %s43, %s44
    %p58 = scmp.eq.s32.totalorder %s15, 1
    %p59 = por %p57, %p58
    %p61 = scmp.ne.s32.totalorder %s44, %s60
    %p62 = scmp.eq.s32.totalorder %s15, 0
    %p63 = por %p61, %p62
    %s64 = ssub.s32 %s18, %s27
    %s65 = ssub.s32 %s17, %s31
    %s66 = sor.u32 %s64, %s65
    %p67 = scmp.eq.s32.totalorder %s66, 0
    %s69 = sadd.s32 %s68, 1
    %s70 = scalar_select %p67, %s68, %s69
    %p73 = pneg %p67
    %p74 = scmp.eq.s32.totalorder %s9, 1
    %p75 = por %p73, %p74
    %p76 = scmp.ne.s32.totalorder %s68, %s71
    %p77 = scmp.eq.s32.totalorder %s9, 0
    %p78 = por %p76, %p77
    %p79 = scmp.ne.s32.totalorder %s68, %s71
    %p80 = scmp.eq.s32.totalorder %s14, 1
    %p81 = por %p79, %p80
    %p82 = scmp.ne.s32.totalorder %s71, %s72
    %p83 = scmp.eq.s32.totalorder %s14, 0
    %p84 = por %p82, %p83
    %p85 = scmp.ne.s32.totalorder %s71, %s72
    %p86 = scmp.eq.s32.totalorder %s15, 1
    %p87 = por %p85, %p86
    %p89 = scmp.ne.s32.totalorder %s72, %s88
    %p90 = scmp.eq.s32.totalorder %s15, 0
    %p91 = por %p89, %p90
    %s92 = ssub.s32 %s17, %s31
    %p93 = scmp.eq.s32.totalorder %s92, 0
    %s95 = sadd.s32 %s94, 1
    %s96 = scalar_select %p93, %s94, %s95
    %p99 = pneg %p93
    %p100 = scmp.eq.s32.totalorder %s9, 1
    %p101 = por %p99, %p100
    %p102 = scmp.ne.s32.totalorder %s94, %s97
    %p103 = scmp.eq.s32.totalorder %s9, 0
    %p104 = por %p102, %p103
    %p105 = scmp.ne.s32.totalorder %s94, %s97
    %p106 = scmp.eq.s32.totalorder %s14, 1
    %p107 = por %p105, %p106
    %p108 = scmp.ne.s32.totalorder %s97, %s98
    %p109 = scmp.eq.s32.totalorder %s14, 0
    %p110 = por %p108, %p109
    %p111 = scmp.ne.s32.totalorder %s97, %s98
    %p112 = scmp.eq.s32.totalorder %s15, 1
    %p113 = por %p111, %p112
    %p115 = scmp.ne.s32.totalorder %s98, %s114
    %p116 = scmp.eq.s32.totalorder %s15, 0
    %p117 = por %p115, %p116
    %s118 = ssub.s32 %s16, %s35
    %s119 = ssub.s32 %s17, %s31
    %s120 = sor.u32 %s118, %s119
    %p121 = scmp.eq.s32.totalorder %s120, 0
    %s123 = sadd.s32 %s122, 1
    %s124 = scalar_select %p121, %s122, %s123
    %p127 = pneg %p121
    %p128 = scmp.eq.s32.totalorder %s9, 1
    %p129 = por %p127, %p128
    %p130 = scmp.ne.s32.totalorder %s122, %s125
    %p131 = scmp.eq.s32.totalorder %s9, 0
    %p132 = por %p130, %p131
    %p133 = scmp.ne.s32.totalorder %s122, %s125
    %p134 = scmp.eq.s32.totalorder %s14, 1
    %p135 = por %p133, %p134
    %p136 = scmp.ne.s32.totalorder %s125, %s126
    %p137 = scmp.eq.s32.totalorder %s14, 0
    %p138 = por %p136, %p137
    %p139 = scmp.ne.s32.totalorder %s125, %s126
    %p140 = scmp.eq.s32.totalorder %s15, 1
    %p141 = por %p139, %p140
    %p143 = scmp.ne.s32.totalorder %s126, %s142
    %p144 = scmp.eq.s32.totalorder %s15, 0
    %p145 = por %p143, %p144
    %p146 = scmp.le.s32.totalorder 1, %s9
    %p147 = scmp.lt.s32.totalorder %s9, 3
    %p148 = pnand %p146, %p147
    %p149 = pneg %p148
    // Predicated region
    $region9: #{decoder_forward.3} parent=5 // pred_check
      _
    $region10: #{decoder_forward.3} parent=5 // pred_check_branch
      %151 = sbr.rel (%p148) target = $region12
    $region11: #{decoder_forward.3} parent=5 // pred_region
      %s152 = ssub.s32 %s9, 1
      // Predicated region
      $region13: #{decoder_forward.3} parent=11 // pred_check
        %p153 = pneg %p84
      $region14: #{decoder_forward.3} parent=11 // pred_check_branch
        %155 = sbr.rel (%p153) target = $region16
      $region15: #{decoder_forward.3} parent=11 // pred_region
        %s156 = smul.u32 16, %s21
        %p157 = scmp.lt.s32.totalorder %s156, 15
        %s158 = scalar_select %p157, %s156, 15
        %p159 = scmp.lt.s32.totalorder %s20, 0
        %s160 = scalar_select %p159, %s20, 0
        %s161 = sadd.s32 %s160, %s158
        %s162 = smul.addr %s161, 4
        %s163 = scalar_lea.vmem %s1, %s162
        %s164 = smul.u32 16, %s21
      $region16: #{decoder_forward.3} parent=11 // pred_fallthru
        _
      // Predicated region
      $region17: #{decoder_forward.3} parent=11 // pred_check
        %p165 = pneg %p110
      $region18: #{decoder_forward.3} parent=11 // pred_check_branch
        %167 = sbr.rel (%p165) target = $region20
      $region19: #{decoder_forward.3} parent=11 // pred_region
        %p168 = scmp.lt.s32.totalorder %s20, 0
        %s169 = scalar_select %p168, %s20, 0
        %s170 = scalar_lea.vmem %s2, %s169
      $region20: #{decoder_forward.3} parent=11 // pred_fallthru
        _
    $region12: #{decoder_forward.3} parent=5 // pred_fallthru
      _
    %p171 = scmp.lt.s32.totalorder %s9, 2
    // Predicated region
    $region21: #{decoder_forward.3} parent=5 // pred_check
      %p172 = pneg %p171
    $region22: #{decoder_forward.3} parent=5 // pred_check_branch
      %174 = sbr.rel (%p172) target = $region24
    $region23: #{decoder_forward.3} parent=5 // pred_region
      // Predicated region
      $region25: #{decoder_forward.3} parent=23 // pred_check
        %p175 = pneg %p50
      $region26: #{decoder_forward.3} parent=23 // pred_check_branch
        %177 = sbr.rel (%p175) target = $region28
      $region27: #{decoder_forward.3} parent=23 // pred_region
        %s178 = smul.u32 8, %s16
        %p179 = scmp.lt.s32.totalorder %s178, 15
        %s180 = scalar_select %p179, %s178, 15
        %p181 = scmp.lt.s32.totalorder %s18, 0
        %s182 = scalar_select %p181, %s18, 0
        %s183 = sadd.s32 %s182, %s180
        %s184 = smul.addr %s183, 4
        %s185 = scalar_lea.vmem %s0, %s184
        %s186 = smul.u32 8, %s16
      $region28: #{decoder_forward.3} parent=23 // pred_fallthru
        _
    $region24: #{decoder_forward.3} parent=5 // pred_fallthru
      _
    %p187 = scmp.le.s32.totalorder 1, %s9
    %p188 = scmp.lt.s32.totalorder %s9, 3
    %p189 = pnand %p187, %p188
    %p190 = pneg %p189
    // Predicated region
    $region29: #{decoder_forward.3} parent=5 // pred_check
      _
    $region30: #{decoder_forward.3} parent=5 // pred_check_branch
      %192 = sbr.rel (%p189) target = $region32
    $region31: #{decoder_forward.3} parent=5 // pred_region
      %s193 = ssub.s32 %s9, 1
      %s194 = smul.u32 8, %s19
      %p195 = scmp.lt.s32.totalorder %s194, 15
      %s196 = scalar_select %p195, %s194, 15
      %p197 = scmp.lt.s32.totalorder %s21, 0
      %s198 = scalar_select %p197, %s21, 0
      %s199 = sadd.s32 %s198, %s196
      %s200 = smul.addr %s199, 4
      %s201 = scalar_lea.vmem %s0, %s200
      %p202 = pneg %p56
      %p203 = pneg %p53
      %s204 = smul.u32 16, %s21
      %p205 = scmp.lt.s32.totalorder %s204, 15
      %s206 = scalar_select %p205, %s204, 15
      %p207 = scmp.lt.s32.totalorder %s20, 0
      %s208 = scalar_select %p207, %s20, 0
      %s209 = sadd.s32 %s208, %s206
      %s210 = smul.addr %s209, 4
      %s211 = scalar_lea.vmem %s1, %s210
      %p212 = pneg %p84
      %p213 = pneg %p81
      %p214 = scmp.lt.s32.totalorder %s20, 0
      %s215 = scalar_select %p214, %s20, 0
      %s216 = scalar_lea.vmem %s2, %s215
      %p217 = pneg %p110
      %p218 = pneg %p107
      %p219 = pneg %p138
      %p220 = pneg %p135
      %s221 = smul.u32 8, %s19
      %p222 = scmp.lt.s32.totalorder %s221, 15
      %s223 = scalar_select %p222, %s221, 15
      %p224 = scmp.lt.s32.totalorder %s20, 0
      %s225 = scalar_select %p224, %s20, 0
      %s226 = sadd.s32 %s225, %s223
      %s227 = smul.addr %s226, 4
      %s228 = scalar_lea.vmem %s3, %s227
      %s229 = smul.u32 8, %s19
      %p230 = scmp.lt.s32.totalorder %s229, 15
      %s231 = scalar_select %p230, %s229, 15
      %p232 = scmp.lt.s32.totalorder %s21, 0
      %s233 = scalar_select %p232, %s21, 0
      %s234 = sadd.s32 %s233, %s231
      %s235 = smul.addr %s234, 4
      %s236 = scalar_lea.vmem %s0, %s235
      %s237 = smul.u32 8, %s19
      %s238 = smul.u32 16, %s21
      %p239 = scmp.lt.s32.totalorder %s238, 15
      %s240 = scalar_select %p239, %s238, 15
      %p241 = scmp.lt.s32.totalorder %s20, 0
      %s242 = scalar_select %p241, %s20, 0
      %s243 = sadd.s32 %s242, %s240
      %s244 = smul.addr %s243, 4
      %s245 = scalar_lea.vmem %s1, %s244
      %s246 = smul.u32 16, %s21
      %p247 = scmp.lt.s32.totalorder %s20, 0
      %s248 = scalar_select %p247, %s20, 0
      %s249 = scalar_lea.vmem %s2, %s248
      %s250 = smul.u32 8, %s19
      %p251 = scmp.lt.s32.totalorder %s250, 15
      %s252 = scalar_select %p251, %s250, 15
      %p253 = scmp.lt.s32.totalorder %s20, 0
      %s254 = scalar_select %p253, %s20, 0
      %s255 = sadd.s32 %s254, %s252
      %s256 = smul.addr %s255, 4
      %s257 = scalar_lea.vmem %s3, %s256
      %s258 = smul.u32 8, %s19
      %p260 = scmp.eq.s32.totalorder %s21, 0
      // Predicated region
      $region33: #{decoder_forward.3} parent=31 // pred_check
        %p261 = pneg %p260
      $region34: #{decoder_forward.3} parent=31 // pred_check_branch
        %263 = sbr.rel (%p261) target = $region36
      $region35: #{decoder_forward.3} parent=31 // pred_region
        %264 = vst [vmem:[#allocation2] sm:$0xff] 0.0
        %265 = vst [vmem:[#allocation2 + $0x8] sm:$0xff] 0.0
        %266 = vst [vmem:[#allocation2 + $0x10] sm:$0xff] 0.0
        %267 = vst [vmem:[#allocation2 + $0x18] sm:$0xff] 0.0
        %268 = vst [vmem:[#allocation2 + $0x20] sm:$0xff] 0.0
        %269 = vst [vmem:[#allocation2 + $0x28] sm:$0xff] 0.0
        %270 = vst [vmem:[#allocation2 + $0x30] sm:$0xff] 0.0
        %271 = vst [vmem:[#allocation2 + $0x38] sm:$0xff] 0.0
      $region36: #{decoder_forward.3} parent=31 // pred_fallthru
        _
      %v272 = vld [vmem:[#allocation2] sm:$0xff]
      %v273 = vld [vmem:[#allocation2 + $0x8] sm:$0xff]
      %v274 = vld [vmem:[#allocation2 + $0x10] sm:$0xff]
      %v275 = vld [vmem:[#allocation2 + $0x18] sm:$0xff]
      %v276 = vld [vmem:[#allocation2 + $0x20] sm:$0xff]
      %v277 = vld [vmem:[#allocation2 + $0x28] sm:$0xff]
      %v278 = vld [vmem:[#allocation2 + $0x30] sm:$0xff]
      %v279 = vld [vmem:[#allocation2 + $0x38] sm:$0xff]
      %v280 = vld [vmem:[%s236] sm:$0xf]
      %v281 = vld [vmem:[%s236 + $0x4] sm:$0xf]
      %v282 = vld [vmem:[%s236 + $0x8] sm:$0xf]
      %v283 = vld [vmem:[%s236 + $0xc] sm:$0xf]
      %v284 = vld [vmem:[%s236 + $0x10] sm:$0xf]
      %v285 = vld [vmem:[%s236 + $0x14] sm:$0xf]
      %v286 = vld [vmem:[%s236 + $0x18] sm:$0xf]
      %v287 = vld [vmem:[%s236 + $0x1c] sm:$0xf]
      %v288 = vld [vmem:[%s245] sm:$0xf]
      %v289 = vld [vmem:[%s245 + $0x4] sm:$0xf]
      %v290 = vld [vmem:[%s245 + $0x8] sm:$0xf]
      %v291 = vld [vmem:[%s245 + $0xc] sm:$0xf]
      %v292 = vld [vmem:[%s245 + $0x10] sm:$0xf]
      %v293 = vld [vmem:[%s245 + $0x14] sm:$0xf]
      %v294 = vld [vmem:[%s245 + $0x18] sm:$0xf]
      %v295 = vld [vmem:[%s245 + $0x1c] sm:$0xf]
      %v296 = vld [vmem:[%s245 + $0x20] sm:$0xf]
      %v297 = vld [vmem:[%s245 + $0x24] sm:$0xf]
      %v298 = vld [vmem:[%s245 + $0x28] sm:$0xf]
      %v299 = vld [vmem:[%s245 + $0x2c] sm:$0xf]
      %v300 = vld [vmem:[%s245 + $0x30] sm:$0xf]
      %v301 = vld [vmem:[%s245 + $0x34] sm:$0xf]
      %v302 = vld [vmem:[%s245 + $0x38] sm:$0xf]
      %v303 = vld [vmem:[%s245 + $0x3c] sm:$0xf]
      %v312 = vunpack.c.l.b16 %v280
      %v313 = vunpack.c.l.b16 %v281
      %v314 = vunpack.c.l.b16 %v282
      %v315 = vunpack.c.l.b16 %v283
      %v316 = vunpack.c.l.b16 %v284
      %v317 = vunpack.c.l.b16 %v285
      %v318 = vunpack.c.l.b16 %v286
      %v319 = vunpack.c.l.b16 %v287
      %v320 = vpack.c.b16 %v313, %v312
      %v321 = vpack.c.b16 %v315, %v314
      %v322 = vpack.c.b16 %v317, %v316
      %v323 = vpack.c.b16 %v319, %v318
      %v344 = vunpack.c.l.b16 %v288
      %v345 = vunpack.c.l.b16 %v289
      %v346 = vunpack.c.l.b16 %v290
      %v347 = vunpack.c.l.b16 %v291
      %v348 = vunpack.c.l.b16 %v292
      %v349 = vunpack.c.l.b16 %v293
      %v350 = vunpack.c.l.b16 %v294
      %v351 = vunpack.c.l.b16 %v295
      %v352 = vunpack.c.l.b16 %v296
      %v353 = vunpack.c.l.b16 %v297
      %v354 = vunpack.c.l.b16 %v298
      %v355 = vunpack.c.l.b16 %v299
      %v356 = vunpack.c.l.b16 %v300
      %v357 = vunpack.c.l.b16 %v301
      %v358 = vunpack.c.l.b16 %v302
      %v359 = vunpack.c.l.b16 %v303
      %v360 = vpack.c.b16 %v345, %v344
      %v361 = vpack.c.b16 %v347, %v346
      %v362 = vpack.c.b16 %v349, %v348
      %v363 = vpack.c.b16 %v351, %v350
      %v364 = vpack.c.b16 %v353, %v352
      %v365 = vpack.c.b16 %v355, %v354
      %v366 = vpack.c.b16 %v357, %v356
      %v367 = vpack.c.b16 %v359, %v358
      %376 = vmatprep.subr.bf16.mxu0 0
      %377 = vmatpush1.bf16.msra.mxu0 %v360
      %378 = vmatprep.subr.bf16.mxu0 0
      %379 = vmatpush1.bf16.msra.mxu0 %v361
      %380 = vmatprep.subr.bf16.mxu0 0
      %381 = vmatpush1.bf16.msra.mxu0 %v362
      %382 = vmatprep.subr.bf16.mxu0 0
      %383 = vmatpush1.bf16.msra.mxu0 %v363
      %384 = vmatprep.subr.bf16.mxu0 0
      %385 = vmatpush1.bf16.msra.mxu0 %v364
      %386 = vmatprep.subr.bf16.mxu0 0
      %387 = vmatpush1.bf16.msra.mxu0 %v365
      %388 = vmatprep.subr.bf16.mxu0 0
      %389 = vmatpush1.bf16.msra.mxu0 %v366
      %390 = vmatprep.subr.bf16.mxu0 0
      %391 = vmatpush1.bf16.msra.mxu0 %v367
      %392 = vmatprep.subr.bf16.mxu0 0
      %393 = vmatpush1.bf16.msra.mxu0 0
      %394 = vmatprep.subr.bf16.mxu0 0
      %395 = vmatpush1.bf16.msra.mxu0 0
      %396 = vmatprep.subr.bf16.mxu0 0
      %397 = vmatpush1.bf16.msra.mxu0 0
      %398 = vmatprep.subr.bf16.mxu0 0
      %399 = vmatpush1.bf16.msra.mxu0 0
      %400 = vmatprep.subr.bf16.mxu0 0
      %401 = vmatpush1.bf16.msra.mxu0 0
      %402 = vmatprep.subr.bf16.mxu0 0
      %403 = vmatpush1.bf16.msra.mxu0 0
      %404 = vmatprep.subr.bf16.mxu0 0
      %405 = vmatpush1.bf16.msra.mxu0 0
      %406 = vmatprep.subr.bf16.mxu0 0
      %407 = vmatpush1.bf16.msra.mxu0 0
      %408 = vmatprep.mubr.bf16.mxu0 0
      %409 = vmatmul.mubr.bf16.gmra.mrb[0].mxu0 %v320
      %v410 = vpop.f32.mrb[0].mxu0
      %v411 = vadd.f32 0.0, %v410
      %v412 = vpop.f32.mrb[0].mxu0
      %v413 = vpop.f32.mrb[0].mxu0
      %v414 = vadd.f32 0.0, %v413
      %v415 = vpop.f32.mrb[0].mxu0
      %416 = vmatprep.mubr.bf16.mxu0 0
      %417 = vmatmul.mubr.bf16.gmra.mrb[0].mxu0 %v321
      %v418 = vpop.f32.mrb[0].mxu0
      %v419 = vadd.f32 0.0, %v418
      %v420 = vpop.f32.mrb[0].mxu0
      %v421 = vpop.f32.mrb[0].mxu0
      %v422 = vadd.f32 0.0, %v421
      %v423 = vpop.f32.mrb[0].mxu0
      %424 = vmatprep.mubr.bf16.mxu0 0
      %425 = vmatmul.mubr.bf16.gmra.mrb[0].mxu0 %v322
      %v426 = vpop.f32.mrb[0].mxu0
      %v427 = vadd.f32 0.0, %v426
      %v428 = vpop.f32.mrb[0].mxu0
      %v429 = vpop.f32.mrb[0].mxu0
      %v430 = vadd.f32 0.0, %v429
      %v431 = vpop.f32.mrb[0].mxu0
      %432 = vmatprep.mubr.bf16.mxu0 0
      %433 = vmatmul.mubr.bf16.gmra.mrb[0].mxu0 %v323
      %v434 = vpop.f32.mrb[0].mxu0
      %v435 = vadd.f32 0.0, %v434
      %v436 = vpop.f32.mrb[0].mxu0
      %v437 = vpop.f32.mrb[0].mxu0
      %v438 = vadd.f32 0.0, %v437
      %v439 = vpop.f32.mrb[0].mxu0
      %440 = vdwg.mxu0
      %v441 = vadd.f32 %v272, %v411
      %v442 = vadd.f32 %v273, %v414
      %v443 = vadd.f32 %v274, %v419
      %v444 = vadd.f32 %v275, %v422
      %v445 = vadd.f32 %v276, %v427
      %v446 = vadd.f32 %v277, %v430
      %v447 = vadd.f32 %v278, %v435
      %v448 = vadd.f32 %v279, %v438
      %449 = vst [vmem:[#allocation2] sm:$0xff] %v441
      %450 = vst [vmem:[#allocation2 + $0x8] sm:$0xff] %v442
      %451 = vst [vmem:[#allocation2 + $0x10] sm:$0xff] %v443
      %452 = vst [vmem:[#allocation2 + $0x18] sm:$0xff] %v444
      %453 = vst [vmem:[#allocation2 + $0x20] sm:$0xff] %v445
      %454 = vst [vmem:[#allocation2 + $0x28] sm:$0xff] %v446
      %455 = vst [vmem:[#allocation2 + $0x30] sm:$0xff] %v447
      %456 = vst [vmem:[#allocation2 + $0x38] sm:$0xff] %v448
      // Predicated region
      $region37: #{decoder_forward.3} parent=31 // pred_check
        %p457 = pneg %p260
      $region38: #{decoder_forward.3} parent=31 // pred_check_branch
        %459 = sbr.rel (%p457) target = $region40
      $region39: #{decoder_forward.3} parent=31 // pred_region
        %v460 = vld [vmem:[#allocation2] sm:$0xff]
        %v461 = vld [vmem:[#allocation2 + $0x8] sm:$0xff]
        %v462 = vld [vmem:[#allocation2 + $0x10] sm:$0xff]
        %v463 = vld [vmem:[#allocation2 + $0x18] sm:$0xff]
        %v464 = vld [vmem:[#allocation2 + $0x20] sm:$0xff]
        %v465 = vld [vmem:[#allocation2 + $0x28] sm:$0xff]
        %v466 = vld [vmem:[#allocation2 + $0x30] sm:$0xff]
        %v467 = vld [vmem:[#allocation2 + $0x38] sm:$0xff]
        %v468 = vld [vmem:[%s249] sm:$0x1]
        %v470 = vlaneseq
        %v471 = vshrl.u32 %v470, 7
        %v472 = vsub.s32 0, %v471
        %v473 = vrot.slane %v468, %v472
        %v475 = vadd.f32 %v460, %v473
        %v476 = vadd.f32 %v461, %v473
        %v477 = vadd.f32 %v462, %v473
        %v478 = vadd.f32 %v463, %v473
        %v479 = vadd.f32 %v464, %v473
        %v480 = vadd.f32 %v465, %v473
        %v481 = vadd.f32 %v466, %v473
        %v482 = vadd.f32 %v467, %v473
        %v483 = vpack.c.bf16 %v476, %v475
        %v484 = vpack.c.bf16 %v478, %v477
        %v485 = vpack.c.bf16 %v480, %v479
        %v486 = vpack.c.bf16 %v482, %v481
        %v491 = vunpack.c.l.b16 %v483
        %v492 = vunpack.c.h.b16 %v483
        %v493 = vunpack.c.l.b16 %v484
        %v494 = vunpack.c.h.b16 %v484
        %v495 = vunpack.c.l.b16 %v485
        %v496 = vunpack.c.h.b16 %v485
        %v497 = vunpack.c.l.b16 %v486
        %v498 = vunpack.c.h.b16 %v486
        %v499 = vpack.c.b16 %v491, %v491
        %v500 = vpack.c.b16 %v492, %v492
        %v501 = vpack.c.b16 %v493, %v493
        %v502 = vpack.c.b16 %v494, %v494
        %v503 = vpack.c.b16 %v495, %v495
        %v504 = vpack.c.b16 %v496, %v496
        %v505 = vpack.c.b16 %v497, %v497
        %v506 = vpack.c.b16 %v498, %v498
        %515 = vst [vmem:[%s257] sm:$0xf] %v499
        %516 = vst [vmem:[%s257 + $0x4] sm:$0xf] %v500
        %517 = vst [vmem:[%s257 + $0x8] sm:$0xf] %v501
        %518 = vst [vmem:[%s257 + $0xc] sm:$0xf] %v502
        %519 = vst [vmem:[%s257 + $0x10] sm:$0xf] %v503
        %520 = vst [vmem:[%s257 + $0x14] sm:$0xf] %v504
        %521 = vst [vmem:[%s257 + $0x18] sm:$0xf] %v505
        %522 = vst [vmem:[%s257 + $0x1c] sm:$0xf] %v506
      $region40: #{decoder_forward.3} parent=31 // pred_fallthru
        _
      %s523 = smul.u32 8, %s19
      %p524 = scmp.lt.s32.totalorder %s523, 15
      %s525 = scalar_select %p524, %s523, 15
      %p526 = scmp.lt.s32.totalorder %s20, 0
      %s527 = scalar_select %p526, %s20, 0
      %s528 = sadd.s32 %s527, %s525
      %s529 = smul.addr %s528, 4
      %s530 = scalar_lea.vmem %s3, %s529
      // Predicated region
      $region41: #{decoder_forward.3} parent=31 // pred_check
        %p531 = pneg %p135
      $region42: #{decoder_forward.3} parent=31 // pred_check_branch
        %533 = sbr.rel (%p531) target = $region44
      $region43: #{decoder_forward.3} parent=31 // pred_region
        %s534 = smul.u32 8, %s19
      $region44: #{decoder_forward.3} parent=31 // pred_fallthru
        _
    $region32: #{decoder_forward.3} parent=5 // pred_fallthru
      _
    %p535 = scmp.le.s32.totalorder 2, %s9
    // Predicated region
    $region45: #{decoder_forward.3} parent=5 // pred_check
      %p536 = pneg %p535
    $region46: #{decoder_forward.3} parent=5 // pred_check_branch
      %538 = sbr.rel (%p536) target = $region48
    $region47: #{decoder_forward.3} parent=5 // pred_region
      %s539 = ssub.s32 %s9, 2
      // Predicated region
      $region49: #{decoder_forward.3} parent=47 // pred_check
        %p540 = pneg %p141
      $region50: #{decoder_forward.3} parent=47 // pred_check_branch
        %542 = sbr.rel (%p540) target = $region52
      $region51: #{decoder_forward.3} parent=47 // pred_region
        %s543 = smul.u32 8, %s22
        %p544 = scmp.lt.s32.totalorder %s543, 15
        %s545 = scalar_select %p544, %s543, 15
        %p546 = scmp.lt.s32.totalorder %s23, 0
        %s547 = scalar_select %p546, %s23, 0
        %s548 = sadd.s32 %s547, %s545
        %s549 = smul.addr %s548, 4
        %s550 = scalar_lea.vmem %s3, %s549
      $region52: #{decoder_forward.3} parent=47 // pred_fallthru
        _
    $region48: #{decoder_forward.3} parent=5 // pred_fallthru
      _
  $region6: #{decoder_forward.3} parent=0 // loop_footer
    %s13 = sadd.s32 1, %s9
  $region7: #{decoder_forward.3} parent=0 // loop_footer_branch
    %8 = sbr.rel target = $region3
  $region8: #{decoder_forward.3} parent=0 // loop_exit
    _

// kernel: decoder_forward.5
$region0: #{decoder_forward.5}
  #allocation0 [shape = 'u32[]', space=smem, size = 0x4, offset = 0x4, fixed_abs, tag = 'smem constant byte address 0x4 - core index']
  #allocation1 [shape = 'u32[144,128]{1,0:T(1,128)}', space=vmem, size = 0x12000, scoped, tag = 'internal scratch']
  #allocation2 [shape = 'f32[256,128]{1,0:T(8,128)}', space=vmem, size = 0x20000, scoped, tag = 'scratch operand']
  %s0 = inlined_call_operand.vmem [shape: bf16[2,18,18,128], index: 0, kind: input, shape index: {}]
  %s1 = inlined_call_operand.vmem [shape: bf16[3,384,128], index: 1, kind: input, shape index: {}]
  %s2 = inlined_call_operand.vmem [shape: f32[1,128], index: 2, kind: input, shape index: {}]
  %s3 = inlined_call_operand.vmem [shape: bf16[2,256,128], index: 3, kind: output, shape index: {}]
  %s4 = sld [smem:[#allocation0]]
  $region45: #{decoder_forward.5} parent=0
    _
  %s6 = ssub.s32 1, %s4
  %s7 = scalar_select 0, %s6, %s4
  loop: start=0, step=1, limit=4
  $region2: #{decoder_forward.5} parent=0 // loop_pre_header
    _
  $region3: #{decoder_forward.5} parent=0 // loop_header
    %s9 = sphi 0, %s13
    %p10 = scmp.ge.s32.totalorder %s9, 4
    %s16 = sphi 0, %s28
    %s17 = sphi 0, %s24
    %s18 = sphi 0, %s16
    %s19 = sphi 0, %s17
    %s20 = sphi 0, %s18
    %s21 = sphi 0, %s19
    %s31 = sphi 0, %s33
    %s34 = sphi 0, %s31
    %s35 = sphi 0, %s34
    %s51 = sphi 0, %s35
    %s57 = sphi 0, %s59
    %s60 = sphi 0, %s57
    %s61 = sphi 0, %s60
    %s77 = sphi 0, %s61
    %s83 = sphi 0, %s85
    %s86 = sphi 0, %s83
    %s87 = sphi 0, %s86
    %s103 = sphi 0, %s87
    %s111 = sphi 0, %s113
    %s114 = sphi 0, %s111
    %s115 = sphi 0, %s114
    %s131 = sphi 0, %s115
  $region4: #{decoder_forward.5} parent=0 // loop_header_branch
    %12 = sbr.rel (%p10) target = $region8
  $region5: #{decoder_forward.5} parent=0 // loop_body
    %s14 = ssub.s32 %s9, 1
    %s15 = ssub.s32 %s9, 2
    %s22 = sadd.s32 1, %s17
    %p23 = scmp.ge.s32.totalorder %s22, 1
    %s24 = scalar_select %p23, 0, %s22
    %s25 = sadd.s32 1, %s16
    %s26 = scalar_select %p23, %s25, %s16
    %p27 = scmp.ge.s32.totalorder %s26, 2
    %s28 = scalar_select %p27, 0, %s26
    %s29 = ssub.s32 %s16, %s28
    %p30 = scmp.eq.s32.totalorder %s29, 0
    %s32 = sadd.s32 %s31, 1
    %s33 = scalar_select %p30, %s31, %s32
    %p36 = pneg %p30
    %p37 = scmp.eq.s32.totalorder %s9, 1
    %p38 = por %p36, %p37
    %p39 = scmp.ne.s32.totalorder %s31, %s34
    %p40 = scmp.eq.s32.totalorder %s9, 0
    %p41 = por %p39, %p40
    %p42 = scmp.ne.s32.totalorder %s31, %s34
    %p43 = scmp.eq.s32.totalorder %s14, 1
    %p44 = por %p42, %p43
    %p45 = scmp.ne.s32.totalorder %s34, %s35
    %p46 = scmp.eq.s32.totalorder %s14, 0
    %p47 = por %p45, %p46
    %p48 = scmp.ne.s32.totalorder %s34, %s35
    %p49 = scmp.eq.s32.totalorder %s15, 1
    %p50 = por %p48, %p49
    %p52 = scmp.ne.s32.totalorder %s35, %s51
    %p53 = scmp.eq.s32.totalorder %s15, 0
    %p54 = por %p52, %p53
    %s55 = ssub.s32 %s17, %s24
    %p56 = scmp.eq.s32.totalorder %s55, 0
    %s58 = sadd.s32 %s57, 1
    %s59 = scalar_select %p56, %s57, %s58
    %p62 = pneg %p56
    %p63 = scmp.eq.s32.totalorder %s9, 1
    %p64 = por %p62, %p63
    %p65 = scmp.ne.s32.totalorder %s57, %s60
    %p66 = scmp.eq.s32.totalorder %s9, 0
    %p67 = por %p65, %p66
    %p68 = scmp.ne.s32.totalorder %s57, %s60
    %p69 = scmp.eq.s32.totalorder %s14, 1
    %p70 = por %p68, %p69
    %p71 = scmp.ne.s32.totalorder %s60, %s61
    %p72 = scmp.eq.s32.totalorder %s14, 0
    %p73 = por %p71, %p72
    %p74 = scmp.ne.s32.totalorder %s60, %s61
    %p75 = scmp.eq.s32.totalorder %s15, 1
    %p76 = por %p74, %p75
    %p78 = scmp.ne.s32.totalorder %s61, %s77
    %p79 = scmp.eq.s32.totalorder %s15, 0
    %p80 = por %p78, %p79
    %s81 = ssub.s32 %s17, %s24
    %p82 = scmp.eq.s32.totalorder %s81, 0
    %s84 = sadd.s32 %s83, 1
    %s85 = scalar_select %p82, %s83, %s84
    %p88 = pneg %p82
    %p89 = scmp.eq.s32.totalorder %s9, 1
    %p90 = por %p88, %p89
    %p91 = scmp.ne.s32.totalorder %s83, %s86
    %p92 = scmp.eq.s32.totalorder %s9, 0
    %p93 = por %p91, %p92
    %p94 = scmp.ne.s32.totalorder %s83, %s86
    %p95 = scmp.eq.s32.totalorder %s14, 1
    %p96 = por %p94, %p95
    %p97 = scmp.ne.s32.totalorder %s86, %s87
    %p98 = scmp.eq.s32.totalorder %s14, 0
    %p99 = por %p97, %p98
    %p100 = scmp.ne.s32.totalorder %s86, %s87
    %p101 = scmp.eq.s32.totalorder %s15, 1
    %p102 = por %p100, %p101
    %p104 = scmp.ne.s32.totalorder %s87, %s103
    %p105 = scmp.eq.s32.totalorder %s15, 0
    %p106 = por %p104, %p105
    %s107 = ssub.s32 %s16, %s28
    %s108 = ssub.s32 %s17, %s24
    %s109 = sor.u32 %s107, %s108
    %p110 = scmp.eq.s32.totalorder %s109, 0
    %s112 = sadd.s32 %s111, 1
    %s113 = scalar_select %p110, %s111, %s112
    %p116 = pneg %p110
    %p117 = scmp.eq.s32.totalorder %s9, 1
    %p118 = por %p116, %p117
    %p119 = scmp.ne.s32.totalorder %s111, %s114
    %p120 = scmp.eq.s32.totalorder %s9, 0
    %p121 = por %p119, %p120
    %p122 = scmp.ne.s32.totalorder %s111, %s114
    %p123 = scmp.eq.s32.totalorder %s14, 1
    %p124 = por %p122, %p123
    %p125 = scmp.ne.s32.totalorder %s114, %s115
    %p126 = scmp.eq.s32.totalorder %s14, 0
    %p127 = por %p125, %p126
    %p128 = scmp.ne.s32.totalorder %s114, %s115
    %p129 = scmp.eq.s32.totalorder %s15, 1
    %p130 = por %p128, %p129
    %p132 = scmp.ne.s32.totalorder %s115, %s131
    %p133 = scmp.eq.s32.totalorder %s15, 0
    %p134 = por %p132, %p133
    %p135 = scmp.le.s32.totalorder 1, %s9
    %p136 = scmp.lt.s32.totalorder %s9, 3
    %p137 = pnand %p135, %p136
    %p138 = pneg %p137
    // Predicated region
    $region9: #{decoder_forward.5} parent=5 // pred_check
      _
    $region10: #{decoder_forward.5} parent=5 // pred_check_branch
      %140 = sbr.rel (%p137) target = $region12
    $region11: #{decoder_forward.5} parent=5 // pred_region
      %s141 = ssub.s32 %s9, 1
      // Predicated region
      $region13: #{decoder_forward.5} parent=11 // pred_check
        %p142 = pneg %p73
      $region14: #{decoder_forward.5} parent=11 // pred_check_branch
        %144 = sbr.rel (%p142) target = $region16
      $region15: #{decoder_forward.5} parent=11 // pred_region
        %p145 = scmp.lt.s32.totalorder %s19, 0
        %s146 = scalar_select %p145, %s19, 0
        %s147 = smul.addr %s146, 4
        %s148 = scalar_lea.vmem %s1, %s147
      $region16: #{decoder_forward.5} parent=11 // pred_fallthru
        _
      // Predicated region
      $region17: #{decoder_forward.5} parent=11 // pred_check
        %p149 = pneg %p99
      $region18: #{decoder_forward.5} parent=11 // pred_check_branch
        %151 = sbr.rel (%p149) target = $region20
      $region19: #{decoder_forward.5} parent=11 // pred_region
        %p152 = scmp.lt.s32.totalorder %s19, 0
        %s153 = scalar_select %p152, %s19, 0
        %s154 = scalar_lea.vmem %s2, %s153
      $region20: #{decoder_forward.5} parent=11 // pred_fallthru
        _
    $region12: #{decoder_forward.5} parent=5 // pred_fallthru
      _
    %p155 = scmp.lt.s32.totalorder %s9, 2
    // Predicated region
    $region21: #{decoder_forward.5} parent=5 // pred_check
      %p156 = pneg %p155
    $region22: #{decoder_forward.5} parent=5 // pred_check_branch
      %158 = sbr.rel (%p156) target = $region24
    $region23: #{decoder_forward.5} parent=5 // pred_region
      // Predicated region
      $region25: #{decoder_forward.5} parent=23 // pred_check
        %p159 = pneg %p41
      $region26: #{decoder_forward.5} parent=23 // pred_check_branch
        %161 = sbr.rel (%p159) target = $region28
      $region27: #{decoder_forward.5} parent=23 // pred_region
        %p162 = scmp.lt.s32.totalorder %s16, 1
        %s163 = scalar_select %p162, %s16, 1
        %s164 = smul.addr %s163, 54
        %s165 = smul.addr %s164, 4
        %s166 = scalar_lea.vmem %s0, %s165
      $region28: #{decoder_forward.5} parent=23 // pred_fallthru
        _
    $region24: #{decoder_forward.5} parent=5 // pred_fallthru
      _
    %p167 = scmp.le.s32.totalorder 1, %s9
    %p168 = scmp.lt.s32.totalorder %s9, 3
    %p169 = pnand %p167, %p168
    %p170 = pneg %p169
    // Predicated region
    $region29: #{decoder_forward.5} parent=5 // pred_check
      _
    $region30: #{decoder_forward.5} parent=5 // pred_check_branch
      %172 = sbr.rel (%p169) target = $region32
    $region31: #{decoder_forward.5} parent=5 // pred_region
      %s173 = ssub.s32 %s9, 1
      %p174 = scmp.lt.s32.totalorder %s18, 1
      %s175 = scalar_select %p174, %s18, 1
      %s176 = smul.addr %s175, 54
      %s177 = smul.addr %s176, 4
      %s178 = scalar_lea.vmem %s0, %s177
      %p179 = pneg %p47
      %p180 = pneg %p44
      %p181 = scmp.lt.s32.totalorder %s19, 0
      %s182 = scalar_select %p181, %s19, 0
      %s183 = smul.addr %s182, 4
      %s184 = scalar_lea.vmem %s1, %s183
      %p185 = pneg %p73
      %p186 = pneg %p70
      %p187 = scmp.lt.s32.totalorder %s19, 0
      %s188 = scalar_select %p187, %s19, 0
      %s189 = scalar_lea.vmem %s2, %s188
      %p190 = pneg %p99
      %p191 = pneg %p96
      %p192 = pneg %p127
      %p193 = pneg %p124
      %p194 = scmp.lt.s32.totalorder %s18, 1
      %s195 = scalar_select %p194, %s18, 1
      %p196 = scmp.lt.s32.totalorder %s19, 0
      %s197 = scalar_select %p196, %s19, 0
      %s198 = smul.addr %s195, 32
      %s199 = sadd.s32 %s197, %s198
      %s200 = smul.addr %s199, 4
      %s201 = scalar_lea.vmem %s3, %s200
      %p202 = scmp.lt.s32.totalorder %s18, 1
      %s203 = scalar_select %p202, %s18, 1
      %s204 = smul.addr %s203, 54
      %s205 = smul.addr %s204, 4
      %s206 = scalar_lea.vmem %s0, %s205
      %p207 = scmp.lt.s32.totalorder %s19, 0
      %s208 = scalar_select %p207, %s19, 0
      %s209 = smul.addr %s208, 4
      %s210 = scalar_lea.vmem %s1, %s209
      %p211 = scmp.lt.s32.totalorder %s19, 0
      %s212 = scalar_select %p211, %s19, 0
      %s213 = scalar_lea.vmem %s2, %s212
      %p214 = scmp.lt.s32.totalorder %s18, 1
      %s215 = scalar_select %p214, %s18, 1
      %p216 = scmp.lt.s32.totalorder %s19, 0
      %s217 = scalar_select %p216, %s19, 0
      %s218 = smul.addr %s215, 32
      %s219 = sadd.s32 %s217, %s218
      %s220 = smul.addr %s219, 4
      %s221 = scalar_lea.vmem %s3, %s220
      %223 = vst [vmem:[#allocation2] sm:$0xff] 0.0
      %224 = vst [vmem:[#allocation2 + $0x8] sm:$0xff] 0.0
      %225 = vst [vmem:[#allocation2 + $0x10] sm:$0xff] 0.0
      %226 = vst [vmem:[#allocation2 + $0x18] sm:$0xff] 0.0
      %227 = vst [vmem:[#allocation2 + $0x20] sm:$0xff] 0.0
      %228 = vst [vmem:[#allocation2 + $0x28] sm:$0xff] 0.0
      %229 = vst [vmem:[#allocation2 + $0x30] sm:$0xff] 0.0
      %230 = vst [vmem:[#allocation2 + $0x38] sm:$0xff] 0.0
      %231 = vst [vmem:[#allocation2 + $0x40] sm:$0xff] 0.0
      %232 = vst [vmem:[#allocation2 + $0x48] sm:$0xff] 0.0
      %233 = vst [vmem:[#allocation2 + $0x50] sm:$0xff] 0.0
      %234 = vst [vmem:[#allocation2 + $0x58] sm:$0xff] 0.0
      %235 = vst [vmem:[#allocation2 + $0x60] sm:$0xff] 0.0
      %236 = vst [vmem:[#allocation2 + $0x68] sm:$0xff] 0.0
      %237 = vst [vmem:[#allocation2 + $0x70] sm:$0xff] 0.0
      %238 = vst [vmem:[#allocation2 + $0x78] sm:$0xff] 0.0
      %239 = vst [vmem:[#allocation2 + $0x80] sm:$0xff] 0.0
      %240 = vst [vmem:[#allocation2 + $0x88] sm:$0xff] 0.0
      %241 = vst [vmem:[#allocation2 + $0x90] sm:$0xff] 0.0
      %242 = vst [vmem:[#allocation2 + $0x98] sm:$0xff] 0.0
      %243 = vst [vmem:[#allocation2 + $0xa0] sm:$0xff] 0.0
      %244 = vst [vmem:[#allocation2 + $0xa8] sm:$0xff] 0.0
      %245 = vst [vmem:[#allocation2 + $0xb0] sm:$0xff] 0.0
      %246 = vst [vmem:[#allocation2 + $0xb8] sm:$0xff] 0.0
      %247 = vst [vmem:[#allocation2 + $0xc0] sm:$0xff] 0.0
      %248 = vst [vmem:[#allocation2 + $0xc8] sm:$0xff] 0.0
      %249 = vst [vmem:[#allocation2 + $0xd0] sm:$0xff] 0.0
      %250 = vst [vmem:[#allocation2 + $0xd8] sm:$0xff] 0.0
      %251 = vst [vmem:[#allocation2 + $0xe0] sm:$0xff] 0.0
      %252 = vst [vmem:[#allocation2 + $0xe8] sm:$0xff] 0.0
      %253 = vst [vmem:[#allocation2 + $0xf0] sm:$0xff] 0.0
      %254 = vst [vmem:[#allocation2 + $0xf8] sm:$0xff] 0.0
      %v255 = vld [vmem:[%s206] sm:$0xf]
      %v256 = vld [vmem:[%s206 + $0x4] sm:$0xf]
      %v257 = vld [vmem:[%s206 + $0x8] sm:$0x1]
      %v258 = vld [vmem:[%s206 + $0xc] sm:$0xf]
      %v259 = vld [vmem:[%s206 + $0x10] sm:$0xf]
      %v260 = vld [vmem:[%s206 + $0x14] sm:$0x1]
      %v261 = vld [vmem:[%s206 + $0x18] sm:$0xf]
      %v262 = vld [vmem:[%s206 + $0x1c] sm:$0xf]
      %v263 = vld [vmem:[%s206 + $0x20] sm:$0x1]
      %v264 = vld [vmem:[%s206 + $0x24] sm:$0xf]
      %v265 = vld [vmem:[%s206 + $0x28] sm:$0xf]
      %v266 = vld [vmem:[%s206 + $0x2c] sm:$0x1]
      %v267 = vld [vmem:[%s206 + $0x30] sm:$0xf]
      %v268 = vld [vmem:[%s206 + $0x34] sm:$0xf]
      %v269 = vld [vmem:[%s206 + $0x38] sm:$0x1]
      %v270 = vld [vmem:[%s206 + $0x3c] sm:$0xf]
      %v271 = vld [vmem:[%s206 + $0x40] sm:$0xf]
      %v272 = vld [vmem:[%s206 + $0x44] sm:$0x1]
      %v273 = vld [vmem:[%s206 + $0x48] sm:$0xf]
      %v274 = vld [vmem:[%s206 + $0x4c] sm:$0xf]
      %v275 = vld [vmem:[%s206 + $0x50] sm:$0x1]
      %v276 = vld [vmem:[%s206 + $0x54] sm:$0xf]
      %v277 = vld [vmem:[%s206 + $0x58] sm:$0xf]
      %v278 = vld [vmem:[%s206 + $0x5c] sm:$0x1]
      %v279 = vld [vmem:[%s206 + $0x60] sm:$0xf]
      %v280 = vld [vmem:[%s206 + $0x64] sm:$0xf]
      %v281 = vld [vmem:[%s206 + $0x68] sm:$0x1]
      %v282 = vld [vmem:[%s206 + $0x6c] sm:$0xf]
      %v283 = vld [vmem:[%s206 + $0x70] sm:$0xf]
      %v284 = vld [vmem:[%s206 + $0x74] sm:$0x1]
      %v285 = vld [vmem:[%s206 + $0x78] sm:$0xf]
      %v286 = vld [vmem:[%s206 + $0x7c] sm:$0xf]
      %v287 = vld [vmem:[%s206 + $0x80] sm:$0x1]
      %v288 = vld [vmem:[%s206 + $0x84] sm:$0xf]
      %v289 = vld [vmem:[%s206 + $0x88] sm:$0xf]
      %v290 = vld [vmem:[%s206 + $0x8c] sm:$0x1]
      %v291 = vld [vmem:[%s206 + $0x90] sm:$0xf]
      %v292 = vld [vmem:[%s206 + $0x94] sm:$0xf]
      %v293 = vld [vmem:[%s206 + $0x98] sm:$0x1]
      %v294 = vld [vmem:[%s206 + $0x9c] sm:$0xf]
      %v295 = vld [vmem:[%s206 + $0xa0] sm:$0xf]
      %v296 = vld [vmem:[%s206 + $0xa4] sm:$0x1]
      %v297 = vld [vmem:[%s206 + $0xa8] sm:$0xf]
      %v298 = vld [vmem:[%s206 + $0xac] sm:$0xf]
      %v299 = vld [vmem:[%s206 + $0xb0] sm:$0x1]
      %v300 = vld [vmem:[%s206 + $0xb4] sm:$0xf]
      %v301 = vld [vmem:[%s206 + $0xb8] sm:$0xf]
      %v302 = vld [vmem:[%s206 + $0xbc] sm:$0x1]
      %v303 = vld [vmem:[%s206 + $0xc0] sm:$0xf]
      %v304 = vld [vmem:[%s206 + $0xc4] sm:$0xf]
      %v305 = vld [vmem:[%s206 + $0xc8] sm:$0x1]
      %v306 = vld [vmem:[%s206 + $0xcc] sm:$0xf]
      %v307 = vld [vmem:[%s206 + $0xd0] sm:$0xf]
      %v308 = vld [vmem:[%s206 + $0xd4] sm:$0x1]
      %v345 = vunpack.c.l.b16 %v255
      %v346 = vunpack.c.l.b16 %v256
      %v347 = vunpack.c.l.b16 %v258
      %v348 = vunpack.c.l.b16 %v259
      %v349 = vunpack.c.l.b16 %v261
      %v350 = vunpack.c.l.b16 %v262
      %v351 = vunpack.c.l.b16 %v264
      %v352 = vunpack.c.l.b16 %v265
      %v353 = vunpack.c.l.b16 %v267
      %v354 = vunpack.c.l.b16 %v268
      %v355 = vunpack.c.l.b16 %v270
      %v356 = vunpack.c.l.b16 %v271
      %v357 = vunpack.c.l.b16 %v273
      %v358 = vunpack.c.l.b16 %v274
      %v359 = vunpack.c.l.b16 %v276
      %v360 = vunpack.c.l.b16 %v277
      %v361 = vunpack.c.l.b16 %v279
      %v362 = vunpack.c.l.b16 %v280
      %v363 = vunpack.c.l.b16 %v282
      %v364 = vunpack.c.l.b16 %v283
      %v365 = vunpack.c.l.b16 %v285
      %v366 = vunpack.c.l.b16 %v286
      %v367 = vunpack.c.l.b16 %v288
      %v368 = vunpack.c.l.b16 %v289
      %v369 = vunpack.c.l.b16 %v291
      %v370 = vunpack.c.l.b16 %v292
      %v371 = vunpack.c.l.b16 %v294
      %v372 = vunpack.c.l.b16 %v295
      %v373 = vunpack.c.l.b16 %v297
      %v374 = vunpack.c.l.b16 %v298
      %v375 = vunpack.c.l.b16 %v300
      %v376 = vunpack.c.l.b16 %v301
      %v377 = vunpack.c.l.b16 %v303
      %v378 = vunpack.c.l.b16 %v304
      %v379 = vunpack.c.l.b16 %v306
      %v380 = vunpack.c.l.b16 %v307
      %v381 = vpack.c.b16 %v346, %v345
      %v382 = vpack.c.b16 %v348, %v347
      %v383 = vpack.c.b16 %v350, %v349
      %v384 = vpack.c.b16 %v352, %v351
      %v385 = vpack.c.b16 %v354, %v353
      %v386 = vpack.c.b16 %v356, %v355
      %v387 = vpack.c.b16 %v358, %v357
      %v388 = vpack.c.b16 %v360, %v359
      %v389 = vpack.c.b16 %v362, %v361
      %v390 = vpack.c.b16 %v364, %v363
      %v391 = vpack.c.b16 %v366, %v365
      %v392 = vpack.c.b16 %v368, %v367
      %v393 = vpack.c.b16 %v370, %v369
      %v394 = vpack.c.b16 %v372, %v371
      %v395 = vpack.c.b16 %v374, %v373
      %v396 = vpack.c.b16 %v376, %v375
      %v397 = vpack.c.b16 %v378, %v377
      %v398 = vpack.c.b16 %v380, %v379
      %v435 = vunpack.c.l.b16 %v257
      %v436 = vunpack.c.l.b16 %v260
      %v437 = vunpack.c.l.b16 %v263
      %v438 = vunpack.c.l.b16 %v266
      %v439 = vunpack.c.l.b16 %v269
      %v440 = vunpack.c.l.b16 %v272
      %v441 = vunpack.c.l.b16 %v275
      %v442 = vunpack.c.l.b16 %v278
      %v443 = vunpack.c.l.b16 %v281
      %v444 = vunpack.c.l.b16 %v284
      %v445 = vunpack.c.l.b16 %v287
      %v446 = vunpack.c.l.b16 %v290
      %v447 = vunpack.c.l.b16 %v293
      %v448 = vunpack.c.l.b16 %v296
      %v449 = vunpack.c.l.b16 %v299
      %v450 = vunpack.c.l.b16 %v302
      %v451 = vunpack.c.l.b16 %v305
      %v452 = vunpack.c.l.b16 %v308
      %v453 = vpack.c.b16 %v435, %v435
      %v454 = vpack.c.b16 %v436, %v436
      %v455 = vpack.c.b16 %v437, %v437
      %v456 = vpack.c.b16 %v438, %v438
      %v457 = vpack.c.b16 %v439, %v439
      %v458 = vpack.c.b16 %v440, %v440
      %v459 = vpack.c.b16 %v441, %v441
      %v460 = vpack.c.b16 %v442, %v442
      %v461 = vpack.c.b16 %v443, %v443
      %v462 = vpack.c.b16 %v444, %v444
      %v463 = vpack.c.b16 %v445, %v445
      %v464 = vpack.c.b16 %v446, %v446
      %v465 = vpack.c.b16 %v447, %v447
      %v466 = vpack.c.b16 %v448, %v448
      %v467 = vpack.c.b16 %v449, %v449
      %v468 = vpack.c.b16 %v450, %v450
      %v469 = vpack.c.b16 %v451, %v451
      %v470 = vpack.c.b16 %v452, %v452
      %vm471 = vsmask.f32 7424
      %v473 = vshrl.u32 %v381, 16
      %v475 = vshll.u32 %v381, 16
      %v477 = vrot.slane %v475, 1
      %v478 = vor.u32 %v473, %v477
      %v480 = vshll.u32 %v453, 16
      %v482 = vrot.slane %v480, 1
      %v483 = vsel %vm471, %v478, %v482
      %v485 = vshrl.u32 %v382, 16
      %v487 = vshll.u32 %v382, 16
      %v489 = vrot.slane %v487, 1
      %v490 = vor.u32 %v485, %v489
      %v492 = vshll.u32 %v454, 16
      %v494 = vrot.slane %v492, 1
      %v495 = vsel %vm471, %v490, %v494
      %v497 = vshrl.u32 %v383, 16
      %v499 = vshll.u32 %v383, 16
      %v501 = vrot.slane %v499, 1
      %v502 = vor.u32 %v497, %v501
      %v504 = vshll.u32 %v455, 16
      %v506 = vrot.slane %v504, 1
      %v507 = vsel %vm471, %v502, %v506
      %v509 = vshrl.u32 %v384, 16
      %v511 = vshll.u32 %v384, 16
      %v513 = vrot.slane %v511, 1
      %v514 = vor.u32 %v509, %v513
      %v516 = vshll.u32 %v456, 16
      %v518 = vrot.slane %v516, 1
      %v519 = vsel %vm471, %v514, %v518
      %v521 = vshrl.u32 %v385, 16
      %v523 = vshll.u32 %v385, 16
      %v525 = vrot.slane %v523, 1
      %v526 = vor.u32 %v521, %v525
      %v528 = vshll.u32 %v457, 16
      %v530 = vrot.slane %v528, 1
      %v531 = vsel %vm471, %v526, %v530
      %v533 = vshrl.u32 %v386, 16
      %v535 = vshll.u32 %v386, 16
      %v537 = vrot.slane %v535, 1
      %v538 = vor.u32 %v533, %v537
      %v540 = vshll.u32 %v458, 16
      %v542 = vrot.slane %v540, 1
      %v543 = vsel %vm471, %v538, %v542
      %v545 = vshrl.u32 %v387, 16
      %v547 = vshll.u32 %v387, 16
      %v549 = vrot.slane %v547, 1
      %v550 = vor.u32 %v545, %v549
      %v552 = vshll.u32 %v459, 16
      %v554 = vrot.slane %v552, 1
      %v555 = vsel %vm471, %v550, %v554
      %v557 = vshrl.u32 %v388, 16
      %v559 = vshll.u32 %v388, 16
      %v561 = vrot.slane %v559, 1
      %v562 = vor.u32 %v557, %v561
      %v564 = vshll.u32 %v460, 16
      %v566 = vrot.slane %v564, 1
      %v567 = vsel %vm471, %v562, %v566
      %v569 = vshrl.u32 %v389, 16
      %v571 = vshll.u32 %v389, 16
      %v573 = vrot.slane %v571, 1
      %v574 = vor.u32 %v569, %v573
      %v576 = vshll.u32 %v461, 16
      %v578 = vrot.slane %v576, 1
      %v579 = vsel %vm471, %v574, %v578
      %v581 = vshrl.u32 %v390, 16
      %v583 = vshll.u32 %v390, 16
      %v585 = vrot.slane %v583, 1
      %v586 = vor.u32 %v581, %v585
      %v588 = vshll.u32 %v462, 16
      %v590 = vrot.slane %v588, 1
      %v591 = vsel %vm471, %v586, %v590
      %v593 = vshrl.u32 %v391, 16
      %v595 = vshll.u32 %v391, 16
      %v597 = vrot.slane %v595, 1
      %v598 = vor.u32 %v593, %v597
      %v600 = vshll.u32 %v463, 16
      %v602 = vrot.slane %v600, 1
      %v603 = vsel %vm471, %v598, %v602
      %v605 = vshrl.u32 %v392, 16
      %v607 = vshll.u32 %v392, 16
      %v609 = vrot.slane %v607, 1
      %v610 = vor.u32 %v605, %v609
      %v612 = vshll.u32 %v464, 16
      %v614 = vrot.slane %v612, 1
      %v615 = vsel %vm471, %v610, %v614
      %v617 = vshrl.u32 %v393, 16
      %v619 = vshll.u32 %v393, 16
      %v621 = vrot.slane %v619, 1
      %v622 = vor.u32 %v617, %v621
      %v624 = vshll.u32 %v465, 16
      %v626 = vrot.slane %v624, 1
      %v627 = vsel %vm471, %v622, %v626
      %v629 = vshrl.u32 %v394, 16
      %v631 = vshll.u32 %v394, 16
      %v633 = vrot.slane %v631, 1
      %v634 = vor.u32 %v629, %v633
      %v636 = vshll.u32 %v466, 16
      %v638 = vrot.slane %v636, 1
      %v639 = vsel %vm471, %v634, %v638
      %v641 = vshrl.u32 %v395, 16
      %v643 = vshll.u32 %v395, 16
      %v645 = vrot.slane %v643, 1
      %v646 = vor.u32 %v641, %v645
      %v648 = vshll.u32 %v467, 16
      %v650 = vrot.slane %v648, 1
      %v651 = vsel %vm471, %v646, %v650
      %v653 = vshrl.u32 %v396, 16
      %v655 = vshll.u32 %v396, 16
      %v657 = vrot.slane %v655, 1
      %v658 = vor.u32 %v653, %v657
      %v660 = vshll.u32 %v468, 16
      %v662 = vrot.slane %v660, 1
      %v663 = vsel %vm471, %v658, %v662
      %v665 = vshrl.u32 %v397, 16
      %v667 = vshll.u32 %v397, 16
      %v669 = vrot.slane %v667, 1
      %v670 = vor.u32 %v665, %v669
      %v672 = vshll.u32 %v469, 16
      %v674 = vrot.slane %v672, 1
      %v675 = vsel %vm471, %v670, %v674
      %v677 = vshrl.u32 %v398, 16
      %v679 = vshll.u32 %v398, 16
      %v681 = vrot.slane %v679, 1
      %v682 = vor.u32 %v677, %v681
      %v684 = vshll.u32 %v470, 16
      %v686 = vrot.slane %v684, 1
      %v687 = vsel %vm471, %v682, %v686
      %vm706 = vcmask 1046528
      %v707 = vrot.slane %v381, 1
      %v708 = vrot.slane %v453, 1
      %v709 = vsel %vm706, %v707, %v708
      %v710 = vrot.slane %v382, 1
      %v711 = vrot.slane %v454, 1
      %v712 = vsel %vm706, %v710, %v711
      %v713 = vrot.slane %v383, 1
      %v714 = vrot.slane %v455, 1
      %v715 = vsel %vm706, %v713, %v714
      %v716 = vrot.slane %v384, 1
      %v717 = vrot.slane %v456, 1
      %v718 = vsel %vm706, %v716, %v717
      %v719 = vrot.slane %v385, 1
      %v720 = vrot.slane %v457, 1
      %v721 = vsel %vm706, %v719, %v720
      %v722 = vrot.slane %v386, 1
      %v723 = vrot.slane %v458, 1
      %v724 = vsel %vm706, %v722, %v723
      %v725 = vrot.slane %v387, 1
      %v726 = vrot.slane %v459, 1
      %v727 = vsel %vm706, %v725, %v726
      %v728 = vrot.slane %v388, 1
      %v729 = vrot.slane %v460, 1
      %v730 = vsel %vm706, %v728, %v729
      %v731 = vrot.slane %v389, 1
      %v732 = vrot.slane %v461, 1
      %v733 = vsel %vm706, %v731, %v732
      %v734 = vrot.slane %v390, 1
      %v735 = vrot.slane %v462, 1
      %v736 = vsel %vm706, %v734, %v735
      %v737 = vrot.slane %v391, 1
      %v738 = vrot.slane %v463, 1
      %v739 = vsel %vm706, %v737, %v738
      %v740 = vrot.slane %v392, 1
      %v741 = vrot.slane %v464, 1
      %v742 = vsel %vm706, %v740, %v741
      %v743 = vrot.slane %v393, 1
      %v744 = vrot.slane %v465, 1
      %v745 = vsel %vm706, %v743, %v744
      %v746 = vrot.slane %v394, 1
      %v747 = vrot.slane %v466, 1
      %v748 = vsel %vm706, %v746, %v747
      %v749 = vrot.slane %v395, 1
      %v750 = vrot.slane %v467, 1
      %v751 = vsel %vm706, %v749, %v750
      %v752 = vrot.slane %v396, 1
      %v753 = vrot.slane %v468, 1
      %v754 = vsel %vm706, %v752, %v753
      %v755 = vrot.slane %v397, 1
      %v756 = vrot.slane %v469, 1
      %v757 = vsel %vm706, %v755, %v756
      %v758 = vrot.slane %v398, 1
      %v759 = vrot.slane %v470, 1
      %v760 = vsel %vm706, %v758, %v759
      %v779 = vld [vmem:[#allocation2] sm:$0xff]
      %v780 = vld [vmem:[#allocation2 + $0x8] sm:$0xff]
      %v781 = vld [vmem:[#allocation2 + $0x10] sm:$0xff]
      %v782 = vld [vmem:[#allocation2 + $0x18] sm:$0xff]
      %v783 = vld [vmem:[#allocation2 + $0x20] sm:$0xff]
      %v784 = vld [vmem:[#allocation2 + $0x28] sm:$0xff]
      %v785 = vld [vmem:[#allocation2 + $0x30] sm:$0xff]
      %v786 = vld [vmem:[#allocation2 + $0x38] sm:$0xff]
      %v787 = vld [vmem:[#allocation2 + $0x40] sm:$0xff]
      %v788 = vld [vmem:[#allocation2 + $0x48] sm:$0xff]
      %v789 = vld [vmem:[#allocation2 + $0x50] sm:$0xff]
      %v790 = vld [vmem:[#allocation2 + $0x58] sm:$0xff]
      %v791 = vld [vmem:[#allocation2 + $0x60] sm:$0xff]
      %v792 = vld [vmem:[#allocation2 + $0x68] sm:$0xff]
      %v793 = vld [vmem:[#allocation2 + $0x70] sm:$0xff]
      %v794 = vld [vmem:[#allocation2 + $0x78] sm:$0xff]
      %v795 = vld [vmem:[#allocation2 + $0x80] sm:$0xff]
      %v796 = vld [vmem:[#allocation2 + $0x88] sm:$0xff]
      %v797 = vld [vmem:[#allocation2 + $0x90] sm:$0xff]
      %v798 = vld [vmem:[#allocation2 + $0x98] sm:$0xff]
      %v799 = vld [vmem:[#allocation2 + $0xa0] sm:$0xff]
      %v800 = vld [vmem:[#allocation2 + $0xa8] sm:$0xff]
      %v801 = vld [vmem:[#allocation2 + $0xb0] sm:$0xff]
      %v802 = vld [vmem:[#allocation2 + $0xb8] sm:$0xff]
      %v803 = vld [vmem:[#allocation2 + $0xc0] sm:$0xff]
      %v804 = vld [vmem:[#allocation2 + $0xc8] sm:$0xff]
      %v805 = vld [vmem:[#allocation2 + $0xd0] sm:$0xff]
      %v806 = vld [vmem:[#allocation2 + $0xd8] sm:$0xff]
      %v807 = vld [vmem:[#allocation2 + $0xe0] sm:$0xff]
      %v808 = vld [vmem:[#allocation2 + $0xe8] sm:$0xff]
      %v809 = vld [vmem:[#allocation2 + $0xf0] sm:$0xff]
      %v810 = vld [vmem:[#allocation2 + $0xf8] sm:$0xff]
      %v811 = vld [vmem:[%s210] sm:$0xf]
      %v812 = vld [vmem:[%s210 + $0x4] sm:$0xf]
      %v813 = vld [vmem:[%s210 + $0x8] sm:$0xf]
      %v814 = vld [vmem:[%s210 + $0xc] sm:$0xf]
      %v815 = vld [vmem:[%s210 + $0x10] sm:$0xf]
      %v816 = vld [vmem:[%s210 + $0x14] sm:$0xf]
      %v817 = vld [vmem:[%s210 + $0x18] sm:$0xf]
      %v818 = vld [vmem:[%s210 + $0x1c] sm:$0xf]
      %v819 = vld [vmem:[%s210 + $0x20] sm:$0xf]
      %v820 = vld [vmem:[%s210 + $0x24] sm:$0xf]
      %v821 = vld [vmem:[%s210 + $0x28] sm:$0xf]
      %v822 = vld [vmem:[%s210 + $0x2c] sm:$0xf]
      %v823 = vld [vmem:[%s210 + $0x30] sm:$0xf]
      %v824 = vld [vmem:[%s210 + $0x34] sm:$0xf]
      %v825 = vld [vmem:[%s210 + $0x38] sm:$0xf]
      %v826 = vld [vmem:[%s210 + $0x3c] sm:$0xf]
      %v827 = vld [vmem:[%s210 + $0x40] sm:$0xf]
      %v828 = vld [vmem:[%s210 + $0x44] sm:$0xf]
      %v829 = vld [vmem:[%s210 + $0x48] sm:$0xf]
      %v830 = vld [vmem:[%s210 + $0x4c] sm:$0xf]
      %v831 = vld [vmem:[%s210 + $0x50] sm:$0xf]
      %v832 = vld [vmem:[%s210 + $0x54] sm:$0xf]
      %v833 = vld [vmem:[%s210 + $0x58] sm:$0xf]
      %v834 = vld [vmem:[%s210 + $0x5c] sm:$0xf]
      %v835 = vld [vmem:[%s210 + $0x60] sm:$0xf]
      %v836 = vld [vmem:[%s210 + $0x64] sm:$0xf]
      %v837 = vld [vmem:[%s210 + $0x68] sm:$0xf]
      %v838 = vld [vmem:[%s210 + $0x6c] sm:$0xf]
      %v839 = vld [vmem:[%s210 + $0x70] sm:$0xf]
      %v840 = vld [vmem:[%s210 + $0x74] sm:$0xf]
      %v841 = vld [vmem:[%s210 + $0x78] sm:$0xf]
      %v842 = vld [vmem:[%s210 + $0x7c] sm:$0xf]
      %v843 = vld [vmem:[%s210 + $0x80] sm:$0xf]
      %v844 = vld [vmem:[%s210 + $0x84] sm:$0xf]
      %v845 = vld [vmem:[%s210 + $0x88] sm:$0xf]
      %v846 = vld [vmem:[%s210 + $0x8c] sm:$0xf]
      %v847 = vld [vmem:[%s210 + $0x90] sm:$0xf]
      %v848 = vld [vmem:[%s210 + $0x94] sm:$0xf]
      %v849 = vld [vmem:[%s210 + $0x98] sm:$0xf]
      %v850 = vld [vmem:[%s210 + $0x9c] sm:$0xf]
      %v851 = vld [vmem:[%s210 + $0xa0] sm:$0xf]
      %v852 = vld [vmem:[%s210 + $0xa4] sm:$0xf]
      %v853 = vld [vmem:[%s210 + $0xa8] sm:$0xf]
      %v854 = vld [vmem:[%s210 + $0xac] sm:$0xf]
      %v855 = vld [vmem:[%s210 + $0xb0] sm:$0xf]
      %v856 = vld [vmem:[%s210 + $0xb4] sm:$0xf]
      %v857 = vld [vmem:[%s210 + $0xb8] sm:$0xf]
      %v858 = vld [vmem:[%s210 + $0xbc] sm:$0xf]
      %v907 = vunpack.c.l.b16 %v811
      %v908 = vunpack.c.l.b16 %v812
      %v909 = vunpack.c.l.b16 %v813
      %v910 = vunpack.c.l.b16 %v814
      %v911 = vunpack.c.l.b16 %v815
      %v912 = vunpack.c.l.b16 %v816
      %v913 = vunpack.c.l.b16 %v817
      %v914 = vunpack.c.l.b16 %v818
      %v915 = vunpack.c.l.b16 %v819
      %v916 = vunpack.c.l.b16 %v820
      %v917 = vunpack.c.l.b16 %v821
      %v918 = vunpack.c.l.b16 %v822
      %v919 = vunpack.c.l.b16 %v823
      %v920 = vunpack.c.l.b16 %v824
      %v921 = vunpack.c.l.b16 %v825
      %v922 = vunpack.c.l.b16 %v826
      %v923 = vunpack.c.l.b16 %v827
      %v924 = vunpack.c.l.b16 %v828
      %v925 = vunpack.c.l.b16 %v829
      %v926 = vunpack.c.l.b16 %v830
      %v927 = vunpack.c.l.b16 %v831
      %v928 = vunpack.c.l.b16 %v832
      %v929 = vunpack.c.l.b16 %v833
      %v930 = vunpack.c.l.b16 %v834
      %v931 = vunpack.c.l.b16 %v835
      %v932 = vunpack.c.l.b16 %v836
      %v933 = vunpack.c.l.b16 %v837
      %v934 = vunpack.c.l.b16 %v838
      %v935 = vunpack.c.l.b16 %v839
      %v936 = vunpack.c.l.b16 %v840
      %v937 = vunpack.c.l.b16 %v841
      %v938 = vunpack.c.l.b16 %v842
      %v939 = vunpack.c.l.b16 %v843
      %v940 = vunpack.c.l.b16 %v844
      %v941 = vunpack.c.l.b16 %v845
      %v942 = vunpack.c.l.b16 %v846
      %v943 = vunpack.c.l.b16 %v847
      %v944 = vunpack.c.l.b16 %v848
      %v945 = vunpack.c.l.b16 %v849
      %v946 = vunpack.c.l.b16 %v850
      %v947 = vunpack.c.l.b16 %v851
      %v948 = vunpack.c.l.b16 %v852
      %v949 = vunpack.c.l.b16 %v853
      %v950 = vunpack.c.l.b16 %v854
      %v951 = vunpack.c.l.b16 %v855
      %v952 = vunpack.c.l.b16 %v856
      %v953 = vunpack.c.l.b16 %v857
      %v954 = vunpack.c.l.b16 %v858
      %v955 = vpack.c.b16 %v908, %v907
      %v956 = vpack.c.b16 %v910, %v909
      %v957 = vpack.c.b16 %v912, %v911
      %v958 = vpack.c.b16 %v914, %v913
      %v959 = vpack.c.b16 %v916, %v915
      %v960 = vpack.c.b16 %v918, %v917
      %v961 = vpack.c.b16 %v920, %v919
      %v962 = vpack.c.b16 %v922, %v921
      %v963 = vpack.c.b16 %v924, %v923
      %v964 = vpack.c.b16 %v926, %v925
      %v965 = vpack.c.b16 %v928, %v927
      %v966 = vpack.c.b16 %v930, %v929
      %v967 = vpack.c.b16 %v932, %v931
      %v968 = vpack.c.b16 %v934, %v933
      %v969 = vpack.c.b16 %v936, %v935
      %v970 = vpack.c.b16 %v938, %v937
      %v971 = vpack.c.b16 %v940, %v939
      %v972 = vpack.c.b16 %v942, %v941
      %v973 = vpack.c.b16 %v944, %v943
      %v974 = vpack.c.b16 %v946, %v945
      %v975 = vpack.c.b16 %v948, %v947
      %v976 = vpack.c.b16 %v950, %v949
      %v977 = vpack.c.b16 %v952, %v951
      %v978 = vpack.c.b16 %v954, %v953
      %1003 = vmatprep.subr.bf16.mxu0 0
      %1004 = vmatpush1.bf16.msra.mxu0 %v955
      %1005 = vmatprep.subr.bf16.mxu0 0
      %1006 = vmatpush1.bf16.msra.mxu0 %v956
      %1007 = vmatprep.subr.bf16.mxu0 0
      %1008 = vmatpush1.bf16.msra.mxu0 %v957
      %1009 = vmatprep.subr.bf16.mxu0 0
      %1010 = vmatpush1.bf16.msra.mxu0 %v958
      %1011 = vmatprep.subr.bf16.mxu0 0
      %1012 = vmatpush1.bf16.msra.mxu0 %v959
      %1013 = vmatprep.subr.bf16.mxu0 0
      %1014 = vmatpush1.bf16.msra.mxu0 %v960
      %1015 = vmatprep.subr.bf16.mxu0 0
      %1016 = vmatpush1.bf16.msra.mxu0 %v961
      %1017 = vmatprep.subr.bf16.mxu0 0
      %1018 = vmatpush1.bf16.msra.mxu0 %v962
      %1019 = vmatprep.subr.bf16.mxu0 0
      %1020 = vmatpush1.bf16.msra.mxu0 %v963
      %1021 = vmatprep.subr.bf16.mxu0 0
      %1022 = vmatpush1.bf16.msra.mxu0 %v964
      %1023 = vmatprep.subr.bf16.mxu0 0
      %1024 = vmatpush1.bf16.msra.mxu0 %v965
      %1025 = vmatprep.subr.bf16.mxu0 0
      %1026 = vmatpush1.bf16.msra.mxu0 %v966
      %1027 = vmatprep.subr.bf16.mxu0 0
      %1028 = vmatpush1.bf16.msra.mxu0 %v967
      %1029 = vmatprep.subr.bf16.mxu0 0
      %1030 = vmatpush1.bf16.msra.mxu0 %v968
      %1031 = vmatprep.subr.bf16.mxu0 0
      %1032 = vmatpush1.bf16.msra.mxu0 %v969
      %1033 = vmatprep.subr.bf16.mxu0 0
      %1034 = vmatpush1.bf16.msra.mxu0 %v970
      %1035 = vmatprep.mubr.bf16.mxu0 %v483
      %1036 = vmatmul.mubr.bf16.gmra.mrb[0].mxu0 %v381
      %v1037 = vpop.f32.mrb[0].mxu0
      %v1038 = vadd.f32 0.0, %v1037
      %v1039 = vpop.f32.mrb[0].mxu0
      %v1040 = vpop.f32.mrb[0].mxu0
      %v1041 = vadd.f32 0.0, %v1040
      %v1042 = vpop.f32.mrb[0].mxu0
      %1043 = vmatprep.mubr.bf16.mxu0 %v495
      %1044 = vmatmul.mubr.bf16.gmra.mrb[0].mxu0 %v382
      %v1045 = vpop.f32.mrb[0].mxu0
      %v1046 = vadd.f32 0.0, %v1045
      %v1047 = vpop.f32.mrb[0].mxu0
      %v1048 = vpop.f32.mrb[0].mxu0
      %v1049 = vadd.f32 0.0, %v1048
      %v1050 = vpop.f32.mrb[0].mxu0
      %1051 = vmatprep.mubr.bf16.mxu0 %v507
      %1052 = vmatmul.mubr.bf16.gmra.mrb[0].mxu0 %v383
      %v1053 = vpop.f32.mrb[0].mxu0
      %v1054 = vadd.f32 0.0, %v1053
      %v1055 = vpop.f32.mrb[0].mxu0
      %v1056 = vpop.f32.mrb[0].mxu0
      %v1057 = vadd.f32 0.0, %v1056
      %v1058 = vpop.f32.mrb[0].mxu0
      %1059 = vmatprep.mubr.bf16.mxu0 %v519
      %1060 = vmatmul.mubr.bf16.gmra.mrb[0].mxu0 %v384
      %v1061 = vpop.f32.mrb[0].mxu0
      %v1062 = vadd.f32 0.0, %v1061
      %v1063 = vpop.f32.mrb[0].mxu0
      %v1064 = vpop.f32.mrb[0].mxu0
      %v1065 = vadd.f32 0.0, %v1064
      %v1066 = vpop.f32.mrb[0].mxu0
      %1067 = vmatprep.mubr.bf16.mxu0 %v531
      %1068 = vmatmul.mubr.bf16.gmra.mrb[0].mxu0 %v385
      %v1069 = vpop.f32.mrb[0].mxu0
      %v1070 = vadd.f32 0.0, %v1069
      %v1071 = vpop.f32.mrb[0].mxu0
      %v1072 = vpop.f32.mrb[0].mxu0
      %v1073 = vadd.f32 0.0, %v1072
      %v1074 = vpop.f32.mrb[0].mxu0
      %1075 = vmatprep.mubr.bf16.mxu0 %v543
      %1076 = vmatmul.mubr.bf16.gmra.mrb[0].mxu0 %v386
      %v1077 = vpop.f32.mrb[0].mxu0
      %v1078 = vadd.f32 0.0, %v1077
      %v1079 = vpop.f32.mrb[0].mxu0
      %v1080 = vpop.f32.mrb[0].mxu0
      %v1081 = vadd.f32 0.0, %v1080
      %v1082 = vpop.f32.mrb[0].mxu0
      %1083 = vmatprep.mubr.bf16.mxu0 %v555
      %1084 = vmatmul.mubr.bf16.gmra.mrb[0].mxu0 %v387
      %v1085 = vpop.f32.mrb[0].mxu0
      %v1086 = vadd.f32 0.0, %v1085
      %v1087 = vpop.f32.mrb[0].mxu0
      %v1088 = vpop.f32.mrb[0].mxu0
      %v1089 = vadd.f32 0.0, %v1088
      %v1090 = vpop.f32.mrb[0].mxu0
      %1091 = vmatprep.mubr.bf16.mxu0 %v567
      %1092 = vmatmul.mubr.bf16.gmra.mrb[0].mxu0 %v388
      %v1093 = vpop.f32.mrb[0].mxu0
      %v1094 = vadd.f32 0.0, %v1093
      %v1095 = vpop.f32.mrb[0].mxu0
      %v1096 = vpop.f32.mrb[0].mxu0
      %v1097 = vadd.f32 0.0, %v1096
      %v1098 = vpop.f32.mrb[0].mxu0
      %1099 = vmatprep.mubr.bf16.mxu0 %v579
      %1100 = vmatmul.mubr.bf16.gmra.mrb[0].mxu0 %v389
      %v1101 = vpop.f32.mrb[0].mxu0
      %v1102 = vadd.f32 0.0, %v1101
      %v1103 = vpop.f32.mrb[0].mxu0
      %v1104 = vpop.f32.mrb[0].mxu0
      %v1105 = vadd.f32 0.0, %v1104
      %v1106 = vpop.f32.mrb[0].mxu0
      %1107 = vmatprep.mubr.bf16.mxu0 %v591
      %1108 = vmatmul.mubr.bf16.gmra.mrb[0].mxu0 %v390
      %v1109 = vpop.f32.mrb[0].mxu0
      %v1110 = vadd.f32 0.0, %v1109
      %v1111 = vpop.f32.mrb[0].mxu0
      %v1112 = vpop.f32.mrb[0].mxu0
      %v1113 = vadd.f32 0.0, %v1112
      %v1114 = vpop.f32.mrb[0].mxu0
      %1115 = vmatprep.mubr.bf16.mxu0 %v603
      %1116 = vmatmul.mubr.bf16.gmra.mrb[0].mxu0 %v391
      %v1117 = vpop.f32.mrb[0].mxu0
      %v1118 = vadd.f32 0.0, %v1117
      %v1119 = vpop.f32.mrb[0].mxu0
      %v1120 = vpop.f32.mrb[0].mxu0
      %v1121 = vadd.f32 0.0, %v1120
      %v1122 = vpop.f32.mrb[0].mxu0
      %1123 = vmatprep.mubr.bf16.mxu0 %v615
      %1124 = vmatmul.mubr.bf16.gmra.mrb[0].mxu0 %v392
      %v1125 = vpop.f32.mrb[0].mxu0
      %v1126 = vadd.f32 0.0, %v1125
      %v1127 = vpop.f32.mrb[0].mxu0
      %v1128 = vpop.f32.mrb[0].mxu0
      %v1129 = vadd.f32 0.0, %v1128
      %v1130 = vpop.f32.mrb[0].mxu0
      %1131 = vmatprep.mubr.bf16.mxu0 %v627
      %1132 = vmatmul.mubr.bf16.gmra.mrb[0].mxu0 %v393
      %v1133 = vpop.f32.mrb[0].mxu0
      %v1134 = vadd.f32 0.0, %v1133
      %v1135 = vpop.f32.mrb[0].mxu0
      %v1136 = vpop.f32.mrb[0].mxu0
      %v1137 = vadd.f32 0.0, %v1136
      %v1138 = vpop.f32.mrb[0].mxu0
      %1139 = vmatprep.mubr.bf16.mxu0 %v639
      %1140 = vmatmul.mubr.bf16.gmra.mrb[0].mxu0 %v394
      %v1141 = vpop.f32.mrb[0].mxu0
      %v1142 = vadd.f32 0.0, %v1141
      %v1143 = vpop.f32.mrb[0].mxu0
      %v1144 = vpop.f32.mrb[0].mxu0
      %v1145 = vadd.f32 0.0, %v1144
      %v1146 = vpop.f32.mrb[0].mxu0
      %1147 = vmatprep.mubr.bf16.mxu0 %v651
      %1148 = vmatmul.mubr.bf16.gmra.mrb[0].mxu0 %v395
      %v1149 = vpop.f32.mrb[0].mxu0
      %v1150 = vadd.f32 0.0, %v1149
      %v1151 = vpop.f32.mrb[0].mxu0
      %v1152 = vpop.f32.mrb[0].mxu0
      %v1153 = vadd.f32 0.0, %v1152
      %v1154 = vpop.f32.mrb[0].mxu0
      %1155 = vmatprep.mubr.bf16.mxu0 %v663
      %1156 = vmatmul.mubr.bf16.gmra.mrb[0].mxu0 %v396
      %v1157 = vpop.f32.mrb[0].mxu0
      %v1158 = vadd.f32 0.0, %v1157
      %v1159 = vpop.f32.mrb[0].mxu0
      %v1160 = vpop.f32.mrb[0].mxu0
      %v1161 = vadd.f32 0.0, %v1160
      %v1162 = vpop.f32.mrb[0].mxu0
      %1163 = vdwg.mxu0
      %1164 = vmatprep.subr.bf16.mxu0 0
      %1165 = vmatpush1.bf16.msra.mxu0 %v971
      %1166 = vmatprep.subr.bf16.mxu0 0
      %1167 = vmatpush1.bf16.msra.mxu0 %v972
      %1168 = vmatprep.subr.bf16.mxu0 0
      %1169 = vmatpush1.bf16.msra.mxu0 %v973
      %1170 = vmatprep.subr.bf16.mxu0 0
      %1171 = vmatpush1.bf16.msra.mxu0 %v974
      %1172 = vmatprep.subr.bf16.mxu0 0
      %1173 = vmatpush1.bf16.msra.mxu0 %v975
      %1174 = vmatprep.subr.bf16.mxu0 0
      %1175 = vmatpush1.bf16.msra.mxu0 %v976
      %1176 = vmatprep.subr.bf16.mxu0 0
      %1177 = vmatpush1.bf16.msra.mxu0 %v977
      %1178 = vmatprep.subr.bf16.mxu0 0
      %1179 = vmatpush1.bf16.msra.mxu0 %v978
      %1180 = vmatprep.subr.bf16.mxu0 0
      %1181 = vmatpush1.bf16.msra.mxu0 0
      %1182 = vmatprep.subr.bf16.mxu0 0
      %1183 = vmatpush1.bf16.msra.mxu0 0
      %1184 = vmatprep.subr.bf16.mxu0 0
      %1185 = vmatpush1.bf16.msra.mxu0 0
      %1186 = vmatprep.subr.bf16.mxu0 0
      %1187 = vmatpush1.bf16.msra.mxu0 0
      %1188 = vmatprep.subr.bf16.mxu0 0
      %1189 = vmatpush1.bf16.msra.mxu0 0
      %1190 = vmatprep.subr.bf16.mxu0 0
      %1191 = vmatpush1.bf16.msra.mxu0 0
      %1192 = vmatprep.subr.bf16.mxu0 0
      %1193 = vmatpush1.bf16.msra.mxu0 0
      %1194 = vmatprep.subr.bf16.mxu0 0
      %1195 = vmatpush1.bf16.msra.mxu0 0
      %1196 = vmatprep.mubr.bf16.mxu0 0
      %1197 = vmatmul.mubr.bf16.gmra.mrb[0].mxu0 %v709
      %v1198 = vpop.f32.mrb[0].mxu0
      %v1199 = vadd.f32 %v1038, %v1198
      %v1200 = vpop.f32.mrb[0].mxu0
      %v1201 = vpop.f32.mrb[0].mxu0
      %v1202 = vadd.f32 %v1041, %v1201
      %v1203 = vpop.f32.mrb[0].mxu0
      %1204 = vmatprep.mubr.bf16.mxu0 0
      %1205 = vmatmul.mubr.bf16.gmra.mrb[0].mxu0 %v712
      %v1206 = vpop.f32.mrb[0].mxu0
      %v1207 = vadd.f32 %v1046, %v1206
      %v1208 = vpop.f32.mrb[0].mxu0
      %v1209 = vpop.f32.mrb[0].mxu0
      %v1210 = vadd.f32 %v1049, %v1209
      %v1211 = vpop.f32.mrb[0].mxu0
      %1212 = vmatprep.mubr.bf16.mxu0 0
      %1213 = vmatmul.mubr.bf16.gmra.mrb[0].mxu0 %v715
      %v1214 = vpop.f32.mrb[0].mxu0
      %v1215 = vadd.f32 %v1054, %v1214
      %v1216 = vpop.f32.mrb[0].mxu0
      %v1217 = vpop.f32.mrb[0].mxu0
      %v1218 = vadd.f32 %v1057, %v1217
      %v1219 = vpop.f32.mrb[0].mxu0
      %1220 = vmatprep.mubr.bf16.mxu0 0
      %1221 = vmatmul.mubr.bf16.gmra.mrb[0].mxu0 %v718
      %v1222 = vpop.f32.mrb[0].mxu0
      %v1223 = vadd.f32 %v1062, %v1222
      %v1224 = vpop.f32.mrb[0].mxu0
      %v1225 = vpop.f32.mrb[0].mxu0
      %v1226 = vadd.f32 %v1065, %v1225
      %v1227 = vpop.f32.mrb[0].mxu0
      %1228 = vmatprep.mubr.bf16.mxu0 0
      %1229 = vmatmul.mubr.bf16.gmra.mrb[0].mxu0 %v721
      %v1230 = vpop.f32.mrb[0].mxu0
      %v1231 = vadd.f32 %v1070, %v1230
      %v1232 = vpop.f32.mrb[0].mxu0
      %v1233 = vpop.f32.mrb[0].mxu0
      %v1234 = vadd.f32 %v1073, %v1233
      %v1235 = vpop.f32.mrb[0].mxu0
      %1236 = vmatprep.mubr.bf16.mxu0 0
      %1237 = vmatmul.mubr.bf16.gmra.mrb[0].mxu0 %v724
      %v1238 = vpop.f32.mrb[0].mxu0
      %v1239 = vadd.f32 %v1078, %v1238
      %v1240 = vpop.f32.mrb[0].mxu0
      %v1241 = vpop.f32.mrb[0].mxu0
      %v1242 = vadd.f32 %v1081, %v1241
      %v1243 = vpop.f32.mrb[0].mxu0
      %1244 = vmatprep.mubr.bf16.mxu0 0
      %1245 = vmatmul.mubr.bf16.gmra.mrb[0].mxu0 %v727
      %v1246 = vpop.f32.mrb[0].mxu0
      %v1247 = vadd.f32 %v1086, %v1246
      %v1248 = vpop.f32.mrb[0].mxu0
      %v1249 = vpop.f32.mrb[0].mxu0
      %v1250 = vadd.f32 %v1089, %v1249
      %v1251 = vpop.f32.mrb[0].mxu0
      %1252 = vmatprep.mubr.bf16.mxu0 0
      %1253 = vmatmul.mubr.bf16.gmra.mrb[0].mxu0 %v730
      %v1254 = vpop.f32.mrb[0].mxu0
      %v1255 = vadd.f32 %v1094, %v1254
      %v1256 = vpop.f32.mrb[0].mxu0
      %v1257 = vpop.f32.mrb[0].mxu0
      %v1258 = vadd.f32 %v1097, %v1257
      %v1259 = vpop.f32.mrb[0].mxu0
      %1260 = vmatprep.mubr.bf16.mxu0 0
      %1261 = vmatmul.mubr.bf16.gmra.mrb[0].mxu0 %v733
      %v1262 = vpop.f32.mrb[0].mxu0
      %v1263 = vadd.f32 %v1102, %v1262
      %v1264 = vpop.f32.mrb[0].mxu0
      %v1265 = vpop.f32.mrb[0].mxu0
      %v1266 = vadd.f32 %v1105, %v1265
      %v1267 = vpop.f32.mrb[0].mxu0
      %1268 = vmatprep.mubr.bf16.mxu0 0
      %1269 = vmatmul.mubr.bf16.gmra.mrb[0].mxu0 %v736
      %v1270 = vpop.f32.mrb[0].mxu0
      %v1271 = vadd.f32 %v1110, %v1270
      %v1272 = vpop.f32.mrb[0].mxu0
      %v1273 = vpop.f32.mrb[0].mxu0
      %v1274 = vadd.f32 %v1113, %v1273
      %v1275 = vpop.f32.mrb[0].mxu0
      %1276 = vmatprep.mubr.bf16.mxu0 0
      %1277 = vmatmul.mubr.bf16.gmra.mrb[0].mxu0 %v739
      %v1278 = vpop.f32.mrb[0].mxu0
      %v1279 = vadd.f32 %v1118, %v1278
      %v1280 = vpop.f32.mrb[0].mxu0
      %v1281 = vpop.f32.mrb[0].mxu0
      %v1282 = vadd.f32 %v1121, %v1281
      %v1283 = vpop.f32.mrb[0].mxu0
      %1284 = vmatprep.mubr.bf16.mxu0 0
      %1285 = vmatmul.mubr.bf16.gmra.mrb[0].mxu0 %v742
      %v1286 = vpop.f32.mrb[0].mxu0
      %v1287 = vadd.f32 %v1126, %v1286
      %v1288 = vpop.f32.mrb[0].mxu0
      %v1289 = vpop.f32.mrb[0].mxu0
      %v1290 = vadd.f32 %v1129, %v1289
      %v1291 = vpop.f32.mrb[0].mxu0
      %1292 = vmatprep.mubr.bf16.mxu0 0
      %1293 = vmatmul.mubr.bf16.gmra.mrb[0].mxu0 %v745
      %v1294 = vpop.f32.mrb[0].mxu0
      %v1295 = vadd.f32 %v1134, %v1294
      %v1296 = vpop.f32.mrb[0].mxu0
      %v1297 = vpop.f32.mrb[0].mxu0
      %v1298 = vadd.f32 %v1137, %v1297
      %v1299 = vpop.f32.mrb[0].mxu0
      %1300 = vmatprep.mubr.bf16.mxu0 0
      %1301 = vmatmul.mubr.bf16.gmra.mrb[0].mxu0 %v748
      %v1302 = vpop.f32.mrb[0].mxu0
      %v1303 = vadd.f32 %v1142, %v1302
      %v1304 = vpop.f32.mrb[0].mxu0
      %v1305 = vpop.f32.mrb[0].mxu0
      %v1306 = vadd.f32 %v1145, %v1305
      %v1307 = vpop.f32.mrb[0].mxu0
      %1308 = vmatprep.mubr.bf16.mxu0 0
      %1309 = vmatmul.mubr.bf16.gmra.mrb[0].mxu0 %v751
      %v1310 = vpop.f32.mrb[0].mxu0
      %v1311 = vadd.f32 %v1150, %v1310
      %v1312 = vpop.f32.mrb[0].mxu0
      %v1313 = vpop.f32.mrb[0].mxu0
      %v1314 = vadd.f32 %v1153, %v1313
      %v1315 = vpop.f32.mrb[0].mxu0
      %1316 = vmatprep.mubr.bf16.mxu0 0
      %1317 = vmatmul.mubr.bf16.gmra.mrb[0].mxu0 %v754
      %v1318 = vpop.f32.mrb[0].mxu0
      %v1319 = vadd.f32 %v1158, %v1318
      %v1320 = vpop.f32.mrb[0].mxu0
      %v1321 = vpop.f32.mrb[0].mxu0
      %v1322 = vadd.f32 %v1161, %v1321
      %v1323 = vpop.f32.mrb[0].mxu0
      %1324 = vdwg.mxu0
      %v1325 = vadd.f32 %v779, %v1199
      %v1326 = vadd.f32 %v780, %v1202
      %v1327 = vadd.f32 %v781, %v1207
      %v1328 = vadd.f32 %v782, %v1210
      %v1329 = vadd.f32 %v783, %v1215
      %v1330 = vadd.f32 %v784, %v1218
      %v1331 = vadd.f32 %v785, %v1223
      %v1332 = vadd.f32 %v786, %v1226
      %v1333 = vadd.f32 %v787, %v1231
      %v1334 = vadd.f32 %v788, %v1234
      %v1335 = vadd.f32 %v789, %v1239
      %v1336 = vadd.f32 %v790, %v1242
      %v1337 = vadd.f32 %v791, %v1247
      %v1338 = vadd.f32 %v792, %v1250
      %v1339 = vadd.f32 %v793, %v1255
      %v1340 = vadd.f32 %v794, %v1258
      %v1341 = vadd.f32 %v795, %v1263
      %v1342 = vadd.f32 %v796, %v1266
      %v1343 = vadd.f32 %v797, %v1271
      %v1344 = vadd.f32 %v798, %v1274
      %v1345 = vadd.f32 %v799, %v1279
      %v1346 = vadd.f32 %v800, %v1282
      %v1347 = vadd.f32 %v801, %v1287
      %v1348 = vadd.f32 %v802, %v1290
      %v1349 = vadd.f32 %v803, %v1295
      %v1350 = vadd.f32 %v804, %v1298
      %v1351 = vadd.f32 %v805, %v1303
      %v1352 = vadd.f32 %v806, %v1306
      %v1353 = vadd.f32 %v807, %v1311
      %v1354 = vadd.f32 %v808, %v1314
      %v1355 = vadd.f32 %v809, %v1319
      %v1356 = vadd.f32 %v810, %v1322
      %1357 = vst [vmem:[#allocation2] sm:$0xff] %v1325
      %1358 = vst [vmem:[#allocation2 + $0x8] sm:$0xff] %v1326
      %1359 = vst [vmem:[#allocation2 + $0x10] sm:$0xff] %v1327
      %1360 = vst [vmem:[#allocation2 + $0x18] sm:$0xff] %v1328
      %1361 = vst [vmem:[#allocation2 + $0x20] sm:$0xff] %v1329
      %1362 = vst [vmem:[#allocation2 + $0x28] sm:$0xff] %v1330
      %1363 = vst [vmem:[#allocation2 + $0x30] sm:$0xff] %v1331
      %1364 = vst [vmem:[#allocation2 + $0x38] sm:$0xff] %v1332
      %1365 = vst [vmem:[#allocation2 + $0x40] sm:$0xff] %v1333
      %1366 = vst [vmem:[#allocation2 + $0x48] sm:$0xff] %v1334
      %1367 = vst [vmem:[#allocation2 + $0x50] sm:$0xff] %v1335
      %1368 = vst [vmem:[#allocation2 + $0x58] sm:$0xff] %v1336
      %1369 = vst [vmem:[#allocation2 + $0x60] sm:$0xff] %v1337
      %1370 = vst [vmem:[#allocation2 + $0x68] sm:$0xff] %v1338
      %1371 = vst [vmem:[#allocation2 + $0x70] sm:$0xff] %v1339
      %1372 = vst [vmem:[#allocation2 + $0x78] sm:$0xff] %v1340
      %1373 = vst [vmem:[#allocation2 + $0x80] sm:$0xff] %v1341
      %1374 = vst [vmem:[#allocation2 + $0x88] sm:$0xff] %v1342
      %1375 = vst [vmem:[#allocation2 + $0x90] sm:$0xff] %v1343
      %1376 = vst [vmem:[#allocation2 + $0x98] sm:$0xff] %v1344
      %1377 = vst [vmem:[#allocation2 + $0xa0] sm:$0xff] %v1345
      %1378 = vst [vmem:[#allocation2 + $0xa8] sm:$0xff] %v1346
      %1379 = vst [vmem:[#allocation2 + $0xb0] sm:$0xff] %v1347
      %1380 = vst [vmem:[#allocation2 + $0xb8] sm:$0xff] %v1348
      %1381 = vst [vmem:[#allocation2 + $0xc0] sm:$0xff] %v1349
      %1382 = vst [vmem:[#allocation2 + $0xc8] sm:$0xff] %v1350
      %1383 = vst [vmem:[#allocation2 + $0xd0] sm:$0xff] %v1351
      %1384 = vst [vmem:[#allocation2 + $0xd8] sm:$0xff] %v1352
      %1385 = vst [vmem:[#allocation2 + $0xe0] sm:$0xff] %v1353
      %1386 = vst [vmem:[#allocation2 + $0xe8] sm:$0xff] %v1354
      %1387 = vst [vmem:[#allocation2 + $0xf0] sm:$0xff] %v1355
      %1388 = vst [vmem:[#allocation2 + $0xf8] sm:$0xff] %v1356
      %v1389 = vld [vmem:[#allocation2] sm:$0xff]
      %v1390 = vld [vmem:[#allocation2 + $0x8] sm:$0xff]
      %v1391 = vld [vmem:[#allocation2 + $0x10] sm:$0xff]
      %v1392 = vld [vmem:[#allocation2 + $0x18] sm:$0xff]
      %v1393 = vld [vmem:[#allocation2 + $0x20] sm:$0xff]
      %v1394 = vld [vmem:[#allocation2 + $0x28] sm:$0xff]
      %v1395 = vld [vmem:[#allocation2 + $0x30] sm:$0xff]
      %v1396 = vld [vmem:[#allocation2 + $0x38] sm:$0xff]
      %v1397 = vld [vmem:[#allocation2 + $0x40] sm:$0xff]
      %v1398 = vld [vmem:[#allocation2 + $0x48] sm:$0xff]
      %v1399 = vld [vmem:[#allocation2 + $0x50] sm:$0xff]
      %v1400 = vld [vmem:[#allocation2 + $0x58] sm:$0xff]
      %v1401 = vld [vmem:[#allocation2 + $0x60] sm:$0xff]
      %v1402 = vld [vmem:[#allocation2 + $0x68] sm:$0xff]
      %v1403 = vld [vmem:[#allocation2 + $0x70] sm:$0xff]
      %v1404 = vld [vmem:[#allocation2 + $0x78] sm:$0xff]
      %v1405 = vld [vmem:[#allocation2 + $0x80] sm:$0xff]
      %v1406 = vld [vmem:[#allocation2 + $0x88] sm:$0xff]
      %v1407 = vld [vmem:[#allocation2 + $0x90] sm:$0xff]
      %v1408 = vld [vmem:[#allocation2 + $0x98] sm:$0xff]
      %v1409 = vld [vmem:[#allocation2 + $0xa0] sm:$0xff]
      %v1410 = vld [vmem:[#allocation2 + $0xa8] sm:$0xff]
      %v1411 = vld [vmem:[#allocation2 + $0xb0] sm:$0xff]
      %v1412 = vld [vmem:[#allocation2 + $0xb8] sm:$0xff]
      %v1413 = vld [vmem:[#allocation2 + $0xc0] sm:$0xff]
      %v1414 = vld [vmem:[#allocation2 + $0xc8] sm:$0xff]
      %v1415 = vld [vmem:[#allocation2 + $0xd0] sm:$0xff]
      %v1416 = vld [vmem:[#allocation2 + $0xd8] sm:$0xff]
      %v1417 = vld [vmem:[#allocation2 + $0xe0] sm:$0xff]
      %v1418 = vld [vmem:[#allocation2 + $0xe8] sm:$0xff]
      %v1419 = vld [vmem:[#allocation2 + $0xf0] sm:$0xff]
      %v1420 = vld [vmem:[#allocation2 + $0xf8] sm:$0xff]
      %s1421 = scalar_lea.vmem %s210, 192
      %v1422 = vld [vmem:[%s1421] sm:$0xf]
      %v1423 = vld [vmem:[%s1421 + $0x4] sm:$0xf]
      %v1424 = vld [vmem:[%s1421 + $0x8] sm:$0xf]
      %v1425 = vld [vmem:[%s1421 + $0xc] sm:$0xf]
      %v1426 = vld [vmem:[%s1421 + $0x10] sm:$0xf]
      %v1427 = vld [vmem:[%s1421 + $0x14] sm:$0xf]
      %v1428 = vld [vmem:[%s1421 + $0x18] sm:$0xf]
      %v1429 = vld [vmem:[%s1421 + $0x1c] sm:$0xf]
      %v1430 = vld [vmem:[%s1421 + $0x20] sm:$0xf]
      %v1431 = vld [vmem:[%s1421 + $0x24] sm:$0xf]
      %v1432 = vld [vmem:[%s1421 + $0x28] sm:$0xf]
      %v1433 = vld [vmem:[%s1421 + $0x2c] sm:$0xf]
      %v1434 = vld [vmem:[%s1421 + $0x30] sm:$0xf]
      %v1435 = vld [vmem:[%s1421 + $0x34] sm:$0xf]
      %v1436 = vld [vmem:[%s1421 + $0x38] sm:$0xf]
      %v1437 = vld [vmem:[%s1421 + $0x3c] sm:$0xf]
      %v1438 = vld [vmem:[%s1421 + $0x40] sm:$0xf]
      %v1439 = vld [vmem:[%s1421 + $0x44] sm:$0xf]
      %v1440 = vld [vmem:[%s1421 + $0x48] sm:$0xf]
      %v1441 = vld [vmem:[%s1421 + $0x4c] sm:$0xf]
      %v1442 = vld [vmem:[%s1421 + $0x50] sm:$0xf]
      %v1443 = vld [vmem:[%s1421 + $0x54] sm:$0xf]
      %v1444 = vld [vmem:[%s1421 + $0x58] sm:$0xf]
      %v1445 = vld [vmem:[%s1421 + $0x5c] sm:$0xf]
      %v1446 = vld [vmem:[%s1421 + $0x60] sm:$0xf]
      %v1447 = vld [vmem:[%s1421 + $0x64] sm:$0xf]
      %v1448 = vld [vmem:[%s1421 + $0x68] sm:$0xf]
      %v1449 = vld [vmem:[%s1421 + $0x6c] sm:$0xf]
      %v1450 = vld [vmem:[%s1421 + $0x70] sm:$0xf]
      %v1451 = vld [vmem:[%s1421 + $0x74] sm:$0xf]
      %v1452 = vld [vmem:[%s1421 + $0x78] sm:$0xf]
      %v1453 = vld [vmem:[%s1421 + $0x7c] sm:$0xf]
      %v1454 = vld [vmem:[%s1421 + $0x80] sm:$0xf]
      %v1455 = vld [vmem:[%s1421 + $0x84] sm:$0xf]
      %v1456 = vld [vmem:[%s1421 + $0x88] sm:$0xf]
      %v1457 = vld [vmem:[%s1421 + $0x8c] sm:$0xf]
      %v1458 = vld [vmem:[%s1421 + $0x90] sm:$0xf]
      %v1459 = vld [vmem:[%s1421 + $0x94] sm:$0xf]
      %v1460 = vld [vmem:[%s1421 + $0x98] sm:$0xf]
      %v1461 = vld [vmem:[%s1421 + $0x9c] sm:$0xf]
      %v1462 = vld [vmem:[%s1421 + $0xa0] sm:$0xf]
      %v1463 = vld [vmem:[%s1421 + $0xa4] sm:$0xf]
      %v1464 = vld [vmem:[%s1421 + $0xa8] sm:$0xf]
      %v1465 = vld [vmem:[%s1421 + $0xac] sm:$0xf]
      %v1466 = vld [vmem:[%s1421 + $0xb0] sm:$0xf]
      %v1467 = vld [vmem:[%s1421 + $0xb4] sm:$0xf]
      %v1468 = vld [vmem:[%s1421 + $0xb8] sm:$0xf]
      %v1469 = vld [vmem:[%s1421 + $0xbc] sm:$0xf]
      %v1518 = vunpack.c.l.b16 %v1422
      %v1519 = vunpack.c.l.b16 %v1423
      %v1520 = vunpack.c.l.b16 %v1424
      %v1521 = vunpack.c.l.b16 %v1425
      %v1522 = vunpack.c.l.b16 %v1426
      %v1523 = vunpack.c.l.b16 %v1427
      %v1524 = vunpack.c.l.b16 %v1428
      %v1525 = vunpack.c.l.b16 %v1429
      %v1526 = vunpack.c.l.b16 %v1430
      %v1527 = vunpack.c.l.b16 %v1431
      %v1528 = vunpack.c.l.b16 %v1432
      %v1529 = vunpack.c.l.b16 %v1433
      %v1530 = vunpack.c.l.b16 %v1434
      %v1531 = vunpack.c.l.b16 %v1435
      %v1532 = vunpack.c.l.b16 %v1436
      %v1533 = vunpack.c.l.b16 %v1437
      %v1534 = vunpack.c.l.b16 %v1438
      %v1535 = vunpack.c.l.b16 %v1439
      %v1536 = vunpack.c.l.b16 %v1440
      %v1537 = vunpack.c.l.b16 %v1441
      %v1538 = vunpack.c.l.b16 %v1442
      %v1539 = vunpack.c.l.b16 %v1443
      %v1540 = vunpack.c.l.b16 %v1444
      %v1541 = vunpack.c.l.b16 %v1445
      %v1542 = vunpack.c.l.b16 %v1446
      %v1543 = vunpack.c.l.b16 %v1447
      %v1544 = vunpack.c.l.b16 %v1448
      %v1545 = vunpack.c.l.b16 %v1449
      %v1546 = vunpack.c.l.b16 %v1450
      %v1547 = vunpack.c.l.b16 %v1451
      %v1548 = vunpack.c.l.b16 %v1452
      %v1549 = vunpack.c.l.b16 %v1453
      %v1550 = vunpack.c.l.b16 %v1454
      %v1551 = vunpack.c.l.b16 %v1455
      %v1552 = vunpack.c.l.b16 %v1456
      %v1553 = vunpack.c.l.b16 %v1457
      %v1554 = vunpack.c.l.b16 %v1458
      %v1555 = vunpack.c.l.b16 %v1459
      %v1556 = vunpack.c.l.b16 %v1460
      %v1557 = vunpack.c.l.b16 %v1461
      %v1558 = vunpack.c.l.b16 %v1462
      %v1559 = vunpack.c.l.b16 %v1463
      %v1560 = vunpack.c.l.b16 %v1464
      %v1561 = vunpack.c.l.b16 %v1465
      %v1562 = vunpack.c.l.b16 %v1466
      %v1563 = vunpack.c.l.b16 %v1467
      %v1564 = vunpack.c.l.b16 %v1468
      %v1565 = vunpack.c.l.b16 %v1469
      %v1566 = vpack.c.b16 %v1519, %v1518
      %v1567 = vpack.c.b16 %v1521, %v1520
      %v1568 = vpack.c.b16 %v1523, %v1522
      %v1569 = vpack.c.b16 %v1525, %v1524
      %v1570 = vpack.c.b16 %v1527, %v1526
      %v1571 = vpack.c.b16 %v1529, %v1528
      %v1572 = vpack.c.b16 %v1531, %v1530
      %v1573 = vpack.c.b16 %v1533, %v1532
      %v1574 = vpack.c.b16 %v1535, %v1534
      %v1575 = vpack.c.b16 %v1537, %v1536
      %v1576 = vpack.c.b16 %v1539, %v1538
      %v1577 = vpack.c.b16 %v1541, %v1540
      %v1578 = vpack.c.b16 %v1543, %v1542
      %v1579 = vpack.c.b16 %v1545, %v1544
      %v1580 = vpack.c.b16 %v1547, %v1546
      %v1581 = vpack.c.b16 %v1549, %v1548
      %v1582 = vpack.c.b16 %v1551, %v1550
      %v1583 = vpack.c.b16 %v1553, %v1552
      %v1584 = vpack.c.b16 %v1555, %v1554
      %v1585 = vpack.c.b16 %v1557, %v1556
      %v1586 = vpack.c.b16 %v1559, %v1558
      %v1587 = vpack.c.b16 %v1561, %v1560
      %v1588 = vpack.c.b16 %v1563, %v1562
      %v1589 = vpack.c.b16 %v1565, %v1564
      %1614 = vmatprep.subr.bf16.mxu0 0
      %1615 = vmatpush1.bf16.msra.mxu0 %v1566
      %1616 = vmatprep.subr.bf16.mxu0 0
      %1617 = vmatpush1.bf16.msra.mxu0 %v1567
      %1618 = vmatprep.subr.bf16.mxu0 0
      %1619 = vmatpush1.bf16.msra.mxu0 %v1568
      %1620 = vmatprep.subr.bf16.mxu0 0
      %1621 = vmatpush1.bf16.msra.mxu0 %v1569
      %1622 = vmatprep.subr.bf16.mxu0 0
      %1623 = vmatpush1.bf16.msra.mxu0 %v1570
      %1624 = vmatprep.subr.bf16.mxu0 0
      %1625 = vmatpush1.bf16.msra.mxu0 %v1571
      %1626 = vmatprep.subr.bf16.mxu0 0
      %1627 = vmatpush1.bf16.msra.mxu0 %v1572
      %1628 = vmatprep.subr.bf16.mxu0 0
      %1629 = vmatpush1.bf16.msra.mxu0 %v1573
      %1630 = vmatprep.subr.bf16.mxu0 0
      %1631 = vmatpush1.bf16.msra.mxu0 %v1574
      %1632 = vmatprep.subr.bf16.mxu0 0
      %1633 = vmatpush1.bf16.msra.mxu0 %v1575
      %1634 = vmatprep.subr.bf16.mxu0 0
      %1635 = vmatpush1.bf16.msra.mxu0 %v1576
      %1636 = vmatprep.subr.bf16.mxu0 0
      %1637 = vmatpush1.bf16.msra.mxu0 %v1577
      %1638 = vmatprep.subr.bf16.mxu0 0
      %1639 = vmatpush1.bf16.msra.mxu0 %v1578
      %1640 = vmatprep.subr.bf16.mxu0 0
      %1641 = vmatpush1.bf16.msra.mxu0 %v1579
      %1642 = vmatprep.subr.bf16.mxu0 0
      %1643 = vmatpush1.bf16.msra.mxu0 %v1580
      %1644 = vmatprep.subr.bf16.mxu0 0
      %1645 = vmatpush1.bf16.msra.mxu0 %v1581
      %1646 = vmatprep.mubr.bf16.mxu0 %v495
      %1647 = vmatmul.mubr.bf16.gmra.mrb[0].mxu0 %v382
      %v1648 = vpop.f32.mrb[0].mxu0
      %v1649 = vadd.f32 0.0, %v1648
      %v1650 = vpop.f32.mrb[0].mxu0
      %v1651 = vpop.f32.mrb[0].mxu0
      %v1652 = vadd.f32 0.0, %v1651
      %v1653 = vpop.f32.mrb[0].mxu0
      %1654 = vmatprep.mubr.bf16.mxu0 %v507
      %1655 = vmatmul.mubr.bf16.gmra.mrb[0].mxu0 %v383
      %v1656 = vpop.f32.mrb[0].mxu0
      %v1657 = vadd.f32 0.0, %v1656
      %v1658 = vpop.f32.mrb[0].mxu0
      %v1659 = vpop.f32.mrb[0].mxu0
      %v1660 = vadd.f32 0.0, %v1659
      %v1661 = vpop.f32.mrb[0].mxu0
      %1662 = vmatprep.mubr.bf16.mxu0 %v519
      %1663 = vmatmul.mubr.bf16.gmra.mrb[0].mxu0 %v384
      %v1664 = vpop.f32.mrb[0].mxu0
      %v1665 = vadd.f32 0.0, %v1664
      %v1666 = vpop.f32.mrb[0].mxu0
      %v1667 = vpop.f32.mrb[0].mxu0
      %v1668 = vadd.f32 0.0, %v1667
      %v1669 = vpop.f32.mrb[0].mxu0
      %1670 = vmatprep.mubr.bf16.mxu0 %v531
      %1671 = vmatmul.mubr.bf16.gmra.mrb[0].mxu0 %v385
      %v1672 = vpop.f32.mrb[0].mxu0
      %v1673 = vadd.f32 0.0, %v1672
      %v1674 = vpop.f32.mrb[0].mxu0
      %v1675 = vpop.f32.mrb[0].mxu0
      %v1676 = vadd.f32 0.0, %v1675
      %v1677 = vpop.f32.mrb[0].mxu0
      %1678 = vmatprep.mubr.bf16.mxu0 %v543
      %1679 = vmatmul.mubr.bf16.gmra.mrb[0].mxu0 %v386
      %v1680 = vpop.f32.mrb[0].mxu0
      %v1681 = vadd.f32 0.0, %v1680
      %v1682 = vpop.f32.mrb[0].mxu0
      %v1683 = vpop.f32.mrb[0].mxu0
      %v1684 = vadd.f32 0.0, %v1683
      %v1685 = vpop.f32.mrb[0].mxu0
      %1686 = vmatprep.mubr.bf16.mxu0 %v555
      %1687 = vmatmul.mubr.bf16.gmra.mrb[0].mxu0 %v387
      %v1688 = vpop.f32.mrb[0].mxu0
      %v1689 = vadd.f32 0.0, %v1688
      %v1690 = vpop.f32.mrb[0].mxu0
      %v1691 = vpop.f32.mrb[0].mxu0
      %v1692 = vadd.f32 0.0, %v1691
      %v1693 = vpop.f32.mrb[0].mxu0
      %1694 = vmatprep.mubr.bf16.mxu0 %v567
      %1695 = vmatmul.mubr.bf16.gmra.mrb[0].mxu0 %v388
      %v1696 = vpop.f32.mrb[0].mxu0
      %v1697 = vadd.f32 0.0, %v1696
      %v1698 = vpop.f32.mrb[0].mxu0
      %v1699 = vpop.f32.mrb[0].mxu0
      %v1700 = vadd.f32 0.0, %v1699
      %v1701 = vpop.f32.mrb[0].mxu0
      %1702 = vmatprep.mubr.bf16.mxu0 %v579
      %1703 = vmatmul.mubr.bf16.gmra.mrb[0].mxu0 %v389
      %v1704 = vpop.f32.mrb[0].mxu0
      %v1705 = vadd.f32 0.0, %v1704
      %v1706 = vpop.f32.mrb[0].mxu0
      %v1707 = vpop.f32.mrb[0].mxu0
      %v1708 = vadd.f32 0.0, %v1707
      %v1709 = vpop.f32.mrb[0].mxu0
      %1710 = vmatprep.mubr.bf16.mxu0 %v591
      %1711 = vmatmul.mubr.bf16.gmra.mrb[0].mxu0 %v390
      %v1712 = vpop.f32.mrb[0].mxu0
      %v1713 = vadd.f32 0.0, %v1712
      %v1714 = vpop.f32.mrb[0].mxu0
      %v1715 = vpop.f32.mrb[0].mxu0
      %v1716 = vadd.f32 0.0, %v1715
      %v1717 = vpop.f32.mrb[0].mxu0
      %1718 = vmatprep.mubr.bf16.mxu0 %v603
      %1719 = vmatmul.mubr.bf16.gmra.mrb[0].mxu0 %v391
      %v1720 = vpop.f32.mrb[0].mxu0
      %v1721 = vadd.f32 0.0, %v1720
      %v1722 = vpop.f32.mrb[0].mxu0
      %v1723 = vpop.f32.mrb[0].mxu0
      %v1724 = vadd.f32 0.0, %v1723
      %v1725 = vpop.f32.mrb[0].mxu0
      %1726 = vmatprep.mubr.bf16.mxu0 %v615
      %1727 = vmatmul.mubr.bf16.gmra.mrb[0].mxu0 %v392
      %v1728 = vpop.f32.mrb[0].mxu0
      %v1729 = vadd.f32 0.0, %v1728
      %v1730 = vpop.f32.mrb[0].mxu0
      %v1731 = vpop.f32.mrb[0].mxu0
      %v1732 = vadd.f32 0.0, %v1731
      %v1733 = vpop.f32.mrb[0].mxu0
      %1734 = vmatprep.mubr.bf16.mxu0 %v627
      %1735 = vmatmul.mubr.bf16.gmra.mrb[0].mxu0 %v393
      %v1736 = vpop.f32.mrb[0].mxu0
      %v1737 = vadd.f32 0.0, %v1736
      %v1738 = vpop.f32.mrb[0].mxu0
      %v1739 = vpop.f32.mrb[0].mxu0
      %v1740 = vadd.f32 0.0, %v1739
      %v1741 = vpop.f32.mrb[0].mxu0
      %1742 = vmatprep.mubr.bf16.mxu0 %v639
      %1743 = vmatmul.mubr.bf16.gmra.mrb[0].mxu0 %v394
      %v1744 = vpop.f32.mrb[0].mxu0
      %v1745 = vadd.f32 0.0, %v1744
      %v1746 = vpop.f32.mrb[0].mxu0
      %v1747 = vpop.f32.mrb[0].mxu0
      %v1748 = vadd.f32 0.0, %v1747
      %v1749 = vpop.f32.mrb[0].mxu0
      %1750 = vmatprep.mubr.bf16.mxu0 %v651
      %1751 = vmatmul.mubr.bf16.gmra.mrb[0].mxu0 %v395
      %v1752 = vpop.f32.mrb[0].mxu0
      %v1753 = vadd.f32 0.0, %v1752
      %v1754 = vpop.f32.mrb[0].mxu0
      %v1755 = vpop.f32.mrb[0].mxu0
      %v1756 = vadd.f32 0.0, %v1755
      %v1757 = vpop.f32.mrb[0].mxu0
      %1758 = vmatprep.mubr.bf16.mxu0 %v663
      %1759 = vmatmul.mubr.bf16.gmra.mrb[0].mxu0 %v396
      %v1760 = vpop.f32.mrb[0].mxu0
      %v1761 = vadd.f32 0.0, %v1760
      %v1762 = vpop.f32.mrb[0].mxu0
      %v1763 = vpop.f32.mrb[0].mxu0
      %v1764 = vadd.f32 0.0, %v1763
      %v1765 = vpop.f32.mrb[0].mxu0
      %1766 = vmatprep.mubr.bf16.mxu0 %v675
      %1767 = vmatmul.mubr.bf16.gmra.mrb[0].mxu0 %v397
      %v1768 = vpop.f32.mrb[0].mxu0
      %v1769 = vadd.f32 0.0, %v1768
      %v1770 = vpop.f32.mrb[0].mxu0
      %v1771 = vpop.f32.mrb[0].mxu0
      %v1772 = vadd.f32 0.0, %v1771
      %v1773 = vpop.f32.mrb[0].mxu0
      %1774 = vdwg.mxu0
      %1775 = vmatprep.subr.bf16.mxu0 0
      %1776 = vmatpush1.bf16.msra.mxu0 %v1582
      %1777 = vmatprep.subr.bf16.mxu0 0
      %1778 = vmatpush1.bf16.msra.mxu0 %v1583
      %1779 = vmatprep.subr.bf16.mxu0 0
      %1780 = vmatpush1.bf16.msra.mxu0 %v1584
      %1781 = vmatprep.subr.bf16.mxu0 0
      %1782 = vmatpush1.bf16.msra.mxu0 %v1585
      %1783 = vmatprep.subr.bf16.mxu0 0
      %1784 = vmatpush1.bf16.msra.mxu0 %v1586
      %1785 = vmatprep.subr.bf16.mxu0 0
      %1786 = vmatpush1.bf16.msra.mxu0 %v1587
      %1787 = vmatprep.subr.bf16.mxu0 0
      %1788 = vmatpush1.bf16.msra.mxu0 %v1588
      %1789 = vmatprep.subr.bf16.mxu0 0
      %1790 = vmatpush1.bf16.msra.mxu0 %v1589
      %1791 = vmatprep.subr.bf16.mxu0 0
      %1792 = vmatpush1.bf16.msra.mxu0 0
      %1793 = vmatprep.subr.bf16.mxu0 0
      %1794 = vmatpush1.bf16.msra.mxu0 0
      %1795 = vmatprep.subr.bf16.mxu0 0
      %1796 = vmatpush1.bf16.msra.mxu0 0
      %1797 = vmatprep.subr.bf16.mxu0 0
      %1798 = vmatpush1.bf16.msra.mxu0 0
      %1799 = vmatprep.subr.bf16.mxu0 0
      %1800 = vmatpush1.bf16.msra.mxu0 0
      %1801 = vmatprep.subr.bf16.mxu0 0
      %1802 = vmatpush1.bf16.msra.mxu0 0
      %1803 = vmatprep.subr.bf16.mxu0 0
      %1804 = vmatpush1.bf16.msra.mxu0 0
      %1805 = vmatprep.subr.bf16.mxu0 0
      %1806 = vmatpush1.bf16.msra.mxu0 0
      %1807 = vmatprep.mubr.bf16.mxu0 0
      %1808 = vmatmul.mubr.bf16.gmra.mrb[0].mxu0 %v712
      %v1809 = vpop.f32.mrb[0].mxu0
      %v1810 = vadd.f32 %v1649, %v1809
      %v1811 = vpop.f32.mrb[0].mxu0
      %v1812 = vpop.f32.mrb[0].mxu0
      %v1813 = vadd.f32 %v1652, %v1812
      %v1814 = vpop.f32.mrb[0].mxu0
      %1815 = vmatprep.mubr.bf16.mxu0 0
      %1816 = vmatmul.mubr.bf16.gmra.mrb[0].mxu0 %v715
      %v1817 = vpop.f32.mrb[0].mxu0
      %v1818 = vadd.f32 %v1657, %v1817
      %v1819 = vpop.f32.mrb[0].mxu0
      %v1820 = vpop.f32.mrb[0].mxu0
      %v1821 = vadd.f32 %v1660, %v1820
      %v1822 = vpop.f32.mrb[0].mxu0
      %1823 = vmatprep.mubr.bf16.mxu0 0
      %1824 = vmatmul.mubr.bf16.gmra.mrb[0].mxu0 %v718
      %v1825 = vpop.f32.mrb[0].mxu0
      %v1826 = vadd.f32 %v1665, %v1825
      %v1827 = vpop.f32.mrb[0].mxu0
      %v1828 = vpop.f32.mrb[0].mxu0
      %v1829 = vadd.f32 %v1668, %v1828
      %v1830 = vpop.f32.mrb[0].mxu0
      %1831 = vmatprep.mubr.bf16.mxu0 0
      %1832 = vmatmul.mubr.bf16.gmra.mrb[0].mxu0 %v721
      %v1833 = vpop.f32.mrb[0].mxu0
      %v1834 = vadd.f32 %v1673, %v1833
      %v1835 = vpop.f32.mrb[0].mxu0
      %v1836 = vpop.f32.mrb[0].mxu0
      %v1837 = vadd.f32 %v1676, %v1836
      %v1838 = vpop.f32.mrb[0].mxu0
      %1839 = vmatprep.mubr.bf16.mxu0 0
      %1840 = vmatmul.mubr.bf16.gmra.mrb[0].mxu0 %v724
      %v1841 = vpop.f32.mrb[0].mxu0
      %v1842 = vadd.f32 %v1681, %v1841
      %v1843 = vpop.f32.mrb[0].mxu0
      %v1844 = vpop.f32.mrb[0].mxu0
      %v1845 = vadd.f32 %v1684, %v1844
      %v1846 = vpop.f32.mrb[0].mxu0
      %1847 = vmatprep.mubr.bf16.mxu0 0
      %1848 = vmatmul.mubr.bf16.gmra.mrb[0].mxu0 %v727
      %v1849 = vpop.f32.mrb[0].mxu0
      %v1850 = vadd.f32 %v1689, %v1849
      %v1851 = vpop.f32.mrb[0].mxu0
      %v1852 = vpop.f32.mrb[0].mxu0
      %v1853 = vadd.f32 %v1692, %v1852
      %v1854 = vpop.f32.mrb[0].mxu0
      %1855 = vmatprep.mubr.bf16.mxu0 0
      %1856 = vmatmul.mubr.bf16.gmra.mrb[0].mxu0 %v730
      %v1857 = vpop.f32.mrb[0].mxu0
      %v1858 = vadd.f32 %v1697, %v1857
      %v1859 = vpop.f32.mrb[0].mxu0
      %v1860 = vpop.f32.mrb[0].mxu0
      %v1861 = vadd.f32 %v1700, %v1860
      %v1862 = vpop.f32.mrb[0].mxu0
      %1863 = vmatprep.mubr.bf16.mxu0 0
      %1864 = vmatmul.mubr.bf16.gmra.mrb[0].mxu0 %v733
      %v1865 = vpop.f32.mrb[0].mxu0
      %v1866 = vadd.f32 %v1705, %v1865
      %v1867 = vpop.f32.mrb[0].mxu0
      %v1868 = vpop.f32.mrb[0].mxu0
      %v1869 = vadd.f32 %v1708, %v1868
      %v1870 = vpop.f32.mrb[0].mxu0
      %1871 = vmatprep.mubr.bf16.mxu0 0
      %1872 = vmatmul.mubr.bf16.gmra.mrb[0].mxu0 %v736
      %v1873 = vpop.f32.mrb[0].mxu0
      %v1874 = vadd.f32 %v1713, %v1873
      %v1875 = vpop.f32.mrb[0].mxu0
      %v1876 = vpop.f32.mrb[0].mxu0
      %v1877 = vadd.f32 %v1716, %v1876
      %v1878 = vpop.f32.mrb[0].mxu0
      %1879 = vmatprep.mubr.bf16.mxu0 0
      %1880 = vmatmul.mubr.bf16.gmra.mrb[0].mxu0 %v739
      %v1881 = vpop.f32.mrb[0].mxu0
      %v1882 = vadd.f32 %v1721, %v1881
      %v1883 = vpop.f32.mrb[0].mxu0
      %v1884 = vpop.f32.mrb[0].mxu0
      %v1885 = vadd.f32 %v1724, %v1884
      %v1886 = vpop.f32.mrb[0].mxu0
      %1887 = vmatprep.mubr.bf16.mxu0 0
      %1888 = vmatmul.mubr.bf16.gmra.mrb[0].mxu0 %v742
      %v1889 = vpop.f32.mrb[0].mxu0
      %v1890 = vadd.f32 %v1729, %v1889
      %v1891 = vpop.f32.mrb[0].mxu0
      %v1892 = vpop.f32.mrb[0].mxu0
      %v1893 = vadd.f32 %v1732, %v1892
      %v1894 = vpop.f32.mrb[0].mxu0
      %1895 = vmatprep.mubr.bf16.mxu0 0
      %1896 = vmatmul.mubr.bf16.gmra.mrb[0].mxu0 %v745
      %v1897 = vpop.f32.mrb[0].mxu0
      %v1898 = vadd.f32 %v1737, %v1897
      %v1899 = vpop.f32.mrb[0].mxu0
      %v1900 = vpop.f32.mrb[0].mxu0
      %v1901 = vadd.f32 %v1740, %v1900
      %v1902 = vpop.f32.mrb[0].mxu0
      %1903 = vmatprep.mubr.bf16.mxu0 0
      %1904 = vmatmul.mubr.bf16.gmra.mrb[0].mxu0 %v748
      %v1905 = vpop.f32.mrb[0].mxu0
      %v1906 = vadd.f32 %v1745, %v1905
      %v1907 = vpop.f32.mrb[0].mxu0
      %v1908 = vpop.f32.mrb[0].mxu0
      %v1909 = vadd.f32 %v1748, %v1908
      %v1910 = vpop.f32.mrb[0].mxu0
      %1911 = vmatprep.mubr.bf16.mxu0 0
      %1912 = vmatmul.mubr.bf16.gmra.mrb[0].mxu0 %v751
      %v1913 = vpop.f32.mrb[0].mxu0
      %v1914 = vadd.f32 %v1753, %v1913
      %v1915 = vpop.f32.mrb[0].mxu0
      %v1916 = vpop.f32.mrb[0].mxu0
      %v1917 = vadd.f32 %v1756, %v1916
      %v1918 = vpop.f32.mrb[0].mxu0
      %1919 = vmatprep.mubr.bf16.mxu0 0
      %1920 = vmatmul.mubr.bf16.gmra.mrb[0].mxu0 %v754
      %v1921 = vpop.f32.mrb[0].mxu0
      %v1922 = vadd.f32 %v1761, %v1921
      %v1923 = vpop.f32.mrb[0].mxu0
      %v1924 = vpop.f32.mrb[0].mxu0
      %v1925 = vadd.f32 %v1764, %v1924
      %v1926 = vpop.f32.mrb[0].mxu0
      %1927 = vmatprep.mubr.bf16.mxu0 0
      %1928 = vmatmul.mubr.bf16.gmra.mrb[0].mxu0 %v757
      %v1929 = vpop.f32.mrb[0].mxu0
      %v1930 = vadd.f32 %v1769, %v1929
      %v1931 = vpop.f32.mrb[0].mxu0
      %v1932 = vpop.f32.mrb[0].mxu0
      %v1933 = vadd.f32 %v1772, %v1932
      %v1934 = vpop.f32.mrb[0].mxu0
      %1935 = vdwg.mxu0
      %v1936 = vadd.f32 %v1389, %v1810
      %v1937 = vadd.f32 %v1390, %v1813
      %v1938 = vadd.f32 %v1391, %v1818
      %v1939 = vadd.f32 %v1392, %v1821
      %v1940 = vadd.f32 %v1393, %v1826
      %v1941 = vadd.f32 %v1394, %v1829
      %v1942 = vadd.f32 %v1395, %v1834
      %v1943 = vadd.f32 %v1396, %v1837
      %v1944 = vadd.f32 %v1397, %v1842
      %v1945 = vadd.f32 %v1398, %v1845
      %v1946 = vadd.f32 %v1399, %v1850
      %v1947 = vadd.f32 %v1400, %v1853
      %v1948 = vadd.f32 %v1401, %v1858
      %v1949 = vadd.f32 %v1402, %v1861
      %v1950 = vadd.f32 %v1403, %v1866
      %v1951 = vadd.f32 %v1404, %v1869
      %v1952 = vadd.f32 %v1405, %v1874
      %v1953 = vadd.f32 %v1406, %v1877
      %v1954 = vadd.f32 %v1407, %v1882
      %v1955 = vadd.f32 %v1408, %v1885
      %v1956 = vadd.f32 %v1409, %v1890
      %v1957 = vadd.f32 %v1410, %v1893
      %v1958 = vadd.f32 %v1411, %v1898
      %v1959 = vadd.f32 %v1412, %v1901
      %v1960 = vadd.f32 %v1413, %v1906
      %v1961 = vadd.f32 %v1414, %v1909
      %v1962 = vadd.f32 %v1415, %v1914
      %v1963 = vadd.f32 %v1416, %v1917
      %v1964 = vadd.f32 %v1417, %v1922
      %v1965 = vadd.f32 %v1418, %v1925
      %v1966 = vadd.f32 %v1419, %v1930
      %v1967 = vadd.f32 %v1420, %v1933
      %1968 = vst [vmem:[#allocation2] sm:$0xff] %v1936
      %1969 = vst [vmem:[#allocation2 + $0x8] sm:$0xff] %v1937
      %1970 = vst [vmem:[#allocation2 + $0x10] sm:$0xff] %v1938
      %1971 = vst [vmem:[#allocation2 + $0x18] sm:$0xff] %v1939
      %1972 = vst [vmem:[#allocation2 + $0x20] sm:$0xff] %v1940
      %1973 = vst [vmem:[#allocation2 + $0x28] sm:$0xff] %v1941
      %1974 = vst [vmem:[#allocation2 + $0x30] sm:$0xff] %v1942
      %1975 = vst [vmem:[#allocation2 + $0x38] sm:$0xff] %v1943
      %1976 = vst [vmem:[#allocation2 + $0x40] sm:$0xff] %v1944
      %1977 = vst [vmem:[#allocation2 + $0x48] sm:$0xff] %v1945
      %1978 = vst [vmem:[#allocation2 + $0x50] sm:$0xff] %v1946
      %1979 = vst [vmem:[#allocation2 + $0x58] sm:$0xff] %v1947
      %1980 = vst [vmem:[#allocation2 + $0x60] sm:$0xff] %v1948
      %1981 = vst [vmem:[#allocation2 + $0x68] sm:$0xff] %v1949
      %1982 = vst [vmem:[#allocation2 + $0x70] sm:$0xff] %v1950
      %1983 = vst [vmem:[#allocation2 + $0x78] sm:$0xff] %v1951
      %1984 = vst [vmem:[#allocation2 + $0x80] sm:$0xff] %v1952
      %1985 = vst [vmem:[#allocation2 + $0x88] sm:$0xff] %v1953
      %1986 = vst [vmem:[#allocation2 + $0x90] sm:$0xff] %v1954
      %1987 = vst [vmem:[#allocation2 + $0x98] sm:$0xff] %v1955
      %1988 = vst [vmem:[#allocation2 + $0xa0] sm:$0xff] %v1956
      %1989 = vst [vmem:[#allocation2 + $0xa8] sm:$0xff] %v1957
      %1990 = vst [vmem:[#allocation2 + $0xb0] sm:$0xff] %v1958
      %1991 = vst [vmem:[#allocation2 + $0xb8] sm:$0xff] %v1959
      %1992 = vst [vmem:[#allocation2 + $0xc0] sm:$0xff] %v1960
      %1993 = vst [vmem:[#allocation2 + $0xc8] sm:$0xff] %v1961
      %1994 = vst [vmem:[#allocation2 + $0xd0] sm:$0xff] %v1962
      %1995 = vst [vmem:[#allocation2 + $0xd8] sm:$0xff] %v1963
      %1996 = vst [vmem:[#allocation2 + $0xe0] sm:$0xff] %v1964
      %1997 = vst [vmem:[#allocation2 + $0xe8] sm:$0xff] %v1965
      %1998 = vst [vmem:[#allocation2 + $0xf0] sm:$0xff] %v1966
      %1999 = vst [vmem:[#allocation2 + $0xf8] sm:$0xff] %v1967
      %v2000 = vld [vmem:[#allocation2] sm:$0xff]
      %v2001 = vld [vmem:[#allocation2 + $0x8] sm:$0xff]
      %v2002 = vld [vmem:[#allocation2 + $0x10] sm:$0xff]
      %v2003 = vld [vmem:[#allocation2 + $0x18] sm:$0xff]
      %v2004 = vld [vmem:[#allocation2 + $0x20] sm:$0xff]
      %v2005 = vld [vmem:[#allocation2 + $0x28] sm:$0xff]
      %v2006 = vld [vmem:[#allocation2 + $0x30] sm:$0xff]
      %v2007 = vld [vmem:[#allocation2 + $0x38] sm:$0xff]
      %v2008 = vld [vmem:[#allocation2 + $0x40] sm:$0xff]
      %v2009 = vld [vmem:[#allocation2 + $0x48] sm:$0xff]
      %v2010 = vld [vmem:[#allocation2 + $0x50] sm:$0xff]
      %v2011 = vld [vmem:[#allocation2 + $0x58] sm:$0xff]
      %v2012 = vld [vmem:[#allocation2 + $0x60] sm:$0xff]
      %v2013 = vld [vmem:[#allocation2 + $0x68] sm:$0xff]
      %v2014 = vld [vmem:[#allocation2 + $0x70] sm:$0xff]
      %v2015 = vld [vmem:[#allocation2 + $0x78] sm:$0xff]
      %v2016 = vld [vmem:[#allocation2 + $0x80] sm:$0xff]
      %v2017 = vld [vmem:[#allocation2 + $0x88] sm:$0xff]
      %v2018 = vld [vmem:[#allocation2 + $0x90] sm:$0xff]
      %v2019 = vld [vmem:[#allocation2 + $0x98] sm:$0xff]
      %v2020 = vld [vmem:[#allocation2 + $0xa0] sm:$0xff]
      %v2021 = vld [vmem:[#allocation2 + $0xa8] sm:$0xff]
      %v2022 = vld [vmem:[#allocation2 + $0xb0] sm:$0xff]
      %v2023 = vld [vmem:[#allocation2 + $0xb8] sm:$0xff]
      %v2024 = vld [vmem:[#allocation2 + $0xc0] sm:$0xff]
      %v2025 = vld [vmem:[#allocation2 + $0xc8] sm:$0xff]
      %v2026 = vld [vmem:[#allocation2 + $0xd0] sm:$0xff]
      %v2027 = vld [vmem:[#allocation2 + $0xd8] sm:$0xff]
      %v2028 = vld [vmem:[#allocation2 + $0xe0] sm:$0xff]
      %v2029 = vld [vmem:[#allocation2 + $0xe8] sm:$0xff]
      %v2030 = vld [vmem:[#allocation2 + $0xf0] sm:$0xff]
      %v2031 = vld [vmem:[#allocation2 + $0xf8] sm:$0xff]
      %s2032 = scalar_lea.vmem %s210, 384
      %v2033 = vld [vmem:[%s2032] sm:$0xf]
      %v2034 = vld [vmem:[%s2032 + $0x4] sm:$0xf]
      %v2035 = vld [vmem:[%s2032 + $0x8] sm:$0xf]
      %v2036 = vld [vmem:[%s2032 + $0xc] sm:$0xf]
      %v2037 = vld [vmem:[%s2032 + $0x10] sm:$0xf]
      %v2038 = vld [vmem:[%s2032 + $0x14] sm:$0xf]
      %v2039 = vld [vmem:[%s2032 + $0x18] sm:$0xf]
      %v2040 = vld [vmem:[%s2032 + $0x1c] sm:$0xf]
      %v2041 = vld [vmem:[%s2032 + $0x20] sm:$0xf]
      %v2042 = vld [vmem:[%s2032 + $0x24] sm:$0xf]
      %v2043 = vld [vmem:[%s2032 + $0x28] sm:$0xf]
      %v2044 = vld [vmem:[%s2032 + $0x2c] sm:$0xf]
      %v2045 = vld [vmem:[%s2032 + $0x30] sm:$0xf]
      %v2046 = vld [vmem:[%s2032 + $0x34] sm:$0xf]
      %v2047 = vld [vmem:[%s2032 + $0x38] sm:$0xf]
      %v2048 = vld [vmem:[%s2032 + $0x3c] sm:$0xf]
      %v2049 = vld [vmem:[%s2032 + $0x40] sm:$0xf]
      %v2050 = vld [vmem:[%s2032 + $0x44] sm:$0xf]
      %v2051 = vld [vmem:[%s2032 + $0x48] sm:$0xf]
      %v2052 = vld [vmem:[%s2032 + $0x4c] sm:$0xf]
      %v2053 = vld [vmem:[%s2032 + $0x50] sm:$0xf]
      %v2054 = vld [vmem:[%s2032 + $0x54] sm:$0xf]
      %v2055 = vld [vmem:[%s2032 + $0x58] sm:$0xf]
      %v2056 = vld [vmem:[%s2032 + $0x5c] sm:$0xf]
      %v2057 = vld [vmem:[%s2032 + $0x60] sm:$0xf]
      %v2058 = vld [vmem:[%s2032 + $0x64] sm:$0xf]
      %v2059 = vld [vmem:[%s2032 + $0x68] sm:$0xf]
      %v2060 = vld [vmem:[%s2032 + $0x6c] sm:$0xf]
      %v2061 = vld [vmem:[%s2032 + $0x70] sm:$0xf]
      %v2062 = vld [vmem:[%s2032 + $0x74] sm:$0xf]
      %v2063 = vld [vmem:[%s2032 + $0x78] sm:$0xf]
      %v2064 = vld [vmem:[%s2032 + $0x7c] sm:$0xf]
      %v2065 = vld [vmem:[%s2032 + $0x80] sm:$0xf]
      %v2066 = vld [vmem:[%s2032 + $0x84] sm:$0xf]
      %v2067 = vld [vmem:[%s2032 + $0x88] sm:$0xf]
      %v2068 = vld [vmem:[%s2032 + $0x8c] sm:$0xf]
      %v2069 = vld [vmem:[%s2032 + $0x90] sm:$0xf]
      %v2070 = vld [vmem:[%s2032 + $0x94] sm:$0xf]
      %v2071 = vld [vmem:[%s2032 + $0x98] sm:$0xf]
      %v2072 = vld [vmem:[%s2032 + $0x9c] sm:$0xf]
      %v2073 = vld [vmem:[%s2032 + $0xa0] sm:$0xf]
      %v2074 = vld [vmem:[%s2032 + $0xa4] sm:$0xf]
      %v2075 = vld [vmem:[%s2032 + $0xa8] sm:$0xf]
      %v2076 = vld [vmem:[%s2032 + $0xac] sm:$0xf]
      %v2077 = vld [vmem:[%s2032 + $0xb0] sm:$0xf]
      %v2078 = vld [vmem:[%s2032 + $0xb4] sm:$0xf]
      %v2079 = vld [vmem:[%s2032 + $0xb8] sm:$0xf]
      %v2080 = vld [vmem:[%s2032 + $0xbc] sm:$0xf]
      %v2129 = vunpack.c.l.b16 %v2033
      %v2130 = vunpack.c.l.b16 %v2034
      %v2131 = vunpack.c.l.b16 %v2035
      %v2132 = vunpack.c.l.b16 %v2036
      %v2133 = vunpack.c.l.b16 %v2037
      %v2134 = vunpack.c.l.b16 %v2038
      %v2135 = vunpack.c.l.b16 %v2039
      %v2136 = vunpack.c.l.b16 %v2040
      %v2137 = vunpack.c.l.b16 %v2041
      %v2138 = vunpack.c.l.b16 %v2042
      %v2139 = vunpack.c.l.b16 %v2043
      %v2140 = vunpack.c.l.b16 %v2044
      %v2141 = vunpack.c.l.b16 %v2045
      %v2142 = vunpack.c.l.b16 %v2046
      %v2143 = vunpack.c.l.b16 %v2047
      %v2144 = vunpack.c.l.b16 %v2048
      %v2145 = vunpack.c.l.b16 %v2049
      %v2146 = vunpack.c.l.b16 %v2050
      %v2147 = vunpack.c.l.b16 %v2051
      %v2148 = vunpack.c.l.b16 %v2052
      %v2149 = vunpack.c.l.b16 %v2053
      %v2150 = vunpack.c.l.b16 %v2054
      %v2151 = vunpack.c.l.b16 %v2055
      %v2152 = vunpack.c.l.b16 %v2056
      %v2153 = vunpack.c.l.b16 %v2057
      %v2154 = vunpack.c.l.b16 %v2058
      %v2155 = vunpack.c.l.b16 %v2059
      %v2156 = vunpack.c.l.b16 %v2060
      %v2157 = vunpack.c.l.b16 %v2061
      %v2158 = vunpack.c.l.b16 %v2062
      %v2159 = vunpack.c.l.b16 %v2063
      %v2160 = vunpack.c.l.b16 %v2064
      %v2161 = vunpack.c.l.b16 %v2065
      %v2162 = vunpack.c.l.b16 %v2066
      %v2163 = vunpack.c.l.b16 %v2067
      %v2164 = vunpack.c.l.b16 %v2068
      %v2165 = vunpack.c.l.b16 %v2069
      %v2166 = vunpack.c.l.b16 %v2070
      %v2167 = vunpack.c.l.b16 %v2071
      %v2168 = vunpack.c.l.b16 %v2072
      %v2169 = vunpack.c.l.b16 %v2073
      %v2170 = vunpack.c.l.b16 %v2074
      %v2171 = vunpack.c.l.b16 %v2075
      %v2172 = vunpack.c.l.b16 %v2076
      %v2173 = vunpack.c.l.b16 %v2077
      %v2174 = vunpack.c.l.b16 %v2078
      %v2175 = vunpack.c.l.b16 %v2079
      %v2176 = vunpack.c.l.b16 %v2080
      %v2177 = vpack.c.b16 %v2130, %v2129
      %v2178 = vpack.c.b16 %v2132, %v2131
      %v2179 = vpack.c.b16 %v2134, %v2133
      %v2180 = vpack.c.b16 %v2136, %v2135
      %v2181 = vpack.c.b16 %v2138, %v2137
      %v2182 = vpack.c.b16 %v2140, %v2139
      %v2183 = vpack.c.b16 %v2142, %v2141
      %v2184 = vpack.c.b16 %v2144, %v2143
      %v2185 = vpack.c.b16 %v2146, %v2145
      %v2186 = vpack.c.b16 %v2148, %v2147
      %v2187 = vpack.c.b16 %v2150, %v2149
      %v2188 = vpack.c.b16 %v2152, %v2151
      %v2189 = vpack.c.b16 %v2154, %v2153
      %v2190 = vpack.c.b16 %v2156, %v2155
      %v2191 = vpack.c.b16 %v2158, %v2157
      %v2192 = vpack.c.b16 %v2160, %v2159
      %v2193 = vpack.c.b16 %v2162, %v2161
      %v2194 = vpack.c.b16 %v2164, %v2163
      %v2195 = vpack.c.b16 %v2166, %v2165
      %v2196 = vpack.c.b16 %v2168, %v2167
      %v2197 = vpack.c.b16 %v2170, %v2169
      %v2198 = vpack.c.b16 %v2172, %v2171
      %v2199 = vpack.c.b16 %v2174, %v2173
      %v2200 = vpack.c.b16 %v2176, %v2175
      %2225 = vmatprep.subr.bf16.mxu0 0
      %2226 = vmatpush1.bf16.msra.mxu0 %v2177
      %2227 = vmatprep.subr.bf16.mxu0 0
      %2228 = vmatpush1.bf16.msra.mxu0 %v2178
      %2229 = vmatprep.subr.bf16.mxu0 0
      %2230 = vmatpush1.bf16.msra.mxu0 %v2179
      %2231 = vmatprep.subr.bf16.mxu0 0
      %2232 = vmatpush1.bf16.msra.mxu0 %v2180
      %2233 = vmatprep.subr.bf16.mxu0 0
      %2234 = vmatpush1.bf16.msra.mxu0 %v2181
      %2235 = vmatprep.subr.bf16.mxu0 0
      %2236 = vmatpush1.bf16.msra.mxu0 %v2182
      %2237 = vmatprep.subr.bf16.mxu0 0
      %2238 = vmatpush1.bf16.msra.mxu0 %v2183
      %2239 = vmatprep.subr.bf16.mxu0 0
      %2240 = vmatpush1.bf16.msra.mxu0 %v2184
      %2241 = vmatprep.subr.bf16.mxu0 0
      %2242 = vmatpush1.bf16.msra.mxu0 %v2185
      %2243 = vmatprep.subr.bf16.mxu0 0
      %2244 = vmatpush1.bf16.msra.mxu0 %v2186
      %2245 = vmatprep.subr.bf16.mxu0 0
      %2246 = vmatpush1.bf16.msra.mxu0 %v2187
      %2247 = vmatprep.subr.bf16.mxu0 0
      %2248 = vmatpush1.bf16.msra.mxu0 %v2188
      %2249 = vmatprep.subr.bf16.mxu0 0
      %2250 = vmatpush1.bf16.msra.mxu0 %v2189
      %2251 = vmatprep.subr.bf16.mxu0 0
      %2252 = vmatpush1.bf16.msra.mxu0 %v2190
      %2253 = vmatprep.subr.bf16.mxu0 0
      %2254 = vmatpush1.bf16.msra.mxu0 %v2191
      %2255 = vmatprep.subr.bf16.mxu0 0
      %2256 = vmatpush1.bf16.msra.mxu0 %v2192
      %2257 = vmatprep.mubr.bf16.mxu0 %v507
      %2258 = vmatmul.mubr.bf16.gmra.mrb[0].mxu0 %v383
      %v2259 = vpop.f32.mrb[0].mxu0
      %v2260 = vadd.f32 0.0, %v2259
      %v2261 = vpop.f32.mrb[0].mxu0
      %v2262 = vpop.f32.mrb[0].mxu0
      %v2263 = vadd.f32 0.0, %v2262
      %v2264 = vpop.f32.mrb[0].mxu0
      %2265 = vmatprep.mubr.bf16.mxu0 %v519
      %2266 = vmatmul.mubr.bf16.gmra.mrb[0].mxu0 %v384
      %v2267 = vpop.f32.mrb[0].mxu0
      %v2268 = vadd.f32 0.0, %v2267
      %v2269 = vpop.f32.mrb[0].mxu0
      %v2270 = vpop.f32.mrb[0].mxu0
      %v2271 = vadd.f32 0.0, %v2270
      %v2272 = vpop.f32.mrb[0].mxu0
      %2273 = vmatprep.mubr.bf16.mxu0 %v531
      %2274 = vmatmul.mubr.bf16.gmra.mrb[0].mxu0 %v385
      %v2275 = vpop.f32.mrb[0].mxu0
      %v2276 = vadd.f32 0.0, %v2275
      %v2277 = vpop.f32.mrb[0].mxu0
      %v2278 = vpop.f32.mrb[0].mxu0
      %v2279 = vadd.f32 0.0, %v2278
      %v2280 = vpop.f32.mrb[0].mxu0
      %2281 = vmatprep.mubr.bf16.mxu0 %v543
      %2282 = vmatmul.mubr.bf16.gmra.mrb[0].mxu0 %v386
      %v2283 = vpop.f32.mrb[0].mxu0
      %v2284 = vadd.f32 0.0, %v2283
      %v2285 = vpop.f32.mrb[0].mxu0
      %v2286 = vpop.f32.mrb[0].mxu0
      %v2287 = vadd.f32 0.0, %v2286
      %v2288 = vpop.f32.mrb[0].mxu0
      %2289 = vmatprep.mubr.bf16.mxu0 %v555
      %2290 = vmatmul.mubr.bf16.gmra.mrb[0].mxu0 %v387
      %v2291 = vpop.f32.mrb[0].mxu0
      %v2292 = vadd.f32 0.0, %v2291
      %v2293 = vpop.f32.mrb[0].mxu0
      %v2294 = vpop.f32.mrb[0].mxu0
      %v2295 = vadd.f32 0.0, %v2294
      %v2296 = vpop.f32.mrb[0].mxu0
      %2297 = vmatprep.mubr.bf16.mxu0 %v567
      %2298 = vmatmul.mubr.bf16.gmra.mrb[0].mxu0 %v388
      %v2299 = vpop.f32.mrb[0].mxu0
      %v2300 = vadd.f32 0.0, %v2299
      %v2301 = vpop.f32.mrb[0].mxu0
      %v2302 = vpop.f32.mrb[0].mxu0
      %v2303 = vadd.f32 0.0, %v2302
      %v2304 = vpop.f32.mrb[0].mxu0
      %2305 = vmatprep.mubr.bf16.mxu0 %v579
      %2306 = vmatmul.mubr.bf16.gmra.mrb[0].mxu0 %v389
      %v2307 = vpop.f32.mrb[0].mxu0
      %v2308 = vadd.f32 0.0, %v2307
      %v2309 = vpop.f32.mrb[0].mxu0
      %v2310 = vpop.f32.mrb[0].mxu0
      %v2311 = vadd.f32 0.0, %v2310
      %v2312 = vpop.f32.mrb[0].mxu0
      %2313 = vmatprep.mubr.bf16.mxu0 %v591
      %2314 = vmatmul.mubr.bf16.gmra.mrb[0].mxu0 %v390
      %v2315 = vpop.f32.mrb[0].mxu0
      %v2316 = vadd.f32 0.0, %v2315
      %v2317 = vpop.f32.mrb[0].mxu0
      %v2318 = vpop.f32.mrb[0].mxu0
      %v2319 = vadd.f32 0.0, %v2318
      %v2320 = vpop.f32.mrb[0].mxu0
      %2321 = vmatprep.mubr.bf16.mxu0 %v603
      %2322 = vmatmul.mubr.bf16.gmra.mrb[0].mxu0 %v391
      %v2323 = vpop.f32.mrb[0].mxu0
      %v2324 = vadd.f32 0.0, %v2323
      %v2325 = vpop.f32.mrb[0].mxu0
      %v2326 = vpop.f32.mrb[0].mxu0
      %v2327 = vadd.f32 0.0, %v2326
      %v2328 = vpop.f32.mrb[0].mxu0
      %2329 = vmatprep.mubr.bf16.mxu0 %v615
      %2330 = vmatmul.mubr.bf16.gmra.mrb[0].mxu0 %v392
      %v2331 = vpop.f32.mrb[0].mxu0
      %v2332 = vadd.f32 0.0, %v2331
      %v2333 = vpop.f32.mrb[0].mxu0
      %v2334 = vpop.f32.mrb[0].mxu0
      %v2335 = vadd.f32 0.0, %v2334
      %v2336 = vpop.f32.mrb[0].mxu0
      %2337 = vmatprep.mubr.bf16.mxu0 %v627
      %2338 = vmatmul.mubr.bf16.gmra.mrb[0].mxu0 %v393
      %v2339 = vpop.f32.mrb[0].mxu0
      %v2340 = vadd.f32 0.0, %v2339
      %v2341 = vpop.f32.mrb[0].mxu0
      %v2342 = vpop.f32.mrb[0].mxu0
      %v2343 = vadd.f32 0.0, %v2342
      %v2344 = vpop.f32.mrb[0].mxu0
      %2345 = vmatprep.mubr.bf16.mxu0 %v639
      %2346 = vmatmul.mubr.bf16.gmra.mrb[0].mxu0 %v394
      %v2347 = vpop.f32.mrb[0].mxu0
      %v2348 = vadd.f32 0.0, %v2347
      %v2349 = vpop.f32.mrb[0].mxu0
      %v2350 = vpop.f32.mrb[0].mxu0
      %v2351 = vadd.f32 0.0, %v2350
      %v2352 = vpop.f32.mrb[0].mxu0
      %2353 = vmatprep.mubr.bf16.mxu0 %v651
      %2354 = vmatmul.mubr.bf16.gmra.mrb[0].mxu0 %v395
      %v2355 = vpop.f32.mrb[0].mxu0
      %v2356 = vadd.f32 0.0, %v2355
      %v2357 = vpop.f32.mrb[0].mxu0
      %v2358 = vpop.f32.mrb[0].mxu0
      %v2359 = vadd.f32 0.0, %v2358
      %v2360 = vpop.f32.mrb[0].mxu0
      %2361 = vmatprep.mubr.bf16.mxu0 %v663
      %2362 = vmatmul.mubr.bf16.gmra.mrb[0].mxu0 %v396
      %v2363 = vpop.f32.mrb[0].mxu0
      %v2364 = vadd.f32 0.0, %v2363
      %v2365 = vpop.f32.mrb[0].mxu0
      %v2366 = vpop.f32.mrb[0].mxu0
      %v2367 = vadd.f32 0.0, %v2366
      %v2368 = vpop.f32.mrb[0].mxu0
      %2369 = vmatprep.mubr.bf16.mxu0 %v675
      %2370 = vmatmul.mubr.bf16.gmra.mrb[0].mxu0 %v397
      %v2371 = vpop.f32.mrb[0].mxu0
      %v2372 = vadd.f32 0.0, %v2371
      %v2373 = vpop.f32.mrb[0].mxu0
      %v2374 = vpop.f32.mrb[0].mxu0
      %v2375 = vadd.f32 0.0, %v2374
      %v2376 = vpop.f32.mrb[0].mxu0
      %2377 = vmatprep.mubr.bf16.mxu0 %v687
      %2378 = vmatmul.mubr.bf16.gmra.mrb[0].mxu0 %v398
      %v2379 = vpop.f32.mrb[0].mxu0
      %v2380 = vadd.f32 0.0, %v2379
      %v2381 = vpop.f32.mrb[0].mxu0
      %v2382 = vpop.f32.mrb[0].mxu0
      %v2383 = vadd.f32 0.0, %v2382
      %v2384 = vpop.f32.mrb[0].mxu0
      %2385 = vdwg.mxu0
      %2386 = vmatprep.subr.bf16.mxu0 0
      %2387 = vmatpush1.bf16.msra.mxu0 %v2193
      %2388 = vmatprep.subr.bf16.mxu0 0
      %2389 = vmatpush1.bf16.msra.mxu0 %v2194
      %2390 = vmatprep.subr.bf16.mxu0 0
      %2391 = vmatpush1.bf16.msra.mxu0 %v2195
      %2392 = vmatprep.subr.bf16.mxu0 0
      %2393 = vmatpush1.bf16.msra.mxu0 %v2196
      %2394 = vmatprep.subr.bf16.mxu0 0
      %2395 = vmatpush1.bf16.msra.mxu0 %v2197
      %2396 = vmatprep.subr.bf16.mxu0 0
      %2397 = vmatpush1.bf16.msra.mxu0 %v2198
      %2398 = vmatprep.subr.bf16.mxu0 0
      %2399 = vmatpush1.bf16.msra.mxu0 %v2199
      %2400 = vmatprep.subr.bf16.mxu0 0
      %2401 = vmatpush1.bf16.msra.mxu0 %v2200
      %2402 = vmatprep.subr.bf16.mxu0 0
      %2403 = vmatpush1.bf16.msra.mxu0 0
      %2404 = vmatprep.subr.bf16.mxu0 0
      %2405 = vmatpush1.bf16.msra.mxu0 0
      %2406 = vmatprep.subr.bf16.mxu0 0
      %2407 = vmatpush1.bf16.msra.mxu0 0
      %2408 = vmatprep.subr.bf16.mxu0 0
      %2409 = vmatpush1.bf16.msra.mxu0 0
      %2410 = vmatprep.subr.bf16.mxu0 0
      %2411 = vmatpush1.bf16.msra.mxu0 0
      %2412 = vmatprep.subr.bf16.mxu0 0
      %2413 = vmatpush1.bf16.msra.mxu0 0
      %2414 = vmatprep.subr.bf16.mxu0 0
      %2415 = vmatpush1.bf16.msra.mxu0 0
      %2416 = vmatprep.subr.bf16.mxu0 0
      %2417 = vmatpush1.bf16.msra.mxu0 0
      %2418 = vmatprep.mubr.bf16.mxu0 0
      %2419 = vmatmul.mubr.bf16.gmra.mrb[0].mxu0 %v715
      %v2420 = vpop.f32.mrb[0].mxu0
      %v2421 = vadd.f32 %v2260, %v2420
      %v2422 = vpop.f32.mrb[0].mxu0
      %v2423 = vpop.f32.mrb[0].mxu0
      %v2424 = vadd.f32 %v2263, %v2423
      %v2425 = vpop.f32.mrb[0].mxu0
      %2426 = vmatprep.mubr.bf16.mxu0 0
      %2427 = vmatmul.mubr.bf16.gmra.mrb[0].mxu0 %v718
      %v2428 = vpop.f32.mrb[0].mxu0
      %v2429 = vadd.f32 %v2268, %v2428
      %v2430 = vpop.f32.mrb[0].mxu0
      %v2431 = vpop.f32.mrb[0].mxu0
      %v2432 = vadd.f32 %v2271, %v2431
      %v2433 = vpop.f32.mrb[0].mxu0
      %2434 = vmatprep.mubr.bf16.mxu0 0
      %2435 = vmatmul.mubr.bf16.gmra.mrb[0].mxu0 %v721
      %v2436 = vpop.f32.mrb[0].mxu0
      %v2437 = vadd.f32 %v2276, %v2436
      %v2438 = vpop.f32.mrb[0].mxu0
      %v2439 = vpop.f32.mrb[0].mxu0
      %v2440 = vadd.f32 %v2279, %v2439
      %v2441 = vpop.f32.mrb[0].mxu0
      %2442 = vmatprep.mubr.bf16.mxu0 0
      %2443 = vmatmul.mubr.bf16.gmra.mrb[0].mxu0 %v724
      %v2444 = vpop.f32.mrb[0].mxu0
      %v2445 = vadd.f32 %v2284, %v2444
      %v2446 = vpop.f32.mrb[0].mxu0
      %v2447 = vpop.f32.mrb[0].mxu0
      %v2448 = vadd.f32 %v2287, %v2447
      %v2449 = vpop.f32.mrb[0].mxu0
      %2450 = vmatprep.mubr.bf16.mxu0 0
      %2451 = vmatmul.mubr.bf16.gmra.mrb[0].mxu0 %v727
      %v2452 = vpop.f32.mrb[0].mxu0
      %v2453 = vadd.f32 %v2292, %v2452
      %v2454 = vpop.f32.mrb[0].mxu0
      %v2455 = vpop.f32.mrb[0].mxu0
      %v2456 = vadd.f32 %v2295, %v2455
      %v2457 = vpop.f32.mrb[0].mxu0
      %2458 = vmatprep.mubr.bf16.mxu0 0
      %2459 = vmatmul.mubr.bf16.gmra.mrb[0].mxu0 %v730
      %v2460 = vpop.f32.mrb[0].mxu0
      %v2461 = vadd.f32 %v2300, %v2460
      %v2462 = vpop.f32.mrb[0].mxu0
      %v2463 = vpop.f32.mrb[0].mxu0
      %v2464 = vadd.f32 %v2303, %v2463
      %v2465 = vpop.f32.mrb[0].mxu0
      %2466 = vmatprep.mubr.bf16.mxu0 0
      %2467 = vmatmul.mubr.bf16.gmra.mrb[0].mxu0 %v733
      %v2468 = vpop.f32.mrb[0].mxu0
      %v2469 = vadd.f32 %v2308, %v2468
      %v2470 = vpop.f32.mrb[0].mxu0
      %v2471 = vpop.f32.mrb[0].mxu0
      %v2472 = vadd.f32 %v2311, %v2471
      %v2473 = vpop.f32.mrb[0].mxu0
      %2474 = vmatprep.mubr.bf16.mxu0 0
      %2475 = vmatmul.mubr.bf16.gmra.mrb[0].mxu0 %v736
      %v2476 = vpop.f32.mrb[0].mxu0
      %v2477 = vadd.f32 %v2316, %v2476
      %v2478 = vpop.f32.mrb[0].mxu0
      %v2479 = vpop.f32.mrb[0].mxu0
      %v2480 = vadd.f32 %v2319, %v2479
      %v2481 = vpop.f32.mrb[0].mxu0
      %2482 = vmatprep.mubr.bf16.mxu0 0
      %2483 = vmatmul.mubr.bf16.gmra.mrb[0].mxu0 %v739
      %v2484 = vpop.f32.mrb[0].mxu0
      %v2485 = vadd.f32 %v2324, %v2484
      %v2486 = vpop.f32.mrb[0].mxu0
      %v2487 = vpop.f32.mrb[0].mxu0
      %v2488 = vadd.f32 %v2327, %v2487
      %v2489 = vpop.f32.mrb[0].mxu0
      %2490 = vmatprep.mubr.bf16.mxu0 0
      %2491 = vmatmul.mubr.bf16.gmra.mrb[0].mxu0 %v742
      %v2492 = vpop.f32.mrb[0].mxu0
      %v2493 = vadd.f32 %v2332, %v2492
      %v2494 = vpop.f32.mrb[0].mxu0
      %v2495 = vpop.f32.mrb[0].mxu0
      %v2496 = vadd.f32 %v2335, %v2495
      %v2497 = vpop.f32.mrb[0].mxu0
      %2498 = vmatprep.mubr.bf16.mxu0 0
      %2499 = vmatmul.mubr.bf16.gmra.mrb[0].mxu0 %v745
      %v2500 = vpop.f32.mrb[0].mxu0
      %v2501 = vadd.f32 %v2340, %v2500
      %v2502 = vpop.f32.mrb[0].mxu0
      %v2503 = vpop.f32.mrb[0].mxu0
      %v2504 = vadd.f32 %v2343, %v2503
      %v2505 = vpop.f32.mrb[0].mxu0
      %2506 = vmatprep.mubr.bf16.mxu0 0
      %2507 = vmatmul.mubr.bf16.gmra.mrb[0].mxu0 %v748
      %v2508 = vpop.f32.mrb[0].mxu0
      %v2509 = vadd.f32 %v2348, %v2508
      %v2510 = vpop.f32.mrb[0].mxu0
      %v2511 = vpop.f32.mrb[0].mxu0
      %v2512 = vadd.f32 %v2351, %v2511
      %v2513 = vpop.f32.mrb[0].mxu0
      %2514 = vmatprep.mubr.bf16.mxu0 0
      %2515 = vmatmul.mubr.bf16.gmra.mrb[0].mxu0 %v751
      %v2516 = vpop.f32.mrb[0].mxu0
      %v2517 = vadd.f32 %v2356, %v2516
      %v2518 = vpop.f32.mrb[0].mxu0
      %v2519 = vpop.f32.mrb[0].mxu0
      %v2520 = vadd.f32 %v2359, %v2519
      %v2521 = vpop.f32.mrb[0].mxu0
      %2522 = vmatprep.mubr.bf16.mxu0 0
      %2523 = vmatmul.mubr.bf16.gmra.mrb[0].mxu0 %v754
      %v2524 = vpop.f32.mrb[0].mxu0
      %v2525 = vadd.f32 %v2364, %v2524
      %v2526 = vpop.f32.mrb[0].mxu0
      %v2527 = vpop.f32.mrb[0].mxu0
      %v2528 = vadd.f32 %v2367, %v2527
      %v2529 = vpop.f32.mrb[0].mxu0
      %2530 = vmatprep.mubr.bf16.mxu0 0
      %2531 = vmatmul.mubr.bf16.gmra.mrb[0].mxu0 %v757
      %v2532 = vpop.f32.mrb[0].mxu0
      %v2533 = vadd.f32 %v2372, %v2532
      %v2534 = vpop.f32.mrb[0].mxu0
      %v2535 = vpop.f32.mrb[0].mxu0
      %v2536 = vadd.f32 %v2375, %v2535
      %v2537 = vpop.f32.mrb[0].mxu0
      %2538 = vmatprep.mubr.bf16.mxu0 0
      %2539 = vmatmul.mubr.bf16.gmra.mrb[0].mxu0 %v760
      %v2540 = vpop.f32.mrb[0].mxu0
      %v2541 = vadd.f32 %v2380, %v2540
      %v2542 = vpop.f32.mrb[0].mxu0
      %v2543 = vpop.f32.mrb[0].mxu0
      %v2544 = vadd.f32 %v2383, %v2543
      %v2545 = vpop.f32.mrb[0].mxu0
      %2546 = vdwg.mxu0
      %v2547 = vadd.f32 %v2000, %v2421
      %v2548 = vadd.f32 %v2001, %v2424
      %v2549 = vadd.f32 %v2002, %v2429
      %v2550 = vadd.f32 %v2003, %v2432
      %v2551 = vadd.f32 %v2004, %v2437
      %v2552 = vadd.f32 %v2005, %v2440
      %v2553 = vadd.f32 %v2006, %v2445
      %v2554 = vadd.f32 %v2007, %v2448
      %v2555 = vadd.f32 %v2008, %v2453
      %v2556 = vadd.f32 %v2009, %v2456
      %v2557 = vadd.f32 %v2010, %v2461
      %v2558 = vadd.f32 %v2011, %v2464
      %v2559 = vadd.f32 %v2012, %v2469
      %v2560 = vadd.f32 %v2013, %v2472
      %v2561 = vadd.f32 %v2014, %v2477
      %v2562 = vadd.f32 %v2015, %v2480
      %v2563 = vadd.f32 %v2016, %v2485
      %v2564 = vadd.f32 %v2017, %v2488
      %v2565 = vadd.f32 %v2018, %v2493
      %v2566 = vadd.f32 %v2019, %v2496
      %v2567 = vadd.f32 %v2020, %v2501
      %v2568 = vadd.f32 %v2021, %v2504
      %v2569 = vadd.f32 %v2022, %v2509
      %v2570 = vadd.f32 %v2023, %v2512
      %v2571 = vadd.f32 %v2024, %v2517
      %v2572 = vadd.f32 %v2025, %v2520
      %v2573 = vadd.f32 %v2026, %v2525
      %v2574 = vadd.f32 %v2027, %v2528
      %v2575 = vadd.f32 %v2028, %v2533
      %v2576 = vadd.f32 %v2029, %v2536
      %v2577 = vadd.f32 %v2030, %v2541
      %v2578 = vadd.f32 %v2031, %v2544
      %2579 = vst [vmem:[#allocation2] sm:$0xff] %v2547
      %2580 = vst [vmem:[#allocation2 + $0x8] sm:$0xff] %v2548
      %2581 = vst [vmem:[#allocation2 + $0x10] sm:$0xff] %v2549
      %2582 = vst [vmem:[#allocation2 + $0x18] sm:$0xff] %v2550
      %2583 = vst [vmem:[#allocation2 + $0x20] sm:$0xff] %v2551
      %2584 = vst [vmem:[#allocation2 + $0x28] sm:$0xff] %v2552
      %2585 = vst [vmem:[#allocation2 + $0x30] sm:$0xff] %v2553
      %2586 = vst [vmem:[#allocation2 + $0x38] sm:$0xff] %v2554
      %2587 = vst [vmem:[#allocation2 + $0x40] sm:$0xff] %v2555
      %2588 = vst [vmem:[#allocation2 + $0x48] sm:$0xff] %v2556
      %2589 = vst [vmem:[#allocation2 + $0x50] sm:$0xff] %v2557
      %2590 = vst [vmem:[#allocation2 + $0x58] sm:$0xff] %v2558
      %2591 = vst [vmem:[#allocation2 + $0x60] sm:$0xff] %v2559
      %2592 = vst [vmem:[#allocation2 + $0x68] sm:$0xff] %v2560
      %2593 = vst [vmem:[#allocation2 + $0x70] sm:$0xff] %v2561
      %2594 = vst [vmem:[#allocation2 + $0x78] sm:$0xff] %v2562
      %2595 = vst [vmem:[#allocation2 + $0x80] sm:$0xff] %v2563
      %2596 = vst [vmem:[#allocation2 + $0x88] sm:$0xff] %v2564
      %2597 = vst [vmem:[#allocation2 + $0x90] sm:$0xff] %v2565
      %2598 = vst [vmem:[#allocation2 + $0x98] sm:$0xff] %v2566
      %2599 = vst [vmem:[#allocation2 + $0xa0] sm:$0xff] %v2567
      %2600 = vst [vmem:[#allocation2 + $0xa8] sm:$0xff] %v2568
      %2601 = vst [vmem:[#allocation2 + $0xb0] sm:$0xff] %v2569
      %2602 = vst [vmem:[#allocation2 + $0xb8] sm:$0xff] %v2570
      %2603 = vst [vmem:[#allocation2 + $0xc0] sm:$0xff] %v2571
      %2604 = vst [vmem:[#allocation2 + $0xc8] sm:$0xff] %v2572
      %2605 = vst [vmem:[#allocation2 + $0xd0] sm:$0xff] %v2573
      %2606 = vst [vmem:[#allocation2 + $0xd8] sm:$0xff] %v2574
      %2607 = vst [vmem:[#allocation2 + $0xe0] sm:$0xff] %v2575
      %2608 = vst [vmem:[#allocation2 + $0xe8] sm:$0xff] %v2576
      %2609 = vst [vmem:[#allocation2 + $0xf0] sm:$0xff] %v2577
      %2610 = vst [vmem:[#allocation2 + $0xf8] sm:$0xff] %v2578
      %v2611 = vld [vmem:[#allocation2] sm:$0xff]
      %v2612 = vld [vmem:[#allocation2 + $0x8] sm:$0xff]
      %v2613 = vld [vmem:[#allocation2 + $0x10] sm:$0xff]
      %v2614 = vld [vmem:[#allocation2 + $0x18] sm:$0xff]
      %v2615 = vld [vmem:[#allocation2 + $0x20] sm:$0xff]
      %v2616 = vld [vmem:[#allocation2 + $0x28] sm:$0xff]
      %v2617 = vld [vmem:[#allocation2 + $0x30] sm:$0xff]
      %v2618 = vld [vmem:[#allocation2 + $0x38] sm:$0xff]
      %v2619 = vld [vmem:[#allocation2 + $0x40] sm:$0xff]
      %v2620 = vld [vmem:[#allocation2 + $0x48] sm:$0xff]
      %v2621 = vld [vmem:[#allocation2 + $0x50] sm:$0xff]
      %v2622 = vld [vmem:[#allocation2 + $0x58] sm:$0xff]
      %v2623 = vld [vmem:[#allocation2 + $0x60] sm:$0xff]
      %v2624 = vld [vmem:[#allocation2 + $0x68] sm:$0xff]
      %v2625 = vld [vmem:[#allocation2 + $0x70] sm:$0xff]
      %v2626 = vld [vmem:[#allocation2 + $0x78] sm:$0xff]
      %v2627 = vld [vmem:[#allocation2 + $0x80] sm:$0xff]
      %v2628 = vld [vmem:[#allocation2 + $0x88] sm:$0xff]
      %v2629 = vld [vmem:[#allocation2 + $0x90] sm:$0xff]
      %v2630 = vld [vmem:[#allocation2 + $0x98] sm:$0xff]
      %v2631 = vld [vmem:[#allocation2 + $0xa0] sm:$0xff]
      %v2632 = vld [vmem:[#allocation2 + $0xa8] sm:$0xff]
      %v2633 = vld [vmem:[#allocation2 + $0xb0] sm:$0xff]
      %v2634 = vld [vmem:[#allocation2 + $0xb8] sm:$0xff]
      %v2635 = vld [vmem:[#allocation2 + $0xc0] sm:$0xff]
      %v2636 = vld [vmem:[#allocation2 + $0xc8] sm:$0xff]
      %v2637 = vld [vmem:[#allocation2 + $0xd0] sm:$0xff]
      %v2638 = vld [vmem:[#allocation2 + $0xd8] sm:$0xff]
      %v2639 = vld [vmem:[#allocation2 + $0xe0] sm:$0xff]
      %v2640 = vld [vmem:[#allocation2 + $0xe8] sm:$0xff]
      %v2641 = vld [vmem:[#allocation2 + $0xf0] sm:$0xff]
      %v2642 = vld [vmem:[#allocation2 + $0xf8] sm:$0xff]
      %v2643 = vld [vmem:[%s213] sm:$0x1]
      %v2645 = vlaneseq
      %v2646 = vshrl.u32 %v2645, 7
      %v2647 = vsub.s32 0, %v2646
      %v2648 = vrot.slane %v2643, %v2647
      %v2650 = vadd.f32 %v2611, %v2648
      %v2651 = vadd.f32 %v2612, %v2648
      %v2652 = vadd.f32 %v2613, %v2648
      %v2653 = vadd.f32 %v2614, %v2648
      %v2654 = vadd.f32 %v2615, %v2648
      %v2655 = vadd.f32 %v2616, %v2648
      %v2656 = vadd.f32 %v2617, %v2648
      %v2657 = vadd.f32 %v2618, %v2648
      %v2658 = vadd.f32 %v2619, %v2648
      %v2659 = vadd.f32 %v2620, %v2648
      %v2660 = vadd.f32 %v2621, %v2648
      %v2661 = vadd.f32 %v2622, %v2648
      %v2662 = vadd.f32 %v2623, %v2648
      %v2663 = vadd.f32 %v2624, %v2648
      %v2664 = vadd.f32 %v2625, %v2648
      %v2665 = vadd.f32 %v2626, %v2648
      %v2666 = vadd.f32 %v2627, %v2648
      %v2667 = vadd.f32 %v2628, %v2648
      %v2668 = vadd.f32 %v2629, %v2648
      %v2669 = vadd.f32 %v2630, %v2648
      %v2670 = vadd.f32 %v2631, %v2648
      %v2671 = vadd.f32 %v2632, %v2648
      %v2672 = vadd.f32 %v2633, %v2648
      %v2673 = vadd.f32 %v2634, %v2648
      %v2674 = vadd.f32 %v2635, %v2648
      %v2675 = vadd.f32 %v2636, %v2648
      %v2676 = vadd.f32 %v2637, %v2648
      %v2677 = vadd.f32 %v2638, %v2648
      %v2678 = vadd.f32 %v2639, %v2648
      %v2679 = vadd.f32 %v2640, %v2648
      %v2680 = vadd.f32 %v2641, %v2648
      %v2681 = vadd.f32 %v2642, %v2648
      %v2682 = vmax.f32 %v2650, 0.0
      %v2683 = vmax.f32 %v2651, 0.0
      %v2684 = vmax.f32 %v2652, 0.0
      %v2685 = vmax.f32 %v2653, 0.0
      %v2686 = vmax.f32 %v2654, 0.0
      %v2687 = vmax.f32 %v2655, 0.0
      %v2688 = vmax.f32 %v2656, 0.0
      %v2689 = vmax.f32 %v2657, 0.0
      %v2690 = vmax.f32 %v2658, 0.0
      %v2691 = vmax.f32 %v2659, 0.0
      %v2692 = vmax.f32 %v2660, 0.0
      %v2693 = vmax.f32 %v2661, 0.0
      %v2694 = vmax.f32 %v2662, 0.0
      %v2695 = vmax.f32 %v2663, 0.0
      %v2696 = vmax.f32 %v2664, 0.0
      %v2697 = vmax.f32 %v2665, 0.0
      %v2698 = vmax.f32 %v2666, 0.0
      %v2699 = vmax.f32 %v2667, 0.0
      %v2700 = vmax.f32 %v2668, 0.0
      %v2701 = vmax.f32 %v2669, 0.0
      %v2702 = vmax.f32 %v2670, 0.0
      %v2703 = vmax.f32 %v2671, 0.0
      %v2704 = vmax.f32 %v2672, 0.0
      %v2705 = vmax.f32 %v2673, 0.0
      %v2706 = vmax.f32 %v2674, 0.0
      %v2707 = vmax.f32 %v2675, 0.0
      %v2708 = vmax.f32 %v2676, 0.0
      %v2709 = vmax.f32 %v2677, 0.0
      %v2710 = vmax.f32 %v2678, 0.0
      %v2711 = vmax.f32 %v2679, 0.0
      %v2712 = vmax.f32 %v2680, 0.0
      %v2713 = vmax.f32 %v2681, 0.0
      %v2714 = vpack.c.bf16 %v2683, %v2682
      %v2715 = vpack.c.bf16 %v2685, %v2684
      %v2716 = vpack.c.bf16 %v2687, %v2686
      %v2717 = vpack.c.bf16 %v2689, %v2688
      %v2718 = vpack.c.bf16 %v2691, %v2690
      %v2719 = vpack.c.bf16 %v2693, %v2692
      %v2720 = vpack.c.bf16 %v2695, %v2694
      %v2721 = vpack.c.bf16 %v2697, %v2696
      %v2722 = vpack.c.bf16 %v2699, %v2698
      %v2723 = vpack.c.bf16 %v2701, %v2700
      %v2724 = vpack.c.bf16 %v2703, %v2702
      %v2725 = vpack.c.bf16 %v2705, %v2704
      %v2726 = vpack.c.bf16 %v2707, %v2706
      %v2727 = vpack.c.bf16 %v2709, %v2708
      %v2728 = vpack.c.bf16 %v2711, %v2710
      %v2729 = vpack.c.bf16 %v2713, %v2712
      %v2746 = vunpack.c.l.b16 %v2714
      %v2747 = vunpack.c.h.b16 %v2714
      %v2748 = vunpack.c.l.b16 %v2715
      %v2749 = vunpack.c.h.b16 %v2715
      %v2750 = vunpack.c.l.b16 %v2716
      %v2751 = vunpack.c.h.b16 %v2716
      %v2752 = vunpack.c.l.b16 %v2717
      %v2753 = vunpack.c.h.b16 %v2717
      %v2754 = vunpack.c.l.b16 %v2718
      %v2755 = vunpack.c.h.b16 %v2718
      %v2756 = vunpack.c.l.b16 %v2719
      %v2757 = vunpack.c.h.b16 %v2719
      %v2758 = vunpack.c.l.b16 %v2720
      %v2759 = vunpack.c.h.b16 %v2720
      %v2760 = vunpack.c.l.b16 %v2721
      %v2761 = vunpack.c.h.b16 %v2721
      %v2762 = vunpack.c.l.b16 %v2722
      %v2763 = vunpack.c.h.b16 %v2722
      %v2764 = vunpack.c.l.b16 %v2723
      %v2765 = vunpack.c.h.b16 %v2723
      %v2766 = vunpack.c.l.b16 %v2724
      %v2767 = vunpack.c.h.b16 %v2724
      %v2768 = vunpack.c.l.b16 %v2725
      %v2769 = vunpack.c.h.b16 %v2725
      %v2770 = vunpack.c.l.b16 %v2726
      %v2771 = vunpack.c.h.b16 %v2726
      %v2772 = vunpack.c.l.b16 %v2727
      %v2773 = vunpack.c.h.b16 %v2727
      %v2774 = vunpack.c.l.b16 %v2728
      %v2775 = vunpack.c.h.b16 %v2728
      %v2776 = vunpack.c.l.b16 %v2729
      %v2777 = vunpack.c.h.b16 %v2729
      %v2778 = vpack.c.b16 %v2746, %v2746
      %v2779 = vpack.c.b16 %v2747, %v2747
      %v2780 = vpack.c.b16 %v2748, %v2748
      %v2781 = vpack.c.b16 %v2749, %v2749
      %v2782 = vpack.c.b16 %v2750, %v2750
      %v2783 = vpack.c.b16 %v2751, %v2751
      %v2784 = vpack.c.b16 %v2752, %v2752
      %v2785 = vpack.c.b16 %v2753, %v2753
      %v2786 = vpack.c.b16 %v2754, %v2754
      %v2787 = vpack.c.b16 %v2755, %v2755
      %v2788 = vpack.c.b16 %v2756, %v2756
      %v2789 = vpack.c.b16 %v2757, %v2757
      %v2790 = vpack.c.b16 %v2758, %v2758
      %v2791 = vpack.c.b16 %v2759, %v2759
      %v2792 = vpack.c.b16 %v2760, %v2760
      %v2793 = vpack.c.b16 %v2761, %v2761
      %v2794 = vpack.c.b16 %v2762, %v2762
      %v2795 = vpack.c.b16 %v2763, %v2763
      %v2796 = vpack.c.b16 %v2764, %v2764
      %v2797 = vpack.c.b16 %v2765, %v2765
      %v2798 = vpack.c.b16 %v2766, %v2766
      %v2799 = vpack.c.b16 %v2767, %v2767
      %v2800 = vpack.c.b16 %v2768, %v2768
      %v2801 = vpack.c.b16 %v2769, %v2769
      %v2802 = vpack.c.b16 %v2770, %v2770
      %v2803 = vpack.c.b16 %v2771, %v2771
      %v2804 = vpack.c.b16 %v2772, %v2772
      %v2805 = vpack.c.b16 %v2773, %v2773
      %v2806 = vpack.c.b16 %v2774, %v2774
      %v2807 = vpack.c.b16 %v2775, %v2775
      %v2808 = vpack.c.b16 %v2776, %v2776
      %v2809 = vpack.c.b16 %v2777, %v2777
      %2842 = vst [vmem:[%s221] sm:$0xf] %v2778
      %2843 = vst [vmem:[%s221 + $0x4] sm:$0xf] %v2779
      %2844 = vst [vmem:[%s221 + $0x8] sm:$0xf] %v2780
      %2845 = vst [vmem:[%s221 + $0xc] sm:$0xf] %v2781
      %2846 = vst [vmem:[%s221 + $0x10] sm:$0xf] %v2782
      %2847 = vst [vmem:[%s221 + $0x14] sm:$0xf] %v2783
      %2848 = vst [vmem:[%s221 + $0x18] sm:$0xf] %v2784
      %2849 = vst [vmem:[%s221 + $0x1c] sm:$0xf] %v2785
      %2850 = vst [vmem:[%s221 + $0x20] sm:$0xf] %v2786
      %2851 = vst [vmem:[%s221 + $0x24] sm:$0xf] %v2787
      %2852 = vst [vmem:[%s221 + $0x28] sm:$0xf] %v2788
      %2853 = vst [vmem:[%s221 + $0x2c] sm:$0xf] %v2789
      %2854 = vst [vmem:[%s221 + $0x30] sm:$0xf] %v2790
      %2855 = vst [vmem:[%s221 + $0x34] sm:$0xf] %v2791
      %2856 = vst [vmem:[%s221 + $0x38] sm:$0xf] %v2792
      %2857 = vst [vmem:[%s221 + $0x3c] sm:$0xf] %v2793
      %2858 = vst [vmem:[%s221 + $0x40] sm:$0xf] %v2794
      %2859 = vst [vmem:[%s221 + $0x44] sm:$0xf] %v2795
      %2860 = vst [vmem:[%s221 + $0x48] sm:$0xf] %v2796
      %2861 = vst [vmem:[%s221 + $0x4c] sm:$0xf] %v2797
      %2862 = vst [vmem:[%s221 + $0x50] sm:$0xf] %v2798
      %2863 = vst [vmem:[%s221 + $0x54] sm:$0xf] %v2799
      %2864 = vst [vmem:[%s221 + $0x58] sm:$0xf] %v2800
      %2865 = vst [vmem:[%s221 + $0x5c] sm:$0xf] %v2801
      %2866 = vst [vmem:[%s221 + $0x60] sm:$0xf] %v2802
      %2867 = vst [vmem:[%s221 + $0x64] sm:$0xf] %v2803
      %2868 = vst [vmem:[%s221 + $0x68] sm:$0xf] %v2804
      %2869 = vst [vmem:[%s221 + $0x6c] sm:$0xf] %v2805
      %2870 = vst [vmem:[%s221 + $0x70] sm:$0xf] %v2806
      %2871 = vst [vmem:[%s221 + $0x74] sm:$0xf] %v2807
      %2872 = vst [vmem:[%s221 + $0x78] sm:$0xf] %v2808
      %2873 = vst [vmem:[%s221 + $0x7c] sm:$0xf] %v2809
      %p2874 = scmp.lt.s32.totalorder %s18, 1
      %s2875 = scalar_select %p2874, %s18, 1
      %p2876 = scmp.lt.s32.totalorder %s19, 0
      %s2877 = scalar_select %p2876, %s19, 0
      %s2878 = smul.addr %s2875, 32
      %s2879 = sadd.s32 %s2877, %s2878
      %s2880 = smul.addr %s2879, 4
      %s2881 = scalar_lea.vmem %s3, %s2880
      // Predicated region
      $region33: #{decoder_forward.5} parent=31 // pred_check
        %p2882 = pneg %p124
      $region34: #{decoder_forward.5} parent=31 // pred_check_branch
        %2884 = sbr.rel (%p2882) target = $region36
      $region35: #{decoder_forward.5} parent=31 // pred_region
        _
      $region36: #{decoder_forward.5} parent=31 // pred_fallthru
        _
    $region32: #{decoder_forward.5} parent=5 // pred_fallthru
      _
    %p2885 = scmp.le.s32.totalorder 2, %s9
    // Predicated region
    $region37: #{decoder_forward.5} parent=5 // pred_check
      %p2886 = pneg %p2885
    $region38: #{decoder_forward.5} parent=5 // pred_check_branch
      %2888 = sbr.rel (%p2886) target = $region40
    $region39: #{decoder_forward.5} parent=5 // pred_region
      %s2889 = ssub.s32 %s9, 2
      // Predicated region
      $region41: #{decoder_forward.5} parent=39 // pred_check
        %p2890 = pneg %p130
      $region42: #{decoder_forward.5} parent=39 // pred_check_branch
        %2892 = sbr.rel (%p2890) target = $region44
      $region43: #{decoder_forward.5} parent=39 // pred_region
        %p2893 = scmp.lt.s32.totalorder %s20, 1
        %s2894 = scalar_select %p2893, %s20, 1
        %p2895 = scmp.lt.s32.totalorder %s21, 0
        %s2896 = scalar_select %p2895, %s21, 0
        %s2897 = smul.addr %s2894, 32
        %s2898 = sadd.s32 %s2896, %s2897
        %s2899 = smul.addr %s2898, 4
        %s2900 = scalar_lea.vmem %s3, %s2899
      $region44: #{decoder_forward.5} parent=39 // pred_fallthru
        _
    $region40: #{decoder_forward.5} parent=5 // pred_fallthru
      _
  $region6: #{decoder_forward.5} parent=0 // loop_footer
    %s13 = sadd.s32 1, %s9
  $region7: #{decoder_forward.5} parent=0 // loop_footer_branch
    %8 = sbr.rel target = $region3
  $region8: #{decoder_forward.5} parent=0 // loop_exit
    _

// kernel: decoder_forward.4
$region0: #{decoder_forward.4}
  #allocation0 [shape = 'u32[]', space=smem, size = 0x4, offset = 0x4, fixed_abs, tag = 'smem constant byte address 0x4 - core index']
  #allocation1 [shape = 'u32[144,128]{1,0:T(1,128)}', space=vmem, size = 0x12000, scoped, tag = 'internal scratch']
  #allocation2 [shape = 'f32[256,128]{1,0:T(8,128)}', space=vmem, size = 0x20000, scoped, tag = 'scratch operand']
  %s0 = inlined_call_operand.vmem [shape: bf16[2,18,18,32], index: 0, kind: input, shape index: {}]
  %s1 = inlined_call_operand.vmem [shape: bf16[2,18,18,32], index: 1, kind: input, shape index: {}]
  %s2 = inlined_call_operand.vmem [shape: bf16[3,96,128], index: 2, kind: input, shape index: {}]
  %s3 = inlined_call_operand.vmem [shape: bf16[3,96,128], index: 3, kind: input, shape index: {}]
  %s4 = inlined_call_operand.vmem [shape: f32[1,128], index: 4, kind: input, shape index: {}]
  %s5 = inlined_call_operand.vmem [shape: bf16[2,256,128], index: 5, kind: output, shape index: {}]
  %s6 = sld [smem:[#allocation0]]
  $region53: #{decoder_forward.4} parent=0
    _
  %s8 = ssub.s32 1, %s6
  %s9 = scalar_select 0, %s8, %s6
  loop: start=0, step=1, limit=4
  $region2: #{decoder_forward.4} parent=0 // loop_pre_header
    _
  $region3: #{decoder_forward.4} parent=0 // loop_header
    %s11 = sphi 0, %s15
    %p12 = scmp.ge.s32.totalorder %s11, 4
    %s18 = sphi 0, %s30
    %s19 = sphi 0, %s26
    %s20 = sphi 0, %s18
    %s21 = sphi 0, %s19
    %s22 = sphi 0, %s20
    %s23 = sphi 0, %s21
    %s33 = sphi 0, %s35
    %s36 = sphi 0, %s33
    %s37 = sphi 0, %s36
    %s53 = sphi 0, %s37
    %s59 = sphi 0, %s61
    %s62 = sphi 0, %s59
    %s63 = sphi 0, %s62
    %s79 = sphi 0, %s63
    %s85 = sphi 0, %s87
    %s88 = sphi 0, %s85
    %s89 = sphi 0, %s88
    %s105 = sphi 0, %s89
    %s111 = sphi 0, %s113
    %s114 = sphi 0, %s111
    %s115 = sphi 0, %s114
    %s131 = sphi 0, %s115
    %s137 = sphi 0, %s139
    %s140 = sphi 0, %s137
    %s141 = sphi 0, %s140
    %s157 = sphi 0, %s141
    %s165 = sphi 0, %s167
    %s168 = sphi 0, %s165
    %s169 = sphi 0, %s168
    %s185 = sphi 0, %s169
  $region4: #{decoder_forward.4} parent=0 // loop_header_branch
    %14 = sbr.rel (%p12) target = $region8
  $region5: #{decoder_forward.4} parent=0 // loop_body
    %s16 = ssub.s32 %s11, 1
    %s17 = ssub.s32 %s11, 2
    %s24 = sadd.s32 1, %s19
    %p25 = scmp.ge.s32.totalorder %s24, 1
    %s26 = scalar_select %p25, 0, %s24
    %s27 = sadd.s32 1, %s18
    %s28 = scalar_select %p25, %s27, %s18
    %p29 = scmp.ge.s32.totalorder %s28, 2
    %s30 = scalar_select %p29, 0, %s28
    %s31 = ssub.s32 %s18, %s30
    %p32 = scmp.eq.s32.totalorder %s31, 0
    %s34 = sadd.s32 %s33, 1
    %s35 = scalar_select %p32, %s33, %s34
    %p38 = pneg %p32
    %p39 = scmp.eq.s32.totalorder %s11, 1
    %p40 = por %p38, %p39
    %p41 = scmp.ne.s32.totalorder %s33, %s36
    %p42 = scmp.eq.s32.totalorder %s11, 0
    %p43 = por %p41, %p42
    %p44 = scmp.ne.s32.totalorder %s33, %s36
    %p45 = scmp.eq.s32.totalorder %s16, 1
    %p46 = por %p44, %p45
    %p47 = scmp.ne.s32.totalorder %s36, %s37
    %p48 = scmp.eq.s32.totalorder %s16, 0
    %p49 = por %p47, %p48
    %p50 = scmp.ne.s32.totalorder %s36, %s37
    %p51 = scmp.eq.s32.totalorder %s17, 1
    %p52 = por %p50, %p51
    %p54 = scmp.ne.s32.totalorder %s37, %s53
    %p55 = scmp.eq.s32.totalorder %s17, 0
    %p56 = por %p54, %p55
    %s57 = ssub.s32 %s18, %s30
    %p58 = scmp.eq.s32.totalorder %s57, 0
    %s60 = sadd.s32 %s59, 1
    %s61 = scalar_select %p58, %s59, %s60
    %p64 = pneg %p58
    %p65 = scmp.eq.s32.totalorder %s11, 1
    %p66 = por %p64, %p65
    %p67 = scmp.ne.s32.totalorder %s59, %s62
    %p68 = scmp.eq.s32.totalorder %s11, 0
    %p69 = por %p67, %p68
    %p70 = scmp.ne.s32.totalorder %s59, %s62
    %p71 = scmp.eq.s32.totalorder %s16, 1
    %p72 = por %p70, %p71
    %p73 = scmp.ne.s32.totalorder %s62, %s63
    %p74 = scmp.eq.s32.totalorder %s16, 0
    %p75 = por %p73, %p74
    %p76 = scmp.ne.s32.totalorder %s62, %s63
    %p77 = scmp.eq.s32.totalorder %s17, 1
    %p78 = por %p76, %p77
    %p80 = scmp.ne.s32.totalorder %s63, %s79
    %p81 = scmp.eq.s32.totalorder %s17, 0
    %p82 = por %p80, %p81
    %s83 = ssub.s32 %s19, %s26
    %p84 = scmp.eq.s32.totalorder %s83, 0
    %s86 = sadd.s32 %s85, 1
    %s87 = scalar_select %p84, %s85, %s86
    %p90 = pneg %p84
    %p91 = scmp.eq.s32.totalorder %s11, 1
    %p92 = por %p90, %p91
    %p93 = scmp.ne.s32.totalorder %s85, %s88
    %p94 = scmp.eq.s32.totalorder %s11, 0
    %p95 = por %p93, %p94
    %p96 = scmp.ne.s32.totalorder %s85, %s88
    %p97 = scmp.eq.s32.totalorder %s16, 1
    %p98 = por %p96, %p97
    %p99 = scmp.ne.s32.totalorder %s88, %s89
    %p100 = scmp.eq.s32.totalorder %s16, 0
    %p101 = por %p99, %p100
    %p102 = scmp.ne.s32.totalorder %s88, %s89
    %p103 = scmp.eq.s32.totalorder %s17, 1
    %p104 = por %p102, %p103
    %p106 = scmp.ne.s32.totalorder %s89, %s105
    %p107 = scmp.eq.s32.totalorder %s17, 0
    %p108 = por %p106, %p107
    %s109 = ssub.s32 %s19, %s26
    %p110 = scmp.eq.s32.totalorder %s109, 0
    %s112 = sadd.s32 %s111, 1
    %s113 = scalar_select %p110, %s111, %s112
    %p116 = pneg %p110
    %p117 = scmp.eq.s32.totalorder %s11, 1
    %p118 = por %p116, %p117
    %p119 = scmp.ne.s32.totalorder %s111, %s114
    %p120 = scmp.eq.s32.totalorder %s11, 0
    %p121 = por %p119, %p120
    %p122 = scmp.ne.s32.totalorder %s111, %s114
    %p123 = scmp.eq.s32.totalorder %s16, 1
    %p124 = por %p122, %p123
    %p125 = scmp.ne.s32.totalorder %s114, %s115
    %p126 = scmp.eq.s32.totalorder %s16, 0
    %p127 = por %p125, %p126
    %p128 = scmp.ne.s32.totalorder %s114, %s115
    %p129 = scmp.eq.s32.totalorder %s17, 1
    %p130 = por %p128, %p129
    %p132 = scmp.ne.s32.totalorder %s115, %s131
    %p133 = scmp.eq.s32.totalorder %s17, 0
    %p134 = por %p132, %p133
    %s135 = ssub.s32 %s19, %s26
    %p136 = scmp.eq.s32.totalorder %s135, 0
    %s138 = sadd.s32 %s137, 1
    %s139 = scalar_select %p136, %s137, %s138
    %p142 = pneg %p136
    %p143 = scmp.eq.s32.totalorder %s11, 1
    %p144 = por %p142, %p143
    %p145 = scmp.ne.s32.totalorder %s137, %s140
    %p146 = scmp.eq.s32.totalorder %s11, 0
    %p147 = por %p145, %p146
    %p148 = scmp.ne.s32.totalorder %s137, %s140
    %p149 = scmp.eq.s32.totalorder %s16, 1
    %p150 = por %p148, %p149
    %p151 = scmp.ne.s32.totalorder %s140, %s141
    %p152 = scmp.eq.s32.totalorder %s16, 0
    %p153 = por %p151, %p152
    %p154 = scmp.ne.s32.totalorder %s140, %s141
    %p155 = scmp.eq.s32.totalorder %s17, 1
    %p156 = por %p154, %p155
    %p158 = scmp.ne.s32.totalorder %s141, %s157
    %p159 = scmp.eq.s32.totalorder %s17, 0
    %p160 = por %p158, %p159
    %s161 = ssub.s32 %s18, %s30
    %s162 = ssub.s32 %s19, %s26
    %s163 = sor.u32 %s161, %s162
    %p164 = scmp.eq.s32.totalorder %s163, 0
    %s166 = sadd.s32 %s165, 1
    %s167 = scalar_select %p164, %s165, %s166
    %p170 = pneg %p164
    %p171 = scmp.eq.s32.totalorder %s11, 1
    %p172 = por %p170, %p171
    %p173 = scmp.ne.s32.totalorder %s165, %s168
    %p174 = scmp.eq.s32.totalorder %s11, 0
    %p175 = por %p173, %p174
    %p176 = scmp.ne.s32.totalorder %s165, %s168
    %p177 = scmp.eq.s32.totalorder %s16, 1
    %p178 = por %p176, %p177
    %p179 = scmp.ne.s32.totalorder %s168, %s169
    %p180 = scmp.eq.s32.totalorder %s16, 0
    %p181 = por %p179, %p180
    %p182 = scmp.ne.s32.totalorder %s168, %s169
    %p183 = scmp.eq.s32.totalorder %s17, 1
    %p184 = por %p182, %p183
    %p186 = scmp.ne.s32.totalorder %s169, %s185
    %p187 = scmp.eq.s32.totalorder %s17, 0
    %p188 = por %p186, %p187
    %p189 = scmp.le.s32.totalorder 1, %s11
    %p190 = scmp.lt.s32.totalorder %s11, 3
    %p191 = pnand %p189, %p190
    %p192 = pneg %p191
    // Predicated region
    $region9: #{decoder_forward.4} parent=5 // pred_check
      _
    $region10: #{decoder_forward.4} parent=5 // pred_check_branch
      %194 = sbr.rel (%p191) target = $region12
    $region11: #{decoder_forward.4} parent=5 // pred_region
      %s195 = ssub.s32 %s11, 1
      // Predicated region
      $region13: #{decoder_forward.4} parent=11 // pred_check
        %p196 = pneg %p101
      $region14: #{decoder_forward.4} parent=11 // pred_check_branch
        %198 = sbr.rel (%p196) target = $region16
      $region15: #{decoder_forward.4} parent=11 // pred_region
        %p199 = scmp.lt.s32.totalorder %s21, 0
        %s200 = scalar_select %p199, %s21, 0
        %s201 = smul.addr %s200, 4
        %s202 = scalar_lea.vmem %s2, %s201
      $region16: #{decoder_forward.4} parent=11 // pred_fallthru
        _
      // Predicated region
      $region17: #{decoder_forward.4} parent=11 // pred_check
        %p203 = pneg %p127
      $region18: #{decoder_forward.4} parent=11 // pred_check_branch
        %205 = sbr.rel (%p203) target = $region20
      $region19: #{decoder_forward.4} parent=11 // pred_region
        %p206 = scmp.lt.s32.totalorder %s21, 0
        %s207 = scalar_select %p206, %s21, 0
        %s208 = smul.addr %s207, 4
        %s209 = scalar_lea.vmem %s3, %s208
      $region20: #{decoder_forward.4} parent=11 // pred_fallthru
        _
      // Predicated region
      $region21: #{decoder_forward.4} parent=11 // pred_check
        %p210 = pneg %p153
      $region22: #{decoder_forward.4} parent=11 // pred_check_branch
        %212 = sbr.rel (%p210) target = $region24
      $region23: #{decoder_forward.4} parent=11 // pred_region
        %p213 = scmp.lt.s32.totalorder %s21, 0
        %s214 = scalar_select %p213, %s21, 0
        %s215 = scalar_lea.vmem %s4, %s214
      $region24: #{decoder_forward.4} parent=11 // pred_fallthru
        _
    $region12: #{decoder_forward.4} parent=5 // pred_fallthru
      _
    %p216 = scmp.lt.s32.totalorder %s11, 2
    // Predicated region
    $region25: #{decoder_forward.4} parent=5 // pred_check
      %p217 = pneg %p216
    $region26: #{decoder_forward.4} parent=5 // pred_check_branch
      %219 = sbr.rel (%p217) target = $region28
    $region27: #{decoder_forward.4} parent=5 // pred_region
      // Predicated region
      $region29: #{decoder_forward.4} parent=27 // pred_check
        %p220 = pneg %p43
      $region30: #{decoder_forward.4} parent=27 // pred_check_branch
        %222 = sbr.rel (%p220) target = $region32
      $region31: #{decoder_forward.4} parent=27 // pred_region
        %p223 = scmp.lt.s32.totalorder %s18, 1
        %s224 = scalar_select %p223, %s18, 1
        %s225 = smul.addr %s224, 54
        %s226 = smul.addr %s225, 4
        %s227 = scalar_lea.vmem %s0, %s226
      $region32: #{decoder_forward.4} parent=27 // pred_fallthru
        _
      // Predicated region
      $region33: #{decoder_forward.4} parent=27 // pred_check
        %p228 = pneg %p69
      $region34: #{decoder_forward.4} parent=27 // pred_check_branch
        %230 = sbr.rel (%p228) target = $region36
      $region35: #{decoder_forward.4} parent=27 // pred_region
        %p231 = scmp.lt.s32.totalorder %s18, 1
        %s232 = scalar_select %p231, %s18, 1
        %s233 = smul.addr %s232, 54
        %s234 = smul.addr %s233, 4
        %s235 = scalar_lea.vmem %s1, %s234
      $region36: #{decoder_forward.4} parent=27 // pred_fallthru
        _
    $region28: #{decoder_forward.4} parent=5 // pred_fallthru
      _
    %p236 = scmp.le.s32.totalorder 1, %s11
    %p237 = scmp.lt.s32.totalorder %s11, 3
    %p238 = pnand %p236, %p237
    %p239 = pneg %p238
    // Predicated region
    $region37: #{decoder_forward.4} parent=5 // pred_check
      _
    $region38: #{decoder_forward.4} parent=5 // pred_check_branch
      %241 = sbr.rel (%p238) target = $region40
    $region39: #{decoder_forward.4} parent=5 // pred_region
      %s242 = ssub.s32 %s11, 1
      %p243 = scmp.lt.s32.totalorder %s20, 1
      %s244 = scalar_select %p243, %s20, 1
      %s245 = smul.addr %s244, 54
      %s246 = smul.addr %s245, 4
      %s247 = scalar_lea.vmem %s0, %s246
      %p248 = pneg %p49
      %p249 = pneg %p46
      %p250 = scmp.lt.s32.totalorder %s20, 1
      %s251 = scalar_select %p250, %s20, 1
      %s252 = smul.addr %s251, 54
      %s253 = smul.addr %s252, 4
      %s254 = scalar_lea.vmem %s1, %s253
      %p255 = pneg %p75
      %p256 = pneg %p72
      %p257 = scmp.lt.s32.totalorder %s21, 0
      %s258 = scalar_select %p257, %s21, 0
      %s259 = smul.addr %s258, 4
      %s260 = scalar_lea.vmem %s2, %s259
      %p261 = pneg %p101
      %p262 = pneg %p98
      %p263 = scmp.lt.s32.totalorder %s21, 0
      %s264 = scalar_select %p263, %s21, 0
      %s265 = smul.addr %s264, 4
      %s266 = scalar_lea.vmem %s3, %s265
      %p267 = pneg %p127
      %p268 = pneg %p124
      %p269 = scmp.lt.s32.totalorder %s21, 0
      %s270 = scalar_select %p269, %s21, 0
      %s271 = scalar_lea.vmem %s4, %s270
      %p272 = pneg %p153
      %p273 = pneg %p150
      %p274 = pneg %p181
      %p275 = pneg %p178
      %p276 = scmp.lt.s32.totalorder %s20, 1
      %s277 = scalar_select %p276, %s20, 1
      %p278 = scmp.lt.s32.totalorder %s21, 0
      %s279 = scalar_select %p278, %s21, 0
      %s280 = smul.addr %s277, 32
      %s281 = sadd.s32 %s279, %s280
      %s282 = smul.addr %s281, 4
      %s283 = scalar_lea.vmem %s5, %s282
      %p284 = scmp.lt.s32.totalorder %s20, 1
      %s285 = scalar_select %p284, %s20, 1
      %s286 = smul.addr %s285, 54
      %s287 = smul.addr %s286, 4
      %s288 = scalar_lea.vmem %s0, %s287
      %p289 = scmp.lt.s32.totalorder %s20, 1
      %s290 = scalar_select %p289, %s20, 1
      %s291 = smul.addr %s290, 54
      %s292 = smul.addr %s291, 4
      %s293 = scalar_lea.vmem %s1, %s292
      %p294 = scmp.lt.s32.totalorder %s21, 0
      %s295 = scalar_select %p294, %s21, 0
      %s296 = smul.addr %s295, 4
      %s297 = scalar_lea.vmem %s2, %s296
      %p298 = scmp.lt.s32.totalorder %s21, 0
      %s299 = scalar_select %p298, %s21, 0
      %s300 = smul.addr %s299, 4
      %s301 = scalar_lea.vmem %s3, %s300
      %p302 = scmp.lt.s32.totalorder %s21, 0
      %s303 = scalar_select %p302, %s21, 0
      %s304 = scalar_lea.vmem %s4, %s303
      %p305 = scmp.lt.s32.totalorder %s20, 1
      %s306 = scalar_select %p305, %s20, 1
      %p307 = scmp.lt.s32.totalorder %s21, 0
      %s308 = scalar_select %p307, %s21, 0
      %s309 = smul.addr %s306, 32
      %s310 = sadd.s32 %s308, %s309
      %s311 = smul.addr %s310, 4
      %s312 = scalar_lea.vmem %s5, %s311
      %314 = vst [vmem:[#allocation2] sm:$0xff] 0.0
      %315 = vst [vmem:[#allocation2 + $0x8] sm:$0xff] 0.0
      %316 = vst [vmem:[#allocation2 + $0x10] sm:$0xff] 0.0
      %317 = vst [vmem:[#allocation2 + $0x18] sm:$0xff] 0.0
      %318 = vst [vmem:[#allocation2 + $0x20] sm:$0xff] 0.0
      %319 = vst [vmem:[#allocation2 + $0x28] sm:$0xff] 0.0
      %320 = vst [vmem:[#allocation2 + $0x30] sm:$0xff] 0.0
      %321 = vst [vmem:[#allocation2 + $0x38] sm:$0xff] 0.0
      %322 = vst [vmem:[#allocation2 + $0x40] sm:$0xff] 0.0
      %323 = vst [vmem:[#allocation2 + $0x48] sm:$0xff] 0.0
      %324 = vst [vmem:[#allocation2 + $0x50] sm:$0xff] 0.0
      %325 = vst [vmem:[#allocation2 + $0x58] sm:$0xff] 0.0
      %326 = vst [vmem:[#allocation2 + $0x60] sm:$0xff] 0.0
      %327 = vst [vmem:[#allocation2 + $0x68] sm:$0xff] 0.0
      %328 = vst [vmem:[#allocation2 + $0x70] sm:$0xff] 0.0
      %329 = vst [vmem:[#allocation2 + $0x78] sm:$0xff] 0.0
      %330 = vst [vmem:[#allocation2 + $0x80] sm:$0xff] 0.0
      %331 = vst [vmem:[#allocation2 + $0x88] sm:$0xff] 0.0
      %332 = vst [vmem:[#allocation2 + $0x90] sm:$0xff] 0.0
      %333 = vst [vmem:[#allocation2 + $0x98] sm:$0xff] 0.0
      %334 = vst [vmem:[#allocation2 + $0xa0] sm:$0xff] 0.0
      %335 = vst [vmem:[#allocation2 + $0xa8] sm:$0xff] 0.0
      %336 = vst [vmem:[#allocation2 + $0xb0] sm:$0xff] 0.0
      %337 = vst [vmem:[#allocation2 + $0xb8] sm:$0xff] 0.0
      %338 = vst [vmem:[#allocation2 + $0xc0] sm:$0xff] 0.0
      %339 = vst [vmem:[#allocation2 + $0xc8] sm:$0xff] 0.0
      %340 = vst [vmem:[#allocation2 + $0xd0] sm:$0xff] 0.0
      %341 = vst [vmem:[#allocation2 + $0xd8] sm:$0xff] 0.0
      %342 = vst [vmem:[#allocation2 + $0xe0] sm:$0xff] 0.0
      %343 = vst [vmem:[#allocation2 + $0xe8] sm:$0xff] 0.0
      %344 = vst [vmem:[#allocation2 + $0xf0] sm:$0xff] 0.0
      %345 = vst [vmem:[#allocation2 + $0xf8] sm:$0xff] 0.0
      %v346 = vld [vmem:[%s288] sm:$0xf]
      %v347 = vld [vmem:[%s288 + $0x4] sm:$0xf]
      %v348 = vld [vmem:[%s288 + $0x8] sm:$0x1]
      %v349 = vld [vmem:[%s288 + $0xc] sm:$0xf]
      %v350 = vld [vmem:[%s288 + $0x10] sm:$0xf]
      %v351 = vld [vmem:[%s288 + $0x14] sm:$0x1]
      %v352 = vld [vmem:[%s288 + $0x18] sm:$0xf]
      %v353 = vld [vmem:[%s288 + $0x1c] sm:$0xf]
      %v354 = vld [vmem:[%s288 + $0x20] sm:$0x1]
      %v355 = vld [vmem:[%s288 + $0x24] sm:$0xf]
      %v356 = vld [vmem:[%s288 + $0x28] sm:$0xf]
      %v357 = vld [vmem:[%s288 + $0x2c] sm:$0x1]
      %v358 = vld [vmem:[%s288 + $0x30] sm:$0xf]
      %v359 = vld [vmem:[%s288 + $0x34] sm:$0xf]
      %v360 = vld [vmem:[%s288 + $0x38] sm:$0x1]
      %v361 = vld [vmem:[%s288 + $0x3c] sm:$0xf]
      %v362 = vld [vmem:[%s288 + $0x40] sm:$0xf]
      %v363 = vld [vmem:[%s288 + $0x44] sm:$0x1]
      %v364 = vld [vmem:[%s288 + $0x48] sm:$0xf]
      %v365 = vld [vmem:[%s288 + $0x4c] sm:$0xf]
      %v366 = vld [vmem:[%s288 + $0x50] sm:$0x1]
      %v367 = vld [vmem:[%s288 + $0x54] sm:$0xf]
      %v368 = vld [vmem:[%s288 + $0x58] sm:$0xf]
      %v369 = vld [vmem:[%s288 + $0x5c] sm:$0x1]
      %v370 = vld [vmem:[%s288 + $0x60] sm:$0xf]
      %v371 = vld [vmem:[%s288 + $0x64] sm:$0xf]
      %v372 = vld [vmem:[%s288 + $0x68] sm:$0x1]
      %v373 = vld [vmem:[%s288 + $0x6c] sm:$0xf]
      %v374 = vld [vmem:[%s288 + $0x70] sm:$0xf]
      %v375 = vld [vmem:[%s288 + $0x74] sm:$0x1]
      %v376 = vld [vmem:[%s288 + $0x78] sm:$0xf]
      %v377 = vld [vmem:[%s288 + $0x7c] sm:$0xf]
      %v378 = vld [vmem:[%s288 + $0x80] sm:$0x1]
      %v379 = vld [vmem:[%s288 + $0x84] sm:$0xf]
      %v380 = vld [vmem:[%s288 + $0x88] sm:$0xf]
      %v381 = vld [vmem:[%s288 + $0x8c] sm:$0x1]
      %v382 = vld [vmem:[%s288 + $0x90] sm:$0xf]
      %v383 = vld [vmem:[%s288 + $0x94] sm:$0xf]
      %v384 = vld [vmem:[%s288 + $0x98] sm:$0x1]
      %v385 = vld [vmem:[%s288 + $0x9c] sm:$0xf]
      %v386 = vld [vmem:[%s288 + $0xa0] sm:$0xf]
      %v387 = vld [vmem:[%s288 + $0xa4] sm:$0x1]
      %v388 = vld [vmem:[%s288 + $0xa8] sm:$0xf]
      %v389 = vld [vmem:[%s288 + $0xac] sm:$0xf]
      %v390 = vld [vmem:[%s288 + $0xb0] sm:$0x1]
      %v391 = vld [vmem:[%s288 + $0xb4] sm:$0xf]
      %v392 = vld [vmem:[%s288 + $0xb8] sm:$0xf]
      %v393 = vld [vmem:[%s288 + $0xbc] sm:$0x1]
      %v394 = vld [vmem:[%s288 + $0xc0] sm:$0xf]
      %v395 = vld [vmem:[%s288 + $0xc4] sm:$0xf]
      %v396 = vld [vmem:[%s288 + $0xc8] sm:$0x1]
      %v397 = vld [vmem:[%s288 + $0xcc] sm:$0xf]
      %v398 = vld [vmem:[%s288 + $0xd0] sm:$0xf]
      %v399 = vld [vmem:[%s288 + $0xd4] sm:$0x1]
      %v436 = vunpack.c.l.b16 %v346
      %v437 = vunpack.c.l.b16 %v347
      %v438 = vunpack.c.l.b16 %v349
      %v439 = vunpack.c.l.b16 %v350
      %v440 = vunpack.c.l.b16 %v352
      %v441 = vunpack.c.l.b16 %v353
      %v442 = vunpack.c.l.b16 %v355
      %v443 = vunpack.c.l.b16 %v356
      %v444 = vunpack.c.l.b16 %v358
      %v445 = vunpack.c.l.b16 %v359
      %v446 = vunpack.c.l.b16 %v361
      %v447 = vunpack.c.l.b16 %v362
      %v448 = vunpack.c.l.b16 %v364
      %v449 = vunpack.c.l.b16 %v365
      %v450 = vunpack.c.l.b16 %v367
      %v451 = vunpack.c.l.b16 %v368
      %v452 = vunpack.c.l.b16 %v370
      %v453 = vunpack.c.l.b16 %v371
      %v454 = vunpack.c.l.b16 %v373
      %v455 = vunpack.c.l.b16 %v374
      %v456 = vunpack.c.l.b16 %v376
      %v457 = vunpack.c.l.b16 %v377
      %v458 = vunpack.c.l.b16 %v379
      %v459 = vunpack.c.l.b16 %v380
      %v460 = vunpack.c.l.b16 %v382
      %v461 = vunpack.c.l.b16 %v383
      %v462 = vunpack.c.l.b16 %v385
      %v463 = vunpack.c.l.b16 %v386
      %v464 = vunpack.c.l.b16 %v388
      %v465 = vunpack.c.l.b16 %v389
      %v466 = vunpack.c.l.b16 %v391
      %v467 = vunpack.c.l.b16 %v392
      %v468 = vunpack.c.l.b16 %v394
      %v469 = vunpack.c.l.b16 %v395
      %v470 = vunpack.c.l.b16 %v397
      %v471 = vunpack.c.l.b16 %v398
      %v472 = vpack.c.b16 %v437, %v436
      %v473 = vpack.c.b16 %v439, %v438
      %v474 = vpack.c.b16 %v441, %v440
      %v475 = vpack.c.b16 %v443, %v442
      %v476 = vpack.c.b16 %v445, %v444
      %v477 = vpack.c.b16 %v447, %v446
      %v478 = vpack.c.b16 %v449, %v448
      %v479 = vpack.c.b16 %v451, %v450
      %v480 = vpack.c.b16 %v453, %v452
      %v481 = vpack.c.b16 %v455, %v454
      %v482 = vpack.c.b16 %v457, %v456
      %v483 = vpack.c.b16 %v459, %v458
      %v484 = vpack.c.b16 %v461, %v460
      %v485 = vpack.c.b16 %v463, %v462
      %v486 = vpack.c.b16 %v465, %v464
      %v487 = vpack.c.b16 %v467, %v466
      %v488 = vpack.c.b16 %v469, %v468
      %v489 = vpack.c.b16 %v471, %v470
      %v508 = vunpack.c.l.b16 %v348
      %v509 = vunpack.c.l.b16 %v351
      %v510 = vunpack.c.l.b16 %v354
      %v511 = vunpack.c.l.b16 %v357
      %v512 = vunpack.c.l.b16 %v360
      %v513 = vunpack.c.l.b16 %v363
      %v514 = vunpack.c.l.b16 %v366
      %v515 = vunpack.c.l.b16 %v369
      %v516 = vunpack.c.l.b16 %v372
      %v517 = vunpack.c.l.b16 %v375
      %v518 = vunpack.c.l.b16 %v378
      %v519 = vunpack.c.l.b16 %v381
      %v520 = vunpack.c.l.b16 %v384
      %v521 = vunpack.c.l.b16 %v387
      %v522 = vunpack.c.l.b16 %v390
      %v523 = vunpack.c.l.b16 %v393
      %v524 = vunpack.c.l.b16 %v396
      %v525 = vunpack.c.l.b16 %v399
      %v526 = vpack.c.b16 %v508, %v508
      %v527 = vpack.c.b16 %v509, %v509
      %v528 = vpack.c.b16 %v510, %v510
      %v529 = vpack.c.b16 %v511, %v511
      %v530 = vpack.c.b16 %v512, %v512
      %v531 = vpack.c.b16 %v513, %v513
      %v532 = vpack.c.b16 %v514, %v514
      %v533 = vpack.c.b16 %v515, %v515
      %v534 = vpack.c.b16 %v516, %v516
      %v535 = vpack.c.b16 %v517, %v517
      %v536 = vpack.c.b16 %v518, %v518
      %v537 = vpack.c.b16 %v519, %v519
      %v538 = vpack.c.b16 %v520, %v520
      %v539 = vpack.c.b16 %v521, %v521
      %v540 = vpack.c.b16 %v522, %v522
      %v541 = vpack.c.b16 %v523, %v523
      %v542 = vpack.c.b16 %v524, %v524
      %v543 = vpack.c.b16 %v525, %v525
      %vm544 = vsmask.f32 7424
      %v546 = vshrl.u32 %v472, 16
      %v548 = vshll.u32 %v472, 16
      %v550 = vrot.slane %v548, 1
      %v551 = vor.u32 %v546, %v550
      %v553 = vshll.u32 %v526, 16
      %v555 = vrot.slane %v553, 1
      %v556 = vsel %vm544, %v551, %v555
      %v558 = vshrl.u32 %v473, 16
      %v560 = vshll.u32 %v473, 16
      %v562 = vrot.slane %v560, 1
      %v563 = vor.u32 %v558, %v562
      %v565 = vshll.u32 %v527, 16
      %v567 = vrot.slane %v565, 1
      %v568 = vsel %vm544, %v563, %v567
      %v570 = vshrl.u32 %v474, 16
      %v572 = vshll.u32 %v474, 16
      %v574 = vrot.slane %v572, 1
      %v575 = vor.u32 %v570, %v574
      %v577 = vshll.u32 %v528, 16
      %v579 = vrot.slane %v577, 1
      %v580 = vsel %vm544, %v575, %v579
      %v582 = vshrl.u32 %v475, 16
      %v584 = vshll.u32 %v475, 16
      %v586 = vrot.slane %v584, 1
      %v587 = vor.u32 %v582, %v586
      %v589 = vshll.u32 %v529, 16
      %v591 = vrot.slane %v589, 1
      %v592 = vsel %vm544, %v587, %v591
      %v594 = vshrl.u32 %v476, 16
      %v596 = vshll.u32 %v476, 16
      %v598 = vrot.slane %v596, 1
      %v599 = vor.u32 %v594, %v598
      %v601 = vshll.u32 %v530, 16
      %v603 = vrot.slane %v601, 1
      %v604 = vsel %vm544, %v599, %v603
      %v606 = vshrl.u32 %v477, 16
      %v608 = vshll.u32 %v477, 16
      %v610 = vrot.slane %v608, 1
      %v611 = vor.u32 %v606, %v610
      %v613 = vshll.u32 %v531, 16
      %v615 = vrot.slane %v613, 1
      %v616 = vsel %vm544, %v611, %v615
      %v618 = vshrl.u32 %v478, 16
      %v620 = vshll.u32 %v478, 16
      %v622 = vrot.slane %v620, 1
      %v623 = vor.u32 %v618, %v622
      %v625 = vshll.u32 %v532, 16
      %v627 = vrot.slane %v625, 1
      %v628 = vsel %vm544, %v623, %v627
      %v630 = vshrl.u32 %v479, 16
      %v632 = vshll.u32 %v479, 16
      %v634 = vrot.slane %v632, 1
      %v635 = vor.u32 %v630, %v634
      %v637 = vshll.u32 %v533, 16
      %v639 = vrot.slane %v637, 1
      %v640 = vsel %vm544, %v635, %v639
      %v642 = vshrl.u32 %v480, 16
      %v644 = vshll.u32 %v480, 16
      %v646 = vrot.slane %v644, 1
      %v647 = vor.u32 %v642, %v646
      %v649 = vshll.u32 %v534, 16
      %v651 = vrot.slane %v649, 1
      %v652 = vsel %vm544, %v647, %v651
      %v654 = vshrl.u32 %v481, 16
      %v656 = vshll.u32 %v481, 16
      %v658 = vrot.slane %v656, 1
      %v659 = vor.u32 %v654, %v658
      %v661 = vshll.u32 %v535, 16
      %v663 = vrot.slane %v661, 1
      %v664 = vsel %vm544, %v659, %v663
      %v666 = vshrl.u32 %v482, 16
      %v668 = vshll.u32 %v482, 16
      %v670 = vrot.slane %v668, 1
      %v671 = vor.u32 %v666, %v670
      %v673 = vshll.u32 %v536, 16
      %v675 = vrot.slane %v673, 1
      %v676 = vsel %vm544, %v671, %v675
      %v678 = vshrl.u32 %v483, 16
      %v680 = vshll.u32 %v483, 16
      %v682 = vrot.slane %v680, 1
      %v683 = vor.u32 %v678, %v682
      %v685 = vshll.u32 %v537, 16
      %v687 = vrot.slane %v685, 1
      %v688 = vsel %vm544, %v683, %v687
      %v690 = vshrl.u32 %v484, 16
      %v692 = vshll.u32 %v484, 16
      %v694 = vrot.slane %v692, 1
      %v695 = vor.u32 %v690, %v694
      %v697 = vshll.u32 %v538, 16
      %v699 = vrot.slane %v697, 1
      %v700 = vsel %vm544, %v695, %v699
      %v702 = vshrl.u32 %v485, 16
      %v704 = vshll.u32 %v485, 16
      %v706 = vrot.slane %v704, 1
      %v707 = vor.u32 %v702, %v706
      %v709 = vshll.u32 %v539, 16
      %v711 = vrot.slane %v709, 1
      %v712 = vsel %vm544, %v707, %v711
      %v714 = vshrl.u32 %v486, 16
      %v716 = vshll.u32 %v486, 16
      %v718 = vrot.slane %v716, 1
      %v719 = vor.u32 %v714, %v718
      %v721 = vshll.u32 %v540, 16
      %v723 = vrot.slane %v721, 1
      %v724 = vsel %vm544, %v719, %v723
      %v726 = vshrl.u32 %v487, 16
      %v728 = vshll.u32 %v487, 16
      %v730 = vrot.slane %v728, 1
      %v731 = vor.u32 %v726, %v730
      %v733 = vshll.u32 %v541, 16
      %v735 = vrot.slane %v733, 1
      %v736 = vsel %vm544, %v731, %v735
      %v738 = vshrl.u32 %v488, 16
      %v740 = vshll.u32 %v488, 16
      %v742 = vrot.slane %v740, 1
      %v743 = vor.u32 %v738, %v742
      %v745 = vshll.u32 %v542, 16
      %v747 = vrot.slane %v745, 1
      %v748 = vsel %vm544, %v743, %v747
      %v750 = vshrl.u32 %v489, 16
      %v752 = vshll.u32 %v489, 16
      %v754 = vrot.slane %v752, 1
      %v755 = vor.u32 %v750, %v754
      %v757 = vshll.u32 %v543, 16
      %v759 = vrot.slane %v757, 1
      %v760 = vsel %vm544, %v755, %v759
      %761 = vrot.lane.b32.xlu0 %v556, 32
      %v762 = vpop.permute.xlu0 %761
      %763 = vrot.lane.b32.xlu0 %v568, 32
      %v764 = vpop.permute.xlu0 %763
      %765 = vrot.lane.b32.xlu0 %v580, 32
      %v766 = vpop.permute.xlu0 %765
      %767 = vrot.lane.b32.xlu0 %v592, 32
      %v768 = vpop.permute.xlu0 %767
      %769 = vrot.lane.b32.xlu0 %v604, 32
      %v770 = vpop.permute.xlu0 %769
      %771 = vrot.lane.b32.xlu0 %v616, 32
      %v772 = vpop.permute.xlu0 %771
      %773 = vrot.lane.b32.xlu0 %v628, 32
      %v774 = vpop.permute.xlu0 %773
      %775 = vrot.lane.b32.xlu0 %v640, 32
      %v776 = vpop.permute.xlu0 %775
      %777 = vrot.lane.b32.xlu0 %v652, 32
      %v778 = vpop.permute.xlu0 %777
      %779 = vrot.lane.b32.xlu0 %v664, 32
      %v780 = vpop.permute.xlu0 %779
      %781 = vrot.lane.b32.xlu0 %v676, 32
      %v782 = vpop.permute.xlu0 %781
      %783 = vrot.lane.b32.xlu0 %v688, 32
      %v784 = vpop.permute.xlu0 %783
      %785 = vrot.lane.b32.xlu0 %v700, 32
      %v786 = vpop.permute.xlu0 %785
      %787 = vrot.lane.b32.xlu0 %v712, 32
      %v788 = vpop.permute.xlu0 %787
      %789 = vrot.lane.b32.xlu0 %v724, 32
      %v790 = vpop.permute.xlu0 %789
      %791 = vrot.lane.b32.xlu0 %v736, 32
      %v792 = vpop.permute.xlu0 %791
      %793 = vrot.lane.b32.xlu0 %v748, 32
      %v794 = vpop.permute.xlu0 %793
      %795 = vrot.lane.b32.xlu0 %v760, 32
      %v796 = vpop.permute.xlu0 %795
      %vm797 = vcmask 1046528
      %v798 = vrot.slane %v472, 1
      %v799 = vrot.slane %v526, 1
      %v800 = vsel %vm797, %v798, %v799
      %v801 = vrot.slane %v473, 1
      %v802 = vrot.slane %v527, 1
      %v803 = vsel %vm797, %v801, %v802
      %v804 = vrot.slane %v474, 1
      %v805 = vrot.slane %v528, 1
      %v806 = vsel %vm797, %v804, %v805
      %v807 = vrot.slane %v475, 1
      %v808 = vrot.slane %v529, 1
      %v809 = vsel %vm797, %v807, %v808
      %v810 = vrot.slane %v476, 1
      %v811 = vrot.slane %v530, 1
      %v812 = vsel %vm797, %v810, %v811
      %v813 = vrot.slane %v477, 1
      %v814 = vrot.slane %v531, 1
      %v815 = vsel %vm797, %v813, %v814
      %v816 = vrot.slane %v478, 1
      %v817 = vrot.slane %v532, 1
      %v818 = vsel %vm797, %v816, %v817
      %v819 = vrot.slane %v479, 1
      %v820 = vrot.slane %v533, 1
      %v821 = vsel %vm797, %v819, %v820
      %v822 = vrot.slane %v480, 1
      %v823 = vrot.slane %v534, 1
      %v824 = vsel %vm797, %v822, %v823
      %v825 = vrot.slane %v481, 1
      %v826 = vrot.slane %v535, 1
      %v827 = vsel %vm797, %v825, %v826
      %v828 = vrot.slane %v482, 1
      %v829 = vrot.slane %v536, 1
      %v830 = vsel %vm797, %v828, %v829
      %v831 = vrot.slane %v483, 1
      %v832 = vrot.slane %v537, 1
      %v833 = vsel %vm797, %v831, %v832
      %v834 = vrot.slane %v484, 1
      %v835 = vrot.slane %v538, 1
      %v836 = vsel %vm797, %v834, %v835
      %v837 = vrot.slane %v485, 1
      %v838 = vrot.slane %v539, 1
      %v839 = vsel %vm797, %v837, %v838
      %v840 = vrot.slane %v486, 1
      %v841 = vrot.slane %v540, 1
      %v842 = vsel %vm797, %v840, %v841
      %v843 = vrot.slane %v487, 1
      %v844 = vrot.slane %v541, 1
      %v845 = vsel %vm797, %v843, %v844
      %v846 = vrot.slane %v488, 1
      %v847 = vrot.slane %v542, 1
      %v848 = vsel %vm797, %v846, %v847
      %v849 = vrot.slane %v489, 1
      %v850 = vrot.slane %v543, 1
      %v851 = vsel %vm797, %v849, %v850
      %852 = vrot.lane.b32.xlu0 %v800, 64
      %v853 = vpop.permute.xlu0 %852
      %854 = vrot.lane.b32.xlu0 %v803, 64
      %v855 = vpop.permute.xlu0 %854
      %856 = vrot.lane.b32.xlu0 %v806, 64
      %v857 = vpop.permute.xlu0 %856
      %858 = vrot.lane.b32.xlu0 %v809, 64
      %v859 = vpop.permute.xlu0 %858
      %860 = vrot.lane.b32.xlu0 %v812, 64
      %v861 = vpop.permute.xlu0 %860
      %862 = vrot.lane.b32.xlu0 %v815, 64
      %v863 = vpop.permute.xlu0 %862
      %864 = vrot.lane.b32.xlu0 %v818, 64
      %v865 = vpop.permute.xlu0 %864
      %866 = vrot.lane.b32.xlu0 %v821, 64
      %v867 = vpop.permute.xlu0 %866
      %868 = vrot.lane.b32.xlu0 %v824, 64
      %v869 = vpop.permute.xlu0 %868
      %870 = vrot.lane.b32.xlu0 %v827, 64
      %v871 = vpop.permute.xlu0 %870
      %872 = vrot.lane.b32.xlu0 %v830, 64
      %v873 = vpop.permute.xlu0 %872
      %874 = vrot.lane.b32.xlu0 %v833, 64
      %v875 = vpop.permute.xlu0 %874
      %876 = vrot.lane.b32.xlu0 %v836, 64
      %v877 = vpop.permute.xlu0 %876
      %878 = vrot.lane.b32.xlu0 %v839, 64
      %v879 = vpop.permute.xlu0 %878
      %880 = vrot.lane.b32.xlu0 %v842, 64
      %v881 = vpop.permute.xlu0 %880
      %882 = vrot.lane.b32.xlu0 %v845, 64
      %v883 = vpop.permute.xlu0 %882
      %884 = vrot.lane.b32.xlu0 %v848, 64
      %v885 = vpop.permute.xlu0 %884
      %886 = vrot.lane.b32.xlu0 %v851, 64
      %v887 = vpop.permute.xlu0 %886
      %vm888 = vcmask 261120
      %v890 = vsel %vm888, %v472, %v762
      %v892 = vsel %vm888, %v473, %v764
      %v894 = vsel %vm888, %v474, %v766
      %v896 = vsel %vm888, %v475, %v768
      %v898 = vsel %vm888, %v476, %v770
      %v900 = vsel %vm888, %v477, %v772
      %v902 = vsel %vm888, %v478, %v774
      %v904 = vsel %vm888, %v479, %v776
      %v906 = vsel %vm888, %v480, %v778
      %v908 = vsel %vm888, %v481, %v780
      %v910 = vsel %vm888, %v482, %v782
      %v912 = vsel %vm888, %v483, %v784
      %v914 = vsel %vm888, %v484, %v786
      %v916 = vsel %vm888, %v485, %v788
      %v918 = vsel %vm888, %v486, %v790
      %v920 = vsel %vm888, %v487, %v792
      %v922 = vsel %vm888, %v488, %v794
      %v924 = vsel %vm888, %v489, %v796
      %vm925 = vcmask 523264
      %v927 = vsel %vm925, %v890, %v853
      %v929 = vsel %vm925, %v892, %v855
      %v931 = vsel %vm925, %v894, %v857
      %v933 = vsel %vm925, %v896, %v859
      %v935 = vsel %vm925, %v898, %v861
      %v937 = vsel %vm925, %v900, %v863
      %v939 = vsel %vm925, %v902, %v865
      %v941 = vsel %vm925, %v904, %v867
      %v943 = vsel %vm925, %v906, %v869
      %v945 = vsel %vm925, %v908, %v871
      %v947 = vsel %vm925, %v910, %v873
      %v949 = vsel %vm925, %v912, %v875
      %v951 = vsel %vm925, %v914, %v877
      %v953 = vsel %vm925, %v916, %v879
      %v955 = vsel %vm925, %v918, %v881
      %v957 = vsel %vm925, %v920, %v883
      %v959 = vsel %vm925, %v922, %v885
      %v961 = vsel %vm925, %v924, %v887
      %v962 = vld [vmem:[#allocation2] sm:$0xff]
      %v963 = vld [vmem:[#allocation2 + $0x8] sm:$0xff]
      %v964 = vld [vmem:[#allocation2 + $0x10] sm:$0xff]
      %v965 = vld [vmem:[#allocation2 + $0x18] sm:$0xff]
      %v966 = vld [vmem:[#allocation2 + $0x20] sm:$0xff]
      %v967 = vld [vmem:[#allocation2 + $0x28] sm:$0xff]
      %v968 = vld [vmem:[#allocation2 + $0x30] sm:$0xff]
      %v969 = vld [vmem:[#allocation2 + $0x38] sm:$0xff]
      %v970 = vld [vmem:[#allocation2 + $0x40] sm:$0xff]
      %v971 = vld [vmem:[#allocation2 + $0x48] sm:$0xff]
      %v972 = vld [vmem:[#allocation2 + $0x50] sm:$0xff]
      %v973 = vld [vmem:[#allocation2 + $0x58] sm:$0xff]
      %v974 = vld [vmem:[#allocation2 + $0x60] sm:$0xff]
      %v975 = vld [vmem:[#allocation2 + $0x68] sm:$0xff]
      %v976 = vld [vmem:[#allocation2 + $0x70] sm:$0xff]
      %v977 = vld [vmem:[#allocation2 + $0x78] sm:$0xff]
      %v978 = vld [vmem:[#allocation2 + $0x80] sm:$0xff]
      %v979 = vld [vmem:[#allocation2 + $0x88] sm:$0xff]
      %v980 = vld [vmem:[#allocation2 + $0x90] sm:$0xff]
      %v981 = vld [vmem:[#allocation2 + $0x98] sm:$0xff]
      %v982 = vld [vmem:[#allocation2 + $0xa0] sm:$0xff]
      %v983 = vld [vmem:[#allocation2 + $0xa8] sm:$0xff]
      %v984 = vld [vmem:[#allocation2 + $0xb0] sm:$0xff]
      %v985 = vld [vmem:[#allocation2 + $0xb8] sm:$0xff]
      %v986 = vld [vmem:[#allocation2 + $0xc0] sm:$0xff]
      %v987 = vld [vmem:[#allocation2 + $0xc8] sm:$0xff]
      %v988 = vld [vmem:[#allocation2 + $0xd0] sm:$0xff]
      %v989 = vld [vmem:[#allocation2 + $0xd8] sm:$0xff]
      %v990 = vld [vmem:[#allocation2 + $0xe0] sm:$0xff]
      %v991 = vld [vmem:[#allocation2 + $0xe8] sm:$0xff]
      %v992 = vld [vmem:[#allocation2 + $0xf0] sm:$0xff]
      %v993 = vld [vmem:[#allocation2 + $0xf8] sm:$0xff]
      %v994 = vld [vmem:[%s297] sm:$0xf]
      %v995 = vld [vmem:[%s297 + $0x4] sm:$0xf]
      %v996 = vld [vmem:[%s297 + $0x8] sm:$0xf]
      %v997 = vld [vmem:[%s297 + $0xc] sm:$0xf]
      %v998 = vld [vmem:[%s297 + $0x10] sm:$0xf]
      %v999 = vld [vmem:[%s297 + $0x14] sm:$0xf]
      %v1000 = vld [vmem:[%s297 + $0x18] sm:$0xf]
      %v1001 = vld [vmem:[%s297 + $0x1c] sm:$0xf]
      %v1002 = vld [vmem:[%s297 + $0x20] sm:$0xf]
      %v1003 = vld [vmem:[%s297 + $0x24] sm:$0xf]
      %v1004 = vld [vmem:[%s297 + $0x28] sm:$0xf]
      %v1005 = vld [vmem:[%s297 + $0x2c] sm:$0xf]
      %v1018 = vunpack.c.l.b16 %v994
      %v1019 = vunpack.c.l.b16 %v995
      %v1020 = vunpack.c.l.b16 %v996
      %v1021 = vunpack.c.l.b16 %v997
      %v1022 = vunpack.c.l.b16 %v998
      %v1023 = vunpack.c.l.b16 %v999
      %v1024 = vunpack.c.l.b16 %v1000
      %v1025 = vunpack.c.l.b16 %v1001
      %v1026 = vunpack.c.l.b16 %v1002
      %v1027 = vunpack.c.l.b16 %v1003
      %v1028 = vunpack.c.l.b16 %v1004
      %v1029 = vunpack.c.l.b16 %v1005
      %v1030 = vpack.c.b16 %v1019, %v1018
      %v1031 = vpack.c.b16 %v1021, %v1020
      %v1032 = vpack.c.b16 %v1023, %v1022
      %v1033 = vpack.c.b16 %v1025, %v1024
      %v1034 = vpack.c.b16 %v1027, %v1026
      %v1035 = vpack.c.b16 %v1029, %v1028
      %vm1042 = vcmask 785408
      %v1043 = vsel %vm1042, %v927, 0
      %v1045 = vsel %vm1042, %v929, 0
      %v1047 = vsel %vm1042, %v931, 0
      %v1049 = vsel %vm1042, %v933, 0
      %v1051 = vsel %vm1042, %v935, 0
      %v1053 = vsel %vm1042, %v937, 0
      %v1055 = vsel %vm1042, %v939, 0
      %v1057 = vsel %vm1042, %v941, 0
      %v1059 = vsel %vm1042, %v943, 0
      %v1061 = vsel %vm1042, %v945, 0
      %v1063 = vsel %vm1042, %v947, 0
      %v1065 = vsel %vm1042, %v949, 0
      %v1067 = vsel %vm1042, %v951, 0
      %v1069 = vsel %vm1042, %v953, 0
      %v1071 = vsel %vm1042, %v955, 0
      %v1073 = vsel %vm1042, %v957, 0
      %1075 = vmatprep.subr.bf16.mxu0 0
      %1076 = vmatpush1.bf16.msra.mxu0 %v1030
      %1077 = vmatprep.subr.bf16.mxu0 0
      %1078 = vmatpush1.bf16.msra.mxu0 %v1031
      %1079 = vmatprep.subr.bf16.mxu0 0
      %1080 = vmatpush1.bf16.msra.mxu0 %v1032
      %1081 = vmatprep.subr.bf16.mxu0 0
      %1082 = vmatpush1.bf16.msra.mxu0 %v1033
      %1083 = vmatprep.subr.bf16.mxu0 0
      %1084 = vmatpush1.bf16.msra.mxu0 %v1034
      %1085 = vmatprep.subr.bf16.mxu0 0
      %1086 = vmatpush1.bf16.msra.mxu0 %v1035
      %1087 = vmatprep.subr.bf16.mxu0 0
      %1088 = vmatpush1.bf16.msra.mxu0 0
      %1089 = vmatprep.subr.bf16.mxu0 0
      %1090 = vmatpush1.bf16.msra.mxu0 0
      %1091 = vmatprep.subr.bf16.mxu0 0
      %1092 = vmatpush1.bf16.msra.mxu0 0
      %1093 = vmatprep.subr.bf16.mxu0 0
      %1094 = vmatpush1.bf16.msra.mxu0 0
      %1095 = vmatprep.subr.bf16.mxu0 0
      %1096 = vmatpush1.bf16.msra.mxu0 0
      %1097 = vmatprep.subr.bf16.mxu0 0
      %1098 = vmatpush1.bf16.msra.mxu0 0
      %1099 = vmatprep.subr.bf16.mxu0 0
      %1100 = vmatpush1.bf16.msra.mxu0 0
      %1101 = vmatprep.subr.bf16.mxu0 0
      %1102 = vmatpush1.bf16.msra.mxu0 0
      %1103 = vmatprep.subr.bf16.mxu0 0
      %1104 = vmatpush1.bf16.msra.mxu0 0
      %1105 = vmatprep.subr.bf16.mxu0 0
      %1106 = vmatpush1.bf16.msra.mxu0 0
      %1107 = vmatprep.mubr.bf16.mxu0 0
      %1108 = vmatmul.mubr.bf16.gmra.mrb[0].mxu0 %v1043
      %v1109 = vpop.f32.mrb[0].mxu0
      %v1110 = vadd.f32 0.0, %v1109
      %v1111 = vpop.f32.mrb[0].mxu0
      %v1112 = vpop.f32.mrb[0].mxu0
      %v1113 = vadd.f32 0.0, %v1112
      %v1114 = vpop.f32.mrb[0].mxu0
      %1115 = vmatprep.mubr.bf16.mxu0 0
      %1116 = vmatmul.mubr.bf16.gmra.mrb[0].mxu0 %v1045
      %v1117 = vpop.f32.mrb[0].mxu0
      %v1118 = vadd.f32 0.0, %v1117
      %v1119 = vpop.f32.mrb[0].mxu0
      %v1120 = vpop.f32.mrb[0].mxu0
      %v1121 = vadd.f32 0.0, %v1120
      %v1122 = vpop.f32.mrb[0].mxu0
      %1123 = vmatprep.mubr.bf16.mxu0 0
      %1124 = vmatmul.mubr.bf16.gmra.mrb[0].mxu0 %v1047
      %v1125 = vpop.f32.mrb[0].mxu0
      %v1126 = vadd.f32 0.0, %v1125
      %v1127 = vpop.f32.mrb[0].mxu0
      %v1128 = vpop.f32.mrb[0].mxu0
      %v1129 = vadd.f32 0.0, %v1128
      %v1130 = vpop.f32.mrb[0].mxu0
      %1131 = vmatprep.mubr.bf16.mxu0 0
      %1132 = vmatmul.mubr.bf16.gmra.mrb[0].mxu0 %v1049
      %v1133 = vpop.f32.mrb[0].mxu0
      %v1134 = vadd.f32 0.0, %v1133
      %v1135 = vpop.f32.mrb[0].mxu0
      %v1136 = vpop.f32.mrb[0].mxu0
      %v1137 = vadd.f32 0.0, %v1136
      %v1138 = vpop.f32.mrb[0].mxu0
      %1139 = vmatprep.mubr.bf16.mxu0 0
      %1140 = vmatmul.mubr.bf16.gmra.mrb[0].mxu0 %v1051
      %v1141 = vpop.f32.mrb[0].mxu0
      %v1142 = vadd.f32 0.0, %v1141
      %v1143 = vpop.f32.mrb[0].mxu0
      %v1144 = vpop.f32.mrb[0].mxu0
      %v1145 = vadd.f32 0.0, %v1144
      %v1146 = vpop.f32.mrb[0].mxu0
      %1147 = vmatprep.mubr.bf16.mxu0 0
      %1148 = vmatmul.mubr.bf16.gmra.mrb[0].mxu0 %v1053
      %v1149 = vpop.f32.mrb[0].mxu0
      %v1150 = vadd.f32 0.0, %v1149
      %v1151 = vpop.f32.mrb[0].mxu0
      %v1152 = vpop.f32.mrb[0].mxu0
      %v1153 = vadd.f32 0.0, %v1152
      %v1154 = vpop.f32.mrb[0].mxu0
      %1155 = vmatprep.mubr.bf16.mxu0 0
      %1156 = vmatmul.mubr.bf16.gmra.mrb[0].mxu0 %v1055
      %v1157 = vpop.f32.mrb[0].mxu0
      %v1158 = vadd.f32 0.0, %v1157
      %v1159 = vpop.f32.mrb[0].mxu0
      %v1160 = vpop.f32.mrb[0].mxu0
      %v1161 = vadd.f32 0.0, %v1160
      %v1162 = vpop.f32.mrb[0].mxu0
      %1163 = vmatprep.mubr.bf16.mxu0 0
      %1164 = vmatmul.mubr.bf16.gmra.mrb[0].mxu0 %v1057
      %v1165 = vpop.f32.mrb[0].mxu0
      %v1166 = vadd.f32 0.0, %v1165
      %v1167 = vpop.f32.mrb[0].mxu0
      %v1168 = vpop.f32.mrb[0].mxu0
      %v1169 = vadd.f32 0.0, %v1168
      %v1170 = vpop.f32.mrb[0].mxu0
      %1171 = vmatprep.mubr.bf16.mxu0 0
      %1172 = vmatmul.mubr.bf16.gmra.mrb[0].mxu0 %v1059
      %v1173 = vpop.f32.mrb[0].mxu0
      %v1174 = vadd.f32 0.0, %v1173
      %v1175 = vpop.f32.mrb[0].mxu0
      %v1176 = vpop.f32.mrb[0].mxu0
      %v1177 = vadd.f32 0.0, %v1176
      %v1178 = vpop.f32.mrb[0].mxu0
      %1179 = vmatprep.mubr.bf16.mxu0 0
      %1180 = vmatmul.mubr.bf16.gmra.mrb[0].mxu0 %v1061
      %v1181 = vpop.f32.mrb[0].mxu0
      %v1182 = vadd.f32 0.0, %v1181
      %v1183 = vpop.f32.mrb[0].mxu0
      %v1184 = vpop.f32.mrb[0].mxu0
      %v1185 = vadd.f32 0.0, %v1184
      %v1186 = vpop.f32.mrb[0].mxu0
      %1187 = vmatprep.mubr.bf16.mxu0 0
      %1188 = vmatmul.mubr.bf16.gmra.mrb[0].mxu0 %v1063
      %v1189 = vpop.f32.mrb[0].mxu0
      %v1190 = vadd.f32 0.0, %v1189
      %v1191 = vpop.f32.mrb[0].mxu0
      %v1192 = vpop.f32.mrb[0].mxu0
      %v1193 = vadd.f32 0.0, %v1192
      %v1194 = vpop.f32.mrb[0].mxu0
      %1195 = vmatprep.mubr.bf16.mxu0 0
      %1196 = vmatmul.mubr.bf16.gmra.mrb[0].mxu0 %v1065
      %v1197 = vpop.f32.mrb[0].mxu0
      %v1198 = vadd.f32 0.0, %v1197
      %v1199 = vpop.f32.mrb[0].mxu0
      %v1200 = vpop.f32.mrb[0].mxu0
      %v1201 = vadd.f32 0.0, %v1200
      %v1202 = vpop.f32.mrb[0].mxu0
      %1203 = vmatprep.mubr.bf16.mxu0 0
      %1204 = vmatmul.mubr.bf16.gmra.mrb[0].mxu0 %v1067
      %v1205 = vpop.f32.mrb[0].mxu0
      %v1206 = vadd.f32 0.0, %v1205
      %v1207 = vpop.f32.mrb[0].mxu0
      %v1208 = vpop.f32.mrb[0].mxu0
      %v1209 = vadd.f32 0.0, %v1208
      %v1210 = vpop.f32.mrb[0].mxu0
      %1211 = vmatprep.mubr.bf16.mxu0 0
      %1212 = vmatmul.mubr.bf16.gmra.mrb[0].mxu0 %v1069
      %v1213 = vpop.f32.mrb[0].mxu0
      %v1214 = vadd.f32 0.0, %v1213
      %v1215 = vpop.f32.mrb[0].mxu0
      %v1216 = vpop.f32.mrb[0].mxu0
      %v1217 = vadd.f32 0.0, %v1216
      %v1218 = vpop.f32.mrb[0].mxu0
      %1219 = vmatprep.mubr.bf16.mxu0 0
      %1220 = vmatmul.mubr.bf16.gmra.mrb[0].mxu0 %v1071
      %v1221 = vpop.f32.mrb[0].mxu0
      %v1222 = vadd.f32 0.0, %v1221
      %v1223 = vpop.f32.mrb[0].mxu0
      %v1224 = vpop.f32.mrb[0].mxu0
      %v1225 = vadd.f32 0.0, %v1224
      %v1226 = vpop.f32.mrb[0].mxu0
      %1227 = vmatprep.mubr.bf16.mxu0 0
      %1228 = vmatmul.mubr.bf16.gmra.mrb[0].mxu0 %v1073
      %v1229 = vpop.f32.mrb[0].mxu0
      %v1230 = vadd.f32 0.0, %v1229
      %v1231 = vpop.f32.mrb[0].mxu0
      %v1232 = vpop.f32.mrb[0].mxu0
      %v1233 = vadd.f32 0.0, %v1232
      %v1234 = vpop.f32.mrb[0].mxu0
      %1235 = vdwg.mxu0
      %v1236 = vadd.f32 %v962, %v1110
      %v1237 = vadd.f32 %v963, %v1113
      %v1238 = vadd.f32 %v964, %v1118
      %v1239 = vadd.f32 %v965, %v1121
      %v1240 = vadd.f32 %v966, %v1126
      %v1241 = vadd.f32 %v967, %v1129
      %v1242 = vadd.f32 %v968, %v1134
      %v1243 = vadd.f32 %v969, %v1137
      %v1244 = vadd.f32 %v970, %v1142
      %v1245 = vadd.f32 %v971, %v1145
      %v1246 = vadd.f32 %v972, %v1150
      %v1247 = vadd.f32 %v973, %v1153
      %v1248 = vadd.f32 %v974, %v1158
      %v1249 = vadd.f32 %v975, %v1161
      %v1250 = vadd.f32 %v976, %v1166
      %v1251 = vadd.f32 %v977, %v1169
      %v1252 = vadd.f32 %v978, %v1174
      %v1253 = vadd.f32 %v979, %v1177
      %v1254 = vadd.f32 %v980, %v1182
      %v1255 = vadd.f32 %v981, %v1185
      %v1256 = vadd.f32 %v982, %v1190
      %v1257 = vadd.f32 %v983, %v1193
      %v1258 = vadd.f32 %v984, %v1198
      %v1259 = vadd.f32 %v985, %v1201
      %v1260 = vadd.f32 %v986, %v1206
      %v1261 = vadd.f32 %v987, %v1209
      %v1262 = vadd.f32 %v988, %v1214
      %v1263 = vadd.f32 %v989, %v1217
      %v1264 = vadd.f32 %v990, %v1222
      %v1265 = vadd.f32 %v991, %v1225
      %v1266 = vadd.f32 %v992, %v1230
      %v1267 = vadd.f32 %v993, %v1233
      %1268 = vst [vmem:[#allocation2] sm:$0xff] %v1236
      %1269 = vst [vmem:[#allocation2 + $0x8] sm:$0xff] %v1237
      %1270 = vst [vmem:[#allocation2 + $0x10] sm:$0xff] %v1238
      %1271 = vst [vmem:[#allocation2 + $0x18] sm:$0xff] %v1239
      %1272 = vst [vmem:[#allocation2 + $0x20] sm:$0xff] %v1240
      %1273 = vst [vmem:[#allocation2 + $0x28] sm:$0xff] %v1241
      %1274 = vst [vmem:[#allocation2 + $0x30] sm:$0xff] %v1242
      %1275 = vst [vmem:[#allocation2 + $0x38] sm:$0xff] %v1243
      %1276 = vst [vmem:[#allocation2 + $0x40] sm:$0xff] %v1244
      %1277 = vst [vmem:[#allocation2 + $0x48] sm:$0xff] %v1245
      %1278 = vst [vmem:[#allocation2 + $0x50] sm:$0xff] %v1246
      %1279 = vst [vmem:[#allocation2 + $0x58] sm:$0xff] %v1247
      %1280 = vst [vmem:[#allocation2 + $0x60] sm:$0xff] %v1248
      %1281 = vst [vmem:[#allocation2 + $0x68] sm:$0xff] %v1249
      %1282 = vst [vmem:[#allocation2 + $0x70] sm:$0xff] %v1250
      %1283 = vst [vmem:[#allocation2 + $0x78] sm:$0xff] %v1251
      %1284 = vst [vmem:[#allocation2 + $0x80] sm:$0xff] %v1252
      %1285 = vst [vmem:[#allocation2 + $0x88] sm:$0xff] %v1253
      %1286 = vst [vmem:[#allocation2 + $0x90] sm:$0xff] %v1254
      %1287 = vst [vmem:[#allocation2 + $0x98] sm:$0xff] %v1255
      %1288 = vst [vmem:[#allocation2 + $0xa0] sm:$0xff] %v1256
      %1289 = vst [vmem:[#allocation2 + $0xa8] sm:$0xff] %v1257
      %1290 = vst [vmem:[#allocation2 + $0xb0] sm:$0xff] %v1258
      %1291 = vst [vmem:[#allocation2 + $0xb8] sm:$0xff] %v1259
      %1292 = vst [vmem:[#allocation2 + $0xc0] sm:$0xff] %v1260
      %1293 = vst [vmem:[#allocation2 + $0xc8] sm:$0xff] %v1261
      %1294 = vst [vmem:[#allocation2 + $0xd0] sm:$0xff] %v1262
      %1295 = vst [vmem:[#allocation2 + $0xd8] sm:$0xff] %v1263
      %1296 = vst [vmem:[#allocation2 + $0xe0] sm:$0xff] %v1264
      %1297 = vst [vmem:[#allocation2 + $0xe8] sm:$0xff] %v1265
      %1298 = vst [vmem:[#allocation2 + $0xf0] sm:$0xff] %v1266
      %1299 = vst [vmem:[#allocation2 + $0xf8] sm:$0xff] %v1267
      %v1300 = vld [vmem:[#allocation2] sm:$0xff]
      %v1301 = vld [vmem:[#allocation2 + $0x8] sm:$0xff]
      %v1302 = vld [vmem:[#allocation2 + $0x10] sm:$0xff]
      %v1303 = vld [vmem:[#allocation2 + $0x18] sm:$0xff]
      %v1304 = vld [vmem:[#allocation2 + $0x20] sm:$0xff]
      %v1305 = vld [vmem:[#allocation2 + $0x28] sm:$0xff]
      %v1306 = vld [vmem:[#allocation2 + $0x30] sm:$0xff]
      %v1307 = vld [vmem:[#allocation2 + $0x38] sm:$0xff]
      %v1308 = vld [vmem:[#allocation2 + $0x40] sm:$0xff]
      %v1309 = vld [vmem:[#allocation2 + $0x48] sm:$0xff]
      %v1310 = vld [vmem:[#allocation2 + $0x50] sm:$0xff]
      %v1311 = vld [vmem:[#allocation2 + $0x58] sm:$0xff]
      %v1312 = vld [vmem:[#allocation2 + $0x60] sm:$0xff]
      %v1313 = vld [vmem:[#allocation2 + $0x68] sm:$0xff]
      %v1314 = vld [vmem:[#allocation2 + $0x70] sm:$0xff]
      %v1315 = vld [vmem:[#allocation2 + $0x78] sm:$0xff]
      %v1316 = vld [vmem:[#allocation2 + $0x80] sm:$0xff]
      %v1317 = vld [vmem:[#allocation2 + $0x88] sm:$0xff]
      %v1318 = vld [vmem:[#allocation2 + $0x90] sm:$0xff]
      %v1319 = vld [vmem:[#allocation2 + $0x98] sm:$0xff]
      %v1320 = vld [vmem:[#allocation2 + $0xa0] sm:$0xff]
      %v1321 = vld [vmem:[#allocation2 + $0xa8] sm:$0xff]
      %v1322 = vld [vmem:[#allocation2 + $0xb0] sm:$0xff]
      %v1323 = vld [vmem:[#allocation2 + $0xb8] sm:$0xff]
      %v1324 = vld [vmem:[#allocation2 + $0xc0] sm:$0xff]
      %v1325 = vld [vmem:[#allocation2 + $0xc8] sm:$0xff]
      %v1326 = vld [vmem:[#allocation2 + $0xd0] sm:$0xff]
      %v1327 = vld [vmem:[#allocation2 + $0xd8] sm:$0xff]
      %v1328 = vld [vmem:[#allocation2 + $0xe0] sm:$0xff]
      %v1329 = vld [vmem:[#allocation2 + $0xe8] sm:$0xff]
      %v1330 = vld [vmem:[#allocation2 + $0xf0] sm:$0xff]
      %v1331 = vld [vmem:[#allocation2 + $0xf8] sm:$0xff]
      %s1332 = scalar_lea.vmem %s297, 48
      %v1333 = vld [vmem:[%s1332] sm:$0xf]
      %v1334 = vld [vmem:[%s1332 + $0x4] sm:$0xf]
      %v1335 = vld [vmem:[%s1332 + $0x8] sm:$0xf]
      %v1336 = vld [vmem:[%s1332 + $0xc] sm:$0xf]
      %v1337 = vld [vmem:[%s1332 + $0x10] sm:$0xf]
      %v1338 = vld [vmem:[%s1332 + $0x14] sm:$0xf]
      %v1339 = vld [vmem:[%s1332 + $0x18] sm:$0xf]
      %v1340 = vld [vmem:[%s1332 + $0x1c] sm:$0xf]
      %v1341 = vld [vmem:[%s1332 + $0x20] sm:$0xf]
      %v1342 = vld [vmem:[%s1332 + $0x24] sm:$0xf]
      %v1343 = vld [vmem:[%s1332 + $0x28] sm:$0xf]
      %v1344 = vld [vmem:[%s1332 + $0x2c] sm:$0xf]
      %v1357 = vunpack.c.l.b16 %v1333
      %v1358 = vunpack.c.l.b16 %v1334
      %v1359 = vunpack.c.l.b16 %v1335
      %v1360 = vunpack.c.l.b16 %v1336
      %v1361 = vunpack.c.l.b16 %v1337
      %v1362 = vunpack.c.l.b16 %v1338
      %v1363 = vunpack.c.l.b16 %v1339
      %v1364 = vunpack.c.l.b16 %v1340
      %v1365 = vunpack.c.l.b16 %v1341
      %v1366 = vunpack.c.l.b16 %v1342
      %v1367 = vunpack.c.l.b16 %v1343
      %v1368 = vunpack.c.l.b16 %v1344
      %v1369 = vpack.c.b16 %v1358, %v1357
      %v1370 = vpack.c.b16 %v1360, %v1359
      %v1371 = vpack.c.b16 %v1362, %v1361
      %v1372 = vpack.c.b16 %v1364, %v1363
      %v1373 = vpack.c.b16 %v1366, %v1365
      %v1374 = vpack.c.b16 %v1368, %v1367
      %v1381 = vsel %vm1042, %v959, 0
      %1383 = vmatprep.subr.bf16.mxu0 0
      %1384 = vmatpush1.bf16.msra.mxu0 %v1369
      %1385 = vmatprep.subr.bf16.mxu0 0
      %1386 = vmatpush1.bf16.msra.mxu0 %v1370
      %1387 = vmatprep.subr.bf16.mxu0 0
      %1388 = vmatpush1.bf16.msra.mxu0 %v1371
      %1389 = vmatprep.subr.bf16.mxu0 0
      %1390 = vmatpush1.bf16.msra.mxu0 %v1372
      %1391 = vmatprep.subr.bf16.mxu0 0
      %1392 = vmatpush1.bf16.msra.mxu0 %v1373
      %1393 = vmatprep.subr.bf16.mxu0 0
      %1394 = vmatpush1.bf16.msra.mxu0 %v1374
      %1395 = vmatprep.subr.bf16.mxu0 0
      %1396 = vmatpush1.bf16.msra.mxu0 0
      %1397 = vmatprep.subr.bf16.mxu0 0
      %1398 = vmatpush1.bf16.msra.mxu0 0
      %1399 = vmatprep.subr.bf16.mxu0 0
      %1400 = vmatpush1.bf16.msra.mxu0 0
      %1401 = vmatprep.subr.bf16.mxu0 0
      %1402 = vmatpush1.bf16.msra.mxu0 0
      %1403 = vmatprep.subr.bf16.mxu0 0
      %1404 = vmatpush1.bf16.msra.mxu0 0
      %1405 = vmatprep.subr.bf16.mxu0 0
      %1406 = vmatpush1.bf16.msra.mxu0 0
      %1407 = vmatprep.subr.bf16.mxu0 0
      %1408 = vmatpush1.bf16.msra.mxu0 0
      %1409 = vmatprep.subr.bf16.mxu0 0
      %1410 = vmatpush1.bf16.msra.mxu0 0
      %1411 = vmatprep.subr.bf16.mxu0 0
      %1412 = vmatpush1.bf16.msra.mxu0 0
      %1413 = vmatprep.subr.bf16.mxu0 0
      %1414 = vmatpush1.bf16.msra.mxu0 0
      %1415 = vmatprep.mubr.bf16.mxu0 0
      %1416 = vmatmul.mubr.bf16.gmra.mrb[0].mxu0 %v1045
      %v1417 = vpop.f32.mrb[0].mxu0
      %v1418 = vadd.f32 0.0, %v1417
      %v1419 = vpop.f32.mrb[0].mxu0
      %v1420 = vpop.f32.mrb[0].mxu0
      %v1421 = vadd.f32 0.0, %v1420
      %v1422 = vpop.f32.mrb[0].mxu0
      %1423 = vmatprep.mubr.bf16.mxu0 0
      %1424 = vmatmul.mubr.bf16.gmra.mrb[0].mxu0 %v1047
      %v1425 = vpop.f32.mrb[0].mxu0
      %v1426 = vadd.f32 0.0, %v1425
      %v1427 = vpop.f32.mrb[0].mxu0
      %v1428 = vpop.f32.mrb[0].mxu0
      %v1429 = vadd.f32 0.0, %v1428
      %v1430 = vpop.f32.mrb[0].mxu0
      %1431 = vmatprep.mubr.bf16.mxu0 0
      %1432 = vmatmul.mubr.bf16.gmra.mrb[0].mxu0 %v1049
      %v1433 = vpop.f32.mrb[0].mxu0
      %v1434 = vadd.f32 0.0, %v1433
      %v1435 = vpop.f32.mrb[0].mxu0
      %v1436 = vpop.f32.mrb[0].mxu0
      %v1437 = vadd.f32 0.0, %v1436
      %v1438 = vpop.f32.mrb[0].mxu0
      %1439 = vmatprep.mubr.bf16.mxu0 0
      %1440 = vmatmul.mubr.bf16.gmra.mrb[0].mxu0 %v1051
      %v1441 = vpop.f32.mrb[0].mxu0
      %v1442 = vadd.f32 0.0, %v1441
      %v1443 = vpop.f32.mrb[0].mxu0
      %v1444 = vpop.f32.mrb[0].mxu0
      %v1445 = vadd.f32 0.0, %v1444
      %v1446 = vpop.f32.mrb[0].mxu0
      %1447 = vmatprep.mubr.bf16.mxu0 0
      %1448 = vmatmul.mubr.bf16.gmra.mrb[0].mxu0 %v1053
      %v1449 = vpop.f32.mrb[0].mxu0
      %v1450 = vadd.f32 0.0, %v1449
      %v1451 = vpop.f32.mrb[0].mxu0
      %v1452 = vpop.f32.mrb[0].mxu0
      %v1453 = vadd.f32 0.0, %v1452
      %v1454 = vpop.f32.mrb[0].mxu0
      %1455 = vmatprep.mubr.bf16.mxu0 0
      %1456 = vmatmul.mubr.bf16.gmra.mrb[0].mxu0 %v1055
      %v1457 = vpop.f32.mrb[0].mxu0
      %v1458 = vadd.f32 0.0, %v1457
      %v1459 = vpop.f32.mrb[0].mxu0
      %v1460 = vpop.f32.mrb[0].mxu0
      %v1461 = vadd.f32 0.0, %v1460
      %v1462 = vpop.f32.mrb[0].mxu0
      %1463 = vmatprep.mubr.bf16.mxu0 0
      %1464 = vmatmul.mubr.bf16.gmra.mrb[0].mxu0 %v1057
      %v1465 = vpop.f32.mrb[0].mxu0
      %v1466 = vadd.f32 0.0, %v1465
      %v1467 = vpop.f32.mrb[0].mxu0
      %v1468 = vpop.f32.mrb[0].mxu0
      %v1469 = vadd.f32 0.0, %v1468
      %v1470 = vpop.f32.mrb[0].mxu0
      %1471 = vmatprep.mubr.bf16.mxu0 0
      %1472 = vmatmul.mubr.bf16.gmra.mrb[0].mxu0 %v1059
      %v1473 = vpop.f32.mrb[0].mxu0
      %v1474 = vadd.f32 0.0, %v1473
      %v1475 = vpop.f32.mrb[0].mxu0
      %v1476 = vpop.f32.mrb[0].mxu0
      %v1477 = vadd.f32 0.0, %v1476
      %v1478 = vpop.f32.mrb[0].mxu0
      %1479 = vmatprep.mubr.bf16.mxu0 0
      %1480 = vmatmul.mubr.bf16.gmra.mrb[0].mxu0 %v1061
      %v1481 = vpop.f32.mrb[0].mxu0
      %v1482 = vadd.f32 0.0, %v1481
      %v1483 = vpop.f32.mrb[0].mxu0
      %v1484 = vpop.f32.mrb[0].mxu0
      %v1485 = vadd.f32 0.0, %v1484
      %v1486 = vpop.f32.mrb[0].mxu0
      %1487 = vmatprep.mubr.bf16.mxu0 0
      %1488 = vmatmul.mubr.bf16.gmra.mrb[0].mxu0 %v1063
      %v1489 = vpop.f32.mrb[0].mxu0
      %v1490 = vadd.f32 0.0, %v1489
      %v1491 = vpop.f32.mrb[0].mxu0
      %v1492 = vpop.f32.mrb[0].mxu0
      %v1493 = vadd.f32 0.0, %v1492
      %v1494 = vpop.f32.mrb[0].mxu0
      %1495 = vmatprep.mubr.bf16.mxu0 0
      %1496 = vmatmul.mubr.bf16.gmra.mrb[0].mxu0 %v1065
      %v1497 = vpop.f32.mrb[0].mxu0
      %v1498 = vadd.f32 0.0, %v1497
      %v1499 = vpop.f32.mrb[0].mxu0
      %v1500 = vpop.f32.mrb[0].mxu0
      %v1501 = vadd.f32 0.0, %v1500
      %v1502 = vpop.f32.mrb[0].mxu0
      %1503 = vmatprep.mubr.bf16.mxu0 0
      %1504 = vmatmul.mubr.bf16.gmra.mrb[0].mxu0 %v1067
      %v1505 = vpop.f32.mrb[0].mxu0
      %v1506 = vadd.f32 0.0, %v1505
      %v1507 = vpop.f32.mrb[0].mxu0
      %v1508 = vpop.f32.mrb[0].mxu0
      %v1509 = vadd.f32 0.0, %v1508
      %v1510 = vpop.f32.mrb[0].mxu0
      %1511 = vmatprep.mubr.bf16.mxu0 0
      %1512 = vmatmul.mubr.bf16.gmra.mrb[0].mxu0 %v1069
      %v1513 = vpop.f32.mrb[0].mxu0
      %v1514 = vadd.f32 0.0, %v1513
      %v1515 = vpop.f32.mrb[0].mxu0
      %v1516 = vpop.f32.mrb[0].mxu0
      %v1517 = vadd.f32 0.0, %v1516
      %v1518 = vpop.f32.mrb[0].mxu0
      %1519 = vmatprep.mubr.bf16.mxu0 0
      %1520 = vmatmul.mubr.bf16.gmra.mrb[0].mxu0 %v1071
      %v1521 = vpop.f32.mrb[0].mxu0
      %v1522 = vadd.f32 0.0, %v1521
      %v1523 = vpop.f32.mrb[0].mxu0
      %v1524 = vpop.f32.mrb[0].mxu0
      %v1525 = vadd.f32 0.0, %v1524
      %v1526 = vpop.f32.mrb[0].mxu0
      %1527 = vmatprep.mubr.bf16.mxu0 0
      %1528 = vmatmul.mubr.bf16.gmra.mrb[0].mxu0 %v1073
      %v1529 = vpop.f32.mrb[0].mxu0
      %v1530 = vadd.f32 0.0, %v1529
      %v1531 = vpop.f32.mrb[0].mxu0
      %v1532 = vpop.f32.mrb[0].mxu0
      %v1533 = vadd.f32 0.0, %v1532
      %v1534 = vpop.f32.mrb[0].mxu0
      %1535 = vmatprep.mubr.bf16.mxu0 0
      %1536 = vmatmul.mubr.bf16.gmra.mrb[0].mxu0 %v1381
      %v1537 = vpop.f32.mrb[0].mxu0
      %v1538 = vadd.f32 0.0, %v1537
      %v1539 = vpop.f32.mrb[0].mxu0
      %v1540 = vpop.f32.mrb[0].mxu0
      %v1541 = vadd.f32 0.0, %v1540
      %v1542 = vpop.f32.mrb[0].mxu0
      %1543 = vdwg.mxu0
      %v1544 = vadd.f32 %v1300, %v1418
      %v1545 = vadd.f32 %v1301, %v1421
      %v1546 = vadd.f32 %v1302, %v1426
      %v1547 = vadd.f32 %v1303, %v1429
      %v1548 = vadd.f32 %v1304, %v1434
      %v1549 = vadd.f32 %v1305, %v1437
      %v1550 = vadd.f32 %v1306, %v1442
      %v1551 = vadd.f32 %v1307, %v1445
      %v1552 = vadd.f32 %v1308, %v1450
      %v1553 = vadd.f32 %v1309, %v1453
      %v1554 = vadd.f32 %v1310, %v1458
      %v1555 = vadd.f32 %v1311, %v1461
      %v1556 = vadd.f32 %v1312, %v1466
      %v1557 = vadd.f32 %v1313, %v1469
      %v1558 = vadd.f32 %v1314, %v1474
      %v1559 = vadd.f32 %v1315, %v1477
      %v1560 = vadd.f32 %v1316, %v1482
      %v1561 = vadd.f32 %v1317, %v1485
      %v1562 = vadd.f32 %v1318, %v1490
      %v1563 = vadd.f32 %v1319, %v1493
      %v1564 = vadd.f32 %v1320, %v1498
      %v1565 = vadd.f32 %v1321, %v1501
      %v1566 = vadd.f32 %v1322, %v1506
      %v1567 = vadd.f32 %v1323, %v1509
      %v1568 = vadd.f32 %v1324, %v1514
      %v1569 = vadd.f32 %v1325, %v1517
      %v1570 = vadd.f32 %v1326, %v1522
      %v1571 = vadd.f32 %v1327, %v1525
      %v1572 = vadd.f32 %v1328, %v1530
      %v1573 = vadd.f32 %v1329, %v1533
      %v1574 = vadd.f32 %v1330, %v1538
      %v1575 = vadd.f32 %v1331, %v1541
      %1576 = vst [vmem:[#allocation2] sm:$0xff] %v1544
      %1577 = vst [vmem:[#allocation2 + $0x8] sm:$0xff] %v1545
      %1578 = vst [vmem:[#allocation2 + $0x10] sm:$0xff] %v1546
      %1579 = vst [vmem:[#allocation2 + $0x18] sm:$0xff] %v1547
      %1580 = vst [vmem:[#allocation2 + $0x20] sm:$0xff] %v1548
      %1581 = vst [vmem:[#allocation2 + $0x28] sm:$0xff] %v1549
      %1582 = vst [vmem:[#allocation2 + $0x30] sm:$0xff] %v1550
      %1583 = vst [vmem:[#allocation2 + $0x38] sm:$0xff] %v1551
      %1584 = vst [vmem:[#allocation2 + $0x40] sm:$0xff] %v1552
      %1585 = vst [vmem:[#allocation2 + $0x48] sm:$0xff] %v1553
      %1586 = vst [vmem:[#allocation2 + $0x50] sm:$0xff] %v1554
      %1587 = vst [vmem:[#allocation2 + $0x58] sm:$0xff] %v1555
      %1588 = vst [vmem:[#allocation2 + $0x60] sm:$0xff] %v1556
      %1589 = vst [vmem:[#allocation2 + $0x68] sm:$0xff] %v1557
      %1590 = vst [vmem:[#allocation2 + $0x70] sm:$0xff] %v1558
      %1591 = vst [vmem:[#allocation2 + $0x78] sm:$0xff] %v1559
      %1592 = vst [vmem:[#allocation2 + $0x80] sm:$0xff] %v1560
      %1593 = vst [vmem:[#allocation2 + $0x88] sm:$0xff] %v1561
      %1594 = vst [vmem:[#allocation2 + $0x90] sm:$0xff] %v1562
      %1595 = vst [vmem:[#allocation2 + $0x98] sm:$0xff] %v1563
      %1596 = vst [vmem:[#allocation2 + $0xa0] sm:$0xff] %v1564
      %1597 = vst [vmem:[#allocation2 + $0xa8] sm:$0xff] %v1565
      %1598 = vst [vmem:[#allocation2 + $0xb0] sm:$0xff] %v1566
      %1599 = vst [vmem:[#allocation2 + $0xb8] sm:$0xff] %v1567
      %1600 = vst [vmem:[#allocation2 + $0xc0] sm:$0xff] %v1568
      %1601 = vst [vmem:[#allocation2 + $0xc8] sm:$0xff] %v1569
      %1602 = vst [vmem:[#allocation2 + $0xd0] sm:$0xff] %v1570
      %1603 = vst [vmem:[#allocation2 + $0xd8] sm:$0xff] %v1571
      %1604 = vst [vmem:[#allocation2 + $0xe0] sm:$0xff] %v1572
      %1605 = vst [vmem:[#allocation2 + $0xe8] sm:$0xff] %v1573
      %1606 = vst [vmem:[#allocation2 + $0xf0] sm:$0xff] %v1574
      %1607 = vst [vmem:[#allocation2 + $0xf8] sm:$0xff] %v1575
      %v1608 = vld [vmem:[#allocation2] sm:$0xff]
      %v1609 = vld [vmem:[#allocation2 + $0x8] sm:$0xff]
      %v1610 = vld [vmem:[#allocation2 + $0x10] sm:$0xff]
      %v1611 = vld [vmem:[#allocation2 + $0x18] sm:$0xff]
      %v1612 = vld [vmem:[#allocation2 + $0x20] sm:$0xff]
      %v1613 = vld [vmem:[#allocation2 + $0x28] sm:$0xff]
      %v1614 = vld [vmem:[#allocation2 + $0x30] sm:$0xff]
      %v1615 = vld [vmem:[#allocation2 + $0x38] sm:$0xff]
      %v1616 = vld [vmem:[#allocation2 + $0x40] sm:$0xff]
      %v1617 = vld [vmem:[#allocation2 + $0x48] sm:$0xff]
      %v1618 = vld [vmem:[#allocation2 + $0x50] sm:$0xff]
      %v1619 = vld [vmem:[#allocation2 + $0x58] sm:$0xff]
      %v1620 = vld [vmem:[#allocation2 + $0x60] sm:$0xff]
      %v1621 = vld [vmem:[#allocation2 + $0x68] sm:$0xff]
      %v1622 = vld [vmem:[#allocation2 + $0x70] sm:$0xff]
      %v1623 = vld [vmem:[#allocation2 + $0x78] sm:$0xff]
      %v1624 = vld [vmem:[#allocation2 + $0x80] sm:$0xff]
      %v1625 = vld [vmem:[#allocation2 + $0x88] sm:$0xff]
      %v1626 = vld [vmem:[#allocation2 + $0x90] sm:$0xff]
      %v1627 = vld [vmem:[#allocation2 + $0x98] sm:$0xff]
      %v1628 = vld [vmem:[#allocation2 + $0xa0] sm:$0xff]
      %v1629 = vld [vmem:[#allocation2 + $0xa8] sm:$0xff]
      %v1630 = vld [vmem:[#allocation2 + $0xb0] sm:$0xff]
      %v1631 = vld [vmem:[#allocation2 + $0xb8] sm:$0xff]
      %v1632 = vld [vmem:[#allocation2 + $0xc0] sm:$0xff]
      %v1633 = vld [vmem:[#allocation2 + $0xc8] sm:$0xff]
      %v1634 = vld [vmem:[#allocation2 + $0xd0] sm:$0xff]
      %v1635 = vld [vmem:[#allocation2 + $0xd8] sm:$0xff]
      %v1636 = vld [vmem:[#allocation2 + $0xe0] sm:$0xff]
      %v1637 = vld [vmem:[#allocation2 + $0xe8] sm:$0xff]
      %v1638 = vld [vmem:[#allocation2 + $0xf0] sm:$0xff]
      %v1639 = vld [vmem:[#allocation2 + $0xf8] sm:$0xff]
      %s1640 = scalar_lea.vmem %s297, 96
      %v1641 = vld [vmem:[%s1640] sm:$0xf]
      %v1642 = vld [vmem:[%s1640 + $0x4] sm:$0xf]
      %v1643 = vld [vmem:[%s1640 + $0x8] sm:$0xf]
      %v1644 = vld [vmem:[%s1640 + $0xc] sm:$0xf]
      %v1645 = vld [vmem:[%s1640 + $0x10] sm:$0xf]
      %v1646 = vld [vmem:[%s1640 + $0x14] sm:$0xf]
      %v1647 = vld [vmem:[%s1640 + $0x18] sm:$0xf]
      %v1648 = vld [vmem:[%s1640 + $0x1c] sm:$0xf]
      %v1649 = vld [vmem:[%s1640 + $0x20] sm:$0xf]
      %v1650 = vld [vmem:[%s1640 + $0x24] sm:$0xf]
      %v1651 = vld [vmem:[%s1640 + $0x28] sm:$0xf]
      %v1652 = vld [vmem:[%s1640 + $0x2c] sm:$0xf]
      %v1665 = vunpack.c.l.b16 %v1641
      %v1666 = vunpack.c.l.b16 %v1642
      %v1667 = vunpack.c.l.b16 %v1643
      %v1668 = vunpack.c.l.b16 %v1644
      %v1669 = vunpack.c.l.b16 %v1645
      %v1670 = vunpack.c.l.b16 %v1646
      %v1671 = vunpack.c.l.b16 %v1647
      %v1672 = vunpack.c.l.b16 %v1648
      %v1673 = vunpack.c.l.b16 %v1649
      %v1674 = vunpack.c.l.b16 %v1650
      %v1675 = vunpack.c.l.b16 %v1651
      %v1676 = vunpack.c.l.b16 %v1652
      %v1677 = vpack.c.b16 %v1666, %v1665
      %v1678 = vpack.c.b16 %v1668, %v1667
      %v1679 = vpack.c.b16 %v1670, %v1669
      %v1680 = vpack.c.b16 %v1672, %v1671
      %v1681 = vpack.c.b16 %v1674, %v1673
      %v1682 = vpack.c.b16 %v1676, %v1675
      %v1689 = vsel %vm1042, %v961, 0
      %1691 = vmatprep.subr.bf16.mxu0 0
      %1692 = vmatpush1.bf16.msra.mxu0 %v1677
      %1693 = vmatprep.subr.bf16.mxu0 0
      %1694 = vmatpush1.bf16.msra.mxu0 %v1678
      %1695 = vmatprep.subr.bf16.mxu0 0
      %1696 = vmatpush1.bf16.msra.mxu0 %v1679
      %1697 = vmatprep.subr.bf16.mxu0 0
      %1698 = vmatpush1.bf16.msra.mxu0 %v1680
      %1699 = vmatprep.subr.bf16.mxu0 0
      %1700 = vmatpush1.bf16.msra.mxu0 %v1681
      %1701 = vmatprep.subr.bf16.mxu0 0
      %1702 = vmatpush1.bf16.msra.mxu0 %v1682
      %1703 = vmatprep.subr.bf16.mxu0 0
      %1704 = vmatpush1.bf16.msra.mxu0 0
      %1705 = vmatprep.subr.bf16.mxu0 0
      %1706 = vmatpush1.bf16.msra.mxu0 0
      %1707 = vmatprep.subr.bf16.mxu0 0
      %1708 = vmatpush1.bf16.msra.mxu0 0
      %1709 = vmatprep.subr.bf16.mxu0 0
      %1710 = vmatpush1.bf16.msra.mxu0 0
      %1711 = vmatprep.subr.bf16.mxu0 0
      %1712 = vmatpush1.bf16.msra.mxu0 0
      %1713 = vmatprep.subr.bf16.mxu0 0
      %1714 = vmatpush1.bf16.msra.mxu0 0
      %1715 = vmatprep.subr.bf16.mxu0 0
      %1716 = vmatpush1.bf16.msra.mxu0 0
      %1717 = vmatprep.subr.bf16.mxu0 0
      %1718 = vmatpush1.bf16.msra.mxu0 0
      %1719 = vmatprep.subr.bf16.mxu0 0
      %1720 = vmatpush1.bf16.msra.mxu0 0
      %1721 = vmatprep.subr.bf16.mxu0 0
      %1722 = vmatpush1.bf16.msra.mxu0 0
      %1723 = vmatprep.mubr.bf16.mxu0 0
      %1724 = vmatmul.mubr.bf16.gmra.mrb[0].mxu0 %v1047
      %v1725 = vpop.f32.mrb[0].mxu0
      %v1726 = vadd.f32 0.0, %v1725
      %v1727 = vpop.f32.mrb[0].mxu0
      %v1728 = vpop.f32.mrb[0].mxu0
      %v1729 = vadd.f32 0.0, %v1728
      %v1730 = vpop.f32.mrb[0].mxu0
      %1731 = vmatprep.mubr.bf16.mxu0 0
      %1732 = vmatmul.mubr.bf16.gmra.mrb[0].mxu0 %v1049
      %v1733 = vpop.f32.mrb[0].mxu0
      %v1734 = vadd.f32 0.0, %v1733
      %v1735 = vpop.f32.mrb[0].mxu0
      %v1736 = vpop.f32.mrb[0].mxu0
      %v1737 = vadd.f32 0.0, %v1736
      %v1738 = vpop.f32.mrb[0].mxu0
      %1739 = vmatprep.mubr.bf16.mxu0 0
      %1740 = vmatmul.mubr.bf16.gmra.mrb[0].mxu0 %v1051
      %v1741 = vpop.f32.mrb[0].mxu0
      %v1742 = vadd.f32 0.0, %v1741
      %v1743 = vpop.f32.mrb[0].mxu0
      %v1744 = vpop.f32.mrb[0].mxu0
      %v1745 = vadd.f32 0.0, %v1744
      %v1746 = vpop.f32.mrb[0].mxu0
      %1747 = vmatprep.mubr.bf16.mxu0 0
      %1748 = vmatmul.mubr.bf16.gmra.mrb[0].mxu0 %v1053
      %v1749 = vpop.f32.mrb[0].mxu0
      %v1750 = vadd.f32 0.0, %v1749
      %v1751 = vpop.f32.mrb[0].mxu0
      %v1752 = vpop.f32.mrb[0].mxu0
      %v1753 = vadd.f32 0.0, %v1752
      %v1754 = vpop.f32.mrb[0].mxu0
      %1755 = vmatprep.mubr.bf16.mxu0 0
      %1756 = vmatmul.mubr.bf16.gmra.mrb[0].mxu0 %v1055
      %v1757 = vpop.f32.mrb[0].mxu0
      %v1758 = vadd.f32 0.0, %v1757
      %v1759 = vpop.f32.mrb[0].mxu0
      %v1760 = vpop.f32.mrb[0].mxu0
      %v1761 = vadd.f32 0.0, %v1760
      %v1762 = vpop.f32.mrb[0].mxu0
      %1763 = vmatprep.mubr.bf16.mxu0 0
      %1764 = vmatmul.mubr.bf16.gmra.mrb[0].mxu0 %v1057
      %v1765 = vpop.f32.mrb[0].mxu0
      %v1766 = vadd.f32 0.0, %v1765
      %v1767 = vpop.f32.mrb[0].mxu0
      %v1768 = vpop.f32.mrb[0].mxu0
      %v1769 = vadd.f32 0.0, %v1768
      %v1770 = vpop.f32.mrb[0].mxu0
      %1771 = vmatprep.mubr.bf16.mxu0 0
      %1772 = vmatmul.mubr.bf16.gmra.mrb[0].mxu0 %v1059
      %v1773 = vpop.f32.mrb[0].mxu0
      %v1774 = vadd.f32 0.0, %v1773
      %v1775 = vpop.f32.mrb[0].mxu0
      %v1776 = vpop.f32.mrb[0].mxu0
      %v1777 = vadd.f32 0.0, %v1776
      %v1778 = vpop.f32.mrb[0].mxu0
      %1779 = vmatprep.mubr.bf16.mxu0 0
      %1780 = vmatmul.mubr.bf16.gmra.mrb[0].mxu0 %v1061
      %v1781 = vpop.f32.mrb[0].mxu0
      %v1782 = vadd.f32 0.0, %v1781
      %v1783 = vpop.f32.mrb[0].mxu0
      %v1784 = vpop.f32.mrb[0].mxu0
      %v1785 = vadd.f32 0.0, %v1784
      %v1786 = vpop.f32.mrb[0].mxu0
      %1787 = vmatprep.mubr.bf16.mxu0 0
      %1788 = vmatmul.mubr.bf16.gmra.mrb[0].mxu0 %v1063
      %v1789 = vpop.f32.mrb[0].mxu0
      %v1790 = vadd.f32 0.0, %v1789
      %v1791 = vpop.f32.mrb[0].mxu0
      %v1792 = vpop.f32.mrb[0].mxu0
      %v1793 = vadd.f32 0.0, %v1792
      %v1794 = vpop.f32.mrb[0].mxu0
      %1795 = vmatprep.mubr.bf16.mxu0 0
      %1796 = vmatmul.mubr.bf16.gmra.mrb[0].mxu0 %v1065
      %v1797 = vpop.f32.mrb[0].mxu0
      %v1798 = vadd.f32 0.0, %v1797
      %v1799 = vpop.f32.mrb[0].mxu0
      %v1800 = vpop.f32.mrb[0].mxu0
      %v1801 = vadd.f32 0.0, %v1800
      %v1802 = vpop.f32.mrb[0].mxu0
      %1803 = vmatprep.mubr.bf16.mxu0 0
      %1804 = vmatmul.mubr.bf16.gmra.mrb[0].mxu0 %v1067
      %v1805 = vpop.f32.mrb[0].mxu0
      %v1806 = vadd.f32 0.0, %v1805
      %v1807 = vpop.f32.mrb[0].mxu0
      %v1808 = vpop.f32.mrb[0].mxu0
      %v1809 = vadd.f32 0.0, %v1808
      %v1810 = vpop.f32.mrb[0].mxu0
      %1811 = vmatprep.mubr.bf16.mxu0 0
      %1812 = vmatmul.mubr.bf16.gmra.mrb[0].mxu0 %v1069
      %v1813 = vpop.f32.mrb[0].mxu0
      %v1814 = vadd.f32 0.0, %v1813
      %v1815 = vpop.f32.mrb[0].mxu0
      %v1816 = vpop.f32.mrb[0].mxu0
      %v1817 = vadd.f32 0.0, %v1816
      %v1818 = vpop.f32.mrb[0].mxu0
      %1819 = vmatprep.mubr.bf16.mxu0 0
      %1820 = vmatmul.mubr.bf16.gmra.mrb[0].mxu0 %v1071
      %v1821 = vpop.f32.mrb[0].mxu0
      %v1822 = vadd.f32 0.0, %v1821
      %v1823 = vpop.f32.mrb[0].mxu0
      %v1824 = vpop.f32.mrb[0].mxu0
      %v1825 = vadd.f32 0.0, %v1824
      %v1826 = vpop.f32.mrb[0].mxu0
      %1827 = vmatprep.mubr.bf16.mxu0 0
      %1828 = vmatmul.mubr.bf16.gmra.mrb[0].mxu0 %v1073
      %v1829 = vpop.f32.mrb[0].mxu0
      %v1830 = vadd.f32 0.0, %v1829
      %v1831 = vpop.f32.mrb[0].mxu0
      %v1832 = vpop.f32.mrb[0].mxu0
      %v1833 = vadd.f32 0.0, %v1832
      %v1834 = vpop.f32.mrb[0].mxu0
      %1835 = vmatprep.mubr.bf16.mxu0 0
      %1836 = vmatmul.mubr.bf16.gmra.mrb[0].mxu0 %v1381
      %v1837 = vpop.f32.mrb[0].mxu0
      %v1838 = vadd.f32 0.0, %v1837
      %v1839 = vpop.f32.mrb[0].mxu0
      %v1840 = vpop.f32.mrb[0].mxu0
      %v1841 = vadd.f32 0.0, %v1840
      %v1842 = vpop.f32.mrb[0].mxu0
      %1843 = vmatprep.mubr.bf16.mxu0 0
      %1844 = vmatmul.mubr.bf16.gmra.mrb[0].mxu0 %v1689
      %v1845 = vpop.f32.mrb[0].mxu0
      %v1846 = vadd.f32 0.0, %v1845
      %v1847 = vpop.f32.mrb[0].mxu0
      %v1848 = vpop.f32.mrb[0].mxu0
      %v1849 = vadd.f32 0.0, %v1848
      %v1850 = vpop.f32.mrb[0].mxu0
      %1851 = vdwg.mxu0
      %v1852 = vadd.f32 %v1608, %v1726
      %v1853 = vadd.f32 %v1609, %v1729
      %v1854 = vadd.f32 %v1610, %v1734
      %v1855 = vadd.f32 %v1611, %v1737
      %v1856 = vadd.f32 %v1612, %v1742
      %v1857 = vadd.f32 %v1613, %v1745
      %v1858 = vadd.f32 %v1614, %v1750
      %v1859 = vadd.f32 %v1615, %v1753
      %v1860 = vadd.f32 %v1616, %v1758
      %v1861 = vadd.f32 %v1617, %v1761
      %v1862 = vadd.f32 %v1618, %v1766
      %v1863 = vadd.f32 %v1619, %v1769
      %v1864 = vadd.f32 %v1620, %v1774
      %v1865 = vadd.f32 %v1621, %v1777
      %v1866 = vadd.f32 %v1622, %v1782
      %v1867 = vadd.f32 %v1623, %v1785
      %v1868 = vadd.f32 %v1624, %v1790
      %v1869 = vadd.f32 %v1625, %v1793
      %v1870 = vadd.f32 %v1626, %v1798
      %v1871 = vadd.f32 %v1627, %v1801
      %v1872 = vadd.f32 %v1628, %v1806
      %v1873 = vadd.f32 %v1629, %v1809
      %v1874 = vadd.f32 %v1630, %v1814
      %v1875 = vadd.f32 %v1631, %v1817
      %v1876 = vadd.f32 %v1632, %v1822
      %v1877 = vadd.f32 %v1633, %v1825
      %v1878 = vadd.f32 %v1634, %v1830
      %v1879 = vadd.f32 %v1635, %v1833
      %v1880 = vadd.f32 %v1636, %v1838
      %v1881 = vadd.f32 %v1637, %v1841
      %v1882 = vadd.f32 %v1638, %v1846
      %v1883 = vadd.f32 %v1639, %v1849
      %1884 = vst [vmem:[#allocation2] sm:$0xff] %v1852
      %1885 = vst [vmem:[#allocation2 + $0x8] sm:$0xff] %v1853
      %1886 = vst [vmem:[#allocation2 + $0x10] sm:$0xff] %v1854
      %1887 = vst [vmem:[#allocation2 + $0x18] sm:$0xff] %v1855
      %1888 = vst [vmem:[#allocation2 + $0x20] sm:$0xff] %v1856
      %1889 = vst [vmem:[#allocation2 + $0x28] sm:$0xff] %v1857
      %1890 = vst [vmem:[#allocation2 + $0x30] sm:$0xff] %v1858
      %1891 = vst [vmem:[#allocation2 + $0x38] sm:$0xff] %v1859
      %1892 = vst [vmem:[#allocation2 + $0x40] sm:$0xff] %v1860
      %1893 = vst [vmem:[#allocation2 + $0x48] sm:$0xff] %v1861
      %1894 = vst [vmem:[#allocation2 + $0x50] sm:$0xff] %v1862
      %1895 = vst [vmem:[#allocation2 + $0x58] sm:$0xff] %v1863
      %1896 = vst [vmem:[#allocation2 + $0x60] sm:$0xff] %v1864
      %1897 = vst [vmem:[#allocation2 + $0x68] sm:$0xff] %v1865
      %1898 = vst [vmem:[#allocation2 + $0x70] sm:$0xff] %v1866
      %1899 = vst [vmem:[#allocation2 + $0x78] sm:$0xff] %v1867
      %1900 = vst [vmem:[#allocation2 + $0x80] sm:$0xff] %v1868
      %1901 = vst [vmem:[#allocation2 + $0x88] sm:$0xff] %v1869
      %1902 = vst [vmem:[#allocation2 + $0x90] sm:$0xff] %v1870
      %1903 = vst [vmem:[#allocation2 + $0x98] sm:$0xff] %v1871
      %1904 = vst [vmem:[#allocation2 + $0xa0] sm:$0xff] %v1872
      %1905 = vst [vmem:[#allocation2 + $0xa8] sm:$0xff] %v1873
      %1906 = vst [vmem:[#allocation2 + $0xb0] sm:$0xff] %v1874
      %1907 = vst [vmem:[#allocation2 + $0xb8] sm:$0xff] %v1875
      %1908 = vst [vmem:[#allocation2 + $0xc0] sm:$0xff] %v1876
      %1909 = vst [vmem:[#allocation2 + $0xc8] sm:$0xff] %v1877
      %1910 = vst [vmem:[#allocation2 + $0xd0] sm:$0xff] %v1878
      %1911 = vst [vmem:[#allocation2 + $0xd8] sm:$0xff] %v1879
      %1912 = vst [vmem:[#allocation2 + $0xe0] sm:$0xff] %v1880
      %1913 = vst [vmem:[#allocation2 + $0xe8] sm:$0xff] %v1881
      %1914 = vst [vmem:[#allocation2 + $0xf0] sm:$0xff] %v1882
      %1915 = vst [vmem:[#allocation2 + $0xf8] sm:$0xff] %v1883
      %v1916 = vld [vmem:[%s293] sm:$0xf]
      %v1917 = vld [vmem:[%s293 + $0x4] sm:$0xf]
      %v1918 = vld [vmem:[%s293 + $0x8] sm:$0x1]
      %v1919 = vld [vmem:[%s293 + $0xc] sm:$0xf]
      %v1920 = vld [vmem:[%s293 + $0x10] sm:$0xf]
      %v1921 = vld [vmem:[%s293 + $0x14] sm:$0x1]
      %v1922 = vld [vmem:[%s293 + $0x18] sm:$0xf]
      %v1923 = vld [vmem:[%s293 + $0x1c] sm:$0xf]
      %v1924 = vld [vmem:[%s293 + $0x20] sm:$0x1]
      %v1925 = vld [vmem:[%s293 + $0x24] sm:$0xf]
      %v1926 = vld [vmem:[%s293 + $0x28] sm:$0xf]
      %v1927 = vld [vmem:[%s293 + $0x2c] sm:$0x1]
      %v1928 = vld [vmem:[%s293 + $0x30] sm:$0xf]
      %v1929 = vld [vmem:[%s293 + $0x34] sm:$0xf]
      %v1930 = vld [vmem:[%s293 + $0x38] sm:$0x1]
      %v1931 = vld [vmem:[%s293 + $0x3c] sm:$0xf]
      %v1932 = vld [vmem:[%s293 + $0x40] sm:$0xf]
      %v1933 = vld [vmem:[%s293 + $0x44] sm:$0x1]
      %v1934 = vld [vmem:[%s293 + $0x48] sm:$0xf]
      %v1935 = vld [vmem:[%s293 + $0x4c] sm:$0xf]
      %v1936 = vld [vmem:[%s293 + $0x50] sm:$0x1]
      %v1937 = vld [vmem:[%s293 + $0x54] sm:$0xf]
      %v1938 = vld [vmem:[%s293 + $0x58] sm:$0xf]
      %v1939 = vld [vmem:[%s293 + $0x5c] sm:$0x1]
      %v1940 = vld [vmem:[%s293 + $0x60] sm:$0xf]
      %v1941 = vld [vmem:[%s293 + $0x64] sm:$0xf]
      %v1942 = vld [vmem:[%s293 + $0x68] sm:$0x1]
      %v1943 = vld [vmem:[%s293 + $0x6c] sm:$0xf]
      %v1944 = vld [vmem:[%s293 + $0x70] sm:$0xf]
      %v1945 = vld [vmem:[%s293 + $0x74] sm:$0x1]
      %v1946 = vld [vmem:[%s293 + $0x78] sm:$0xf]
      %v1947 = vld [vmem:[%s293 + $0x7c] sm:$0xf]
      %v1948 = vld [vmem:[%s293 + $0x80] sm:$0x1]
      %v1949 = vld [vmem:[%s293 + $0x84] sm:$0xf]
      %v1950 = vld [vmem:[%s293 + $0x88] sm:$0xf]
      %v1951 = vld [vmem:[%s293 + $0x8c] sm:$0x1]
      %v1952 = vld [vmem:[%s293 + $0x90] sm:$0xf]
      %v1953 = vld [vmem:[%s293 + $0x94] sm:$0xf]
      %v1954 = vld [vmem:[%s293 + $0x98] sm:$0x1]
      %v1955 = vld [vmem:[%s293 + $0x9c] sm:$0xf]
      %v1956 = vld [vmem:[%s293 + $0xa0] sm:$0xf]
      %v1957 = vld [vmem:[%s293 + $0xa4] sm:$0x1]
      %v1958 = vld [vmem:[%s293 + $0xa8] sm:$0xf]
      %v1959 = vld [vmem:[%s293 + $0xac] sm:$0xf]
      %v1960 = vld [vmem:[%s293 + $0xb0] sm:$0x1]
      %v1961 = vld [vmem:[%s293 + $0xb4] sm:$0xf]
      %v1962 = vld [vmem:[%s293 + $0xb8] sm:$0xf]
      %v1963 = vld [vmem:[%s293 + $0xbc] sm:$0x1]
      %v1964 = vld [vmem:[%s293 + $0xc0] sm:$0xf]
      %v1965 = vld [vmem:[%s293 + $0xc4] sm:$0xf]
      %v1966 = vld [vmem:[%s293 + $0xc8] sm:$0x1]
      %v1967 = vld [vmem:[%s293 + $0xcc] sm:$0xf]
      %v1968 = vld [vmem:[%s293 + $0xd0] sm:$0xf]
      %v1969 = vld [vmem:[%s293 + $0xd4] sm:$0x1]
      %v2006 = vunpack.c.l.b16 %v1916
      %v2007 = vunpack.c.l.b16 %v1917
      %v2008 = vunpack.c.l.b16 %v1919
      %v2009 = vunpack.c.l.b16 %v1920
      %v2010 = vunpack.c.l.b16 %v1922
      %v2011 = vunpack.c.l.b16 %v1923
      %v2012 = vunpack.c.l.b16 %v1925
      %v2013 = vunpack.c.l.b16 %v1926
      %v2014 = vunpack.c.l.b16 %v1928
      %v2015 = vunpack.c.l.b16 %v1929
      %v2016 = vunpack.c.l.b16 %v1931
      %v2017 = vunpack.c.l.b16 %v1932
      %v2018 = vunpack.c.l.b16 %v1934
      %v2019 = vunpack.c.l.b16 %v1935
      %v2020 = vunpack.c.l.b16 %v1937
      %v2021 = vunpack.c.l.b16 %v1938
      %v2022 = vunpack.c.l.b16 %v1940
      %v2023 = vunpack.c.l.b16 %v1941
      %v2024 = vunpack.c.l.b16 %v1943
      %v2025 = vunpack.c.l.b16 %v1944
      %v2026 = vunpack.c.l.b16 %v1946
      %v2027 = vunpack.c.l.b16 %v1947
      %v2028 = vunpack.c.l.b16 %v1949
      %v2029 = vunpack.c.l.b16 %v1950
      %v2030 = vunpack.c.l.b16 %v1952
      %v2031 = vunpack.c.l.b16 %v1953
      %v2032 = vunpack.c.l.b16 %v1955
      %v2033 = vunpack.c.l.b16 %v1956
      %v2034 = vunpack.c.l.b16 %v1958
      %v2035 = vunpack.c.l.b16 %v1959
      %v2036 = vunpack.c.l.b16 %v1961
      %v2037 = vunpack.c.l.b16 %v1962
      %v2038 = vunpack.c.l.b16 %v1964
      %v2039 = vunpack.c.l.b16 %v1965
      %v2040 = vunpack.c.l.b16 %v1967
      %v2041 = vunpack.c.l.b16 %v1968
      %v2042 = vpack.c.b16 %v2007, %v2006
      %v2043 = vpack.c.b16 %v2009, %v2008
      %v2044 = vpack.c.b16 %v2011, %v2010
      %v2045 = vpack.c.b16 %v2013, %v2012
      %v2046 = vpack.c.b16 %v2015, %v2014
      %v2047 = vpack.c.b16 %v2017, %v2016
      %v2048 = vpack.c.b16 %v2019, %v2018
      %v2049 = vpack.c.b16 %v2021, %v2020
      %v2050 = vpack.c.b16 %v2023, %v2022
      %v2051 = vpack.c.b16 %v2025, %v2024
      %v2052 = vpack.c.b16 %v2027, %v2026
      %v2053 = vpack.c.b16 %v2029, %v2028
      %v2054 = vpack.c.b16 %v2031, %v2030
      %v2055 = vpack.c.b16 %v2033, %v2032
      %v2056 = vpack.c.b16 %v2035, %v2034
      %v2057 = vpack.c.b16 %v2037, %v2036
      %v2058 = vpack.c.b16 %v2039, %v2038
      %v2059 = vpack.c.b16 %v2041, %v2040
      %v2078 = vunpack.c.l.b16 %v1918
      %v2079 = vunpack.c.l.b16 %v1921
      %v2080 = vunpack.c.l.b16 %v1924
      %v2081 = vunpack.c.l.b16 %v1927
      %v2082 = vunpack.c.l.b16 %v1930
      %v2083 = vunpack.c.l.b16 %v1933
      %v2084 = vunpack.c.l.b16 %v1936
      %v2085 = vunpack.c.l.b16 %v1939
      %v2086 = vunpack.c.l.b16 %v1942
      %v2087 = vunpack.c.l.b16 %v1945
      %v2088 = vunpack.c.l.b16 %v1948
      %v2089 = vunpack.c.l.b16 %v1951
      %v2090 = vunpack.c.l.b16 %v1954
      %v2091 = vunpack.c.l.b16 %v1957
      %v2092 = vunpack.c.l.b16 %v1960
      %v2093 = vunpack.c.l.b16 %v1963
      %v2094 = vunpack.c.l.b16 %v1966
      %v2095 = vunpack.c.l.b16 %v1969
      %v2096 = vpack.c.b16 %v2078, %v2078
      %v2097 = vpack.c.b16 %v2079, %v2079
      %v2098 = vpack.c.b16 %v2080, %v2080
      %v2099 = vpack.c.b16 %v2081, %v2081
      %v2100 = vpack.c.b16 %v2082, %v2082
      %v2101 = vpack.c.b16 %v2083, %v2083
      %v2102 = vpack.c.b16 %v2084, %v2084
      %v2103 = vpack.c.b16 %v2085, %v2085
      %v2104 = vpack.c.b16 %v2086, %v2086
      %v2105 = vpack.c.b16 %v2087, %v2087
      %v2106 = vpack.c.b16 %v2088, %v2088
      %v2107 = vpack.c.b16 %v2089, %v2089
      %v2108 = vpack.c.b16 %v2090, %v2090
      %v2109 = vpack.c.b16 %v2091, %v2091
      %v2110 = vpack.c.b16 %v2092, %v2092
      %v2111 = vpack.c.b16 %v2093, %v2093
      %v2112 = vpack.c.b16 %v2094, %v2094
      %v2113 = vpack.c.b16 %v2095, %v2095
      %v2115 = vshrl.u32 %v2042, 16
      %v2117 = vshll.u32 %v2042, 16
      %v2119 = vrot.slane %v2117, 1
      %v2120 = vor.u32 %v2115, %v2119
      %v2122 = vshll.u32 %v2096, 16
      %v2124 = vrot.slane %v2122, 1
      %v2125 = vsel %vm544, %v2120, %v2124
      %v2127 = vshrl.u32 %v2043, 16
      %v2129 = vshll.u32 %v2043, 16
      %v2131 = vrot.slane %v2129, 1
      %v2132 = vor.u32 %v2127, %v2131
      %v2134 = vshll.u32 %v2097, 16
      %v2136 = vrot.slane %v2134, 1
      %v2137 = vsel %vm544, %v2132, %v2136
      %v2139 = vshrl.u32 %v2044, 16
      %v2141 = vshll.u32 %v2044, 16
      %v2143 = vrot.slane %v2141, 1
      %v2144 = vor.u32 %v2139, %v2143
      %v2146 = vshll.u32 %v2098, 16
      %v2148 = vrot.slane %v2146, 1
      %v2149 = vsel %vm544, %v2144, %v2148
      %v2151 = vshrl.u32 %v2045, 16
      %v2153 = vshll.u32 %v2045, 16
      %v2155 = vrot.slane %v2153, 1
      %v2156 = vor.u32 %v2151, %v2155
      %v2158 = vshll.u32 %v2099, 16
      %v2160 = vrot.slane %v2158, 1
      %v2161 = vsel %vm544, %v2156, %v2160
      %v2163 = vshrl.u32 %v2046, 16
      %v2165 = vshll.u32 %v2046, 16
      %v2167 = vrot.slane %v2165, 1
      %v2168 = vor.u32 %v2163, %v2167
      %v2170 = vshll.u32 %v2100, 16
      %v2172 = vrot.slane %v2170, 1
      %v2173 = vsel %vm544, %v2168, %v2172
      %v2175 = vshrl.u32 %v2047, 16
      %v2177 = vshll.u32 %v2047, 16
      %v2179 = vrot.slane %v2177, 1
      %v2180 = vor.u32 %v2175, %v2179
      %v2182 = vshll.u32 %v2101, 16
      %v2184 = vrot.slane %v2182, 1
      %v2185 = vsel %vm544, %v2180, %v2184
      %v2187 = vshrl.u32 %v2048, 16
      %v2189 = vshll.u32 %v2048, 16
      %v2191 = vrot.slane %v2189, 1
      %v2192 = vor.u32 %v2187, %v2191
      %v2194 = vshll.u32 %v2102, 16
      %v2196 = vrot.slane %v2194, 1
      %v2197 = vsel %vm544, %v2192, %v2196
      %v2199 = vshrl.u32 %v2049, 16
      %v2201 = vshll.u32 %v2049, 16
      %v2203 = vrot.slane %v2201, 1
      %v2204 = vor.u32 %v2199, %v2203
      %v2206 = vshll.u32 %v2103, 16
      %v2208 = vrot.slane %v2206, 1
      %v2209 = vsel %vm544, %v2204, %v2208
      %v2211 = vshrl.u32 %v2050, 16
      %v2213 = vshll.u32 %v2050, 16
      %v2215 = vrot.slane %v2213, 1
      %v2216 = vor.u32 %v2211, %v2215
      %v2218 = vshll.u32 %v2104, 16
      %v2220 = vrot.slane %v2218, 1
      %v2221 = vsel %vm544, %v2216, %v2220
      %v2223 = vshrl.u32 %v2051, 16
      %v2225 = vshll.u32 %v2051, 16
      %v2227 = vrot.slane %v2225, 1
      %v2228 = vor.u32 %v2223, %v2227
      %v2230 = vshll.u32 %v2105, 16
      %v2232 = vrot.slane %v2230, 1
      %v2233 = vsel %vm544, %v2228, %v2232
      %v2235 = vshrl.u32 %v2052, 16
      %v2237 = vshll.u32 %v2052, 16
      %v2239 = vrot.slane %v2237, 1
      %v2240 = vor.u32 %v2235, %v2239
      %v2242 = vshll.u32 %v2106, 16
      %v2244 = vrot.slane %v2242, 1
      %v2245 = vsel %vm544, %v2240, %v2244
      %v2247 = vshrl.u32 %v2053, 16
      %v2249 = vshll.u32 %v2053, 16
      %v2251 = vrot.slane %v2249, 1
      %v2252 = vor.u32 %v2247, %v2251
      %v2254 = vshll.u32 %v2107, 16
      %v2256 = vrot.slane %v2254, 1
      %v2257 = vsel %vm544, %v2252, %v2256
      %v2259 = vshrl.u32 %v2054, 16
      %v2261 = vshll.u32 %v2054, 16
      %v2263 = vrot.slane %v2261, 1
      %v2264 = vor.u32 %v2259, %v2263
      %v2266 = vshll.u32 %v2108, 16
      %v2268 = vrot.slane %v2266, 1
      %v2269 = vsel %vm544, %v2264, %v2268
      %v2271 = vshrl.u32 %v2055, 16
      %v2273 = vshll.u32 %v2055, 16
      %v2275 = vrot.slane %v2273, 1
      %v2276 = vor.u32 %v2271, %v2275
      %v2278 = vshll.u32 %v2109, 16
      %v2280 = vrot.slane %v2278, 1
      %v2281 = vsel %vm544, %v2276, %v2280
      %v2283 = vshrl.u32 %v2056, 16
      %v2285 = vshll.u32 %v2056, 16
      %v2287 = vrot.slane %v2285, 1
      %v2288 = vor.u32 %v2283, %v2287
      %v2290 = vshll.u32 %v2110, 16
      %v2292 = vrot.slane %v2290, 1
      %v2293 = vsel %vm544, %v2288, %v2292
      %v2295 = vshrl.u32 %v2057, 16
      %v2297 = vshll.u32 %v2057, 16
      %v2299 = vrot.slane %v2297, 1
      %v2300 = vor.u32 %v2295, %v2299
      %v2302 = vshll.u32 %v2111, 16
      %v2304 = vrot.slane %v2302, 1
      %v2305 = vsel %vm544, %v2300, %v2304
      %v2307 = vshrl.u32 %v2058, 16
      %v2309 = vshll.u32 %v2058, 16
      %v2311 = vrot.slane %v2309, 1
      %v2312 = vor.u32 %v2307, %v2311
      %v2314 = vshll.u32 %v2112, 16
      %v2316 = vrot.slane %v2314, 1
      %v2317 = vsel %vm544, %v2312, %v2316
      %v2319 = vshrl.u32 %v2059, 16
      %v2321 = vshll.u32 %v2059, 16
      %v2323 = vrot.slane %v2321, 1
      %v2324 = vor.u32 %v2319, %v2323
      %v2326 = vshll.u32 %v2113, 16
      %v2328 = vrot.slane %v2326, 1
      %v2329 = vsel %vm544, %v2324, %v2328
      %2330 = vrot.lane.b32.xlu0 %v2125, 32
      %v2331 = vpop.permute.xlu0 %2330
      %2332 = vrot.lane.b32.xlu0 %v2137, 32
      %v2333 = vpop.permute.xlu0 %2332
      %2334 = vrot.lane.b32.xlu0 %v2149, 32
      %v2335 = vpop.permute.xlu0 %2334
      %2336 = vrot.lane.b32.xlu0 %v2161, 32
      %v2337 = vpop.permute.xlu0 %2336
      %2338 = vrot.lane.b32.xlu0 %v2173, 32
      %v2339 = vpop.permute.xlu0 %2338
      %2340 = vrot.lane.b32.xlu0 %v2185, 32
      %v2341 = vpop.permute.xlu0 %2340
      %2342 = vrot.lane.b32.xlu0 %v2197, 32
      %v2343 = vpop.permute.xlu0 %2342
      %2344 = vrot.lane.b32.xlu0 %v2209, 32
      %v2345 = vpop.permute.xlu0 %2344
      %2346 = vrot.lane.b32.xlu0 %v2221, 32
      %v2347 = vpop.permute.xlu0 %2346
      %2348 = vrot.lane.b32.xlu0 %v2233, 32
      %v2349 = vpop.permute.xlu0 %2348
      %2350 = vrot.lane.b32.xlu0 %v2245, 32
      %v2351 = vpop.permute.xlu0 %2350
      %2352 = vrot.lane.b32.xlu0 %v2257, 32
      %v2353 = vpop.permute.xlu0 %2352
      %2354 = vrot.lane.b32.xlu0 %v2269, 32
      %v2355 = vpop.permute.xlu0 %2354
      %2356 = vrot.lane.b32.xlu0 %v2281, 32
      %v2357 = vpop.permute.xlu0 %2356
      %2358 = vrot.lane.b32.xlu0 %v2293, 32
      %v2359 = vpop.permute.xlu0 %2358
      %2360 = vrot.lane.b32.xlu0 %v2305, 32
      %v2361 = vpop.permute.xlu0 %2360
      %2362 = vrot.lane.b32.xlu0 %v2317, 32
      %v2363 = vpop.permute.xlu0 %2362
      %2364 = vrot.lane.b32.xlu0 %v2329, 32
      %v2365 = vpop.permute.xlu0 %2364
      %v2366 = vrot.slane %v2042, 1
      %v2367 = vrot.slane %v2096, 1
      %v2368 = vsel %vm797, %v2366, %v2367
      %v2369 = vrot.slane %v2043, 1
      %v2370 = vrot.slane %v2097, 1
      %v2371 = vsel %vm797, %v2369, %v2370
      %v2372 = vrot.slane %v2044, 1
      %v2373 = vrot.slane %v2098, 1
      %v2374 = vsel %vm797, %v2372, %v2373
      %v2375 = vrot.slane %v2045, 1
      %v2376 = vrot.slane %v2099, 1
      %v2377 = vsel %vm797, %v2375, %v2376
      %v2378 = vrot.slane %v2046, 1
      %v2379 = vrot.slane %v2100, 1
      %v2380 = vsel %vm797, %v2378, %v2379
      %v2381 = vrot.slane %v2047, 1
      %v2382 = vrot.slane %v2101, 1
      %v2383 = vsel %vm797, %v2381, %v2382
      %v2384 = vrot.slane %v2048, 1
      %v2385 = vrot.slane %v2102, 1
      %v2386 = vsel %vm797, %v2384, %v2385
      %v2387 = vrot.slane %v2049, 1
      %v2388 = vrot.slane %v2103, 1
      %v2389 = vsel %vm797, %v2387, %v2388
      %v2390 = vrot.slane %v2050, 1
      %v2391 = vrot.slane %v2104, 1
      %v2392 = vsel %vm797, %v2390, %v2391
      %v2393 = vrot.slane %v2051, 1
      %v2394 = vrot.slane %v2105, 1
      %v2395 = vsel %vm797, %v2393, %v2394
      %v2396 = vrot.slane %v2052, 1
      %v2397 = vrot.slane %v2106, 1
      %v2398 = vsel %vm797, %v2396, %v2397
      %v2399 = vrot.slane %v2053, 1
      %v2400 = vrot.slane %v2107, 1
      %v2401 = vsel %vm797, %v2399, %v2400
      %v2402 = vrot.slane %v2054, 1
      %v2403 = vrot.slane %v2108, 1
      %v2404 = vsel %vm797, %v2402, %v2403
      %v2405 = vrot.slane %v2055, 1
      %v2406 = vrot.slane %v2109, 1
      %v2407 = vsel %vm797, %v2405, %v2406
      %v2408 = vrot.slane %v2056, 1
      %v2409 = vrot.slane %v2110, 1
      %v2410 = vsel %vm797, %v2408, %v2409
      %v2411 = vrot.slane %v2057, 1
      %v2412 = vrot.slane %v2111, 1
      %v2413 = vsel %vm797, %v2411, %v2412
      %v2414 = vrot.slane %v2058, 1
      %v2415 = vrot.slane %v2112, 1
      %v2416 = vsel %vm797, %v2414, %v2415
      %v2417 = vrot.slane %v2059, 1
      %v2418 = vrot.slane %v2113, 1
      %v2419 = vsel %vm797, %v2417, %v2418
      %2420 = vrot.lane.b32.xlu0 %v2368, 64
      %v2421 = vpop.permute.xlu0 %2420
      %2422 = vrot.lane.b32.xlu0 %v2371, 64
      %v2423 = vpop.permute.xlu0 %2422
      %2424 = vrot.lane.b32.xlu0 %v2374, 64
      %v2425 = vpop.permute.xlu0 %2424
      %2426 = vrot.lane.b32.xlu0 %v2377, 64
      %v2427 = vpop.permute.xlu0 %2426
      %2428 = vrot.lane.b32.xlu0 %v2380, 64
      %v2429 = vpop.permute.xlu0 %2428
      %2430 = vrot.lane.b32.xlu0 %v2383, 64
      %v2431 = vpop.permute.xlu0 %2430
      %2432 = vrot.lane.b32.xlu0 %v2386, 64
      %v2433 = vpop.permute.xlu0 %2432
      %2434 = vrot.lane.b32.xlu0 %v2389, 64
      %v2435 = vpop.permute.xlu0 %2434
      %2436 = vrot.lane.b32.xlu0 %v2392, 64
      %v2437 = vpop.permute.xlu0 %2436
      %2438 = vrot.lane.b32.xlu0 %v2395, 64
      %v2439 = vpop.permute.xlu0 %2438
      %2440 = vrot.lane.b32.xlu0 %v2398, 64
      %v2441 = vpop.permute.xlu0 %2440
      %2442 = vrot.lane.b32.xlu0 %v2401, 64
      %v2443 = vpop.permute.xlu0 %2442
      %2444 = vrot.lane.b32.xlu0 %v2404, 64
      %v2445 = vpop.permute.xlu0 %2444
      %2446 = vrot.lane.b32.xlu0 %v2407, 64
      %v2447 = vpop.permute.xlu0 %2446
      %2448 = vrot.lane.b32.xlu0 %v2410, 64
      %v2449 = vpop.permute.xlu0 %2448
      %2450 = vrot.lane.b32.xlu0 %v2413, 64
      %v2451 = vpop.permute.xlu0 %2450
      %2452 = vrot.lane.b32.xlu0 %v2416, 64
      %v2453 = vpop.permute.xlu0 %2452
      %2454 = vrot.lane.b32.xlu0 %v2419, 64
      %v2455 = vpop.permute.xlu0 %2454
      %v2457 = vsel %vm888, %v2042, %v2331
      %v2459 = vsel %vm888, %v2043, %v2333
      %v2461 = vsel %vm888, %v2044, %v2335
      %v2463 = vsel %vm888, %v2045, %v2337
      %v2465 = vsel %vm888, %v2046, %v2339
      %v2467 = vsel %vm888, %v2047, %v2341
      %v2469 = vsel %vm888, %v2048, %v2343
      %v2471 = vsel %vm888, %v2049, %v2345
      %v2473 = vsel %vm888, %v2050, %v2347
      %v2475 = vsel %vm888, %v2051, %v2349
      %v2477 = vsel %vm888, %v2052, %v2351
      %v2479 = vsel %vm888, %v2053, %v2353
      %v2481 = vsel %vm888, %v2054, %v2355
      %v2483 = vsel %vm888, %v2055, %v2357
      %v2485 = vsel %vm888, %v2056, %v2359
      %v2487 = vsel %vm888, %v2057, %v2361
      %v2489 = vsel %vm888, %v2058, %v2363
      %v2491 = vsel %vm888, %v2059, %v2365
      %v2493 = vsel %vm925, %v2457, %v2421
      %v2495 = vsel %vm925, %v2459, %v2423
      %v2497 = vsel %vm925, %v2461, %v2425
      %v2499 = vsel %vm925, %v2463, %v2427
      %v2501 = vsel %vm925, %v2465, %v2429
      %v2503 = vsel %vm925, %v2467, %v2431
      %v2505 = vsel %vm925, %v2469, %v2433
      %v2507 = vsel %vm925, %v2471, %v2435
      %v2509 = vsel %vm925, %v2473, %v2437
      %v2511 = vsel %vm925, %v2475, %v2439
      %v2513 = vsel %vm925, %v2477, %v2441
      %v2515 = vsel %vm925, %v2479, %v2443
      %v2517 = vsel %vm925, %v2481, %v2445
      %v2519 = vsel %vm925, %v2483, %v2447
      %v2521 = vsel %vm925, %v2485, %v2449
      %v2523 = vsel %vm925, %v2487, %v2451
      %v2525 = vsel %vm925, %v2489, %v2453
      %v2527 = vsel %vm925, %v2491, %v2455
      %v2528 = vld [vmem:[#allocation2] sm:$0xff]
      %v2529 = vld [vmem:[#allocation2 + $0x8] sm:$0xff]
      %v2530 = vld [vmem:[#allocation2 + $0x10] sm:$0xff]
      %v2531 = vld [vmem:[#allocation2 + $0x18] sm:$0xff]
      %v2532 = vld [vmem:[#allocation2 + $0x20] sm:$0xff]
      %v2533 = vld [vmem:[#allocation2 + $0x28] sm:$0xff]
      %v2534 = vld [vmem:[#allocation2 + $0x30] sm:$0xff]
      %v2535 = vld [vmem:[#allocation2 + $0x38] sm:$0xff]
      %v2536 = vld [vmem:[#allocation2 + $0x40] sm:$0xff]
      %v2537 = vld [vmem:[#allocation2 + $0x48] sm:$0xff]
      %v2538 = vld [vmem:[#allocation2 + $0x50] sm:$0xff]
      %v2539 = vld [vmem:[#allocation2 + $0x58] sm:$0xff]
      %v2540 = vld [vmem:[#allocation2 + $0x60] sm:$0xff]
      %v2541 = vld [vmem:[#allocation2 + $0x68] sm:$0xff]
      %v2542 = vld [vmem:[#allocation2 + $0x70] sm:$0xff]
      %v2543 = vld [vmem:[#allocation2 + $0x78] sm:$0xff]
      %v2544 = vld [vmem:[#allocation2 + $0x80] sm:$0xff]
      %v2545 = vld [vmem:[#allocation2 + $0x88] sm:$0xff]
      %v2546 = vld [vmem:[#allocation2 + $0x90] sm:$0xff]
      %v2547 = vld [vmem:[#allocation2 + $0x98] sm:$0xff]
      %v2548 = vld [vmem:[#allocation2 + $0xa0] sm:$0xff]
      %v2549 = vld [vmem:[#allocation2 + $0xa8] sm:$0xff]
      %v2550 = vld [vmem:[#allocation2 + $0xb0] sm:$0xff]
      %v2551 = vld [vmem:[#allocation2 + $0xb8] sm:$0xff]
      %v2552 = vld [vmem:[#allocation2 + $0xc0] sm:$0xff]
      %v2553 = vld [vmem:[#allocation2 + $0xc8] sm:$0xff]
      %v2554 = vld [vmem:[#allocation2 + $0xd0] sm:$0xff]
      %v2555 = vld [vmem:[#allocation2 + $0xd8] sm:$0xff]
      %v2556 = vld [vmem:[#allocation2 + $0xe0] sm:$0xff]
      %v2557 = vld [vmem:[#allocation2 + $0xe8] sm:$0xff]
      %v2558 = vld [vmem:[#allocation2 + $0xf0] sm:$0xff]
      %v2559 = vld [vmem:[#allocation2 + $0xf8] sm:$0xff]
      %v2560 = vld [vmem:[%s301] sm:$0xf]
      %v2561 = vld [vmem:[%s301 + $0x4] sm:$0xf]
      %v2562 = vld [vmem:[%s301 + $0x8] sm:$0xf]
      %v2563 = vld [vmem:[%s301 + $0xc] sm:$0xf]
      %v2564 = vld [vmem:[%s301 + $0x10] sm:$0xf]
      %v2565 = vld [vmem:[%s301 + $0x14] sm:$0xf]
      %v2566 = vld [vmem:[%s301 + $0x18] sm:$0xf]
      %v2567 = vld [vmem:[%s301 + $0x1c] sm:$0xf]
      %v2568 = vld [vmem:[%s301 + $0x20] sm:$0xf]
      %v2569 = vld [vmem:[%s301 + $0x24] sm:$0xf]
      %v2570 = vld [vmem:[%s301 + $0x28] sm:$0xf]
      %v2571 = vld [vmem:[%s301 + $0x2c] sm:$0xf]
      %v2584 = vunpack.c.l.b16 %v2560
      %v2585 = vunpack.c.l.b16 %v2561
      %v2586 = vunpack.c.l.b16 %v2562
      %v2587 = vunpack.c.l.b16 %v2563
      %v2588 = vunpack.c.l.b16 %v2564
      %v2589 = vunpack.c.l.b16 %v2565
      %v2590 = vunpack.c.l.b16 %v2566
      %v2591 = vunpack.c.l.b16 %v2567
      %v2592 = vunpack.c.l.b16 %v2568
      %v2593 = vunpack.c.l.b16 %v2569
      %v2594 = vunpack.c.l.b16 %v2570
      %v2595 = vunpack.c.l.b16 %v2571
      %v2596 = vpack.c.b16 %v2585, %v2584
      %v2597 = vpack.c.b16 %v2587, %v2586
      %v2598 = vpack.c.b16 %v2589, %v2588
      %v2599 = vpack.c.b16 %v2591, %v2590
      %v2600 = vpack.c.b16 %v2593, %v2592
      %v2601 = vpack.c.b16 %v2595, %v2594
      %v2608 = vsel %vm1042, %v2493, 0
      %v2610 = vsel %vm1042, %v2495, 0
      %v2612 = vsel %vm1042, %v2497, 0
      %v2614 = vsel %vm1042, %v2499, 0
      %v2616 = vsel %vm1042, %v2501, 0
      %v2618 = vsel %vm1042, %v2503, 0
      %v2620 = vsel %vm1042, %v2505, 0
      %v2622 = vsel %vm1042, %v2507, 0
      %v2624 = vsel %vm1042, %v2509, 0
      %v2626 = vsel %vm1042, %v2511, 0
      %v2628 = vsel %vm1042, %v2513, 0
      %v2630 = vsel %vm1042, %v2515, 0
      %v2632 = vsel %vm1042, %v2517, 0
      %v2634 = vsel %vm1042, %v2519, 0
      %v2636 = vsel %vm1042, %v2521, 0
      %v2638 = vsel %vm1042, %v2523, 0
      %2640 = vmatprep.subr.bf16.mxu0 0
      %2641 = vmatpush1.bf16.msra.mxu0 %v2596
      %2642 = vmatprep.subr.bf16.mxu0 0
      %2643 = vmatpush1.bf16.msra.mxu0 %v2597
      %2644 = vmatprep.subr.bf16.mxu0 0
      %2645 = vmatpush1.bf16.msra.mxu0 %v2598
      %2646 = vmatprep.subr.bf16.mxu0 0
      %2647 = vmatpush1.bf16.msra.mxu0 %v2599
      %2648 = vmatprep.subr.bf16.mxu0 0
      %2649 = vmatpush1.bf16.msra.mxu0 %v2600
      %2650 = vmatprep.subr.bf16.mxu0 0
      %2651 = vmatpush1.bf16.msra.mxu0 %v2601
      %2652 = vmatprep.subr.bf16.mxu0 0
      %2653 = vmatpush1.bf16.msra.mxu0 0
      %2654 = vmatprep.subr.bf16.mxu0 0
      %2655 = vmatpush1.bf16.msra.mxu0 0
      %2656 = vmatprep.subr.bf16.mxu0 0
      %2657 = vmatpush1.bf16.msra.mxu0 0
      %2658 = vmatprep.subr.bf16.mxu0 0
      %2659 = vmatpush1.bf16.msra.mxu0 0
      %2660 = vmatprep.subr.bf16.mxu0 0
      %2661 = vmatpush1.bf16.msra.mxu0 0
      %2662 = vmatprep.subr.bf16.mxu0 0
      %2663 = vmatpush1.bf16.msra.mxu0 0
      %2664 = vmatprep.subr.bf16.mxu0 0
      %2665 = vmatpush1.bf16.msra.mxu0 0
      %2666 = vmatprep.subr.bf16.mxu0 0
      %2667 = vmatpush1.bf16.msra.mxu0 0
      %2668 = vmatprep.subr.bf16.mxu0 0
      %2669 = vmatpush1.bf16.msra.mxu0 0
      %2670 = vmatprep.subr.bf16.mxu0 0
      %2671 = vmatpush1.bf16.msra.mxu0 0
      %2672 = vmatprep.mubr.bf16.mxu0 0
      %2673 = vmatmul.mubr.bf16.gmra.mrb[0].mxu0 %v2608
      %v2674 = vpop.f32.mrb[0].mxu0
      %v2675 = vadd.f32 0.0, %v2674
      %v2676 = vpop.f32.mrb[0].mxu0
      %v2677 = vpop.f32.mrb[0].mxu0
      %v2678 = vadd.f32 0.0, %v2677
      %v2679 = vpop.f32.mrb[0].mxu0
      %2680 = vmatprep.mubr.bf16.mxu0 0
      %2681 = vmatmul.mubr.bf16.gmra.mrb[0].mxu0 %v2610
      %v2682 = vpop.f32.mrb[0].mxu0
      %v2683 = vadd.f32 0.0, %v2682
      %v2684 = vpop.f32.mrb[0].mxu0
      %v2685 = vpop.f32.mrb[0].mxu0
      %v2686 = vadd.f32 0.0, %v2685
      %v2687 = vpop.f32.mrb[0].mxu0
      %2688 = vmatprep.mubr.bf16.mxu0 0
      %2689 = vmatmul.mubr.bf16.gmra.mrb[0].mxu0 %v2612
      %v2690 = vpop.f32.mrb[0].mxu0
      %v2691 = vadd.f32 0.0, %v2690
      %v2692 = vpop.f32.mrb[0].mxu0
      %v2693 = vpop.f32.mrb[0].mxu0
      %v2694 = vadd.f32 0.0, %v2693
      %v2695 = vpop.f32.mrb[0].mxu0
      %2696 = vmatprep.mubr.bf16.mxu0 0
      %2697 = vmatmul.mubr.bf16.gmra.mrb[0].mxu0 %v2614
      %v2698 = vpop.f32.mrb[0].mxu0
      %v2699 = vadd.f32 0.0, %v2698
      %v2700 = vpop.f32.mrb[0].mxu0
      %v2701 = vpop.f32.mrb[0].mxu0
      %v2702 = vadd.f32 0.0, %v2701
      %v2703 = vpop.f32.mrb[0].mxu0
      %2704 = vmatprep.mubr.bf16.mxu0 0
      %2705 = vmatmul.mubr.bf16.gmra.mrb[0].mxu0 %v2616
      %v2706 = vpop.f32.mrb[0].mxu0
      %v2707 = vadd.f32 0.0, %v2706
      %v2708 = vpop.f32.mrb[0].mxu0
      %v2709 = vpop.f32.mrb[0].mxu0
      %v2710 = vadd.f32 0.0, %v2709
      %v2711 = vpop.f32.mrb[0].mxu0
      %2712 = vmatprep.mubr.bf16.mxu0 0
      %2713 = vmatmul.mubr.bf16.gmra.mrb[0].mxu0 %v2618
      %v2714 = vpop.f32.mrb[0].mxu0
      %v2715 = vadd.f32 0.0, %v2714
      %v2716 = vpop.f32.mrb[0].mxu0
      %v2717 = vpop.f32.mrb[0].mxu0
      %v2718 = vadd.f32 0.0, %v2717
      %v2719 = vpop.f32.mrb[0].mxu0
      %2720 = vmatprep.mubr.bf16.mxu0 0
      %2721 = vmatmul.mubr.bf16.gmra.mrb[0].mxu0 %v2620
      %v2722 = vpop.f32.mrb[0].mxu0
      %v2723 = vadd.f32 0.0, %v2722
      %v2724 = vpop.f32.mrb[0].mxu0
      %v2725 = vpop.f32.mrb[0].mxu0
      %v2726 = vadd.f32 0.0, %v2725
      %v2727 = vpop.f32.mrb[0].mxu0
      %2728 = vmatprep.mubr.bf16.mxu0 0
      %2729 = vmatmul.mubr.bf16.gmra.mrb[0].mxu0 %v2622
      %v2730 = vpop.f32.mrb[0].mxu0
      %v2731 = vadd.f32 0.0, %v2730
      %v2732 = vpop.f32.mrb[0].mxu0
      %v2733 = vpop.f32.mrb[0].mxu0
      %v2734 = vadd.f32 0.0, %v2733
      %v2735 = vpop.f32.mrb[0].mxu0
      %2736 = vmatprep.mubr.bf16.mxu0 0
      %2737 = vmatmul.mubr.bf16.gmra.mrb[0].mxu0 %v2624
      %v2738 = vpop.f32.mrb[0].mxu0
      %v2739 = vadd.f32 0.0, %v2738
      %v2740 = vpop.f32.mrb[0].mxu0
      %v2741 = vpop.f32.mrb[0].mxu0
      %v2742 = vadd.f32 0.0, %v2741
      %v2743 = vpop.f32.mrb[0].mxu0
      %2744 = vmatprep.mubr.bf16.mxu0 0
      %2745 = vmatmul.mubr.bf16.gmra.mrb[0].mxu0 %v2626
      %v2746 = vpop.f32.mrb[0].mxu0
      %v2747 = vadd.f32 0.0, %v2746
      %v2748 = vpop.f32.mrb[0].mxu0
      %v2749 = vpop.f32.mrb[0].mxu0
      %v2750 = vadd.f32 0.0, %v2749
      %v2751 = vpop.f32.mrb[0].mxu0
      %2752 = vmatprep.mubr.bf16.mxu0 0
      %2753 = vmatmul.mubr.bf16.gmra.mrb[0].mxu0 %v2628
      %v2754 = vpop.f32.mrb[0].mxu0
      %v2755 = vadd.f32 0.0, %v2754
      %v2756 = vpop.f32.mrb[0].mxu0
      %v2757 = vpop.f32.mrb[0].mxu0
      %v2758 = vadd.f32 0.0, %v2757
      %v2759 = vpop.f32.mrb[0].mxu0
      %2760 = vmatprep.mubr.bf16.mxu0 0
      %2761 = vmatmul.mubr.bf16.gmra.mrb[0].mxu0 %v2630
      %v2762 = vpop.f32.mrb[0].mxu0
      %v2763 = vadd.f32 0.0, %v2762
      %v2764 = vpop.f32.mrb[0].mxu0
      %v2765 = vpop.f32.mrb[0].mxu0
      %v2766 = vadd.f32 0.0, %v2765
      %v2767 = vpop.f32.mrb[0].mxu0
      %2768 = vmatprep.mubr.bf16.mxu0 0
      %2769 = vmatmul.mubr.bf16.gmra.mrb[0].mxu0 %v2632
      %v2770 = vpop.f32.mrb[0].mxu0
      %v2771 = vadd.f32 0.0, %v2770
      %v2772 = vpop.f32.mrb[0].mxu0
      %v2773 = vpop.f32.mrb[0].mxu0
      %v2774 = vadd.f32 0.0, %v2773
      %v2775 = vpop.f32.mrb[0].mxu0
      %2776 = vmatprep.mubr.bf16.mxu0 0
      %2777 = vmatmul.mubr.bf16.gmra.mrb[0].mxu0 %v2634
      %v2778 = vpop.f32.mrb[0].mxu0
      %v2779 = vadd.f32 0.0, %v2778
      %v2780 = vpop.f32.mrb[0].mxu0
      %v2781 = vpop.f32.mrb[0].mxu0
      %v2782 = vadd.f32 0.0, %v2781
      %v2783 = vpop.f32.mrb[0].mxu0
      %2784 = vmatprep.mubr.bf16.mxu0 0
      %2785 = vmatmul.mubr.bf16.gmra.mrb[0].mxu0 %v2636
      %v2786 = vpop.f32.mrb[0].mxu0
      %v2787 = vadd.f32 0.0, %v2786
      %v2788 = vpop.f32.mrb[0].mxu0
      %v2789 = vpop.f32.mrb[0].mxu0
      %v2790 = vadd.f32 0.0, %v2789
      %v2791 = vpop.f32.mrb[0].mxu0
      %2792 = vmatprep.mubr.bf16.mxu0 0
      %2793 = vmatmul.mubr.bf16.gmra.mrb[0].mxu0 %v2638
      %v2794 = vpop.f32.mrb[0].mxu0
      %v2795 = vadd.f32 0.0, %v2794
      %v2796 = vpop.f32.mrb[0].mxu0
      %v2797 = vpop.f32.mrb[0].mxu0
      %v2798 = vadd.f32 0.0, %v2797
      %v2799 = vpop.f32.mrb[0].mxu0
      %2800 = vdwg.mxu0
      %v2801 = vadd.f32 %v2528, %v2675
      %v2802 = vadd.f32 %v2529, %v2678
      %v2803 = vadd.f32 %v2530, %v2683
      %v2804 = vadd.f32 %v2531, %v2686
      %v2805 = vadd.f32 %v2532, %v2691
      %v2806 = vadd.f32 %v2533, %v2694
      %v2807 = vadd.f32 %v2534, %v2699
      %v2808 = vadd.f32 %v2535, %v2702
      %v2809 = vadd.f32 %v2536, %v2707
      %v2810 = vadd.f32 %v2537, %v2710
      %v2811 = vadd.f32 %v2538, %v2715
      %v2812 = vadd.f32 %v2539, %v2718
      %v2813 = vadd.f32 %v2540, %v2723
      %v2814 = vadd.f32 %v2541, %v2726
      %v2815 = vadd.f32 %v2542, %v2731
      %v2816 = vadd.f32 %v2543, %v2734
      %v2817 = vadd.f32 %v2544, %v2739
      %v2818 = vadd.f32 %v2545, %v2742
      %v2819 = vadd.f32 %v2546, %v2747
      %v2820 = vadd.f32 %v2547, %v2750
      %v2821 = vadd.f32 %v2548, %v2755
      %v2822 = vadd.f32 %v2549, %v2758
      %v2823 = vadd.f32 %v2550, %v2763
      %v2824 = vadd.f32 %v2551, %v2766
      %v2825 = vadd.f32 %v2552, %v2771
      %v2826 = vadd.f32 %v2553, %v2774
      %v2827 = vadd.f32 %v2554, %v2779
      %v2828 = vadd.f32 %v2555, %v2782
      %v2829 = vadd.f32 %v2556, %v2787
      %v2830 = vadd.f32 %v2557, %v2790
      %v2831 = vadd.f32 %v2558, %v2795
      %v2832 = vadd.f32 %v2559, %v2798
      %2833 = vst [vmem:[#allocation2] sm:$0xff] %v2801
      %2834 = vst [vmem:[#allocation2 + $0x8] sm:$0xff] %v2802
      %2835 = vst [vmem:[#allocation2 + $0x10] sm:$0xff] %v2803
      %2836 = vst [vmem:[#allocation2 + $0x18] sm:$0xff] %v2804
      %2837 = vst [vmem:[#allocation2 + $0x20] sm:$0xff] %v2805
      %2838 = vst [vmem:[#allocation2 + $0x28] sm:$0xff] %v2806
      %2839 = vst [vmem:[#allocation2 + $0x30] sm:$0xff] %v2807
      %2840 = vst [vmem:[#allocation2 + $0x38] sm:$0xff] %v2808
      %2841 = vst [vmem:[#allocation2 + $0x40] sm:$0xff] %v2809
      %2842 = vst [vmem:[#allocation2 + $0x48] sm:$0xff] %v2810
      %2843 = vst [vmem:[#allocation2 + $0x50] sm:$0xff] %v2811
      %2844 = vst [vmem:[#allocation2 + $0x58] sm:$0xff] %v2812
      %2845 = vst [vmem:[#allocation2 + $0x60] sm:$0xff] %v2813
      %2846 = vst [vmem:[#allocation2 + $0x68] sm:$0xff] %v2814
      %2847 = vst [vmem:[#allocation2 + $0x70] sm:$0xff] %v2815
      %2848 = vst [vmem:[#allocation2 + $0x78] sm:$0xff] %v2816
      %2849 = vst [vmem:[#allocation2 + $0x80] sm:$0xff] %v2817
      %2850 = vst [vmem:[#allocation2 + $0x88] sm:$0xff] %v2818
      %2851 = vst [vmem:[#allocation2 + $0x90] sm:$0xff] %v2819
      %2852 = vst [vmem:[#allocation2 + $0x98] sm:$0xff] %v2820
      %2853 = vst [vmem:[#allocation2 + $0xa0] sm:$0xff] %v2821
      %2854 = vst [vmem:[#allocation2 + $0xa8] sm:$0xff] %v2822
      %2855 = vst [vmem:[#allocation2 + $0xb0] sm:$0xff] %v2823
      %2856 = vst [vmem:[#allocation2 + $0xb8] sm:$0xff] %v2824
      %2857 = vst [vmem:[#allocation2 + $0xc0] sm:$0xff] %v2825
      %2858 = vst [vmem:[#allocation2 + $0xc8] sm:$0xff] %v2826
      %2859 = vst [vmem:[#allocation2 + $0xd0] sm:$0xff] %v2827
      %2860 = vst [vmem:[#allocation2 + $0xd8] sm:$0xff] %v2828
      %2861 = vst [vmem:[#allocation2 + $0xe0] sm:$0xff] %v2829
      %2862 = vst [vmem:[#allocation2 + $0xe8] sm:$0xff] %v2830
      %2863 = vst [vmem:[#allocation2 + $0xf0] sm:$0xff] %v2831
      %2864 = vst [vmem:[#allocation2 + $0xf8] sm:$0xff] %v2832
      %v2865 = vld [vmem:[#allocation2] sm:$0xff]
      %v2866 = vld [vmem:[#allocation2 + $0x8] sm:$0xff]
      %v2867 = vld [vmem:[#allocation2 + $0x10] sm:$0xff]
      %v2868 = vld [vmem:[#allocation2 + $0x18] sm:$0xff]
      %v2869 = vld [vmem:[#allocation2 + $0x20] sm:$0xff]
      %v2870 = vld [vmem:[#allocation2 + $0x28] sm:$0xff]
      %v2871 = vld [vmem:[#allocation2 + $0x30] sm:$0xff]
      %v2872 = vld [vmem:[#allocation2 + $0x38] sm:$0xff]
      %v2873 = vld [vmem:[#allocation2 + $0x40] sm:$0xff]
      %v2874 = vld [vmem:[#allocation2 + $0x48] sm:$0xff]
      %v2875 = vld [vmem:[#allocation2 + $0x50] sm:$0xff]
      %v2876 = vld [vmem:[#allocation2 + $0x58] sm:$0xff]
      %v2877 = vld [vmem:[#allocation2 + $0x60] sm:$0xff]
      %v2878 = vld [vmem:[#allocation2 + $0x68] sm:$0xff]
      %v2879 = vld [vmem:[#allocation2 + $0x70] sm:$0xff]
      %v2880 = vld [vmem:[#allocation2 + $0x78] sm:$0xff]
      %v2881 = vld [vmem:[#allocation2 + $0x80] sm:$0xff]
      %v2882 = vld [vmem:[#allocation2 + $0x88] sm:$0xff]
      %v2883 = vld [vmem:[#allocation2 + $0x90] sm:$0xff]
      %v2884 = vld [vmem:[#allocation2 + $0x98] sm:$0xff]
      %v2885 = vld [vmem:[#allocation2 + $0xa0] sm:$0xff]
      %v2886 = vld [vmem:[#allocation2 + $0xa8] sm:$0xff]
      %v2887 = vld [vmem:[#allocation2 + $0xb0] sm:$0xff]
      %v2888 = vld [vmem:[#allocation2 + $0xb8] sm:$0xff]
      %v2889 = vld [vmem:[#allocation2 + $0xc0] sm:$0xff]
      %v2890 = vld [vmem:[#allocation2 + $0xc8] sm:$0xff]
      %v2891 = vld [vmem:[#allocation2 + $0xd0] sm:$0xff]
      %v2892 = vld [vmem:[#allocation2 + $0xd8] sm:$0xff]
      %v2893 = vld [vmem:[#allocation2 + $0xe0] sm:$0xff]
      %v2894 = vld [vmem:[#allocation2 + $0xe8] sm:$0xff]
      %v2895 = vld [vmem:[#allocation2 + $0xf0] sm:$0xff]
      %v2896 = vld [vmem:[#allocation2 + $0xf8] sm:$0xff]
      %s2897 = scalar_lea.vmem %s301, 48
      %v2898 = vld [vmem:[%s2897] sm:$0xf]
      %v2899 = vld [vmem:[%s2897 + $0x4] sm:$0xf]
      %v2900 = vld [vmem:[%s2897 + $0x8] sm:$0xf]
      %v2901 = vld [vmem:[%s2897 + $0xc] sm:$0xf]
      %v2902 = vld [vmem:[%s2897 + $0x10] sm:$0xf]
      %v2903 = vld [vmem:[%s2897 + $0x14] sm:$0xf]
      %v2904 = vld [vmem:[%s2897 + $0x18] sm:$0xf]
      %v2905 = vld [vmem:[%s2897 + $0x1c] sm:$0xf]
      %v2906 = vld [vmem:[%s2897 + $0x20] sm:$0xf]
      %v2907 = vld [vmem:[%s2897 + $0x24] sm:$0xf]
      %v2908 = vld [vmem:[%s2897 + $0x28] sm:$0xf]
      %v2909 = vld [vmem:[%s2897 + $0x2c] sm:$0xf]
      %v2922 = vunpack.c.l.b16 %v2898
      %v2923 = vunpack.c.l.b16 %v2899
      %v2924 = vunpack.c.l.b16 %v2900
      %v2925 = vunpack.c.l.b16 %v2901
      %v2926 = vunpack.c.l.b16 %v2902
      %v2927 = vunpack.c.l.b16 %v2903
      %v2928 = vunpack.c.l.b16 %v2904
      %v2929 = vunpack.c.l.b16 %v2905
      %v2930 = vunpack.c.l.b16 %v2906
      %v2931 = vunpack.c.l.b16 %v2907
      %v2932 = vunpack.c.l.b16 %v2908
      %v2933 = vunpack.c.l.b16 %v2909
      %v2934 = vpack.c.b16 %v2923, %v2922
      %v2935 = vpack.c.b16 %v2925, %v2924
      %v2936 = vpack.c.b16 %v2927, %v2926
      %v2937 = vpack.c.b16 %v2929, %v2928
      %v2938 = vpack.c.b16 %v2931, %v2930
      %v2939 = vpack.c.b16 %v2933, %v2932
      %v2946 = vsel %vm1042, %v2525, 0
      %2948 = vmatprep.subr.bf16.mxu0 0
      %2949 = vmatpush1.bf16.msra.mxu0 %v2934
      %2950 = vmatprep.subr.bf16.mxu0 0
      %2951 = vmatpush1.bf16.msra.mxu0 %v2935
      %2952 = vmatprep.subr.bf16.mxu0 0
      %2953 = vmatpush1.bf16.msra.mxu0 %v2936
      %2954 = vmatprep.subr.bf16.mxu0 0
      %2955 = vmatpush1.bf16.msra.mxu0 %v2937
      %2956 = vmatprep.subr.bf16.mxu0 0
      %2957 = vmatpush1.bf16.msra.mxu0 %v2938
      %2958 = vmatprep.subr.bf16.mxu0 0
      %2959 = vmatpush1.bf16.msra.mxu0 %v2939
      %2960 = vmatprep.subr.bf16.mxu0 0
      %2961 = vmatpush1.bf16.msra.mxu0 0
      %2962 = vmatprep.subr.bf16.mxu0 0
      %2963 = vmatpush1.bf16.msra.mxu0 0
      %2964 = vmatprep.subr.bf16.mxu0 0
      %2965 = vmatpush1.bf16.msra.mxu0 0
      %2966 = vmatprep.subr.bf16.mxu0 0
      %2967 = vmatpush1.bf16.msra.mxu0 0
      %2968 = vmatprep.subr.bf16.mxu0 0
      %2969 = vmatpush1.bf16.msra.mxu0 0
      %2970 = vmatprep.subr.bf16.mxu0 0
      %2971 = vmatpush1.bf16.msra.mxu0 0
      %2972 = vmatprep.subr.bf16.mxu0 0
      %2973 = vmatpush1.bf16.msra.mxu0 0
      %2974 = vmatprep.subr.bf16.mxu0 0
      %2975 = vmatpush1.bf16.msra.mxu0 0
      %2976 = vmatprep.subr.bf16.mxu0 0
      %2977 = vmatpush1.bf16.msra.mxu0 0
      %2978 = vmatprep.subr.bf16.mxu0 0
      %2979 = vmatpush1.bf16.msra.mxu0 0
      %2980 = vmatprep.mubr.bf16.mxu0 0
      %2981 = vmatmul.mubr.bf16.gmra.mrb[0].mxu0 %v2610
      %v2982 = vpop.f32.mrb[0].mxu0
      %v2983 = vadd.f32 0.0, %v2982
      %v2984 = vpop.f32.mrb[0].mxu0
      %v2985 = vpop.f32.mrb[0].mxu0
      %v2986 = vadd.f32 0.0, %v2985
      %v2987 = vpop.f32.mrb[0].mxu0
      %2988 = vmatprep.mubr.bf16.mxu0 0
      %2989 = vmatmul.mubr.bf16.gmra.mrb[0].mxu0 %v2612
      %v2990 = vpop.f32.mrb[0].mxu0
      %v2991 = vadd.f32 0.0, %v2990
      %v2992 = vpop.f32.mrb[0].mxu0
      %v2993 = vpop.f32.mrb[0].mxu0
      %v2994 = vadd.f32 0.0, %v2993
      %v2995 = vpop.f32.mrb[0].mxu0
      %2996 = vmatprep.mubr.bf16.mxu0 0
      %2997 = vmatmul.mubr.bf16.gmra.mrb[0].mxu0 %v2614
      %v2998 = vpop.f32.mrb[0].mxu0
      %v2999 = vadd.f32 0.0, %v2998
      %v3000 = vpop.f32.mrb[0].mxu0
      %v3001 = vpop.f32.mrb[0].mxu0
      %v3002 = vadd.f32 0.0, %v3001
      %v3003 = vpop.f32.mrb[0].mxu0
      %3004 = vmatprep.mubr.bf16.mxu0 0
      %3005 = vmatmul.mubr.bf16.gmra.mrb[0].mxu0 %v2616
      %v3006 = vpop.f32.mrb[0].mxu0
      %v3007 = vadd.f32 0.0, %v3006
      %v3008 = vpop.f32.mrb[0].mxu0
      %v3009 = vpop.f32.mrb[0].mxu0
      %v3010 = vadd.f32 0.0, %v3009
      %v3011 = vpop.f32.mrb[0].mxu0
      %3012 = vmatprep.mubr.bf16.mxu0 0
      %3013 = vmatmul.mubr.bf16.gmra.mrb[0].mxu0 %v2618
      %v3014 = vpop.f32.mrb[0].mxu0
      %v3015 = vadd.f32 0.0, %v3014
      %v3016 = vpop.f32.mrb[0].mxu0
      %v3017 = vpop.f32.mrb[0].mxu0
      %v3018 = vadd.f32 0.0, %v3017
      %v3019 = vpop.f32.mrb[0].mxu0
      %3020 = vmatprep.mubr.bf16.mxu0 0
      %3021 = vmatmul.mubr.bf16.gmra.mrb[0].mxu0 %v2620
      %v3022 = vpop.f32.mrb[0].mxu0
      %v3023 = vadd.f32 0.0, %v3022
      %v3024 = vpop.f32.mrb[0].mxu0
      %v3025 = vpop.f32.mrb[0].mxu0
      %v3026 = vadd.f32 0.0, %v3025
      %v3027 = vpop.f32.mrb[0].mxu0
      %3028 = vmatprep.mubr.bf16.mxu0 0
      %3029 = vmatmul.mubr.bf16.gmra.mrb[0].mxu0 %v2622
      %v3030 = vpop.f32.mrb[0].mxu0
      %v3031 = vadd.f32 0.0, %v3030
      %v3032 = vpop.f32.mrb[0].mxu0
      %v3033 = vpop.f32.mrb[0].mxu0
      %v3034 = vadd.f32 0.0, %v3033
      %v3035 = vpop.f32.mrb[0].mxu0
      %3036 = vmatprep.mubr.bf16.mxu0 0
      %3037 = vmatmul.mubr.bf16.gmra.mrb[0].mxu0 %v2624
      %v3038 = vpop.f32.mrb[0].mxu0
      %v3039 = vadd.f32 0.0, %v3038
      %v3040 = vpop.f32.mrb[0].mxu0
      %v3041 = vpop.f32.mrb[0].mxu0
      %v3042 = vadd.f32 0.0, %v3041
      %v3043 = vpop.f32.mrb[0].mxu0
      %3044 = vmatprep.mubr.bf16.mxu0 0
      %3045 = vmatmul.mubr.bf16.gmra.mrb[0].mxu0 %v2626
      %v3046 = vpop.f32.mrb[0].mxu0
      %v3047 = vadd.f32 0.0, %v3046
      %v3048 = vpop.f32.mrb[0].mxu0
      %v3049 = vpop.f32.mrb[0].mxu0
      %v3050 = vadd.f32 0.0, %v3049
      %v3051 = vpop.f32.mrb[0].mxu0
      %3052 = vmatprep.mubr.bf16.mxu0 0
      %3053 = vmatmul.mubr.bf16.gmra.mrb[0].mxu0 %v2628
      %v3054 = vpop.f32.mrb[0].mxu0
      %v3055 = vadd.f32 0.0, %v3054
      %v3056 = vpop.f32.mrb[0].mxu0
      %v3057 = vpop.f32.mrb[0].mxu0
      %v3058 = vadd.f32 0.0, %v3057
      %v3059 = vpop.f32.mrb[0].mxu0
      %3060 = vmatprep.mubr.bf16.mxu0 0
      %3061 = vmatmul.mubr.bf16.gmra.mrb[0].mxu0 %v2630
      %v3062 = vpop.f32.mrb[0].mxu0
      %v3063 = vadd.f32 0.0, %v3062
      %v3064 = vpop.f32.mrb[0].mxu0
      %v3065 = vpop.f32.mrb[0].mxu0
      %v3066 = vadd.f32 0.0, %v3065
      %v3067 = vpop.f32.mrb[0].mxu0
      %3068 = vmatprep.mubr.bf16.mxu0 0
      %3069 = vmatmul.mubr.bf16.gmra.mrb[0].mxu0 %v2632
      %v3070 = vpop.f32.mrb[0].mxu0
      %v3071 = vadd.f32 0.0, %v3070
      %v3072 = vpop.f32.mrb[0].mxu0
      %v3073 = vpop.f32.mrb[0].mxu0
      %v3074 = vadd.f32 0.0, %v3073
      %v3075 = vpop.f32.mrb[0].mxu0
      %3076 = vmatprep.mubr.bf16.mxu0 0
      %3077 = vmatmul.mubr.bf16.gmra.mrb[0].mxu0 %v2634
      %v3078 = vpop.f32.mrb[0].mxu0
      %v3079 = vadd.f32 0.0, %v3078
      %v3080 = vpop.f32.mrb[0].mxu0
      %v3081 = vpop.f32.mrb[0].mxu0
      %v3082 = vadd.f32 0.0, %v3081
      %v3083 = vpop.f32.mrb[0].mxu0
      %3084 = vmatprep.mubr.bf16.mxu0 0
      %3085 = vmatmul.mubr.bf16.gmra.mrb[0].mxu0 %v2636
      %v3086 = vpop.f32.mrb[0].mxu0
      %v3087 = vadd.f32 0.0, %v3086
      %v3088 = vpop.f32.mrb[0].mxu0
      %v3089 = vpop.f32.mrb[0].mxu0
      %v3090 = vadd.f32 0.0, %v3089
      %v3091 = vpop.f32.mrb[0].mxu0
      %3092 = vmatprep.mubr.bf16.mxu0 0
      %3093 = vmatmul.mubr.bf16.gmra.mrb[0].mxu0 %v2638
      %v3094 = vpop.f32.mrb[0].mxu0
      %v3095 = vadd.f32 0.0, %v3094
      %v3096 = vpop.f32.mrb[0].mxu0
      %v3097 = vpop.f32.mrb[0].mxu0
      %v3098 = vadd.f32 0.0, %v3097
      %v3099 = vpop.f32.mrb[0].mxu0
      %3100 = vmatprep.mubr.bf16.mxu0 0
      %3101 = vmatmul.mubr.bf16.gmra.mrb[0].mxu0 %v2946
      %v3102 = vpop.f32.mrb[0].mxu0
      %v3103 = vadd.f32 0.0, %v3102
      %v3104 = vpop.f32.mrb[0].mxu0
      %v3105 = vpop.f32.mrb[0].mxu0
      %v3106 = vadd.f32 0.0, %v3105
      %v3107 = vpop.f32.mrb[0].mxu0
      %3108 = vdwg.mxu0
      %v3109 = vadd.f32 %v2865, %v2983
      %v3110 = vadd.f32 %v2866, %v2986
      %v3111 = vadd.f32 %v2867, %v2991
      %v3112 = vadd.f32 %v2868, %v2994
      %v3113 = vadd.f32 %v2869, %v2999
      %v3114 = vadd.f32 %v2870, %v3002
      %v3115 = vadd.f32 %v2871, %v3007
      %v3116 = vadd.f32 %v2872, %v3010
      %v3117 = vadd.f32 %v2873, %v3015
      %v3118 = vadd.f32 %v2874, %v3018
      %v3119 = vadd.f32 %v2875, %v3023
      %v3120 = vadd.f32 %v2876, %v3026
      %v3121 = vadd.f32 %v2877, %v3031
      %v3122 = vadd.f32 %v2878, %v3034
      %v3123 = vadd.f32 %v2879, %v3039
      %v3124 = vadd.f32 %v2880, %v3042
      %v3125 = vadd.f32 %v2881, %v3047
      %v3126 = vadd.f32 %v2882, %v3050
      %v3127 = vadd.f32 %v2883, %v3055
      %v3128 = vadd.f32 %v2884, %v3058
      %v3129 = vadd.f32 %v2885, %v3063
      %v3130 = vadd.f32 %v2886, %v3066
      %v3131 = vadd.f32 %v2887, %v3071
      %v3132 = vadd.f32 %v2888, %v3074
      %v3133 = vadd.f32 %v2889, %v3079
      %v3134 = vadd.f32 %v2890, %v3082
      %v3135 = vadd.f32 %v2891, %v3087
      %v3136 = vadd.f32 %v2892, %v3090
      %v3137 = vadd.f32 %v2893, %v3095
      %v3138 = vadd.f32 %v2894, %v3098
      %v3139 = vadd.f32 %v2895, %v3103
      %v3140 = vadd.f32 %v2896, %v3106
      %3141 = vst [vmem:[#allocation2] sm:$0xff] %v3109
      %3142 = vst [vmem:[#allocation2 + $0x8] sm:$0xff] %v3110
      %3143 = vst [vmem:[#allocation2 + $0x10] sm:$0xff] %v3111
      %3144 = vst [vmem:[#allocation2 + $0x18] sm:$0xff] %v3112
      %3145 = vst [vmem:[#allocation2 + $0x20] sm:$0xff] %v3113
      %3146 = vst [vmem:[#allocation2 + $0x28] sm:$0xff] %v3114
      %3147 = vst [vmem:[#allocation2 + $0x30] sm:$0xff] %v3115
      %3148 = vst [vmem:[#allocation2 + $0x38] sm:$0xff] %v3116
      %3149 = vst [vmem:[#allocation2 + $0x40] sm:$0xff] %v3117
      %3150 = vst [vmem:[#allocation2 + $0x48] sm:$0xff] %v3118
      %3151 = vst [vmem:[#allocation2 + $0x50] sm:$0xff] %v3119
      %3152 = vst [vmem:[#allocation2 + $0x58] sm:$0xff] %v3120
      %3153 = vst [vmem:[#allocation2 + $0x60] sm:$0xff] %v3121
      %3154 = vst [vmem:[#allocation2 + $0x68] sm:$0xff] %v3122
      %3155 = vst [vmem:[#allocation2 + $0x70] sm:$0xff] %v3123
      %3156 = vst [vmem:[#allocation2 + $0x78] sm:$0xff] %v3124
      %3157 = vst [vmem:[#allocation2 + $0x80] sm:$0xff] %v3125
      %3158 = vst [vmem:[#allocation2 + $0x88] sm:$0xff] %v3126
      %3159 = vst [vmem:[#allocation2 + $0x90] sm:$0xff] %v3127
      %3160 = vst [vmem:[#allocation2 + $0x98] sm:$0xff] %v3128
      %3161 = vst [vmem:[#allocation2 + $0xa0] sm:$0xff] %v3129
      %3162 = vst [vmem:[#allocation2 + $0xa8] sm:$0xff] %v3130
      %3163 = vst [vmem:[#allocation2 + $0xb0] sm:$0xff] %v3131
      %3164 = vst [vmem:[#allocation2 + $0xb8] sm:$0xff] %v3132
      %3165 = vst [vmem:[#allocation2 + $0xc0] sm:$0xff] %v3133
      %3166 = vst [vmem:[#allocation2 + $0xc8] sm:$0xff] %v3134
      %3167 = vst [vmem:[#allocation2 + $0xd0] sm:$0xff] %v3135
      %3168 = vst [vmem:[#allocation2 + $0xd8] sm:$0xff] %v3136
      %3169 = vst [vmem:[#allocation2 + $0xe0] sm:$0xff] %v3137
      %3170 = vst [vmem:[#allocation2 + $0xe8] sm:$0xff] %v3138
      %3171 = vst [vmem:[#allocation2 + $0xf0] sm:$0xff] %v3139
      %3172 = vst [vmem:[#allocation2 + $0xf8] sm:$0xff] %v3140
      %v3173 = vld [vmem:[#allocation2] sm:$0xff]
      %v3174 = vld [vmem:[#allocation2 + $0x8] sm:$0xff]
      %v3175 = vld [vmem:[#allocation2 + $0x10] sm:$0xff]
      %v3176 = vld [vmem:[#allocation2 + $0x18] sm:$0xff]
      %v3177 = vld [vmem:[#allocation2 + $0x20] sm:$0xff]
      %v3178 = vld [vmem:[#allocation2 + $0x28] sm:$0xff]
      %v3179 = vld [vmem:[#allocation2 + $0x30] sm:$0xff]
      %v3180 = vld [vmem:[#allocation2 + $0x38] sm:$0xff]
      %v3181 = vld [vmem:[#allocation2 + $0x40] sm:$0xff]
      %v3182 = vld [vmem:[#allocation2 + $0x48] sm:$0xff]
      %v3183 = vld [vmem:[#allocation2 + $0x50] sm:$0xff]
      %v3184 = vld [vmem:[#allocation2 + $0x58] sm:$0xff]
      %v3185 = vld [vmem:[#allocation2 + $0x60] sm:$0xff]
      %v3186 = vld [vmem:[#allocation2 + $0x68] sm:$0xff]
      %v3187 = vld [vmem:[#allocation2 + $0x70] sm:$0xff]
      %v3188 = vld [vmem:[#allocation2 + $0x78] sm:$0xff]
      %v3189 = vld [vmem:[#allocation2 + $0x80] sm:$0xff]
      %v3190 = vld [vmem:[#allocation2 + $0x88] sm:$0xff]
      %v3191 = vld [vmem:[#allocation2 + $0x90] sm:$0xff]
      %v3192 = vld [vmem:[#allocation2 + $0x98] sm:$0xff]
      %v3193 = vld [vmem:[#allocation2 + $0xa0] sm:$0xff]
      %v3194 = vld [vmem:[#allocation2 + $0xa8] sm:$0xff]
      %v3195 = vld [vmem:[#allocation2 + $0xb0] sm:$0xff]
      %v3196 = vld [vmem:[#allocation2 + $0xb8] sm:$0xff]
      %v3197 = vld [vmem:[#allocation2 + $0xc0] sm:$0xff]
      %v3198 = vld [vmem:[#allocation2 + $0xc8] sm:$0xff]
      %v3199 = vld [vmem:[#allocation2 + $0xd0] sm:$0xff]
      %v3200 = vld [vmem:[#allocation2 + $0xd8] sm:$0xff]
      %v3201 = vld [vmem:[#allocation2 + $0xe0] sm:$0xff]
      %v3202 = vld [vmem:[#allocation2 + $0xe8] sm:$0xff]
      %v3203 = vld [vmem:[#allocation2 + $0xf0] sm:$0xff]
      %v3204 = vld [vmem:[#allocation2 + $0xf8] sm:$0xff]
      %s3205 = scalar_lea.vmem %s301, 96
      %v3206 = vld [vmem:[%s3205] sm:$0xf]
      %v3207 = vld [vmem:[%s3205 + $0x4] sm:$0xf]
      %v3208 = vld [vmem:[%s3205 + $0x8] sm:$0xf]
      %v3209 = vld [vmem:[%s3205 + $0xc] sm:$0xf]
      %v3210 = vld [vmem:[%s3205 + $0x10] sm:$0xf]
      %v3211 = vld [vmem:[%s3205 + $0x14] sm:$0xf]
      %v3212 = vld [vmem:[%s3205 + $0x18] sm:$0xf]
      %v3213 = vld [vmem:[%s3205 + $0x1c] sm:$0xf]
      %v3214 = vld [vmem:[%s3205 + $0x20] sm:$0xf]
      %v3215 = vld [vmem:[%s3205 + $0x24] sm:$0xf]
      %v3216 = vld [vmem:[%s3205 + $0x28] sm:$0xf]
      %v3217 = vld [vmem:[%s3205 + $0x2c] sm:$0xf]
      %v3230 = vunpack.c.l.b16 %v3206
      %v3231 = vunpack.c.l.b16 %v3207
      %v3232 = vunpack.c.l.b16 %v3208
      %v3233 = vunpack.c.l.b16 %v3209
      %v3234 = vunpack.c.l.b16 %v3210
      %v3235 = vunpack.c.l.b16 %v3211
      %v3236 = vunpack.c.l.b16 %v3212
      %v3237 = vunpack.c.l.b16 %v3213
      %v3238 = vunpack.c.l.b16 %v3214
      %v3239 = vunpack.c.l.b16 %v3215
      %v3240 = vunpack.c.l.b16 %v3216
      %v3241 = vunpack.c.l.b16 %v3217
      %v3242 = vpack.c.b16 %v3231, %v3230
      %v3243 = vpack.c.b16 %v3233, %v3232
      %v3244 = vpack.c.b16 %v3235, %v3234
      %v3245 = vpack.c.b16 %v3237, %v3236
      %v3246 = vpack.c.b16 %v3239, %v3238
      %v3247 = vpack.c.b16 %v3241, %v3240
      %v3254 = vsel %vm1042, %v2527, 0
      %3256 = vmatprep.subr.bf16.mxu0 0
      %3257 = vmatpush1.bf16.msra.mxu0 %v3242
      %3258 = vmatprep.subr.bf16.mxu0 0
      %3259 = vmatpush1.bf16.msra.mxu0 %v3243
      %3260 = vmatprep.subr.bf16.mxu0 0
      %3261 = vmatpush1.bf16.msra.mxu0 %v3244
      %3262 = vmatprep.subr.bf16.mxu0 0
      %3263 = vmatpush1.bf16.msra.mxu0 %v3245
      %3264 = vmatprep.subr.bf16.mxu0 0
      %3265 = vmatpush1.bf16.msra.mxu0 %v3246
      %3266 = vmatprep.subr.bf16.mxu0 0
      %3267 = vmatpush1.bf16.msra.mxu0 %v3247
      %3268 = vmatprep.subr.bf16.mxu0 0
      %3269 = vmatpush1.bf16.msra.mxu0 0
      %3270 = vmatprep.subr.bf16.mxu0 0
      %3271 = vmatpush1.bf16.msra.mxu0 0
      %3272 = vmatprep.subr.bf16.mxu0 0
      %3273 = vmatpush1.bf16.msra.mxu0 0
      %3274 = vmatprep.subr.bf16.mxu0 0
      %3275 = vmatpush1.bf16.msra.mxu0 0
      %3276 = vmatprep.subr.bf16.mxu0 0
      %3277 = vmatpush1.bf16.msra.mxu0 0
      %3278 = vmatprep.subr.bf16.mxu0 0
      %3279 = vmatpush1.bf16.msra.mxu0 0
      %3280 = vmatprep.subr.bf16.mxu0 0
      %3281 = vmatpush1.bf16.msra.mxu0 0
      %3282 = vmatprep.subr.bf16.mxu0 0
      %3283 = vmatpush1.bf16.msra.mxu0 0
      %3284 = vmatprep.subr.bf16.mxu0 0
      %3285 = vmatpush1.bf16.msra.mxu0 0
      %3286 = vmatprep.subr.bf16.mxu0 0
      %3287 = vmatpush1.bf16.msra.mxu0 0
      %3288 = vmatprep.mubr.bf16.mxu0 0
      %3289 = vmatmul.mubr.bf16.gmra.mrb[0].mxu0 %v2612
      %v3290 = vpop.f32.mrb[0].mxu0
      %v3291 = vadd.f32 0.0, %v3290
      %v3292 = vpop.f32.mrb[0].mxu0
      %v3293 = vpop.f32.mrb[0].mxu0
      %v3294 = vadd.f32 0.0, %v3293
      %v3295 = vpop.f32.mrb[0].mxu0
      %3296 = vmatprep.mubr.bf16.mxu0 0
      %3297 = vmatmul.mubr.bf16.gmra.mrb[0].mxu0 %v2614
      %v3298 = vpop.f32.mrb[0].mxu0
      %v3299 = vadd.f32 0.0, %v3298
      %v3300 = vpop.f32.mrb[0].mxu0
      %v3301 = vpop.f32.mrb[0].mxu0
      %v3302 = vadd.f32 0.0, %v3301
      %v3303 = vpop.f32.mrb[0].mxu0
      %3304 = vmatprep.mubr.bf16.mxu0 0
      %3305 = vmatmul.mubr.bf16.gmra.mrb[0].mxu0 %v2616
      %v3306 = vpop.f32.mrb[0].mxu0
      %v3307 = vadd.f32 0.0, %v3306
      %v3308 = vpop.f32.mrb[0].mxu0
      %v3309 = vpop.f32.mrb[0].mxu0
      %v3310 = vadd.f32 0.0, %v3309
      %v3311 = vpop.f32.mrb[0].mxu0
      %3312 = vmatprep.mubr.bf16.mxu0 0
      %3313 = vmatmul.mubr.bf16.gmra.mrb[0].mxu0 %v2618
      %v3314 = vpop.f32.mrb[0].mxu0
      %v3315 = vadd.f32 0.0, %v3314
      %v3316 = vpop.f32.mrb[0].mxu0
      %v3317 = vpop.f32.mrb[0].mxu0
      %v3318 = vadd.f32 0.0, %v3317
      %v3319 = vpop.f32.mrb[0].mxu0
      %3320 = vmatprep.mubr.bf16.mxu0 0
      %3321 = vmatmul.mubr.bf16.gmra.mrb[0].mxu0 %v2620
      %v3322 = vpop.f32.mrb[0].mxu0
      %v3323 = vadd.f32 0.0, %v3322
      %v3324 = vpop.f32.mrb[0].mxu0
      %v3325 = vpop.f32.mrb[0].mxu0
      %v3326 = vadd.f32 0.0, %v3325
      %v3327 = vpop.f32.mrb[0].mxu0
      %3328 = vmatprep.mubr.bf16.mxu0 0
      %3329 = vmatmul.mubr.bf16.gmra.mrb[0].mxu0 %v2622
      %v3330 = vpop.f32.mrb[0].mxu0
      %v3331 = vadd.f32 0.0, %v3330
      %v3332 = vpop.f32.mrb[0].mxu0
      %v3333 = vpop.f32.mrb[0].mxu0
      %v3334 = vadd.f32 0.0, %v3333
      %v3335 = vpop.f32.mrb[0].mxu0
      %3336 = vmatprep.mubr.bf16.mxu0 0
      %3337 = vmatmul.mubr.bf16.gmra.mrb[0].mxu0 %v2624
      %v3338 = vpop.f32.mrb[0].mxu0
      %v3339 = vadd.f32 0.0, %v3338
      %v3340 = vpop.f32.mrb[0].mxu0
      %v3341 = vpop.f32.mrb[0].mxu0
      %v3342 = vadd.f32 0.0, %v3341
      %v3343 = vpop.f32.mrb[0].mxu0
      %3344 = vmatprep.mubr.bf16.mxu0 0
      %3345 = vmatmul.mubr.bf16.gmra.mrb[0].mxu0 %v2626
      %v3346 = vpop.f32.mrb[0].mxu0
      %v3347 = vadd.f32 0.0, %v3346
      %v3348 = vpop.f32.mrb[0].mxu0
      %v3349 = vpop.f32.mrb[0].mxu0
      %v3350 = vadd.f32 0.0, %v3349
      %v3351 = vpop.f32.mrb[0].mxu0
      %3352 = vmatprep.mubr.bf16.mxu0 0
      %3353 = vmatmul.mubr.bf16.gmra.mrb[0].mxu0 %v2628
      %v3354 = vpop.f32.mrb[0].mxu0
      %v3355 = vadd.f32 0.0, %v3354
      %v3356 = vpop.f32.mrb[0].mxu0
      %v3357 = vpop.f32.mrb[0].mxu0
      %v3358 = vadd.f32 0.0, %v3357
      %v3359 = vpop.f32.mrb[0].mxu0
      %3360 = vmatprep.mubr.bf16.mxu0 0
      %3361 = vmatmul.mubr.bf16.gmra.mrb[0].mxu0 %v2630
      %v3362 = vpop.f32.mrb[0].mxu0
      %v3363 = vadd.f32 0.0, %v3362
      %v3364 = vpop.f32.mrb[0].mxu0
      %v3365 = vpop.f32.mrb[0].mxu0
      %v3366 = vadd.f32 0.0, %v3365
      %v3367 = vpop.f32.mrb[0].mxu0
      %3368 = vmatprep.mubr.bf16.mxu0 0
      %3369 = vmatmul.mubr.bf16.gmra.mrb[0].mxu0 %v2632
      %v3370 = vpop.f32.mrb[0].mxu0
      %v3371 = vadd.f32 0.0, %v3370
      %v3372 = vpop.f32.mrb[0].mxu0
      %v3373 = vpop.f32.mrb[0].mxu0
      %v3374 = vadd.f32 0.0, %v3373
      %v3375 = vpop.f32.mrb[0].mxu0
      %3376 = vmatprep.mubr.bf16.mxu0 0
      %3377 = vmatmul.mubr.bf16.gmra.mrb[0].mxu0 %v2634
      %v3378 = vpop.f32.mrb[0].mxu0
      %v3379 = vadd.f32 0.0, %v3378
      %v3380 = vpop.f32.mrb[0].mxu0
      %v3381 = vpop.f32.mrb[0].mxu0
      %v3382 = vadd.f32 0.0, %v3381
      %v3383 = vpop.f32.mrb[0].mxu0
      %3384 = vmatprep.mubr.bf16.mxu0 0
      %3385 = vmatmul.mubr.bf16.gmra.mrb[0].mxu0 %v2636
      %v3386 = vpop.f32.mrb[0].mxu0
      %v3387 = vadd.f32 0.0, %v3386
      %v3388 = vpop.f32.mrb[0].mxu0
      %v3389 = vpop.f32.mrb[0].mxu0
      %v3390 = vadd.f32 0.0, %v3389
      %v3391 = vpop.f32.mrb[0].mxu0
      %3392 = vmatprep.mubr.bf16.mxu0 0
      %3393 = vmatmul.mubr.bf16.gmra.mrb[0].mxu0 %v2638
      %v3394 = vpop.f32.mrb[0].mxu0
      %v3395 = vadd.f32 0.0, %v3394
      %v3396 = vpop.f32.mrb[0].mxu0
      %v3397 = vpop.f32.mrb[0].mxu0
      %v3398 = vadd.f32 0.0, %v3397
      %v3399 = vpop.f32.mrb[0].mxu0
      %3400 = vmatprep.mubr.bf16.mxu0 0
      %3401 = vmatmul.mubr.bf16.gmra.mrb[0].mxu0 %v2946
      %v3402 = vpop.f32.mrb[0].mxu0
      %v3403 = vadd.f32 0.0, %v3402
      %v3404 = vpop.f32.mrb[0].mxu0
      %v3405 = vpop.f32.mrb[0].mxu0
      %v3406 = vadd.f32 0.0, %v3405
      %v3407 = vpop.f32.mrb[0].mxu0
      %3408 = vmatprep.mubr.bf16.mxu0 0
      %3409 = vmatmul.mubr.bf16.gmra.mrb[0].mxu0 %v3254
      %v3410 = vpop.f32.mrb[0].mxu0
      %v3411 = vadd.f32 0.0, %v3410
      %v3412 = vpop.f32.mrb[0].mxu0
      %v3413 = vpop.f32.mrb[0].mxu0
      %v3414 = vadd.f32 0.0, %v3413
      %v3415 = vpop.f32.mrb[0].mxu0
      %3416 = vdwg.mxu0
      %v3417 = vadd.f32 %v3173, %v3291
      %v3418 = vadd.f32 %v3174, %v3294
      %v3419 = vadd.f32 %v3175, %v3299
      %v3420 = vadd.f32 %v3176, %v3302
      %v3421 = vadd.f32 %v3177, %v3307
      %v3422 = vadd.f32 %v3178, %v3310
      %v3423 = vadd.f32 %v3179, %v3315
      %v3424 = vadd.f32 %v3180, %v3318
      %v3425 = vadd.f32 %v3181, %v3323
      %v3426 = vadd.f32 %v3182, %v3326
      %v3427 = vadd.f32 %v3183, %v3331
      %v3428 = vadd.f32 %v3184, %v3334
      %v3429 = vadd.f32 %v3185, %v3339
      %v3430 = vadd.f32 %v3186, %v3342
      %v3431 = vadd.f32 %v3187, %v3347
      %v3432 = vadd.f32 %v3188, %v3350
      %v3433 = vadd.f32 %v3189, %v3355
      %v3434 = vadd.f32 %v3190, %v3358
      %v3435 = vadd.f32 %v3191, %v3363
      %v3436 = vadd.f32 %v3192, %v3366
      %v3437 = vadd.f32 %v3193, %v3371
      %v3438 = vadd.f32 %v3194, %v3374
      %v3439 = vadd.f32 %v3195, %v3379
      %v3440 = vadd.f32 %v3196, %v3382
      %v3441 = vadd.f32 %v3197, %v3387
      %v3442 = vadd.f32 %v3198, %v3390
      %v3443 = vadd.f32 %v3199, %v3395
      %v3444 = vadd.f32 %v3200, %v3398
      %v3445 = vadd.f32 %v3201, %v3403
      %v3446 = vadd.f32 %v3202, %v3406
      %v3447 = vadd.f32 %v3203, %v3411
      %v3448 = vadd.f32 %v3204, %v3414
      %3449 = vst [vmem:[#allocation2] sm:$0xff] %v3417
      %3450 = vst [vmem:[#allocation2 + $0x8] sm:$0xff] %v3418
      %3451 = vst [vmem:[#allocation2 + $0x10] sm:$0xff] %v3419
      %3452 = vst [vmem:[#allocation2 + $0x18] sm:$0xff] %v3420
      %3453 = vst [vmem:[#allocation2 + $0x20] sm:$0xff] %v3421
      %3454 = vst [vmem:[#allocation2 + $0x28] sm:$0xff] %v3422
      %3455 = vst [vmem:[#allocation2 + $0x30] sm:$0xff] %v3423
      %3456 = vst [vmem:[#allocation2 + $0x38] sm:$0xff] %v3424
      %3457 = vst [vmem:[#allocation2 + $0x40] sm:$0xff] %v3425
      %3458 = vst [vmem:[#allocation2 + $0x48] sm:$0xff] %v3426
      %3459 = vst [vmem:[#allocation2 + $0x50] sm:$0xff] %v3427
      %3460 = vst [vmem:[#allocation2 + $0x58] sm:$0xff] %v3428
      %3461 = vst [vmem:[#allocation2 + $0x60] sm:$0xff] %v3429
      %3462 = vst [vmem:[#allocation2 + $0x68] sm:$0xff] %v3430
      %3463 = vst [vmem:[#allocation2 + $0x70] sm:$0xff] %v3431
      %3464 = vst [vmem:[#allocation2 + $0x78] sm:$0xff] %v3432
      %3465 = vst [vmem:[#allocation2 + $0x80] sm:$0xff] %v3433
      %3466 = vst [vmem:[#allocation2 + $0x88] sm:$0xff] %v3434
      %3467 = vst [vmem:[#allocation2 + $0x90] sm:$0xff] %v3435
      %3468 = vst [vmem:[#allocation2 + $0x98] sm:$0xff] %v3436
      %3469 = vst [vmem:[#allocation2 + $0xa0] sm:$0xff] %v3437
      %3470 = vst [vmem:[#allocation2 + $0xa8] sm:$0xff] %v3438
      %3471 = vst [vmem:[#allocation2 + $0xb0] sm:$0xff] %v3439
      %3472 = vst [vmem:[#allocation2 + $0xb8] sm:$0xff] %v3440
      %3473 = vst [vmem:[#allocation2 + $0xc0] sm:$0xff] %v3441
      %3474 = vst [vmem:[#allocation2 + $0xc8] sm:$0xff] %v3442
      %3475 = vst [vmem:[#allocation2 + $0xd0] sm:$0xff] %v3443
      %3476 = vst [vmem:[#allocation2 + $0xd8] sm:$0xff] %v3444
      %3477 = vst [vmem:[#allocation2 + $0xe0] sm:$0xff] %v3445
      %3478 = vst [vmem:[#allocation2 + $0xe8] sm:$0xff] %v3446
      %3479 = vst [vmem:[#allocation2 + $0xf0] sm:$0xff] %v3447
      %3480 = vst [vmem:[#allocation2 + $0xf8] sm:$0xff] %v3448
      %v3481 = vld [vmem:[#allocation2] sm:$0xff]
      %v3482 = vld [vmem:[#allocation2 + $0x8] sm:$0xff]
      %v3483 = vld [vmem:[#allocation2 + $0x10] sm:$0xff]
      %v3484 = vld [vmem:[#allocation2 + $0x18] sm:$0xff]
      %v3485 = vld [vmem:[#allocation2 + $0x20] sm:$0xff]
      %v3486 = vld [vmem:[#allocation2 + $0x28] sm:$0xff]
      %v3487 = vld [vmem:[#allocation2 + $0x30] sm:$0xff]
      %v3488 = vld [vmem:[#allocation2 + $0x38] sm:$0xff]
      %v3489 = vld [vmem:[#allocation2 + $0x40] sm:$0xff]
      %v3490 = vld [vmem:[#allocation2 + $0x48] sm:$0xff]
      %v3491 = vld [vmem:[#allocation2 + $0x50] sm:$0xff]
      %v3492 = vld [vmem:[#allocation2 + $0x58] sm:$0xff]
      %v3493 = vld [vmem:[#allocation2 + $0x60] sm:$0xff]
      %v3494 = vld [vmem:[#allocation2 + $0x68] sm:$0xff]
      %v3495 = vld [vmem:[#allocation2 + $0x70] sm:$0xff]
      %v3496 = vld [vmem:[#allocation2 + $0x78] sm:$0xff]
      %v3497 = vld [vmem:[#allocation2 + $0x80] sm:$0xff]
      %v3498 = vld [vmem:[#allocation2 + $0x88] sm:$0xff]
      %v3499 = vld [vmem:[#allocation2 + $0x90] sm:$0xff]
      %v3500 = vld [vmem:[#allocation2 + $0x98] sm:$0xff]
      %v3501 = vld [vmem:[#allocation2 + $0xa0] sm:$0xff]
      %v3502 = vld [vmem:[#allocation2 + $0xa8] sm:$0xff]
      %v3503 = vld [vmem:[#allocation2 + $0xb0] sm:$0xff]
      %v3504 = vld [vmem:[#allocation2 + $0xb8] sm:$0xff]
      %v3505 = vld [vmem:[#allocation2 + $0xc0] sm:$0xff]
      %v3506 = vld [vmem:[#allocation2 + $0xc8] sm:$0xff]
      %v3507 = vld [vmem:[#allocation2 + $0xd0] sm:$0xff]
      %v3508 = vld [vmem:[#allocation2 + $0xd8] sm:$0xff]
      %v3509 = vld [vmem:[#allocation2 + $0xe0] sm:$0xff]
      %v3510 = vld [vmem:[#allocation2 + $0xe8] sm:$0xff]
      %v3511 = vld [vmem:[#allocation2 + $0xf0] sm:$0xff]
      %v3512 = vld [vmem:[#allocation2 + $0xf8] sm:$0xff]
      %v3513 = vld [vmem:[%s304] sm:$0x1]
      %v3515 = vlaneseq
      %v3516 = vshrl.u32 %v3515, 7
      %v3517 = vsub.s32 0, %v3516
      %v3518 = vrot.slane %v3513, %v3517
      %v3520 = vadd.f32 %v3481, %v3518
      %v3521 = vadd.f32 %v3482, %v3518
      %v3522 = vadd.f32 %v3483, %v3518
      %v3523 = vadd.f32 %v3484, %v3518
      %v3524 = vadd.f32 %v3485, %v3518
      %v3525 = vadd.f32 %v3486, %v3518
      %v3526 = vadd.f32 %v3487, %v3518
      %v3527 = vadd.f32 %v3488, %v3518
      %v3528 = vadd.f32 %v3489, %v3518
      %v3529 = vadd.f32 %v3490, %v3518
      %v3530 = vadd.f32 %v3491, %v3518
      %v3531 = vadd.f32 %v3492, %v3518
      %v3532 = vadd.f32 %v3493, %v3518
      %v3533 = vadd.f32 %v3494, %v3518
      %v3534 = vadd.f32 %v3495, %v3518
      %v3535 = vadd.f32 %v3496, %v3518
      %v3536 = vadd.f32 %v3497, %v3518
      %v3537 = vadd.f32 %v3498, %v3518
      %v3538 = vadd.f32 %v3499, %v3518
      %v3539 = vadd.f32 %v3500, %v3518
      %v3540 = vadd.f32 %v3501, %v3518
      %v3541 = vadd.f32 %v3502, %v3518
      %v3542 = vadd.f32 %v3503, %v3518
      %v3543 = vadd.f32 %v3504, %v3518
      %v3544 = vadd.f32 %v3505, %v3518
      %v3545 = vadd.f32 %v3506, %v3518
      %v3546 = vadd.f32 %v3507, %v3518
      %v3547 = vadd.f32 %v3508, %v3518
      %v3548 = vadd.f32 %v3509, %v3518
      %v3549 = vadd.f32 %v3510, %v3518
      %v3550 = vadd.f32 %v3511, %v3518
      %v3551 = vadd.f32 %v3512, %v3518
      %v3552 = vmax.f32 %v3520, 0.0
      %v3553 = vmax.f32 %v3521, 0.0
      %v3554 = vmax.f32 %v3522, 0.0
      %v3555 = vmax.f32 %v3523, 0.0
      %v3556 = vmax.f32 %v3524, 0.0
      %v3557 = vmax.f32 %v3525, 0.0
      %v3558 = vmax.f32 %v3526, 0.0
      %v3559 = vmax.f32 %v3527, 0.0
      %v3560 = vmax.f32 %v3528, 0.0
      %v3561 = vmax.f32 %v3529, 0.0
      %v3562 = vmax.f32 %v3530, 0.0
      %v3563 = vmax.f32 %v3531, 0.0
      %v3564 = vmax.f32 %v3532, 0.0
      %v3565 = vmax.f32 %v3533, 0.0
      %v3566 = vmax.f32 %v3534, 0.0
      %v3567 = vmax.f32 %v3535, 0.0
      %v3568 = vmax.f32 %v3536, 0.0
      %v3569 = vmax.f32 %v3537, 0.0
      %v3570 = vmax.f32 %v3538, 0.0
      %v3571 = vmax.f32 %v3539, 0.0
      %v3572 = vmax.f32 %v3540, 0.0
      %v3573 = vmax.f32 %v3541, 0.0
      %v3574 = vmax.f32 %v3542, 0.0
      %v3575 = vmax.f32 %v3543, 0.0
      %v3576 = vmax.f32 %v3544, 0.0
      %v3577 = vmax.f32 %v3545, 0.0
      %v3578 = vmax.f32 %v3546, 0.0
      %v3579 = vmax.f32 %v3547, 0.0
      %v3580 = vmax.f32 %v3548, 0.0
      %v3581 = vmax.f32 %v3549, 0.0
      %v3582 = vmax.f32 %v3550, 0.0
      %v3583 = vmax.f32 %v3551, 0.0
      %v3584 = vpack.c.bf16 %v3553, %v3552
      %v3585 = vpack.c.bf16 %v3555, %v3554
      %v3586 = vpack.c.bf16 %v3557, %v3556
      %v3587 = vpack.c.bf16 %v3559, %v3558
      %v3588 = vpack.c.bf16 %v3561, %v3560
      %v3589 = vpack.c.bf16 %v3563, %v3562
      %v3590 = vpack.c.bf16 %v3565, %v3564
      %v3591 = vpack.c.bf16 %v3567, %v3566
      %v3592 = vpack.c.bf16 %v3569, %v3568
      %v3593 = vpack.c.bf16 %v3571, %v3570
      %v3594 = vpack.c.bf16 %v3573, %v3572
      %v3595 = vpack.c.bf16 %v3575, %v3574
      %v3596 = vpack.c.bf16 %v3577, %v3576
      %v3597 = vpack.c.bf16 %v3579, %v3578
      %v3598 = vpack.c.bf16 %v3581, %v3580
      %v3599 = vpack.c.bf16 %v3583, %v3582
      %v3616 = vunpack.c.l.b16 %v3584
      %v3617 = vunpack.c.h.b16 %v3584
      %v3618 = vunpack.c.l.b16 %v3585
      %v3619 = vunpack.c.h.b16 %v3585
      %v3620 = vunpack.c.l.b16 %v3586
      %v3621 = vunpack.c.h.b16 %v3586
      %v3622 = vunpack.c.l.b16 %v3587
      %v3623 = vunpack.c.h.b16 %v3587
      %v3624 = vunpack.c.l.b16 %v3588
      %v3625 = vunpack.c.h.b16 %v3588
      %v3626 = vunpack.c.l.b16 %v3589
      %v3627 = vunpack.c.h.b16 %v3589
      %v3628 = vunpack.c.l.b16 %v3590
      %v3629 = vunpack.c.h.b16 %v3590
      %v3630 = vunpack.c.l.b16 %v3591
      %v3631 = vunpack.c.h.b16 %v3591
      %v3632 = vunpack.c.l.b16 %v3592
      %v3633 = vunpack.c.h.b16 %v3592
      %v3634 = vunpack.c.l.b16 %v3593
      %v3635 = vunpack.c.h.b16 %v3593
      %v3636 = vunpack.c.l.b16 %v3594
      %v3637 = vunpack.c.h.b16 %v3594
      %v3638 = vunpack.c.l.b16 %v3595
      %v3639 = vunpack.c.h.b16 %v3595
      %v3640 = vunpack.c.l.b16 %v3596
      %v3641 = vunpack.c.h.b16 %v3596
      %v3642 = vunpack.c.l.b16 %v3597
      %v3643 = vunpack.c.h.b16 %v3597
      %v3644 = vunpack.c.l.b16 %v3598
      %v3645 = vunpack.c.h.b16 %v3598
      %v3646 = vunpack.c.l.b16 %v3599
      %v3647 = vunpack.c.h.b16 %v3599
      %v3648 = vpack.c.b16 %v3616, %v3616
      %v3649 = vpack.c.b16 %v3617, %v3617
      %v3650 = vpack.c.b16 %v3618, %v3618
      %v3651 = vpack.c.b16 %v3619, %v3619
      %v3652 = vpack.c.b16 %v3620, %v3620
      %v3653 = vpack.c.b16 %v3621, %v3621
      %v3654 = vpack.c.b16 %v3622, %v3622
      %v3655 = vpack.c.b16 %v3623, %v3623
      %v3656 = vpack.c.b16 %v3624, %v3624
      %v3657 = vpack.c.b16 %v3625, %v3625
      %v3658 = vpack.c.b16 %v3626, %v3626
      %v3659 = vpack.c.b16 %v3627, %v3627
      %v3660 = vpack.c.b16 %v3628, %v3628
      %v3661 = vpack.c.b16 %v3629, %v3629
      %v3662 = vpack.c.b16 %v3630, %v3630
      %v3663 = vpack.c.b16 %v3631, %v3631
      %v3664 = vpack.c.b16 %v3632, %v3632
      %v3665 = vpack.c.b16 %v3633, %v3633
      %v3666 = vpack.c.b16 %v3634, %v3634
      %v3667 = vpack.c.b16 %v3635, %v3635
      %v3668 = vpack.c.b16 %v3636, %v3636
      %v3669 = vpack.c.b16 %v3637, %v3637
      %v3670 = vpack.c.b16 %v3638, %v3638
      %v3671 = vpack.c.b16 %v3639, %v3639
      %v3672 = vpack.c.b16 %v3640, %v3640
      %v3673 = vpack.c.b16 %v3641, %v3641
      %v3674 = vpack.c.b16 %v3642, %v3642
      %v3675 = vpack.c.b16 %v3643, %v3643
      %v3676 = vpack.c.b16 %v3644, %v3644
      %v3677 = vpack.c.b16 %v3645, %v3645
      %v3678 = vpack.c.b16 %v3646, %v3646
      %v3679 = vpack.c.b16 %v3647, %v3647
      %3712 = vst [vmem:[%s312] sm:$0xf] %v3648
      %3713 = vst [vmem:[%s312 + $0x4] sm:$0xf] %v3649
      %3714 = vst [vmem:[%s312 + $0x8] sm:$0xf] %v3650
      %3715 = vst [vmem:[%s312 + $0xc] sm:$0xf] %v3651
      %3716 = vst [vmem:[%s312 + $0x10] sm:$0xf] %v3652
      %3717 = vst [vmem:[%s312 + $0x14] sm:$0xf] %v3653
      %3718 = vst [vmem:[%s312 + $0x18] sm:$0xf] %v3654
      %3719 = vst [vmem:[%s312 + $0x1c] sm:$0xf] %v3655
      %3720 = vst [vmem:[%s312 + $0x20] sm:$0xf] %v3656
      %3721 = vst [vmem:[%s312 + $0x24] sm:$0xf] %v3657
      %3722 = vst [vmem:[%s312 + $0x28] sm:$0xf] %v3658
      %3723 = vst [vmem:[%s312 + $0x2c] sm:$0xf] %v3659
      %3724 = vst [vmem:[%s312 + $0x30] sm:$0xf] %v3660
      %3725 = vst [vmem:[%s312 + $0x34] sm:$0xf] %v3661
      %3726 = vst [vmem:[%s312 + $0x38] sm:$0xf] %v3662
      %3727 = vst [vmem:[%s312 + $0x3c] sm:$0xf] %v3663
      %3728 = vst [vmem:[%s312 + $0x40] sm:$0xf] %v3664
      %3729 = vst [vmem:[%s312 + $0x44] sm:$0xf] %v3665
      %3730 = vst [vmem:[%s312 + $0x48] sm:$0xf] %v3666
      %3731 = vst [vmem:[%s312 + $0x4c] sm:$0xf] %v3667
      %3732 = vst [vmem:[%s312 + $0x50] sm:$0xf] %v3668
      %3733 = vst [vmem:[%s312 + $0x54] sm:$0xf] %v3669
      %3734 = vst [vmem:[%s312 + $0x58] sm:$0xf] %v3670
      %3735 = vst [vmem:[%s312 + $0x5c] sm:$0xf] %v3671
      %3736 = vst [vmem:[%s312 + $0x60] sm:$0xf] %v3672
      %3737 = vst [vmem:[%s312 + $0x64] sm:$0xf] %v3673
      %3738 = vst [vmem:[%s312 + $0x68] sm:$0xf] %v3674
      %3739 = vst [vmem:[%s312 + $0x6c] sm:$0xf] %v3675
      %3740 = vst [vmem:[%s312 + $0x70] sm:$0xf] %v3676
      %3741 = vst [vmem:[%s312 + $0x74] sm:$0xf] %v3677
      %3742 = vst [vmem:[%s312 + $0x78] sm:$0xf] %v3678
      %3743 = vst [vmem:[%s312 + $0x7c] sm:$0xf] %v3679
      %p3744 = scmp.lt.s32.totalorder %s20, 1
      %s3745 = scalar_select %p3744, %s20, 1
      %p3746 = scmp.lt.s32.totalorder %s21, 0
      %s3747 = scalar_select %p3746, %s21, 0
      %s3748 = smul.addr %s3745, 32
      %s3749 = sadd.s32 %s3747, %s3748
      %s3750 = smul.addr %s3749, 4
      %s3751 = scalar_lea.vmem %s5, %s3750
      // Predicated region
      $region41: #{decoder_forward.4} parent=39 // pred_check
        %p3752 = pneg %p178
      $region42: #{decoder_forward.4} parent=39 // pred_check_branch
        %3754 = sbr.rel (%p3752) target = $region44
      $region43: #{decoder_forward.4} parent=39 // pred_region
        _
      $region44: #{decoder_forward.4} parent=39 // pred_fallthru
        _
    $region40: #{decoder_forward.4} parent=5 // pred_fallthru
      _
    %p3755 = scmp.le.s32.totalorder 2, %s11
    // Predicated region
    $region45: #{decoder_forward.4} parent=5 // pred_check
      %p3756 = pneg %p3755
    $region46: #{decoder_forward.4} parent=5 // pred_check_branch
      %3758 = sbr.rel (%p3756) target = $region48
    $region47: #{decoder_forward.4} parent=5 // pred_region
      %s3759 = ssub.s32 %s11, 2
      // Predicated region
      $region49: #{decoder_forward.4} parent=47 // pred_check
        %p3760 = pneg %p184
      $region50: #{decoder_forward.4} parent=47 // pred_check_branch
        %3762 = sbr.rel (%p3760) target = $region52
      $region51: #{decoder_forward.4} parent=47 // pred_region
        %p3763 = scmp.lt.s32.totalorder %s22, 1
        %s3764 = scalar_select %p3763, %s22, 1
        %p3765 = scmp.lt.s32.totalorder %s23, 0
        %s3766 = scalar_select %p3765, %s23, 0
        %s3767 = smul.addr %s3764, 32
        %s3768 = sadd.s32 %s3766, %s3767
        %s3769 = smul.addr %s3768, 4
        %s3770 = scalar_lea.vmem %s5, %s3769
      $region52: #{decoder_forward.4} parent=47 // pred_fallthru
        _
    $region48: #{decoder_forward.4} parent=5 // pred_fallthru
      _
  $region6: #{decoder_forward.4} parent=0 // loop_footer
    %s15 = sadd.s32 1, %s11
  $region7: #{decoder_forward.4} parent=0 // loop_footer_branch
    %10 = sbr.rel target = $region3
  $region8: #{decoder_forward.4} parent=0 // loop_exit
    _

</llo_original>
